<compile_context>
chip_gen: v7x
topology: tpu7x:2x2x1
jax: 0.10.0
libtpu: 0.0.40
codegen_flags: <defaults>
</compile_context>

<pallas_src>
import functools

import jax
import jax.numpy as jnp
from jax.experimental import pallas as pl
from jax.experimental.pallas import tpu as pltpu


# ----------------------------------------------------------------------------
# Fused Pallas kernel: 3x GRU layer + Linear(H, 1) + sigmoid
# ----------------------------------------------------------------------------
def _gru_model_kernel(num_layers, B, T, *refs):
    """refs = [x2d,
               (w_ih, w_hh, b_ih, b_hh) * num_layers,
               w_fc_t, b_fc,                # inputs
               out,                         # output
               gx_scr, seq_scr]             # VMEM scratch

    Time-major 2-D layout, gate order r|z|n (PyTorch nn.GRU), gates padded to
    HP lanes each:
      x2d:    (T*B, D)          row block [t*B:(t+1)*B] = timestep t
      w_ih:   (D, 3HP) layer 0, (HP, 3HP) layers > 0   (zero pad rows/cols)
      w_hh:   (HP, 3HP)
      b_ih:   (1, 3HP)          separate from b_hh (GRU n-gate needs it)
      b_hh:   (1, 3HP)
      w_fc_t: (O, HP), b_fc: (1, O)
      out:    (B, O)
      gx_scr: (T*B, 3HP)        hoisted input projections (all timesteps)
      seq_scr:(T*B, HP)         inter-layer hidden-state sequence
    """
    x_ref = refs[0]
    layer_refs = [refs[1 + 4 * l: 1 + 4 * (l + 1)] for l in range(num_layers)]
    w_fc_ref = refs[1 + 4 * num_layers]
    b_fc_ref = refs[2 + 4 * num_layers]
    out_ref = refs[3 + 4 * num_layers]
    gx_ref = refs[4 + 4 * num_layers]
    seq_ref = refs[5 + 4 * num_layers]

    HP = layer_refs[0][1].shape[0]        # w_hh: (HP, 3HP), HP = padded hidden
    O = out_ref.shape[1]

    h_last = None
    for l in range(num_layers):
        w_ih_ref, w_hh_ref, b_ih_ref, b_hh_ref = layer_refs[l]
        last_layer = (l == num_layers - 1)

        # Hoisted input-side projection for ALL timesteps: one lane-dense 2-D
        # matmul per layer (no reshape — operands are already 2-D, time-major).
        x_in = x_ref[...] if l == 0 else seq_ref[...]
        gx_ref[...] = (
            jnp.dot(x_in, w_ih_ref[...], preferred_element_type=jnp.float32)
            + b_ih_ref[...]
        )

        b_hh = b_hh_ref[...]

        # Static in-kernel recurrence over time (T small & static).
        h = jnp.zeros((B, HP), jnp.float32)
        for t in range(T):
            gx_t = gx_ref[pl.ds(t * B, B), :]                       # (B, 3HP)
            # w_hh read per step; the compiler keeps loads near their use
            # instead of pinning a 48-vreg value across the unrolled loop.
            gh = jnp.dot(h, w_hh_ref[...],
                         preferred_element_type=jnp.float32) + b_hh
            # All gate slices are whole 128-lane-aligned blocks (HP = 128).
            r = jax.nn.sigmoid(gx_t[:, 0:HP] + gh[:, 0:HP])
            z = jax.nn.sigmoid(gx_t[:, HP:2 * HP] + gh[:, HP:2 * HP])
            n = jnp.tanh(gx_t[:, 2 * HP:3 * HP] + r * gh[:, 2 * HP:3 * HP])
            h = (1.0 - z) * n + z * h
            if not last_layer:
                seq_ref[pl.ds(t * B, B), :] = h     # next layer's input
        h_last = h

    # FC head + sigmoid on the last-timestep hidden state.
    if O == 1:
        # VPU path: elementwise mul + lane reduce — no MXU round trip.
        logit = (jnp.sum(h_last * w_fc_ref[...], axis=-1, keepdims=True)
                 + b_fc_ref[...])
    else:
        logit = jax.lax.dot_general(
            h_last, w_fc_ref[...], (((1,), (1,)), ((), ())),
            preferred_element_type=jnp.float32) + b_fc_ref[...]
    out_ref[...] = jax.nn.sigmoid(logit).astype(out_ref.dtype)


# ----------------------------------------------------------------------------
# Wrapper: single pallas_call for the whole model
# ----------------------------------------------------------------------------
def gru_model_forward(x_btd, params):
    """Equivalent of GRUModel.forward. x_btd: (B, T, D) -> (B,)."""
    B, T, D = x_btd.shape
    layers = params["gru"]
    num_layers = len(layers)
    HP = layers[0]["w_hh"].shape[0]
    O = params["w_fc_t"].shape[0]

    # Time-major flatten OUTSIDE the kernel (tiny XLA op) so the kernel never
    # reshapes: timestep t is the contiguous row block [t*B:(t+1)*B].
    x2d = jnp.transpose(x_btd, (1, 0, 2)).reshape(T * B, D)

    args = [x2d]
    for layer in layers:
        args += [layer["w_ih"], layer["w_hh"], layer["b_ih"], layer["b_hh"]]
    args += [params["w_fc_t"], params["b_fc"]]

    kernel = functools.partial(_gru_model_kernel, num_layers, B, T)

    out = pl.pallas_call(
        kernel,
        out_shape=jax.ShapeDtypeStruct((B, O), jnp.float32),
        in_specs=[pl.BlockSpec(memory_space=pltpu.MemorySpace.VMEM)
                  for _ in args],
        out_specs=pl.BlockSpec(memory_space=pltpu.MemorySpace.VMEM),
        scratch_shapes=[
            pltpu.VMEM((T * B, 3 * HP), jnp.float32),   # gx: input projections
            pltpu.VMEM((T * B, HP), jnp.float32),       # seq: inter-layer states
        ],
    )(*args)
    return out.reshape(-1)                              # .view(-1)


# ----------------------------------------------------------------------------
# Deterministic parameter init (PyTorch-style uniform(-1/sqrt(H), 1/sqrt(H))),
# UNPADDED — used by the pure-JAX reference and as the source for padding.
# ----------------------------------------------------------------------------
def init_params(key, input_size, hidden_size, output_size, num_layers):
    k = 1.0 / jnp.sqrt(hidden_size)
    params = {"gru": []}
    for layer in range(num_layers):
        d_in = input_size if layer == 0 else hidden_size
        key, k1, k2, k3, k4 = jax.random.split(key, 5)
        # stored transposed & gate-concatenated (r|z|n) for x @ W:
        w_ih = jax.random.uniform(k1, (d_in, 3 * hidden_size), jnp.float32, -k, k)
        w_hh = jax.random.uniform(k2, (hidden_size, 3 * hidden_size), jnp.float32, -k, k)
        b_ih = jax.random.uniform(k3, (1, 3 * hidden_size), jnp.float32, -k, k)
        b_hh = jax.random.uniform(k4, (1, 3 * hidden_size), jnp.float32, -k, k)
        params["gru"].append(
            {"w_ih": w_ih, "w_hh": w_hh, "b_ih": b_ih, "b_hh": b_hh})
    key, k5, k6 = jax.random.split(key, 3)
    params["w_fc"] = jax.random.uniform(k5, (hidden_size, output_size), jnp.float32, -k, k)
    params["b_fc"] = jax.random.uniform(k6, (1, output_size), jnp.float32, -k, k)
    return params


# ----------------------------------------------------------------------------
# Lane padding: pad hidden/gate width to a multiple of 128 with exact zeros.
# Pad lanes of h stay identically 0 (zero pad rows in W_hh/W_ih/W_fc, zero
# pad biases), so results are unchanged while every gate slice is vreg-aligned.
# ----------------------------------------------------------------------------
def _pad_gate_cols(w, h, hp):
    """(d, 3h) -> (d, 3hp): gate block g placed at cols [g*hp : g*hp+h]."""
    d = w.shape[0]
    out = jnp.zeros((d, 3 * hp), w.dtype)
    for g in range(3):
        out = out.at[:, g * hp:g * hp + h].set(w[:, g * h:(g + 1) * h])
    return out


def pad_params(params, lane=128):
    h = params["gru"][0]["w_hh"].shape[0]
    hp = -(-h // lane) * lane
    padded = {"gru": []}
    for l, layer in enumerate(params["gru"]):
        w_ih = _pad_gate_cols(layer["w_ih"], h, hp)
        if l > 0:                                    # stacked layers: pad input rows
            w_ih = jnp.zeros((hp, 3 * hp), w_ih.dtype).at[:h, :].set(w_ih)
        w_hh = jnp.zeros((hp, 3 * hp), jnp.float32).at[:h, :].set(
            _pad_gate_cols(layer["w_hh"], h, hp))
        padded["gru"].append({
            "w_ih": w_ih, "w_hh": w_hh,
            "b_ih": _pad_gate_cols(layer["b_ih"], h, hp),
            "b_hh": _pad_gate_cols(layer["b_hh"], h, hp)})
    o = params["w_fc"].shape[1]
    padded["w_fc_t"] = jnp.zeros((o, hp), jnp.float32).at[:, :h].set(params["w_fc"].T)
    padded["b_fc"] = params["b_fc"]
    return padded


# ----------------------------------------------------------------------------
# Pure-JAX reference (sanity check only, uses UNPADDED params)
# ----------------------------------------------------------------------------
def reference_forward(x_btd, params):
    B = x_btd.shape[0]
    seq = jnp.transpose(x_btd, (1, 0, 2))  # (T, B, D)
    for layer in params["gru"]:
        w_ih, w_hh = layer["w_ih"], layer["w_hh"]
        b_ih, b_hh = layer["b_ih"], layer["b_hh"]
        H = w_hh.shape[0]

        def step(h, x_t, w_ih=w_ih, w_hh=w_hh, b_ih=b_ih, b_hh=b_hh, H=H):
            gx = x_t @ w_ih + b_ih
            gh = h @ w_hh + b_hh
            r = jax.nn.sigmoid(gx[:, :H] + gh[:, :H])
            z = jax.nn.sigmoid(gx[:, H:2 * H] + gh[:, H:2 * H])
            n = jnp.tanh(gx[:, 2 * H:] + r * gh[:, 2 * H:])
            h_new = (1.0 - z) * n + z * h
            return h_new, h_new

        h0 = jnp.zeros((B, H), jnp.float32)
        _, seq = jax.lax.scan(step, h0, seq)
    h_last = seq[-1]
    out = jax.nn.sigmoid(h_last @ params["w_fc"] + params["b_fc"])
    return out.reshape(-1)


# ----------------------------------------------------------------------------
if __name__ == "__main__":
    # NOTE: jax_default_matmul_precision="highest" intentionally NOT set —
    # multi-pass f32 MXU emulation on the recurrent dot was the main per-step
    # latency cost flagged in review.  Tolerance below accounts for default
    # (reduced-precision) MXU passes; outputs are sigmoids in (0, 1).

    # Shapes consistent with the module: hidden=64, layers=3, output=1;
    # small batch=2, seq=8, input=8.
    B, T, D = 2, 8, 8
    hidden_size, num_layers, output_size = 64, 3, 1

    key = jax.random.PRNGKey(0)
    key, kx = jax.random.split(key)
    x = jax.random.normal(kx, (B, T, D), jnp.float32)

    params = init_params(key, D, hidden_size, output_size, num_layers)
    kernel_params = pad_params(params)          # lane-aligned (128-padded) copy

    fwd = jax.jit(functools.partial(gru_model_forward, params=kernel_params))
    y = fwd(x)
    jax.block_until_ready(y)

    y_ref = reference_forward(x, params)
    assert y.shape == (B * output_size,)
    assert jnp.allclose(y, y_ref, atol=5e-3, rtol=5e-3), (y, y_ref)

    print("KERNEL_OK")
</pallas_src>

<mosaic_0001>
module attributes {stable_mosaic.version = 11 : i64} {
  func.func @_gru_model_kernel(%arg0: memref<16x8xf32, #tpu.memory_space<vmem>>, %arg1: memref<8x384xf32, #tpu.memory_space<vmem>>, %arg2: memref<128x384xf32, #tpu.memory_space<vmem>>, %arg3: memref<1x384xf32, #tpu.memory_space<vmem>>, %arg4: memref<1x384xf32, #tpu.memory_space<vmem>>, %arg5: memref<128x384xf32, #tpu.memory_space<vmem>>, %arg6: memref<128x384xf32, #tpu.memory_space<vmem>>, %arg7: memref<1x384xf32, #tpu.memory_space<vmem>>, %arg8: memref<1x384xf32, #tpu.memory_space<vmem>>, %arg9: memref<128x384xf32, #tpu.memory_space<vmem>>, %arg10: memref<128x384xf32, #tpu.memory_space<vmem>>, %arg11: memref<1x384xf32, #tpu.memory_space<vmem>>, %arg12: memref<1x384xf32, #tpu.memory_space<vmem>>, %arg13: memref<1x128xf32, #tpu.memory_space<vmem>>, %arg14: memref<1x1xf32, #tpu.memory_space<vmem>>, %arg15: memref<2x1xf32, #tpu.memory_space<vmem>>, %arg16: memref<16x384xf32, #tpu.memory_space<vmem>>, %arg17: memref<16x128xf32, #tpu.memory_space<vmem>>) attributes {dimension_semantics = [], scalar_prefetch = 0 : i64, scratch_operands = 2 : i64, tpu.core_type = #tpu.core_type<tc>} {
    %c0 = arith.constant 0 : index
    %c0_0 = arith.constant 0 : index
    %0 = vector.load %arg0[%c0, %c0_0] : memref<16x8xf32, #tpu.memory_space<vmem>>, vector<16x8xf32>
    %c0_1 = arith.constant 0 : index
    %c0_2 = arith.constant 0 : index
    %1 = vector.load %arg1[%c0_1, %c0_2] : memref<8x384xf32, #tpu.memory_space<vmem>>, vector<8x384xf32>
    %cst = arith.constant dense<0.000000e+00> : vector<16x384xf32>
    %2 = tpu.matmul %0, %1, %cst {dimension_numbers = #tpu.dot_dimension_numbers<[1], [0], [0], [1], [0, 0, 1, 1], [], []>} : vector<16x8xf32>, vector<8x384xf32>, vector<16x384xf32> -> vector<16x384xf32>
    %c0_3 = arith.constant 0 : index
    %c0_4 = arith.constant 0 : index
    %3 = vector.load %arg3[%c0_3, %c0_4] : memref<1x384xf32, #tpu.memory_space<vmem>>, vector<1x384xf32>
    %4 = vector.broadcast %3 : vector<1x384xf32> to vector<16x384xf32>
    %5 = arith.addf %2, %4 : vector<16x384xf32>
    %c0_5 = arith.constant 0 : index
    %c0_6 = arith.constant 0 : index
    %6 = vector.load %arg16[%c0_5, %c0_6] : memref<16x384xf32, #tpu.memory_space<vmem>>, vector<16x384xf32>
    tpu.vector_store %arg16[%c0_5, %c0_6], %5 {strides = array<i32>} : memref<16x384xf32, #tpu.memory_space<vmem>>, vector<16x384xf32>,
    %c0_7 = arith.constant 0 : index
    %c0_8 = arith.constant 0 : index
    %7 = vector.load %arg4[%c0_7, %c0_8] : memref<1x384xf32, #tpu.memory_space<vmem>>, vector<1x384xf32>
    %cst_9 = arith.constant 0.000000e+00 : f32
    %8 = vector.broadcast %cst_9 : f32 to vector<2x128xf32>
    %c0_10 = arith.constant 0 : index
    %c0_11 = arith.constant 0 : index
    %9 = vector.load %arg16[%c0_10, %c0_11] : memref<16x384xf32, #tpu.memory_space<vmem>>, vector<2x384xf32>
    %c0_12 = arith.constant 0 : index
    %c0_13 = arith.constant 0 : index
    %10 = vector.load %arg2[%c0_12, %c0_13] : memref<128x384xf32, #tpu.memory_space<vmem>>, vector<128x384xf32>
    %cst_14 = arith.constant dense<0.000000e+00> : vector<2x384xf32>
    %11 = tpu.matmul %8, %10, %cst_14 {dimension_numbers = #tpu.dot_dimension_numbers<[1], [0], [0], [1], [0, 0, 1, 1], [], []>} : vector<2x128xf32>, vector<128x384xf32>, vector<2x384xf32> -> vector<2x384xf32>
    %12 = vector.broadcast %7 : vector<1x384xf32> to vector<2x384xf32>
    %13 = arith.addf %11, %12 : vector<2x384xf32>
    %14 = vector.extract_strided_slice %9 {offsets = [0, 0], sizes = [2, 128], strides = [1, 1]} : vector<2x384xf32> to vector<2x128xf32>
    %15 = vector.extract_strided_slice %13 {offsets = [0, 0], sizes = [2, 128], strides = [1, 1]} : vector<2x384xf32> to vector<2x128xf32>
    %16 = arith.addf %14, %15 : vector<2x128xf32>
    %17 = arith.negf %16 : vector<2x128xf32>
    %18 = math.exp %17 : vector<2x128xf32>
    %cst_15 = arith.constant 1.000000e+00 : f32
    %19 = vector.broadcast %cst_15 : f32 to vector<2x128xf32>
    %20 = arith.addf %19, %18 : vector<2x128xf32>
    %21 = arith.divf %19, %20 : vector<2x128xf32>
    %22 = vector.extract_strided_slice %9 {offsets = [0, 128], sizes = [2, 128], strides = [1, 1]} : vector<2x384xf32> to vector<2x128xf32>
    %23 = vector.extract_strided_slice %13 {offsets = [0, 128], sizes = [2, 128], strides = [1, 1]} : vector<2x384xf32> to vector<2x128xf32>
    %24 = arith.addf %22, %23 : vector<2x128xf32>
    %25 = arith.negf %24 : vector<2x128xf32>
    %26 = math.exp %25 : vector<2x128xf32>
    %cst_16 = arith.constant 1.000000e+00 : f32
    %27 = vector.broadcast %cst_16 : f32 to vector<2x128xf32>
    %28 = arith.addf %27, %26 : vector<2x128xf32>
    %29 = arith.divf %27, %28 : vector<2x128xf32>
    %30 = vector.extract_strided_slice %9 {offsets = [0, 256], sizes = [2, 128], strides = [1, 1]} : vector<2x384xf32> to vector<2x128xf32>
    %31 = vector.extract_strided_slice %13 {offsets = [0, 256], sizes = [2, 128], strides = [1, 1]} : vector<2x384xf32> to vector<2x128xf32>
    %32 = arith.mulf %21, %31 : vector<2x128xf32>
    %33 = arith.addf %30, %32 : vector<2x128xf32>
    %34 = math.tanh %33 : vector<2x128xf32>
    %cst_17 = arith.constant 1.000000e+00 : f32
    %35 = vector.broadcast %cst_17 : f32 to vector<2x128xf32>
    %36 = arith.subf %35, %29 : vector<2x128xf32>
    %37 = arith.mulf %36, %34 : vector<2x128xf32>
    %38 = arith.mulf %29, %8 : vector<2x128xf32>
    %39 = arith.addf %37, %38 : vector<2x128xf32>
    %c0_18 = arith.constant 0 : index
    %c0_19 = arith.constant 0 : index
    %40 = vector.load %arg17[%c0_18, %c0_19] : memref<16x128xf32, #tpu.memory_space<vmem>>, vector<2x128xf32>
    tpu.vector_store %arg17[%c0_18, %c0_19], %39 {strides = array<i32>} : memref<16x128xf32, #tpu.memory_space<vmem>>, vector<2x128xf32>,
    %c2 = arith.constant 2 : index
    %c0_20 = arith.constant 0 : index
    %41 = vector.load %arg16[%c2, %c0_20] : memref<16x384xf32, #tpu.memory_space<vmem>>, vector<2x384xf32>
    %c0_21 = arith.constant 0 : index
    %c0_22 = arith.constant 0 : index
    %42 = vector.load %arg2[%c0_21, %c0_22] : memref<128x384xf32, #tpu.memory_space<vmem>>, vector<128x384xf32>
    %cst_23 = arith.constant dense<0.000000e+00> : vector<2x384xf32>
    %43 = tpu.matmul %39, %42, %cst_23 {dimension_numbers = #tpu.dot_dimension_numbers<[1], [0], [0], [1], [0, 0, 1, 1], [], []>} : vector<2x128xf32>, vector<128x384xf32>, vector<2x384xf32> -> vector<2x384xf32>
    %44 = vector.broadcast %7 : vector<1x384xf32> to vector<2x384xf32>
    %45 = arith.addf %43, %44 : vector<2x384xf32>
    %46 = vector.extract_strided_slice %41 {offsets = [0, 0], sizes = [2, 128], strides = [1, 1]} : vector<2x384xf32> to vector<2x128xf32>
    %47 = vector.extract_strided_slice %45 {offsets = [0, 0], sizes = [2, 128], strides = [1, 1]} : vector<2x384xf32> to vector<2x128xf32>
    %48 = arith.addf %46, %47 : vector<2x128xf32>
    %49 = arith.negf %48 : vector<2x128xf32>
    %50 = math.exp %49 : vector<2x128xf32>
    %cst_24 = arith.constant 1.000000e+00 : f32
    %51 = vector.broadcast %cst_24 : f32 to vector<2x128xf32>
    %52 = arith.addf %51, %50 : vector<2x128xf32>
    %53 = arith.divf %51, %52 : vector<2x128xf32>
    %54 = vector.extract_strided_slice %41 {offsets = [0, 128], sizes = [2, 128], strides = [1, 1]} : vector<2x384xf32> to vector<2x128xf32>
    %55 = vector.extract_strided_slice %45 {offsets = [0, 128], sizes = [2, 128], strides = [1, 1]} : vector<2x384xf32> to vector<2x128xf32>
    %56 = arith.addf %54, %55 : vector<2x128xf32>
    %57 = arith.negf %56 : vector<2x128xf32>
    %58 = math.exp %57 : vector<2x128xf32>
    %cst_25 = arith.constant 1.000000e+00 : f32
    %59 = vector.broadcast %cst_25 : f32 to vector<2x128xf32>
    %60 = arith.addf %59, %58 : vector<2x128xf32>
    %61 = arith.divf %59, %60 : vector<2x128xf32>
    %62 = vector.extract_strided_slice %41 {offsets = [0, 256], sizes = [2, 128], strides = [1, 1]} : vector<2x384xf32> to vector<2x128xf32>
    %63 = vector.extract_strided_slice %45 {offsets = [0, 256], sizes = [2, 128], strides = [1, 1]} : vector<2x384xf32> to vector<2x128xf32>
    %64 = arith.mulf %53, %63 : vector<2x128xf32>
    %65 = arith.addf %62, %64 : vector<2x128xf32>
    %66 = math.tanh %65 : vector<2x128xf32>
    %cst_26 = arith.constant 1.000000e+00 : f32
    %67 = vector.broadcast %cst_26 : f32 to vector<2x128xf32>
    %68 = arith.subf %67, %61 : vector<2x128xf32>
    %69 = arith.mulf %68, %66 : vector<2x128xf32>
    %70 = arith.mulf %61, %39 : vector<2x128xf32>
    %71 = arith.addf %69, %70 : vector<2x128xf32>
    %c2_27 = arith.constant 2 : index
    %c0_28 = arith.constant 0 : index
    %72 = vector.load %arg17[%c2_27, %c0_28] : memref<16x128xf32, #tpu.memory_space<vmem>>, vector<2x128xf32>
    tpu.vector_store %arg17[%c2_27, %c0_28], %71 {strides = array<i32>} : memref<16x128xf32, #tpu.memory_space<vmem>>, vector<2x128xf32>,
    %c4 = arith.constant 4 : index
    %c0_29 = arith.constant 0 : index
    %73 = vector.load %arg16[%c4, %c0_29] : memref<16x384xf32, #tpu.memory_space<vmem>>, vector<2x384xf32>
    %c0_30 = arith.constant 0 : index
    %c0_31 = arith.constant 0 : index
    %74 = vector.load %arg2[%c0_30, %c0_31] : memref<128x384xf32, #tpu.memory_space<vmem>>, vector<128x384xf32>
    %cst_32 = arith.constant dense<0.000000e+00> : vector<2x384xf32>
    %75 = tpu.matmul %71, %74, %cst_32 {dimension_numbers = #tpu.dot_dimension_numbers<[1], [0], [0], [1], [0, 0, 1, 1], [], []>} : vector<2x128xf32>, vector<128x384xf32>, vector<2x384xf32> -> vector<2x384xf32>
    %76 = vector.broadcast %7 : vector<1x384xf32> to vector<2x384xf32>
    %77 = arith.addf %75, %76 : vector<2x384xf32>
    %78 = vector.extract_strided_slice %73 {offsets = [0, 0], sizes = [2, 128], strides = [1, 1]} : vector<2x384xf32> to vector<2x128xf32>
    %79 = vector.extract_strided_slice %77 {offsets = [0, 0], sizes = [2, 128], strides = [1, 1]} : vector<2x384xf32> to vector<2x128xf32>
    %80 = arith.addf %78, %79 : vector<2x128xf32>
    %81 = arith.negf %80 : vector<2x128xf32>
    %82 = math.exp %81 : vector<2x128xf32>
    %cst_33 = arith.constant 1.000000e+00 : f32
    %83 = vector.broadcast %cst_33 : f32 to vector<2x128xf32>
    %84 = arith.addf %83, %82 : vector<2x128xf32>
    %85 = arith.divf %83, %84 : vector<2x128xf32>
    %86 = vector.extract_strided_slice %73 {offsets = [0, 128], sizes = [2, 128], strides = [1, 1]} : vector<2x384xf32> to vector<2x128xf32>
    %87 = vector.extract_strided_slice %77 {offsets = [0, 128], sizes = [2, 128], strides = [1, 1]} : vector<2x384xf32> to vector<2x128xf32>
    %88 = arith.addf %86, %87 : vector<2x128xf32>
    %89 = arith.negf %88 : vector<2x128xf32>
    %90 = math.exp %89 : vector<2x128xf32>
    %cst_34 = arith.constant 1.000000e+00 : f32
    %91 = vector.broadcast %cst_34 : f32 to vector<2x128xf32>
    %92 = arith.addf %91, %90 : vector<2x128xf32>
    %93 = arith.divf %91, %92 : vector<2x128xf32>
    %94 = vector.extract_strided_slice %73 {offsets = [0, 256], sizes = [2, 128], strides = [1, 1]} : vector<2x384xf32> to vector<2x128xf32>
    %95 = vector.extract_strided_slice %77 {offsets = [0, 256], sizes = [2, 128], strides = [1, 1]} : vector<2x384xf32> to vector<2x128xf32>
    %96 = arith.mulf %85, %95 : vector<2x128xf32>
    %97 = arith.addf %94, %96 : vector<2x128xf32>
    %98 = math.tanh %97 : vector<2x128xf32>
    %cst_35 = arith.constant 1.000000e+00 : f32
    %99 = vector.broadcast %cst_35 : f32 to vector<2x128xf32>
    %100 = arith.subf %99, %93 : vector<2x128xf32>
    %101 = arith.mulf %100, %98 : vector<2x128xf32>
    %102 = arith.mulf %93, %71 : vector<2x128xf32>
    %103 = arith.addf %101, %102 : vector<2x128xf32>
    %c4_36 = arith.constant 4 : index
    %c0_37 = arith.constant 0 : index
    %104 = vector.load %arg17[%c4_36, %c0_37] : memref<16x128xf32, #tpu.memory_space<vmem>>, vector<2x128xf32>
    tpu.vector_store %arg17[%c4_36, %c0_37], %103 {strides = array<i32>} : memref<16x128xf32, #tpu.memory_space<vmem>>, vector<2x128xf32>,
    %c6 = arith.constant 6 : index
    %c0_38 = arith.constant 0 : index
    %105 = vector.load %arg16[%c6, %c0_38] : memref<16x384xf32, #tpu.memory_space<vmem>>, vector<2x384xf32>
    %c0_39 = arith.constant 0 : index
    %c0_40 = arith.constant 0 : index
    %106 = vector.load %arg2[%c0_39, %c0_40] : memref<128x384xf32, #tpu.memory_space<vmem>>, vector<128x384xf32>
    %cst_41 = arith.constant dense<0.000000e+00> : vector<2x384xf32>
    %107 = tpu.matmul %103, %106, %cst_41 {dimension_numbers = #tpu.dot_dimension_numbers<[1], [0], [0], [1], [0, 0, 1, 1], [], []>} : vector<2x128xf32>, vector<128x384xf32>, vector<2x384xf32> -> vector<2x384xf32>
    %108 = vector.broadcast %7 : vector<1x384xf32> to vector<2x384xf32>
    %109 = arith.addf %107, %108 : vector<2x384xf32>
    %110 = vector.extract_strided_slice %105 {offsets = [0, 0], sizes = [2, 128], strides = [1, 1]} : vector<2x384xf32> to vector<2x128xf32>
    %111 = vector.extract_strided_slice %109 {offsets = [0, 0], sizes = [2, 128], strides = [1, 1]} : vector<2x384xf32> to vector<2x128xf32>
    %112 = arith.addf %110, %111 : vector<2x128xf32>
    %113 = arith.negf %112 : vector<2x128xf32>
    %114 = math.exp %113 : vector<2x128xf32>
    %cst_42 = arith.constant 1.000000e+00 : f32
    %115 = vector.broadcast %cst_42 : f32 to vector<2x128xf32>
    %116 = arith.addf %115, %114 : vector<2x128xf32>
    %117 = arith.divf %115, %116 : vector<2x128xf32>
    %118 = vector.extract_strided_slice %105 {offsets = [0, 128], sizes = [2, 128], strides = [1, 1]} : vector<2x384xf32> to vector<2x128xf32>
    %119 = vector.extract_strided_slice %109 {offsets = [0, 128], sizes = [2, 128], strides = [1, 1]} : vector<2x384xf32> to vector<2x128xf32>
    %120 = arith.addf %118, %119 : vector<2x128xf32>
    %121 = arith.negf %120 : vector<2x128xf32>
    %122 = math.exp %121 : vector<2x128xf32>
    %cst_43 = arith.constant 1.000000e+00 : f32
    %123 = vector.broadcast %cst_43 : f32 to vector<2x128xf32>
    %124 = arith.addf %123, %122 : vector<2x128xf32>
    %125 = arith.divf %123, %124 : vector<2x128xf32>
    %126 = vector.extract_strided_slice %105 {offsets = [0, 256], sizes = [2, 128], strides = [1, 1]} : vector<2x384xf32> to vector<2x128xf32>
    %127 = vector.extract_strided_slice %109 {offsets = [0, 256], sizes = [2, 128], strides = [1, 1]} : vector<2x384xf32> to vector<2x128xf32>
    %128 = arith.mulf %117, %127 : vector<2x128xf32>
    %129 = arith.addf %126, %128 : vector<2x128xf32>
    %130 = math.tanh %129 : vector<2x128xf32>
    %cst_44 = arith.constant 1.000000e+00 : f32
    %131 = vector.broadcast %cst_44 : f32 to vector<2x128xf32>
    %132 = arith.subf %131, %125 : vector<2x128xf32>
    %133 = arith.mulf %132, %130 : vector<2x128xf32>
    %134 = arith.mulf %125, %103 : vector<2x128xf32>
    %135 = arith.addf %133, %134 : vector<2x128xf32>
    %c6_45 = arith.constant 6 : index
    %c0_46 = arith.constant 0 : index
    %136 = vector.load %arg17[%c6_45, %c0_46] : memref<16x128xf32, #tpu.memory_space<vmem>>, vector<2x128xf32>
    tpu.vector_store %arg17[%c6_45, %c0_46], %135 {strides = array<i32>} : memref<16x128xf32, #tpu.memory_space<vmem>>, vector<2x128xf32>,
    %c8 = arith.constant 8 : index
    %c0_47 = arith.constant 0 : index
    %137 = vector.load %arg16[%c8, %c0_47] : memref<16x384xf32, #tpu.memory_space<vmem>>, vector<2x384xf32>
    %c0_48 = arith.constant 0 : index
    %c0_49 = arith.constant 0 : index
    %138 = vector.load %arg2[%c0_48, %c0_49] : memref<128x384xf32, #tpu.memory_space<vmem>>, vector<128x384xf32>
    %cst_50 = arith.constant dense<0.000000e+00> : vector<2x384xf32>
    %139 = tpu.matmul %135, %138, %cst_50 {dimension_numbers = #tpu.dot_dimension_numbers<[1], [0], [0], [1], [0, 0, 1, 1], [], []>} : vector<2x128xf32>, vector<128x384xf32>, vector<2x384xf32> -> vector<2x384xf32>
    %140 = vector.broadcast %7 : vector<1x384xf32> to vector<2x384xf32>
    %141 = arith.addf %139, %140 : vector<2x384xf32>
    %142 = vector.extract_strided_slice %137 {offsets = [0, 0], sizes = [2, 128], strides = [1, 1]} : vector<2x384xf32> to vector<2x128xf32>
    %143 = vector.extract_strided_slice %141 {offsets = [0, 0], sizes = [2, 128], strides = [1, 1]} : vector<2x384xf32> to vector<2x128xf32>
    %144 = arith.addf %142, %143 : vector<2x128xf32>
    %145 = arith.negf %144 : vector<2x128xf32>
    %146 = math.exp %145 : vector<2x128xf32>
    %cst_51 = arith.constant 1.000000e+00 : f32
    %147 = vector.broadcast %cst_51 : f32 to vector<2x128xf32>
    %148 = arith.addf %147, %146 : vector<2x128xf32>
    %149 = arith.divf %147, %148 : vector<2x128xf32>
    %150 = vector.extract_strided_slice %137 {offsets = [0, 128], sizes = [2, 128], strides = [1, 1]} : vector<2x384xf32> to vector<2x128xf32>
    %151 = vector.extract_strided_slice %141 {offsets = [0, 128], sizes = [2, 128], strides = [1, 1]} : vector<2x384xf32> to vector<2x128xf32>
    %152 = arith.addf %150, %151 : vector<2x128xf32>
    %153 = arith.negf %152 : vector<2x128xf32>
    %154 = math.exp %153 : vector<2x128xf32>
    %cst_52 = arith.constant 1.000000e+00 : f32
    %155 = vector.broadcast %cst_52 : f32 to vector<2x128xf32>
    %156 = arith.addf %155, %154 : vector<2x128xf32>
    %157 = arith.divf %155, %156 : vector<2x128xf32>
    %158 = vector.extract_strided_slice %137 {offsets = [0, 256], sizes = [2, 128], strides = [1, 1]} : vector<2x384xf32> to vector<2x128xf32>
    %159 = vector.extract_strided_slice %141 {offsets = [0, 256], sizes = [2, 128], strides = [1, 1]} : vector<2x384xf32> to vector<2x128xf32>
    %160 = arith.mulf %149, %159 : vector<2x128xf32>
    %161 = arith.addf %158, %160 : vector<2x128xf32>
    %162 = math.tanh %161 : vector<2x128xf32>
    %cst_53 = arith.constant 1.000000e+00 : f32
    %163 = vector.broadcast %cst_53 : f32 to vector<2x128xf32>
    %164 = arith.subf %163, %157 : vector<2x128xf32>
    %165 = arith.mulf %164, %162 : vector<2x128xf32>
    %166 = arith.mulf %157, %135 : vector<2x128xf32>
    %167 = arith.addf %165, %166 : vector<2x128xf32>
    %c8_54 = arith.constant 8 : index
    %c0_55 = arith.constant 0 : index
    %168 = vector.load %arg17[%c8_54, %c0_55] : memref<16x128xf32, #tpu.memory_space<vmem>>, vector<2x128xf32>
    tpu.vector_store %arg17[%c8_54, %c0_55], %167 {strides = array<i32>} : memref<16x128xf32, #tpu.memory_space<vmem>>, vector<2x128xf32>,
    %c10 = arith.constant 10 : index
    %c0_56 = arith.constant 0 : index
    %169 = vector.load %arg16[%c10, %c0_56] : memref<16x384xf32, #tpu.memory_space<vmem>>, vector<2x384xf32>
    %c0_57 = arith.constant 0 : index
    %c0_58 = arith.constant 0 : index
    %170 = vector.load %arg2[%c0_57, %c0_58] : memref<128x384xf32, #tpu.memory_space<vmem>>, vector<128x384xf32>
    %cst_59 = arith.constant dense<0.000000e+00> : vector<2x384xf32>
    %171 = tpu.matmul %167, %170, %cst_59 {dimension_numbers = #tpu.dot_dimension_numbers<[1], [0], [0], [1], [0, 0, 1, 1], [], []>} : vector<2x128xf32>, vector<128x384xf32>, vector<2x384xf32> -> vector<2x384xf32>
    %172 = vector.broadcast %7 : vector<1x384xf32> to vector<2x384xf32>
    %173 = arith.addf %171, %172 : vector<2x384xf32>
    %174 = vector.extract_strided_slice %169 {offsets = [0, 0], sizes = [2, 128], strides = [1, 1]} : vector<2x384xf32> to vector<2x128xf32>
    %175 = vector.extract_strided_slice %173 {offsets = [0, 0], sizes = [2, 128], strides = [1, 1]} : vector<2x384xf32> to vector<2x128xf32>
    %176 = arith.addf %174, %175 : vector<2x128xf32>
    %177 = arith.negf %176 : vector<2x128xf32>
    %178 = math.exp %177 : vector<2x128xf32>
    %cst_60 = arith.constant 1.000000e+00 : f32
    %179 = vector.broadcast %cst_60 : f32 to vector<2x128xf32>
    %180 = arith.addf %179, %178 : vector<2x128xf32>
    %181 = arith.divf %179, %180 : vector<2x128xf32>
    %182 = vector.extract_strided_slice %169 {offsets = [0, 128], sizes = [2, 128], strides = [1, 1]} : vector<2x384xf32> to vector<2x128xf32>
    %183 = vector.extract_strided_slice %173 {offsets = [0, 128], sizes = [2, 128], strides = [1, 1]} : vector<2x384xf32> to vector<2x128xf32>
    %184 = arith.addf %182, %183 : vector<2x128xf32>
    %185 = arith.negf %184 : vector<2x128xf32>
    %186 = math.exp %185 : vector<2x128xf32>
    %cst_61 = arith.constant 1.000000e+00 : f32
    %187 = vector.broadcast %cst_61 : f32 to vector<2x128xf32>
    %188 = arith.addf %187, %186 : vector<2x128xf32>
    %189 = arith.divf %187, %188 : vector<2x128xf32>
    %190 = vector.extract_strided_slice %169 {offsets = [0, 256], sizes = [2, 128], strides = [1, 1]} : vector<2x384xf32> to vector<2x128xf32>
    %191 = vector.extract_strided_slice %173 {offsets = [0, 256], sizes = [2, 128], strides = [1, 1]} : vector<2x384xf32> to vector<2x128xf32>
    %192 = arith.mulf %181, %191 : vector<2x128xf32>
    %193 = arith.addf %190, %192 : vector<2x128xf32>
    %194 = math.tanh %193 : vector<2x128xf32>
    %cst_62 = arith.constant 1.000000e+00 : f32
    %195 = vector.broadcast %cst_62 : f32 to vector<2x128xf32>
    %196 = arith.subf %195, %189 : vector<2x128xf32>
    %197 = arith.mulf %196, %194 : vector<2x128xf32>
    %198 = arith.mulf %189, %167 : vector<2x128xf32>
    %199 = arith.addf %197, %198 : vector<2x128xf32>
    %c10_63 = arith.constant 10 : index
    %c0_64 = arith.constant 0 : index
    %200 = vector.load %arg17[%c10_63, %c0_64] : memref<16x128xf32, #tpu.memory_space<vmem>>, vector<2x128xf32>
    tpu.vector_store %arg17[%c10_63, %c0_64], %199 {strides = array<i32>} : memref<16x128xf32, #tpu.memory_space<vmem>>, vector<2x128xf32>,
    %c12 = arith.constant 12 : index
    %c0_65 = arith.constant 0 : index
    %201 = vector.load %arg16[%c12, %c0_65] : memref<16x384xf32, #tpu.memory_space<vmem>>, vector<2x384xf32>
    %c0_66 = arith.constant 0 : index
    %c0_67 = arith.constant 0 : index
    %202 = vector.load %arg2[%c0_66, %c0_67] : memref<128x384xf32, #tpu.memory_space<vmem>>, vector<128x384xf32>
    %cst_68 = arith.constant dense<0.000000e+00> : vector<2x384xf32>
    %203 = tpu.matmul %199, %202, %cst_68 {dimension_numbers = #tpu.dot_dimension_numbers<[1], [0], [0], [1], [0, 0, 1, 1], [], []>} : vector<2x128xf32>, vector<128x384xf32>, vector<2x384xf32> -> vector<2x384xf32>
    %204 = vector.broadcast %7 : vector<1x384xf32> to vector<2x384xf32>
    %205 = arith.addf %203, %204 : vector<2x384xf32>
    %206 = vector.extract_strided_slice %201 {offsets = [0, 0], sizes = [2, 128], strides = [1, 1]} : vector<2x384xf32> to vector<2x128xf32>
    %207 = vector.extract_strided_slice %205 {offsets = [0, 0], sizes = [2, 128], strides = [1, 1]} : vector<2x384xf32> to vector<2x128xf32>
    %208 = arith.addf %206, %207 : vector<2x128xf32>
    %209 = arith.negf %208 : vector<2x128xf32>
    %210 = math.exp %209 : vector<2x128xf32>
    %cst_69 = arith.constant 1.000000e+00 : f32
    %211 = vector.broadcast %cst_69 : f32 to vector<2x128xf32>
    %212 = arith.addf %211, %210 : vector<2x128xf32>
    %213 = arith.divf %211, %212 : vector<2x128xf32>
    %214 = vector.extract_strided_slice %201 {offsets = [0, 128], sizes = [2, 128], strides = [1, 1]} : vector<2x384xf32> to vector<2x128xf32>
    %215 = vector.extract_strided_slice %205 {offsets = [0, 128], sizes = [2, 128], strides = [1, 1]} : vector<2x384xf32> to vector<2x128xf32>
    %216 = arith.addf %214, %215 : vector<2x128xf32>
    %217 = arith.negf %216 : vector<2x128xf32>
    %218 = math.exp %217 : vector<2x128xf32>
    %cst_70 = arith.constant 1.000000e+00 : f32
    %219 = vector.broadcast %cst_70 : f32 to vector<2x128xf32>
    %220 = arith.addf %219, %218 : vector<2x128xf32>
    %221 = arith.divf %219, %220 : vector<2x128xf32>
    %222 = vector.extract_strided_slice %201 {offsets = [0, 256], sizes = [2, 128], strides = [1, 1]} : vector<2x384xf32> to vector<2x128xf32>
    %223 = vector.extract_strided_slice %205 {offsets = [0, 256], sizes = [2, 128], strides = [1, 1]} : vector<2x384xf32> to vector<2x128xf32>
    %224 = arith.mulf %213, %223 : vector<2x128xf32>
    %225 = arith.addf %222, %224 : vector<2x128xf32>
    %226 = math.tanh %225 : vector<2x128xf32>
    %cst_71 = arith.constant 1.000000e+00 : f32
    %227 = vector.broadcast %cst_71 : f32 to vector<2x128xf32>
    %228 = arith.subf %227, %221 : vector<2x128xf32>
    %229 = arith.mulf %228, %226 : vector<2x128xf32>
    %230 = arith.mulf %221, %199 : vector<2x128xf32>
    %231 = arith.addf %229, %230 : vector<2x128xf32>
    %c12_72 = arith.constant 12 : index
    %c0_73 = arith.constant 0 : index
    %232 = vector.load %arg17[%c12_72, %c0_73] : memref<16x128xf32, #tpu.memory_space<vmem>>, vector<2x128xf32>
    tpu.vector_store %arg17[%c12_72, %c0_73], %231 {strides = array<i32>} : memref<16x128xf32, #tpu.memory_space<vmem>>, vector<2x128xf32>,
    %c14 = arith.constant 14 : index
    %c0_74 = arith.constant 0 : index
    %233 = vector.load %arg16[%c14, %c0_74] : memref<16x384xf32, #tpu.memory_space<vmem>>, vector<2x384xf32>
    %c0_75 = arith.constant 0 : index
    %c0_76 = arith.constant 0 : index
    %234 = vector.load %arg2[%c0_75, %c0_76] : memref<128x384xf32, #tpu.memory_space<vmem>>, vector<128x384xf32>
    %cst_77 = arith.constant dense<0.000000e+00> : vector<2x384xf32>
    %235 = tpu.matmul %231, %234, %cst_77 {dimension_numbers = #tpu.dot_dimension_numbers<[1], [0], [0], [1], [0, 0, 1, 1], [], []>} : vector<2x128xf32>, vector<128x384xf32>, vector<2x384xf32> -> vector<2x384xf32>
    %236 = vector.broadcast %7 : vector<1x384xf32> to vector<2x384xf32>
    %237 = arith.addf %235, %236 : vector<2x384xf32>
    %238 = vector.extract_strided_slice %233 {offsets = [0, 0], sizes = [2, 128], strides = [1, 1]} : vector<2x384xf32> to vector<2x128xf32>
    %239 = vector.extract_strided_slice %237 {offsets = [0, 0], sizes = [2, 128], strides = [1, 1]} : vector<2x384xf32> to vector<2x128xf32>
    %240 = arith.addf %238, %239 : vector<2x128xf32>
    %241 = arith.negf %240 : vector<2x128xf32>
    %242 = math.exp %241 : vector<2x128xf32>
    %cst_78 = arith.constant 1.000000e+00 : f32
    %243 = vector.broadcast %cst_78 : f32 to vector<2x128xf32>
    %244 = arith.addf %243, %242 : vector<2x128xf32>
    %245 = arith.divf %243, %244 : vector<2x128xf32>
    %246 = vector.extract_strided_slice %233 {offsets = [0, 128], sizes = [2, 128], strides = [1, 1]} : vector<2x384xf32> to vector<2x128xf32>
    %247 = vector.extract_strided_slice %237 {offsets = [0, 128], sizes = [2, 128], strides = [1, 1]} : vector<2x384xf32> to vector<2x128xf32>
    %248 = arith.addf %246, %247 : vector<2x128xf32>
    %249 = arith.negf %248 : vector<2x128xf32>
    %250 = math.exp %249 : vector<2x128xf32>
    %cst_79 = arith.constant 1.000000e+00 : f32
    %251 = vector.broadcast %cst_79 : f32 to vector<2x128xf32>
    %252 = arith.addf %251, %250 : vector<2x128xf32>
    %253 = arith.divf %251, %252 : vector<2x128xf32>
    %254 = vector.extract_strided_slice %233 {offsets = [0, 256], sizes = [2, 128], strides = [1, 1]} : vector<2x384xf32> to vector<2x128xf32>
    %255 = vector.extract_strided_slice %237 {offsets = [0, 256], sizes = [2, 128], strides = [1, 1]} : vector<2x384xf32> to vector<2x128xf32>
    %256 = arith.mulf %245, %255 : vector<2x128xf32>
    %257 = arith.addf %254, %256 : vector<2x128xf32>
    %258 = math.tanh %257 : vector<2x128xf32>
    %cst_80 = arith.constant 1.000000e+00 : f32
    %259 = vector.broadcast %cst_80 : f32 to vector<2x128xf32>
    %260 = arith.subf %259, %253 : vector<2x128xf32>
    %261 = arith.mulf %260, %258 : vector<2x128xf32>
    %262 = arith.mulf %253, %231 : vector<2x128xf32>
    %263 = arith.addf %261, %262 : vector<2x128xf32>
    %c14_81 = arith.constant 14 : index
    %c0_82 = arith.constant 0 : index
    %264 = vector.load %arg17[%c14_81, %c0_82] : memref<16x128xf32, #tpu.memory_space<vmem>>, vector<2x128xf32>
    tpu.vector_store %arg17[%c14_81, %c0_82], %263 {strides = array<i32>} : memref<16x128xf32, #tpu.memory_space<vmem>>, vector<2x128xf32>,
    %c0_83 = arith.constant 0 : index
    %c0_84 = arith.constant 0 : index
    %265 = vector.load %arg17[%c0_83, %c0_84] : memref<16x128xf32, #tpu.memory_space<vmem>>, vector<16x128xf32>
    %c0_85 = arith.constant 0 : index
    %c0_86 = arith.constant 0 : index
    %266 = vector.load %arg5[%c0_85, %c0_86] : memref<128x384xf32, #tpu.memory_space<vmem>>, vector<128x384xf32>
    %cst_87 = arith.constant dense<0.000000e+00> : vector<16x384xf32>
    %267 = tpu.matmul %265, %266, %cst_87 {dimension_numbers = #tpu.dot_dimension_numbers<[1], [0], [0], [1], [0, 0, 1, 1], [], []>} : vector<16x128xf32>, vector<128x384xf32>, vector<16x384xf32> -> vector<16x384xf32>
    %c0_88 = arith.constant 0 : index
    %c0_89 = arith.constant 0 : index
    %268 = vector.load %arg7[%c0_88, %c0_89] : memref<1x384xf32, #tpu.memory_space<vmem>>, vector<1x384xf32>
    %269 = vector.broadcast %268 : vector<1x384xf32> to vector<16x384xf32>
    %270 = arith.addf %267, %269 : vector<16x384xf32>
    %c0_90 = arith.constant 0 : index
    %c0_91 = arith.constant 0 : index
    %271 = vector.load %arg16[%c0_90, %c0_91] : memref<16x384xf32, #tpu.memory_space<vmem>>, vector<16x384xf32>
    tpu.vector_store %arg16[%c0_90, %c0_91], %270 {strides = array<i32>} : memref<16x384xf32, #tpu.memory_space<vmem>>, vector<16x384xf32>,
    %c0_92 = arith.constant 0 : index
    %c0_93 = arith.constant 0 : index
    %272 = vector.load %arg8[%c0_92, %c0_93] : memref<1x384xf32, #tpu.memory_space<vmem>>, vector<1x384xf32>
    %cst_94 = arith.constant 0.000000e+00 : f32
    %273 = vector.broadcast %cst_94 : f32 to vector<2x128xf32>
    %c0_95 = arith.constant 0 : index
    %c0_96 = arith.constant 0 : index
    %274 = vector.load %arg16[%c0_95, %c0_96] : memref<16x384xf32, #tpu.memory_space<vmem>>, vector<2x384xf32>
    %c0_97 = arith.constant 0 : index
    %c0_98 = arith.constant 0 : index
    %275 = vector.load %arg6[%c0_97, %c0_98] : memref<128x384xf32, #tpu.memory_space<vmem>>, vector<128x384xf32>
    %cst_99 = arith.constant dense<0.000000e+00> : vector<2x384xf32>
    %276 = tpu.matmul %273, %275, %cst_99 {dimension_numbers = #tpu.dot_dimension_numbers<[1], [0], [0], [1], [0, 0, 1, 1], [], []>} : vector<2x128xf32>, vector<128x384xf32>, vector<2x384xf32> -> vector<2x384xf32>
    %277 = vector.broadcast %272 : vector<1x384xf32> to vector<2x384xf32>
    %278 = arith.addf %276, %277 : vector<2x384xf32>
    %279 = vector.extract_strided_slice %274 {offsets = [0, 0], sizes = [2, 128], strides = [1, 1]} : vector<2x384xf32> to vector<2x128xf32>
    %280 = vector.extract_strided_slice %278 {offsets = [0, 0], sizes = [2, 128], strides = [1, 1]} : vector<2x384xf32> to vector<2x128xf32>
    %281 = arith.addf %279, %280 : vector<2x128xf32>
    %282 = arith.negf %281 : vector<2x128xf32>
    %283 = math.exp %282 : vector<2x128xf32>
    %cst_100 = arith.constant 1.000000e+00 : f32
    %284 = vector.broadcast %cst_100 : f32 to vector<2x128xf32>
    %285 = arith.addf %284, %283 : vector<2x128xf32>
    %286 = arith.divf %284, %285 : vector<2x128xf32>
    %287 = vector.extract_strided_slice %274 {offsets = [0, 128], sizes = [2, 128], strides = [1, 1]} : vector<2x384xf32> to vector<2x128xf32>
    %288 = vector.extract_strided_slice %278 {offsets = [0, 128], sizes = [2, 128], strides = [1, 1]} : vector<2x384xf32> to vector<2x128xf32>
    %289 = arith.addf %287, %288 : vector<2x128xf32>
    %290 = arith.negf %289 : vector<2x128xf32>
    %291 = math.exp %290 : vector<2x128xf32>
    %cst_101 = arith.constant 1.000000e+00 : f32
    %292 = vector.broadcast %cst_101 : f32 to vector<2x128xf32>
    %293 = arith.addf %292, %291 : vector<2x128xf32>
    %294 = arith.divf %292, %293 : vector<2x128xf32>
    %295 = vector.extract_strided_slice %274 {offsets = [0, 256], sizes = [2, 128], strides = [1, 1]} : vector<2x384xf32> to vector<2x128xf32>
    %296 = vector.extract_strided_slice %278 {offsets = [0, 256], sizes = [2, 128], strides = [1, 1]} : vector<2x384xf32> to vector<2x128xf32>
    %297 = arith.mulf %286, %296 : vector<2x128xf32>
    %298 = arith.addf %295, %297 : vector<2x128xf32>
    %299 = math.tanh %298 : vector<2x128xf32>
    %cst_102 = arith.constant 1.000000e+00 : f32
    %300 = vector.broadcast %cst_102 : f32 to vector<2x128xf32>
    %301 = arith.subf %300, %294 : vector<2x128xf32>
    %302 = arith.mulf %301, %299 : vector<2x128xf32>
    %303 = arith.mulf %294, %273 : vector<2x128xf32>
    %304 = arith.addf %302, %303 : vector<2x128xf32>
    %c0_103 = arith.constant 0 : index
    %c0_104 = arith.constant 0 : index
    %305 = vector.load %arg17[%c0_103, %c0_104] : memref<16x128xf32, #tpu.memory_space<vmem>>, vector<2x128xf32>
    tpu.vector_store %arg17[%c0_103, %c0_104], %304 {strides = array<i32>} : memref<16x128xf32, #tpu.memory_space<vmem>>, vector<2x128xf32>,
    %c2_105 = arith.constant 2 : index
    %c0_106 = arith.constant 0 : index
    %306 = vector.load %arg16[%c2_105, %c0_106] : memref<16x384xf32, #tpu.memory_space<vmem>>, vector<2x384xf32>
    %c0_107 = arith.constant 0 : index
    %c0_108 = arith.constant 0 : index
    %307 = vector.load %arg6[%c0_107, %c0_108] : memref<128x384xf32, #tpu.memory_space<vmem>>, vector<128x384xf32>
    %cst_109 = arith.constant dense<0.000000e+00> : vector<2x384xf32>
    %308 = tpu.matmul %304, %307, %cst_109 {dimension_numbers = #tpu.dot_dimension_numbers<[1], [0], [0], [1], [0, 0, 1, 1], [], []>} : vector<2x128xf32>, vector<128x384xf32>, vector<2x384xf32> -> vector<2x384xf32>
    %309 = vector.broadcast %272 : vector<1x384xf32> to vector<2x384xf32>
    %310 = arith.addf %308, %309 : vector<2x384xf32>
    %311 = vector.extract_strided_slice %306 {offsets = [0, 0], sizes = [2, 128], strides = [1, 1]} : vector<2x384xf32> to vector<2x128xf32>
    %312 = vector.extract_strided_slice %310 {offsets = [0, 0], sizes = [2, 128], strides = [1, 1]} : vector<2x384xf32> to vector<2x128xf32>
    %313 = arith.addf %311, %312 : vector<2x128xf32>
    %314 = arith.negf %313 : vector<2x128xf32>
    %315 = math.exp %314 : vector<2x128xf32>
    %cst_110 = arith.constant 1.000000e+00 : f32
    %316 = vector.broadcast %cst_110 : f32 to vector<2x128xf32>
    %317 = arith.addf %316, %315 : vector<2x128xf32>
    %318 = arith.divf %316, %317 : vector<2x128xf32>
    %319 = vector.extract_strided_slice %306 {offsets = [0, 128], sizes = [2, 128], strides = [1, 1]} : vector<2x384xf32> to vector<2x128xf32>
    %320 = vector.extract_strided_slice %310 {offsets = [0, 128], sizes = [2, 128], strides = [1, 1]} : vector<2x384xf32> to vector<2x128xf32>
    %321 = arith.addf %319, %320 : vector<2x128xf32>
    %322 = arith.negf %321 : vector<2x128xf32>
    %323 = math.exp %322 : vector<2x128xf32>
    %cst_111 = arith.constant 1.000000e+00 : f32
    %324 = vector.broadcast %cst_111 : f32 to vector<2x128xf32>
    %325 = arith.addf %324, %323 : vector<2x128xf32>
    %326 = arith.divf %324, %325 : vector<2x128xf32>
    %327 = vector.extract_strided_slice %306 {offsets = [0, 256], sizes = [2, 128], strides = [1, 1]} : vector<2x384xf32> to vector<2x128xf32>
    %328 = vector.extract_strided_slice %310 {offsets = [0, 256], sizes = [2, 128], strides = [1, 1]} : vector<2x384xf32> to vector<2x128xf32>
    %329 = arith.mulf %318, %328 : vector<2x128xf32>
    %330 = arith.addf %327, %329 : vector<2x128xf32>
    %331 = math.tanh %330 : vector<2x128xf32>
    %cst_112 = arith.constant 1.000000e+00 : f32
    %332 = vector.broadcast %cst_112 : f32 to vector<2x128xf32>
    %333 = arith.subf %332, %326 : vector<2x128xf32>
    %334 = arith.mulf %333, %331 : vector<2x128xf32>
    %335 = arith.mulf %326, %304 : vector<2x128xf32>
    %336 = arith.addf %334, %335 : vector<2x128xf32>
    %c2_113 = arith.constant 2 : index
    %c0_114 = arith.constant 0 : index
    %337 = vector.load %arg17[%c2_113, %c0_114] : memref<16x128xf32, #tpu.memory_space<vmem>>, vector<2x128xf32>
    tpu.vector_store %arg17[%c2_113, %c0_114], %336 {strides = array<i32>} : memref<16x128xf32, #tpu.memory_space<vmem>>, vector<2x128xf32>,
    %c4_115 = arith.constant 4 : index
    %c0_116 = arith.constant 0 : index
    %338 = vector.load %arg16[%c4_115, %c0_116] : memref<16x384xf32, #tpu.memory_space<vmem>>, vector<2x384xf32>
    %c0_117 = arith.constant 0 : index
    %c0_118 = arith.constant 0 : index
    %339 = vector.load %arg6[%c0_117, %c0_118] : memref<128x384xf32, #tpu.memory_space<vmem>>, vector<128x384xf32>
    %cst_119 = arith.constant dense<0.000000e+00> : vector<2x384xf32>
    %340 = tpu.matmul %336, %339, %cst_119 {dimension_numbers = #tpu.dot_dimension_numbers<[1], [0], [0], [1], [0, 0, 1, 1], [], []>} : vector<2x128xf32>, vector<128x384xf32>, vector<2x384xf32> -> vector<2x384xf32>
    %341 = vector.broadcast %272 : vector<1x384xf32> to vector<2x384xf32>
    %342 = arith.addf %340, %341 : vector<2x384xf32>
    %343 = vector.extract_strided_slice %338 {offsets = [0, 0], sizes = [2, 128], strides = [1, 1]} : vector<2x384xf32> to vector<2x128xf32>
    %344 = vector.extract_strided_slice %342 {offsets = [0, 0], sizes = [2, 128], strides = [1, 1]} : vector<2x384xf32> to vector<2x128xf32>
    %345 = arith.addf %343, %344 : vector<2x128xf32>
    %346 = arith.negf %345 : vector<2x128xf32>
    %347 = math.exp %346 : vector<2x128xf32>
    %cst_120 = arith.constant 1.000000e+00 : f32
    %348 = vector.broadcast %cst_120 : f32 to vector<2x128xf32>
    %349 = arith.addf %348, %347 : vector<2x128xf32>
    %350 = arith.divf %348, %349 : vector<2x128xf32>
    %351 = vector.extract_strided_slice %338 {offsets = [0, 128], sizes = [2, 128], strides = [1, 1]} : vector<2x384xf32> to vector<2x128xf32>
    %352 = vector.extract_strided_slice %342 {offsets = [0, 128], sizes = [2, 128], strides = [1, 1]} : vector<2x384xf32> to vector<2x128xf32>
    %353 = arith.addf %351, %352 : vector<2x128xf32>
    %354 = arith.negf %353 : vector<2x128xf32>
    %355 = math.exp %354 : vector<2x128xf32>
    %cst_121 = arith.constant 1.000000e+00 : f32
    %356 = vector.broadcast %cst_121 : f32 to vector<2x128xf32>
    %357 = arith.addf %356, %355 : vector<2x128xf32>
    %358 = arith.divf %356, %357 : vector<2x128xf32>
    %359 = vector.extract_strided_slice %338 {offsets = [0, 256], sizes = [2, 128], strides = [1, 1]} : vector<2x384xf32> to vector<2x128xf32>
    %360 = vector.extract_strided_slice %342 {offsets = [0, 256], sizes = [2, 128], strides = [1, 1]} : vector<2x384xf32> to vector<2x128xf32>
    %361 = arith.mulf %350, %360 : vector<2x128xf32>
    %362 = arith.addf %359, %361 : vector<2x128xf32>
    %363 = math.tanh %362 : vector<2x128xf32>
    %cst_122 = arith.constant 1.000000e+00 : f32
    %364 = vector.broadcast %cst_122 : f32 to vector<2x128xf32>
    %365 = arith.subf %364, %358 : vector<2x128xf32>
    %366 = arith.mulf %365, %363 : vector<2x128xf32>
    %367 = arith.mulf %358, %336 : vector<2x128xf32>
    %368 = arith.addf %366, %367 : vector<2x128xf32>
    %c4_123 = arith.constant 4 : index
    %c0_124 = arith.constant 0 : index
    %369 = vector.load %arg17[%c4_123, %c0_124] : memref<16x128xf32, #tpu.memory_space<vmem>>, vector<2x128xf32>
    tpu.vector_store %arg17[%c4_123, %c0_124], %368 {strides = array<i32>} : memref<16x128xf32, #tpu.memory_space<vmem>>, vector<2x128xf32>,
    %c6_125 = arith.constant 6 : index
    %c0_126 = arith.constant 0 : index
    %370 = vector.load %arg16[%c6_125, %c0_126] : memref<16x384xf32, #tpu.memory_space<vmem>>, vector<2x384xf32>
    %c0_127 = arith.constant 0 : index
    %c0_128 = arith.constant 0 : index
    %371 = vector.load %arg6[%c0_127, %c0_128] : memref<128x384xf32, #tpu.memory_space<vmem>>, vector<128x384xf32>
    %cst_129 = arith.constant dense<0.000000e+00> : vector<2x384xf32>
    %372 = tpu.matmul %368, %371, %cst_129 {dimension_numbers = #tpu.dot_dimension_numbers<[1], [0], [0], [1], [0, 0, 1, 1], [], []>} : vector<2x128xf32>, vector<128x384xf32>, vector<2x384xf32> -> vector<2x384xf32>
    %373 = vector.broadcast %272 : vector<1x384xf32> to vector<2x384xf32>
    %374 = arith.addf %372, %373 : vector<2x384xf32>
    %375 = vector.extract_strided_slice %370 {offsets = [0, 0], sizes = [2, 128], strides = [1, 1]} : vector<2x384xf32> to vector<2x128xf32>
    %376 = vector.extract_strided_slice %374 {offsets = [0, 0], sizes = [2, 128], strides = [1, 1]} : vector<2x384xf32> to vector<2x128xf32>
    %377 = arith.addf %375, %376 : vector<2x128xf32>
    %378 = arith.negf %377 : vector<2x128xf32>
    %379 = math.exp %378 : vector<2x128xf32>
    %cst_130 = arith.constant 1.000000e+00 : f32
    %380 = vector.broadcast %cst_130 : f32 to vector<2x128xf32>
    %381 = arith.addf %380, %379 : vector<2x128xf32>
    %382 = arith.divf %380, %381 : vector<2x128xf32>
    %383 = vector.extract_strided_slice %370 {offsets = [0, 128], sizes = [2, 128], strides = [1, 1]} : vector<2x384xf32> to vector<2x128xf32>
    %384 = vector.extract_strided_slice %374 {offsets = [0, 128], sizes = [2, 128], strides = [1, 1]} : vector<2x384xf32> to vector<2x128xf32>
    %385 = arith.addf %383, %384 : vector<2x128xf32>
    %386 = arith.negf %385 : vector<2x128xf32>
    %387 = math.exp %386 : vector<2x128xf32>
    %cst_131 = arith.constant 1.000000e+00 : f32
    %388 = vector.broadcast %cst_131 : f32 to vector<2x128xf32>
    %389 = arith.addf %388, %387 : vector<2x128xf32>
    %390 = arith.divf %388, %389 : vector<2x128xf32>
    %391 = vector.extract_strided_slice %370 {offsets = [0, 256], sizes = [2, 128], strides = [1, 1]} : vector<2x384xf32> to vector<2x128xf32>
    %392 = vector.extract_strided_slice %374 {offsets = [0, 256], sizes = [2, 128], strides = [1, 1]} : vector<2x384xf32> to vector<2x128xf32>
    %393 = arith.mulf %382, %392 : vector<2x128xf32>
    %394 = arith.addf %391, %393 : vector<2x128xf32>
    %395 = math.tanh %394 : vector<2x128xf32>
    %cst_132 = arith.constant 1.000000e+00 : f32
    %396 = vector.broadcast %cst_132 : f32 to vector<2x128xf32>
    %397 = arith.subf %396, %390 : vector<2x128xf32>
    %398 = arith.mulf %397, %395 : vector<2x128xf32>
    %399 = arith.mulf %390, %368 : vector<2x128xf32>
    %400 = arith.addf %398, %399 : vector<2x128xf32>
    %c6_133 = arith.constant 6 : index
    %c0_134 = arith.constant 0 : index
    %401 = vector.load %arg17[%c6_133, %c0_134] : memref<16x128xf32, #tpu.memory_space<vmem>>, vector<2x128xf32>
    tpu.vector_store %arg17[%c6_133, %c0_134], %400 {strides = array<i32>} : memref<16x128xf32, #tpu.memory_space<vmem>>, vector<2x128xf32>,
    %c8_135 = arith.constant 8 : index
    %c0_136 = arith.constant 0 : index
    %402 = vector.load %arg16[%c8_135, %c0_136] : memref<16x384xf32, #tpu.memory_space<vmem>>, vector<2x384xf32>
    %c0_137 = arith.constant 0 : index
    %c0_138 = arith.constant 0 : index
    %403 = vector.load %arg6[%c0_137, %c0_138] : memref<128x384xf32, #tpu.memory_space<vmem>>, vector<128x384xf32>
    %cst_139 = arith.constant dense<0.000000e+00> : vector<2x384xf32>
    %404 = tpu.matmul %400, %403, %cst_139 {dimension_numbers = #tpu.dot_dimension_numbers<[1], [0], [0], [1], [0, 0, 1, 1], [], []>} : vector<2x128xf32>, vector<128x384xf32>, vector<2x384xf32> -> vector<2x384xf32>
    %405 = vector.broadcast %272 : vector<1x384xf32> to vector<2x384xf32>
    %406 = arith.addf %404, %405 : vector<2x384xf32>
    %407 = vector.extract_strided_slice %402 {offsets = [0, 0], sizes = [2, 128], strides = [1, 1]} : vector<2x384xf32> to vector<2x128xf32>
    %408 = vector.extract_strided_slice %406 {offsets = [0, 0], sizes = [2, 128], strides = [1, 1]} : vector<2x384xf32> to vector<2x128xf32>
    %409 = arith.addf %407, %408 : vector<2x128xf32>
    %410 = arith.negf %409 : vector<2x128xf32>
    %411 = math.exp %410 : vector<2x128xf32>
    %cst_140 = arith.constant 1.000000e+00 : f32
    %412 = vector.broadcast %cst_140 : f32 to vector<2x128xf32>
    %413 = arith.addf %412, %411 : vector<2x128xf32>
    %414 = arith.divf %412, %413 : vector<2x128xf32>
    %415 = vector.extract_strided_slice %402 {offsets = [0, 128], sizes = [2, 128], strides = [1, 1]} : vector<2x384xf32> to vector<2x128xf32>
    %416 = vector.extract_strided_slice %406 {offsets = [0, 128], sizes = [2, 128], strides = [1, 1]} : vector<2x384xf32> to vector<2x128xf32>
    %417 = arith.addf %415, %416 : vector<2x128xf32>
    %418 = arith.negf %417 : vector<2x128xf32>
    %419 = math.exp %418 : vector<2x128xf32>
    %cst_141 = arith.constant 1.000000e+00 : f32
    %420 = vector.broadcast %cst_141 : f32 to vector<2x128xf32>
    %421 = arith.addf %420, %419 : vector<2x128xf32>
    %422 = arith.divf %420, %421 : vector<2x128xf32>
    %423 = vector.extract_strided_slice %402 {offsets = [0, 256], sizes = [2, 128], strides = [1, 1]} : vector<2x384xf32> to vector<2x128xf32>
    %424 = vector.extract_strided_slice %406 {offsets = [0, 256], sizes = [2, 128], strides = [1, 1]} : vector<2x384xf32> to vector<2x128xf32>
    %425 = arith.mulf %414, %424 : vector<2x128xf32>
    %426 = arith.addf %423, %425 : vector<2x128xf32>
    %427 = math.tanh %426 : vector<2x128xf32>
    %cst_142 = arith.constant 1.000000e+00 : f32
    %428 = vector.broadcast %cst_142 : f32 to vector<2x128xf32>
    %429 = arith.subf %428, %422 : vector<2x128xf32>
    %430 = arith.mulf %429, %427 : vector<2x128xf32>
    %431 = arith.mulf %422, %400 : vector<2x128xf32>
    %432 = arith.addf %430, %431 : vector<2x128xf32>
    %c8_143 = arith.constant 8 : index
    %c0_144 = arith.constant 0 : index
    %433 = vector.load %arg17[%c8_143, %c0_144] : memref<16x128xf32, #tpu.memory_space<vmem>>, vector<2x128xf32>
    tpu.vector_store %arg17[%c8_143, %c0_144], %432 {strides = array<i32>} : memref<16x128xf32, #tpu.memory_space<vmem>>, vector<2x128xf32>,
    %c10_145 = arith.constant 10 : index
    %c0_146 = arith.constant 0 : index
    %434 = vector.load %arg16[%c10_145, %c0_146] : memref<16x384xf32, #tpu.memory_space<vmem>>, vector<2x384xf32>
    %c0_147 = arith.constant 0 : index
    %c0_148 = arith.constant 0 : index
    %435 = vector.load %arg6[%c0_147, %c0_148] : memref<128x384xf32, #tpu.memory_space<vmem>>, vector<128x384xf32>
    %cst_149 = arith.constant dense<0.000000e+00> : vector<2x384xf32>
    %436 = tpu.matmul %432, %435, %cst_149 {dimension_numbers = #tpu.dot_dimension_numbers<[1], [0], [0], [1], [0, 0, 1, 1], [], []>} : vector<2x128xf32>, vector<128x384xf32>, vector<2x384xf32> -> vector<2x384xf32>
    %437 = vector.broadcast %272 : vector<1x384xf32> to vector<2x384xf32>
    %438 = arith.addf %436, %437 : vector<2x384xf32>
    %439 = vector.extract_strided_slice %434 {offsets = [0, 0], sizes = [2, 128], strides = [1, 1]} : vector<2x384xf32> to vector<2x128xf32>
    %440 = vector.extract_strided_slice %438 {offsets = [0, 0], sizes = [2, 128], strides = [1, 1]} : vector<2x384xf32> to vector<2x128xf32>
    %441 = arith.addf %439, %440 : vector<2x128xf32>
    %442 = arith.negf %441 : vector<2x128xf32>
    %443 = math.exp %442 : vector<2x128xf32>
    %cst_150 = arith.constant 1.000000e+00 : f32
    %444 = vector.broadcast %cst_150 : f32 to vector<2x128xf32>
    %445 = arith.addf %444, %443 : vector<2x128xf32>
    %446 = arith.divf %444, %445 : vector<2x128xf32>
    %447 = vector.extract_strided_slice %434 {offsets = [0, 128], sizes = [2, 128], strides = [1, 1]} : vector<2x384xf32> to vector<2x128xf32>
    %448 = vector.extract_strided_slice %438 {offsets = [0, 128], sizes = [2, 128], strides = [1, 1]} : vector<2x384xf32> to vector<2x128xf32>
    %449 = arith.addf %447, %448 : vector<2x128xf32>
    %450 = arith.negf %449 : vector<2x128xf32>
    %451 = math.exp %450 : vector<2x128xf32>
    %cst_151 = arith.constant 1.000000e+00 : f32
    %452 = vector.broadcast %cst_151 : f32 to vector<2x128xf32>
    %453 = arith.addf %452, %451 : vector<2x128xf32>
    %454 = arith.divf %452, %453 : vector<2x128xf32>
    %455 = vector.extract_strided_slice %434 {offsets = [0, 256], sizes = [2, 128], strides = [1, 1]} : vector<2x384xf32> to vector<2x128xf32>
    %456 = vector.extract_strided_slice %438 {offsets = [0, 256], sizes = [2, 128], strides = [1, 1]} : vector<2x384xf32> to vector<2x128xf32>
    %457 = arith.mulf %446, %456 : vector<2x128xf32>
    %458 = arith.addf %455, %457 : vector<2x128xf32>
    %459 = math.tanh %458 : vector<2x128xf32>
    %cst_152 = arith.constant 1.000000e+00 : f32
    %460 = vector.broadcast %cst_152 : f32 to vector<2x128xf32>
    %461 = arith.subf %460, %454 : vector<2x128xf32>
    %462 = arith.mulf %461, %459 : vector<2x128xf32>
    %463 = arith.mulf %454, %432 : vector<2x128xf32>
    %464 = arith.addf %462, %463 : vector<2x128xf32>
    %c10_153 = arith.constant 10 : index
    %c0_154 = arith.constant 0 : index
    %465 = vector.load %arg17[%c10_153, %c0_154] : memref<16x128xf32, #tpu.memory_space<vmem>>, vector<2x128xf32>
    tpu.vector_store %arg17[%c10_153, %c0_154], %464 {strides = array<i32>} : memref<16x128xf32, #tpu.memory_space<vmem>>, vector<2x128xf32>,
    %c12_155 = arith.constant 12 : index
    %c0_156 = arith.constant 0 : index
    %466 = vector.load %arg16[%c12_155, %c0_156] : memref<16x384xf32, #tpu.memory_space<vmem>>, vector<2x384xf32>
    %c0_157 = arith.constant 0 : index
    %c0_158 = arith.constant 0 : index
    %467 = vector.load %arg6[%c0_157, %c0_158] : memref<128x384xf32, #tpu.memory_space<vmem>>, vector<128x384xf32>
    %cst_159 = arith.constant dense<0.000000e+00> : vector<2x384xf32>
    %468 = tpu.matmul %464, %467, %cst_159 {dimension_numbers = #tpu.dot_dimension_numbers<[1], [0], [0], [1], [0, 0, 1, 1], [], []>} : vector<2x128xf32>, vector<128x384xf32>, vector<2x384xf32> -> vector<2x384xf32>
    %469 = vector.broadcast %272 : vector<1x384xf32> to vector<2x384xf32>
    %470 = arith.addf %468, %469 : vector<2x384xf32>
    %471 = vector.extract_strided_slice %466 {offsets = [0, 0], sizes = [2, 128], strides = [1, 1]} : vector<2x384xf32> to vector<2x128xf32>
    %472 = vector.extract_strided_slice %470 {offsets = [0, 0], sizes = [2, 128], strides = [1, 1]} : vector<2x384xf32> to vector<2x128xf32>
    %473 = arith.addf %471, %472 : vector<2x128xf32>
    %474 = arith.negf %473 : vector<2x128xf32>
    %475 = math.exp %474 : vector<2x128xf32>
    %cst_160 = arith.constant 1.000000e+00 : f32
    %476 = vector.broadcast %cst_160 : f32 to vector<2x128xf32>
    %477 = arith.addf %476, %475 : vector<2x128xf32>
    %478 = arith.divf %476, %477 : vector<2x128xf32>
    %479 = vector.extract_strided_slice %466 {offsets = [0, 128], sizes = [2, 128], strides = [1, 1]} : vector<2x384xf32> to vector<2x128xf32>
    %480 = vector.extract_strided_slice %470 {offsets = [0, 128], sizes = [2, 128], strides = [1, 1]} : vector<2x384xf32> to vector<2x128xf32>
    %481 = arith.addf %479, %480 : vector<2x128xf32>
    %482 = arith.negf %481 : vector<2x128xf32>
    %483 = math.exp %482 : vector<2x128xf32>
    %cst_161 = arith.constant 1.000000e+00 : f32
    %484 = vector.broadcast %cst_161 : f32 to vector<2x128xf32>
    %485 = arith.addf %484, %483 : vector<2x128xf32>
    %486 = arith.divf %484, %485 : vector<2x128xf32>
    %487 = vector.extract_strided_slice %466 {offsets = [0, 256], sizes = [2, 128], strides = [1, 1]} : vector<2x384xf32> to vector<2x128xf32>
    %488 = vector.extract_strided_slice %470 {offsets = [0, 256], sizes = [2, 128], strides = [1, 1]} : vector<2x384xf32> to vector<2x128xf32>
    %489 = arith.mulf %478, %488 : vector<2x128xf32>
    %490 = arith.addf %487, %489 : vector<2x128xf32>
    %491 = math.tanh %490 : vector<2x128xf32>
    %cst_162 = arith.constant 1.000000e+00 : f32
    %492 = vector.broadcast %cst_162 : f32 to vector<2x128xf32>
    %493 = arith.subf %492, %486 : vector<2x128xf32>
    %494 = arith.mulf %493, %491 : vector<2x128xf32>
    %495 = arith.mulf %486, %464 : vector<2x128xf32>
    %496 = arith.addf %494, %495 : vector<2x128xf32>
    %c12_163 = arith.constant 12 : index
    %c0_164 = arith.constant 0 : index
    %497 = vector.load %arg17[%c12_163, %c0_164] : memref<16x128xf32, #tpu.memory_space<vmem>>, vector<2x128xf32>
    tpu.vector_store %arg17[%c12_163, %c0_164], %496 {strides = array<i32>} : memref<16x128xf32, #tpu.memory_space<vmem>>, vector<2x128xf32>,
    %c14_165 = arith.constant 14 : index
    %c0_166 = arith.constant 0 : index
    %498 = vector.load %arg16[%c14_165, %c0_166] : memref<16x384xf32, #tpu.memory_space<vmem>>, vector<2x384xf32>
    %c0_167 = arith.constant 0 : index
    %c0_168 = arith.constant 0 : index
    %499 = vector.load %arg6[%c0_167, %c0_168] : memref<128x384xf32, #tpu.memory_space<vmem>>, vector<128x384xf32>
    %cst_169 = arith.constant dense<0.000000e+00> : vector<2x384xf32>
    %500 = tpu.matmul %496, %499, %cst_169 {dimension_numbers = #tpu.dot_dimension_numbers<[1], [0], [0], [1], [0, 0, 1, 1], [], []>} : vector<2x128xf32>, vector<128x384xf32>, vector<2x384xf32> -> vector<2x384xf32>
    %501 = vector.broadcast %272 : vector<1x384xf32> to vector<2x384xf32>
    %502 = arith.addf %500, %501 : vector<2x384xf32>
    %503 = vector.extract_strided_slice %498 {offsets = [0, 0], sizes = [2, 128], strides = [1, 1]} : vector<2x384xf32> to vector<2x128xf32>
    %504 = vector.extract_strided_slice %502 {offsets = [0, 0], sizes = [2, 128], strides = [1, 1]} : vector<2x384xf32> to vector<2x128xf32>
    %505 = arith.addf %503, %504 : vector<2x128xf32>
    %506 = arith.negf %505 : vector<2x128xf32>
    %507 = math.exp %506 : vector<2x128xf32>
    %cst_170 = arith.constant 1.000000e+00 : f32
    %508 = vector.broadcast %cst_170 : f32 to vector<2x128xf32>
    %509 = arith.addf %508, %507 : vector<2x128xf32>
    %510 = arith.divf %508, %509 : vector<2x128xf32>
    %511 = vector.extract_strided_slice %498 {offsets = [0, 128], sizes = [2, 128], strides = [1, 1]} : vector<2x384xf32> to vector<2x128xf32>
    %512 = vector.extract_strided_slice %502 {offsets = [0, 128], sizes = [2, 128], strides = [1, 1]} : vector<2x384xf32> to vector<2x128xf32>
    %513 = arith.addf %511, %512 : vector<2x128xf32>
    %514 = arith.negf %513 : vector<2x128xf32>
    %515 = math.exp %514 : vector<2x128xf32>
    %cst_171 = arith.constant 1.000000e+00 : f32
    %516 = vector.broadcast %cst_171 : f32 to vector<2x128xf32>
    %517 = arith.addf %516, %515 : vector<2x128xf32>
    %518 = arith.divf %516, %517 : vector<2x128xf32>
    %519 = vector.extract_strided_slice %498 {offsets = [0, 256], sizes = [2, 128], strides = [1, 1]} : vector<2x384xf32> to vector<2x128xf32>
    %520 = vector.extract_strided_slice %502 {offsets = [0, 256], sizes = [2, 128], strides = [1, 1]} : vector<2x384xf32> to vector<2x128xf32>
    %521 = arith.mulf %510, %520 : vector<2x128xf32>
    %522 = arith.addf %519, %521 : vector<2x128xf32>
    %523 = math.tanh %522 : vector<2x128xf32>
    %cst_172 = arith.constant 1.000000e+00 : f32
    %524 = vector.broadcast %cst_172 : f32 to vector<2x128xf32>
    %525 = arith.subf %524, %518 : vector<2x128xf32>
    %526 = arith.mulf %525, %523 : vector<2x128xf32>
    %527 = arith.mulf %518, %496 : vector<2x128xf32>
    %528 = arith.addf %526, %527 : vector<2x128xf32>
    %c14_173 = arith.constant 14 : index
    %c0_174 = arith.constant 0 : index
    %529 = vector.load %arg17[%c14_173, %c0_174] : memref<16x128xf32, #tpu.memory_space<vmem>>, vector<2x128xf32>
    tpu.vector_store %arg17[%c14_173, %c0_174], %528 {strides = array<i32>} : memref<16x128xf32, #tpu.memory_space<vmem>>, vector<2x128xf32>,
    %c0_175 = arith.constant 0 : index
    %c0_176 = arith.constant 0 : index
    %530 = vector.load %arg17[%c0_175, %c0_176] : memref<16x128xf32, #tpu.memory_space<vmem>>, vector<16x128xf32>
    %c0_177 = arith.constant 0 : index
    %c0_178 = arith.constant 0 : index
    %531 = vector.load %arg9[%c0_177, %c0_178] : memref<128x384xf32, #tpu.memory_space<vmem>>, vector<128x384xf32>
    %cst_179 = arith.constant dense<0.000000e+00> : vector<16x384xf32>
    %532 = tpu.matmul %530, %531, %cst_179 {dimension_numbers = #tpu.dot_dimension_numbers<[1], [0], [0], [1], [0, 0, 1, 1], [], []>} : vector<16x128xf32>, vector<128x384xf32>, vector<16x384xf32> -> vector<16x384xf32>
    %c0_180 = arith.constant 0 : index
    %c0_181 = arith.constant 0 : index
    %533 = vector.load %arg11[%c0_180, %c0_181] : memref<1x384xf32, #tpu.memory_space<vmem>>, vector<1x384xf32>
    %534 = vector.broadcast %533 : vector<1x384xf32> to vector<16x384xf32>
    %535 = arith.addf %532, %534 : vector<16x384xf32>
    %c0_182 = arith.constant 0 : index
    %c0_183 = arith.constant 0 : index
    %536 = vector.load %arg16[%c0_182, %c0_183] : memref<16x384xf32, #tpu.memory_space<vmem>>, vector<16x384xf32>
    tpu.vector_store %arg16[%c0_182, %c0_183], %535 {strides = array<i32>} : memref<16x384xf32, #tpu.memory_space<vmem>>, vector<16x384xf32>,
    %c0_184 = arith.constant 0 : index
    %c0_185 = arith.constant 0 : index
    %537 = vector.load %arg12[%c0_184, %c0_185] : memref<1x384xf32, #tpu.memory_space<vmem>>, vector<1x384xf32>
    %cst_186 = arith.constant 0.000000e+00 : f32
    %538 = vector.broadcast %cst_186 : f32 to vector<2x128xf32>
    %c0_187 = arith.constant 0 : index
    %c0_188 = arith.constant 0 : index
    %539 = vector.load %arg16[%c0_187, %c0_188] : memref<16x384xf32, #tpu.memory_space<vmem>>, vector<2x384xf32>
    %c0_189 = arith.constant 0 : index
    %c0_190 = arith.constant 0 : index
    %540 = vector.load %arg10[%c0_189, %c0_190] : memref<128x384xf32, #tpu.memory_space<vmem>>, vector<128x384xf32>
    %cst_191 = arith.constant dense<0.000000e+00> : vector<2x384xf32>
    %541 = tpu.matmul %538, %540, %cst_191 {dimension_numbers = #tpu.dot_dimension_numbers<[1], [0], [0], [1], [0, 0, 1, 1], [], []>} : vector<2x128xf32>, vector<128x384xf32>, vector<2x384xf32> -> vector<2x384xf32>
    %542 = vector.broadcast %537 : vector<1x384xf32> to vector<2x384xf32>
    %543 = arith.addf %541, %542 : vector<2x384xf32>
    %544 = vector.extract_strided_slice %539 {offsets = [0, 0], sizes = [2, 128], strides = [1, 1]} : vector<2x384xf32> to vector<2x128xf32>
    %545 = vector.extract_strided_slice %543 {offsets = [0, 0], sizes = [2, 128], strides = [1, 1]} : vector<2x384xf32> to vector<2x128xf32>
    %546 = arith.addf %544, %545 : vector<2x128xf32>
    %547 = arith.negf %546 : vector<2x128xf32>
    %548 = math.exp %547 : vector<2x128xf32>
    %cst_192 = arith.constant 1.000000e+00 : f32
    %549 = vector.broadcast %cst_192 : f32 to vector<2x128xf32>
    %550 = arith.addf %549, %548 : vector<2x128xf32>
    %551 = arith.divf %549, %550 : vector<2x128xf32>
    %552 = vector.extract_strided_slice %539 {offsets = [0, 128], sizes = [2, 128], strides = [1, 1]} : vector<2x384xf32> to vector<2x128xf32>
    %553 = vector.extract_strided_slice %543 {offsets = [0, 128], sizes = [2, 128], strides = [1, 1]} : vector<2x384xf32> to vector<2x128xf32>
    %554 = arith.addf %552, %553 : vector<2x128xf32>
    %555 = arith.negf %554 : vector<2x128xf32>
    %556 = math.exp %555 : vector<2x128xf32>
    %cst_193 = arith.constant 1.000000e+00 : f32
    %557 = vector.broadcast %cst_193 : f32 to vector<2x128xf32>
    %558 = arith.addf %557, %556 : vector<2x128xf32>
    %559 = arith.divf %557, %558 : vector<2x128xf32>
    %560 = vector.extract_strided_slice %539 {offsets = [0, 256], sizes = [2, 128], strides = [1, 1]} : vector<2x384xf32> to vector<2x128xf32>
    %561 = vector.extract_strided_slice %543 {offsets = [0, 256], sizes = [2, 128], strides = [1, 1]} : vector<2x384xf32> to vector<2x128xf32>
    %562 = arith.mulf %551, %561 : vector<2x128xf32>
    %563 = arith.addf %560, %562 : vector<2x128xf32>
    %564 = math.tanh %563 : vector<2x128xf32>
    %cst_194 = arith.constant 1.000000e+00 : f32
    %565 = vector.broadcast %cst_194 : f32 to vector<2x128xf32>
    %566 = arith.subf %565, %559 : vector<2x128xf32>
    %567 = arith.mulf %566, %564 : vector<2x128xf32>
    %568 = arith.mulf %559, %538 : vector<2x128xf32>
    %569 = arith.addf %567, %568 : vector<2x128xf32>
    %c2_195 = arith.constant 2 : index
    %c0_196 = arith.constant 0 : index
    %570 = vector.load %arg16[%c2_195, %c0_196] : memref<16x384xf32, #tpu.memory_space<vmem>>, vector<2x384xf32>
    %c0_197 = arith.constant 0 : index
    %c0_198 = arith.constant 0 : index
    %571 = vector.load %arg10[%c0_197, %c0_198] : memref<128x384xf32, #tpu.memory_space<vmem>>, vector<128x384xf32>
    %cst_199 = arith.constant dense<0.000000e+00> : vector<2x384xf32>
    %572 = tpu.matmul %569, %571, %cst_199 {dimension_numbers = #tpu.dot_dimension_numbers<[1], [0], [0], [1], [0, 0, 1, 1], [], []>} : vector<2x128xf32>, vector<128x384xf32>, vector<2x384xf32> -> vector<2x384xf32>
    %573 = vector.broadcast %537 : vector<1x384xf32> to vector<2x384xf32>
    %574 = arith.addf %572, %573 : vector<2x384xf32>
    %575 = vector.extract_strided_slice %570 {offsets = [0, 0], sizes = [2, 128], strides = [1, 1]} : vector<2x384xf32> to vector<2x128xf32>
    %576 = vector.extract_strided_slice %574 {offsets = [0, 0], sizes = [2, 128], strides = [1, 1]} : vector<2x384xf32> to vector<2x128xf32>
    %577 = arith.addf %575, %576 : vector<2x128xf32>
    %578 = arith.negf %577 : vector<2x128xf32>
    %579 = math.exp %578 : vector<2x128xf32>
    %cst_200 = arith.constant 1.000000e+00 : f32
    %580 = vector.broadcast %cst_200 : f32 to vector<2x128xf32>
    %581 = arith.addf %580, %579 : vector<2x128xf32>
    %582 = arith.divf %580, %581 : vector<2x128xf32>
    %583 = vector.extract_strided_slice %570 {offsets = [0, 128], sizes = [2, 128], strides = [1, 1]} : vector<2x384xf32> to vector<2x128xf32>
    %584 = vector.extract_strided_slice %574 {offsets = [0, 128], sizes = [2, 128], strides = [1, 1]} : vector<2x384xf32> to vector<2x128xf32>
    %585 = arith.addf %583, %584 : vector<2x128xf32>
    %586 = arith.negf %585 : vector<2x128xf32>
    %587 = math.exp %586 : vector<2x128xf32>
    %cst_201 = arith.constant 1.000000e+00 : f32
    %588 = vector.broadcast %cst_201 : f32 to vector<2x128xf32>
    %589 = arith.addf %588, %587 : vector<2x128xf32>
    %590 = arith.divf %588, %589 : vector<2x128xf32>
    %591 = vector.extract_strided_slice %570 {offsets = [0, 256], sizes = [2, 128], strides = [1, 1]} : vector<2x384xf32> to vector<2x128xf32>
    %592 = vector.extract_strided_slice %574 {offsets = [0, 256], sizes = [2, 128], strides = [1, 1]} : vector<2x384xf32> to vector<2x128xf32>
    %593 = arith.mulf %582, %592 : vector<2x128xf32>
    %594 = arith.addf %591, %593 : vector<2x128xf32>
    %595 = math.tanh %594 : vector<2x128xf32>
    %cst_202 = arith.constant 1.000000e+00 : f32
    %596 = vector.broadcast %cst_202 : f32 to vector<2x128xf32>
    %597 = arith.subf %596, %590 : vector<2x128xf32>
    %598 = arith.mulf %597, %595 : vector<2x128xf32>
    %599 = arith.mulf %590, %569 : vector<2x128xf32>
    %600 = arith.addf %598, %599 : vector<2x128xf32>
    %c4_203 = arith.constant 4 : index
    %c0_204 = arith.constant 0 : index
    %601 = vector.load %arg16[%c4_203, %c0_204] : memref<16x384xf32, #tpu.memory_space<vmem>>, vector<2x384xf32>
    %c0_205 = arith.constant 0 : index
    %c0_206 = arith.constant 0 : index
    %602 = vector.load %arg10[%c0_205, %c0_206] : memref<128x384xf32, #tpu.memory_space<vmem>>, vector<128x384xf32>
    %cst_207 = arith.constant dense<0.000000e+00> : vector<2x384xf32>
    %603 = tpu.matmul %600, %602, %cst_207 {dimension_numbers = #tpu.dot_dimension_numbers<[1], [0], [0], [1], [0, 0, 1, 1], [], []>} : vector<2x128xf32>, vector<128x384xf32>, vector<2x384xf32> -> vector<2x384xf32>
    %604 = vector.broadcast %537 : vector<1x384xf32> to vector<2x384xf32>
    %605 = arith.addf %603, %604 : vector<2x384xf32>
    %606 = vector.extract_strided_slice %601 {offsets = [0, 0], sizes = [2, 128], strides = [1, 1]} : vector<2x384xf32> to vector<2x128xf32>
    %607 = vector.extract_strided_slice %605 {offsets = [0, 0], sizes = [2, 128], strides = [1, 1]} : vector<2x384xf32> to vector<2x128xf32>
    %608 = arith.addf %606, %607 : vector<2x128xf32>
    %609 = arith.negf %608 : vector<2x128xf32>
    %610 = math.exp %609 : vector<2x128xf32>
    %cst_208 = arith.constant 1.000000e+00 : f32
    %611 = vector.broadcast %cst_208 : f32 to vector<2x128xf32>
    %612 = arith.addf %611, %610 : vector<2x128xf32>
    %613 = arith.divf %611, %612 : vector<2x128xf32>
    %614 = vector.extract_strided_slice %601 {offsets = [0, 128], sizes = [2, 128], strides = [1, 1]} : vector<2x384xf32> to vector<2x128xf32>
    %615 = vector.extract_strided_slice %605 {offsets = [0, 128], sizes = [2, 128], strides = [1, 1]} : vector<2x384xf32> to vector<2x128xf32>
    %616 = arith.addf %614, %615 : vector<2x128xf32>
    %617 = arith.negf %616 : vector<2x128xf32>
    %618 = math.exp %617 : vector<2x128xf32>
    %cst_209 = arith.constant 1.000000e+00 : f32
    %619 = vector.broadcast %cst_209 : f32 to vector<2x128xf32>
    %620 = arith.addf %619, %618 : vector<2x128xf32>
    %621 = arith.divf %619, %620 : vector<2x128xf32>
    %622 = vector.extract_strided_slice %601 {offsets = [0, 256], sizes = [2, 128], strides = [1, 1]} : vector<2x384xf32> to vector<2x128xf32>
    %623 = vector.extract_strided_slice %605 {offsets = [0, 256], sizes = [2, 128], strides = [1, 1]} : vector<2x384xf32> to vector<2x128xf32>
    %624 = arith.mulf %613, %623 : vector<2x128xf32>
    %625 = arith.addf %622, %624 : vector<2x128xf32>
    %626 = math.tanh %625 : vector<2x128xf32>
    %cst_210 = arith.constant 1.000000e+00 : f32
    %627 = vector.broadcast %cst_210 : f32 to vector<2x128xf32>
    %628 = arith.subf %627, %621 : vector<2x128xf32>
    %629 = arith.mulf %628, %626 : vector<2x128xf32>
    %630 = arith.mulf %621, %600 : vector<2x128xf32>
    %631 = arith.addf %629, %630 : vector<2x128xf32>
    %c6_211 = arith.constant 6 : index
    %c0_212 = arith.constant 0 : index
    %632 = vector.load %arg16[%c6_211, %c0_212] : memref<16x384xf32, #tpu.memory_space<vmem>>, vector<2x384xf32>
    %c0_213 = arith.constant 0 : index
    %c0_214 = arith.constant 0 : index
    %633 = vector.load %arg10[%c0_213, %c0_214] : memref<128x384xf32, #tpu.memory_space<vmem>>, vector<128x384xf32>
    %cst_215 = arith.constant dense<0.000000e+00> : vector<2x384xf32>
    %634 = tpu.matmul %631, %633, %cst_215 {dimension_numbers = #tpu.dot_dimension_numbers<[1], [0], [0], [1], [0, 0, 1, 1], [], []>} : vector<2x128xf32>, vector<128x384xf32>, vector<2x384xf32> -> vector<2x384xf32>
    %635 = vector.broadcast %537 : vector<1x384xf32> to vector<2x384xf32>
    %636 = arith.addf %634, %635 : vector<2x384xf32>
    %637 = vector.extract_strided_slice %632 {offsets = [0, 0], sizes = [2, 128], strides = [1, 1]} : vector<2x384xf32> to vector<2x128xf32>
    %638 = vector.extract_strided_slice %636 {offsets = [0, 0], sizes = [2, 128], strides = [1, 1]} : vector<2x384xf32> to vector<2x128xf32>
    %639 = arith.addf %637, %638 : vector<2x128xf32>
    %640 = arith.negf %639 : vector<2x128xf32>
    %641 = math.exp %640 : vector<2x128xf32>
    %cst_216 = arith.constant 1.000000e+00 : f32
    %642 = vector.broadcast %cst_216 : f32 to vector<2x128xf32>
    %643 = arith.addf %642, %641 : vector<2x128xf32>
    %644 = arith.divf %642, %643 : vector<2x128xf32>
    %645 = vector.extract_strided_slice %632 {offsets = [0, 128], sizes = [2, 128], strides = [1, 1]} : vector<2x384xf32> to vector<2x128xf32>
    %646 = vector.extract_strided_slice %636 {offsets = [0, 128], sizes = [2, 128], strides = [1, 1]} : vector<2x384xf32> to vector<2x128xf32>
    %647 = arith.addf %645, %646 : vector<2x128xf32>
    %648 = arith.negf %647 : vector<2x128xf32>
    %649 = math.exp %648 : vector<2x128xf32>
    %cst_217 = arith.constant 1.000000e+00 : f32
    %650 = vector.broadcast %cst_217 : f32 to vector<2x128xf32>
    %651 = arith.addf %650, %649 : vector<2x128xf32>
    %652 = arith.divf %650, %651 : vector<2x128xf32>
    %653 = vector.extract_strided_slice %632 {offsets = [0, 256], sizes = [2, 128], strides = [1, 1]} : vector<2x384xf32> to vector<2x128xf32>
    %654 = vector.extract_strided_slice %636 {offsets = [0, 256], sizes = [2, 128], strides = [1, 1]} : vector<2x384xf32> to vector<2x128xf32>
    %655 = arith.mulf %644, %654 : vector<2x128xf32>
    %656 = arith.addf %653, %655 : vector<2x128xf32>
    %657 = math.tanh %656 : vector<2x128xf32>
    %cst_218 = arith.constant 1.000000e+00 : f32
    %658 = vector.broadcast %cst_218 : f32 to vector<2x128xf32>
    %659 = arith.subf %658, %652 : vector<2x128xf32>
    %660 = arith.mulf %659, %657 : vector<2x128xf32>
    %661 = arith.mulf %652, %631 : vector<2x128xf32>
    %662 = arith.addf %660, %661 : vector<2x128xf32>
    %c8_219 = arith.constant 8 : index
    %c0_220 = arith.constant 0 : index
    %663 = vector.load %arg16[%c8_219, %c0_220] : memref<16x384xf32, #tpu.memory_space<vmem>>, vector<2x384xf32>
    %c0_221 = arith.constant 0 : index
    %c0_222 = arith.constant 0 : index
    %664 = vector.load %arg10[%c0_221, %c0_222] : memref<128x384xf32, #tpu.memory_space<vmem>>, vector<128x384xf32>
    %cst_223 = arith.constant dense<0.000000e+00> : vector<2x384xf32>
    %665 = tpu.matmul %662, %664, %cst_223 {dimension_numbers = #tpu.dot_dimension_numbers<[1], [0], [0], [1], [0, 0, 1, 1], [], []>} : vector<2x128xf32>, vector<128x384xf32>, vector<2x384xf32> -> vector<2x384xf32>
    %666 = vector.broadcast %537 : vector<1x384xf32> to vector<2x384xf32>
    %667 = arith.addf %665, %666 : vector<2x384xf32>
    %668 = vector.extract_strided_slice %663 {offsets = [0, 0], sizes = [2, 128], strides = [1, 1]} : vector<2x384xf32> to vector<2x128xf32>
    %669 = vector.extract_strided_slice %667 {offsets = [0, 0], sizes = [2, 128], strides = [1, 1]} : vector<2x384xf32> to vector<2x128xf32>
    %670 = arith.addf %668, %669 : vector<2x128xf32>
    %671 = arith.negf %670 : vector<2x128xf32>
    %672 = math.exp %671 : vector<2x128xf32>
    %cst_224 = arith.constant 1.000000e+00 : f32
    %673 = vector.broadcast %cst_224 : f32 to vector<2x128xf32>
    %674 = arith.addf %673, %672 : vector<2x128xf32>
    %675 = arith.divf %673, %674 : vector<2x128xf32>
    %676 = vector.extract_strided_slice %663 {offsets = [0, 128], sizes = [2, 128], strides = [1, 1]} : vector<2x384xf32> to vector<2x128xf32>
    %677 = vector.extract_strided_slice %667 {offsets = [0, 128], sizes = [2, 128], strides = [1, 1]} : vector<2x384xf32> to vector<2x128xf32>
    %678 = arith.addf %676, %677 : vector<2x128xf32>
    %679 = arith.negf %678 : vector<2x128xf32>
    %680 = math.exp %679 : vector<2x128xf32>
    %cst_225 = arith.constant 1.000000e+00 : f32
    %681 = vector.broadcast %cst_225 : f32 to vector<2x128xf32>
    %682 = arith.addf %681, %680 : vector<2x128xf32>
    %683 = arith.divf %681, %682 : vector<2x128xf32>
    %684 = vector.extract_strided_slice %663 {offsets = [0, 256], sizes = [2, 128], strides = [1, 1]} : vector<2x384xf32> to vector<2x128xf32>
    %685 = vector.extract_strided_slice %667 {offsets = [0, 256], sizes = [2, 128], strides = [1, 1]} : vector<2x384xf32> to vector<2x128xf32>
    %686 = arith.mulf %675, %685 : vector<2x128xf32>
    %687 = arith.addf %684, %686 : vector<2x128xf32>
    %688 = math.tanh %687 : vector<2x128xf32>
    %cst_226 = arith.constant 1.000000e+00 : f32
    %689 = vector.broadcast %cst_226 : f32 to vector<2x128xf32>
    %690 = arith.subf %689, %683 : vector<2x128xf32>
    %691 = arith.mulf %690, %688 : vector<2x128xf32>
    %692 = arith.mulf %683, %662 : vector<2x128xf32>
    %693 = arith.addf %691, %692 : vector<2x128xf32>
    %c10_227 = arith.constant 10 : index
    %c0_228 = arith.constant 0 : index
    %694 = vector.load %arg16[%c10_227, %c0_228] : memref<16x384xf32, #tpu.memory_space<vmem>>, vector<2x384xf32>
    %c0_229 = arith.constant 0 : index
    %c0_230 = arith.constant 0 : index
    %695 = vector.load %arg10[%c0_229, %c0_230] : memref<128x384xf32, #tpu.memory_space<vmem>>, vector<128x384xf32>
    %cst_231 = arith.constant dense<0.000000e+00> : vector<2x384xf32>
    %696 = tpu.matmul %693, %695, %cst_231 {dimension_numbers = #tpu.dot_dimension_numbers<[1], [0], [0], [1], [0, 0, 1, 1], [], []>} : vector<2x128xf32>, vector<128x384xf32>, vector<2x384xf32> -> vector<2x384xf32>
    %697 = vector.broadcast %537 : vector<1x384xf32> to vector<2x384xf32>
    %698 = arith.addf %696, %697 : vector<2x384xf32>
    %699 = vector.extract_strided_slice %694 {offsets = [0, 0], sizes = [2, 128], strides = [1, 1]} : vector<2x384xf32> to vector<2x128xf32>
    %700 = vector.extract_strided_slice %698 {offsets = [0, 0], sizes = [2, 128], strides = [1, 1]} : vector<2x384xf32> to vector<2x128xf32>
    %701 = arith.addf %699, %700 : vector<2x128xf32>
    %702 = arith.negf %701 : vector<2x128xf32>
    %703 = math.exp %702 : vector<2x128xf32>
    %cst_232 = arith.constant 1.000000e+00 : f32
    %704 = vector.broadcast %cst_232 : f32 to vector<2x128xf32>
    %705 = arith.addf %704, %703 : vector<2x128xf32>
    %706 = arith.divf %704, %705 : vector<2x128xf32>
    %707 = vector.extract_strided_slice %694 {offsets = [0, 128], sizes = [2, 128], strides = [1, 1]} : vector<2x384xf32> to vector<2x128xf32>
    %708 = vector.extract_strided_slice %698 {offsets = [0, 128], sizes = [2, 128], strides = [1, 1]} : vector<2x384xf32> to vector<2x128xf32>
    %709 = arith.addf %707, %708 : vector<2x128xf32>
    %710 = arith.negf %709 : vector<2x128xf32>
    %711 = math.exp %710 : vector<2x128xf32>
    %cst_233 = arith.constant 1.000000e+00 : f32
    %712 = vector.broadcast %cst_233 : f32 to vector<2x128xf32>
    %713 = arith.addf %712, %711 : vector<2x128xf32>
    %714 = arith.divf %712, %713 : vector<2x128xf32>
    %715 = vector.extract_strided_slice %694 {offsets = [0, 256], sizes = [2, 128], strides = [1, 1]} : vector<2x384xf32> to vector<2x128xf32>
    %716 = vector.extract_strided_slice %698 {offsets = [0, 256], sizes = [2, 128], strides = [1, 1]} : vector<2x384xf32> to vector<2x128xf32>
    %717 = arith.mulf %706, %716 : vector<2x128xf32>
    %718 = arith.addf %715, %717 : vector<2x128xf32>
    %719 = math.tanh %718 : vector<2x128xf32>
    %cst_234 = arith.constant 1.000000e+00 : f32
    %720 = vector.broadcast %cst_234 : f32 to vector<2x128xf32>
    %721 = arith.subf %720, %714 : vector<2x128xf32>
    %722 = arith.mulf %721, %719 : vector<2x128xf32>
    %723 = arith.mulf %714, %693 : vector<2x128xf32>
    %724 = arith.addf %722, %723 : vector<2x128xf32>
    %c12_235 = arith.constant 12 : index
    %c0_236 = arith.constant 0 : index
    %725 = vector.load %arg16[%c12_235, %c0_236] : memref<16x384xf32, #tpu.memory_space<vmem>>, vector<2x384xf32>
    %c0_237 = arith.constant 0 : index
    %c0_238 = arith.constant 0 : index
    %726 = vector.load %arg10[%c0_237, %c0_238] : memref<128x384xf32, #tpu.memory_space<vmem>>, vector<128x384xf32>
    %cst_239 = arith.constant dense<0.000000e+00> : vector<2x384xf32>
    %727 = tpu.matmul %724, %726, %cst_239 {dimension_numbers = #tpu.dot_dimension_numbers<[1], [0], [0], [1], [0, 0, 1, 1], [], []>} : vector<2x128xf32>, vector<128x384xf32>, vector<2x384xf32> -> vector<2x384xf32>
    %728 = vector.broadcast %537 : vector<1x384xf32> to vector<2x384xf32>
    %729 = arith.addf %727, %728 : vector<2x384xf32>
    %730 = vector.extract_strided_slice %725 {offsets = [0, 0], sizes = [2, 128], strides = [1, 1]} : vector<2x384xf32> to vector<2x128xf32>
    %731 = vector.extract_strided_slice %729 {offsets = [0, 0], sizes = [2, 128], strides = [1, 1]} : vector<2x384xf32> to vector<2x128xf32>
    %732 = arith.addf %730, %731 : vector<2x128xf32>
    %733 = arith.negf %732 : vector<2x128xf32>
    %734 = math.exp %733 : vector<2x128xf32>
    %cst_240 = arith.constant 1.000000e+00 : f32
    %735 = vector.broadcast %cst_240 : f32 to vector<2x128xf32>
    %736 = arith.addf %735, %734 : vector<2x128xf32>
    %737 = arith.divf %735, %736 : vector<2x128xf32>
    %738 = vector.extract_strided_slice %725 {offsets = [0, 128], sizes = [2, 128], strides = [1, 1]} : vector<2x384xf32> to vector<2x128xf32>
    %739 = vector.extract_strided_slice %729 {offsets = [0, 128], sizes = [2, 128], strides = [1, 1]} : vector<2x384xf32> to vector<2x128xf32>
    %740 = arith.addf %738, %739 : vector<2x128xf32>
    %741 = arith.negf %740 : vector<2x128xf32>
    %742 = math.exp %741 : vector<2x128xf32>
    %cst_241 = arith.constant 1.000000e+00 : f32
    %743 = vector.broadcast %cst_241 : f32 to vector<2x128xf32>
    %744 = arith.addf %743, %742 : vector<2x128xf32>
    %745 = arith.divf %743, %744 : vector<2x128xf32>
    %746 = vector.extract_strided_slice %725 {offsets = [0, 256], sizes = [2, 128], strides = [1, 1]} : vector<2x384xf32> to vector<2x128xf32>
    %747 = vector.extract_strided_slice %729 {offsets = [0, 256], sizes = [2, 128], strides = [1, 1]} : vector<2x384xf32> to vector<2x128xf32>
    %748 = arith.mulf %737, %747 : vector<2x128xf32>
    %749 = arith.addf %746, %748 : vector<2x128xf32>
    %750 = math.tanh %749 : vector<2x128xf32>
    %cst_242 = arith.constant 1.000000e+00 : f32
    %751 = vector.broadcast %cst_242 : f32 to vector<2x128xf32>
    %752 = arith.subf %751, %745 : vector<2x128xf32>
    %753 = arith.mulf %752, %750 : vector<2x128xf32>
    %754 = arith.mulf %745, %724 : vector<2x128xf32>
    %755 = arith.addf %753, %754 : vector<2x128xf32>
    %c14_243 = arith.constant 14 : index
    %c0_244 = arith.constant 0 : index
    %756 = vector.load %arg16[%c14_243, %c0_244] : memref<16x384xf32, #tpu.memory_space<vmem>>, vector<2x384xf32>
    %c0_245 = arith.constant 0 : index
    %c0_246 = arith.constant 0 : index
    %757 = vector.load %arg10[%c0_245, %c0_246] : memref<128x384xf32, #tpu.memory_space<vmem>>, vector<128x384xf32>
    %cst_247 = arith.constant dense<0.000000e+00> : vector<2x384xf32>
    %758 = tpu.matmul %755, %757, %cst_247 {dimension_numbers = #tpu.dot_dimension_numbers<[1], [0], [0], [1], [0, 0, 1, 1], [], []>} : vector<2x128xf32>, vector<128x384xf32>, vector<2x384xf32> -> vector<2x384xf32>
    %759 = vector.broadcast %537 : vector<1x384xf32> to vector<2x384xf32>
    %760 = arith.addf %758, %759 : vector<2x384xf32>
    %761 = vector.extract_strided_slice %756 {offsets = [0, 0], sizes = [2, 128], strides = [1, 1]} : vector<2x384xf32> to vector<2x128xf32>
    %762 = vector.extract_strided_slice %760 {offsets = [0, 0], sizes = [2, 128], strides = [1, 1]} : vector<2x384xf32> to vector<2x128xf32>
    %763 = arith.addf %761, %762 : vector<2x128xf32>
    %764 = arith.negf %763 : vector<2x128xf32>
    %765 = math.exp %764 : vector<2x128xf32>
    %cst_248 = arith.constant 1.000000e+00 : f32
    %766 = vector.broadcast %cst_248 : f32 to vector<2x128xf32>
    %767 = arith.addf %766, %765 : vector<2x128xf32>
    %768 = arith.divf %766, %767 : vector<2x128xf32>
    %769 = vector.extract_strided_slice %756 {offsets = [0, 128], sizes = [2, 128], strides = [1, 1]} : vector<2x384xf32> to vector<2x128xf32>
    %770 = vector.extract_strided_slice %760 {offsets = [0, 128], sizes = [2, 128], strides = [1, 1]} : vector<2x384xf32> to vector<2x128xf32>
    %771 = arith.addf %769, %770 : vector<2x128xf32>
    %772 = arith.negf %771 : vector<2x128xf32>
    %773 = math.exp %772 : vector<2x128xf32>
    %cst_249 = arith.constant 1.000000e+00 : f32
    %774 = vector.broadcast %cst_249 : f32 to vector<2x128xf32>
    %775 = arith.addf %774, %773 : vector<2x128xf32>
    %776 = arith.divf %774, %775 : vector<2x128xf32>
    %777 = vector.extract_strided_slice %756 {offsets = [0, 256], sizes = [2, 128], strides = [1, 1]} : vector<2x384xf32> to vector<2x128xf32>
    %778 = vector.extract_strided_slice %760 {offsets = [0, 256], sizes = [2, 128], strides = [1, 1]} : vector<2x384xf32> to vector<2x128xf32>
    %779 = arith.mulf %768, %778 : vector<2x128xf32>
    %780 = arith.addf %777, %779 : vector<2x128xf32>
    %781 = math.tanh %780 : vector<2x128xf32>
    %cst_250 = arith.constant 1.000000e+00 : f32
    %782 = vector.broadcast %cst_250 : f32 to vector<2x128xf32>
    %783 = arith.subf %782, %776 : vector<2x128xf32>
    %784 = arith.mulf %783, %781 : vector<2x128xf32>
    %785 = arith.mulf %776, %755 : vector<2x128xf32>
    %786 = arith.addf %784, %785 : vector<2x128xf32>
    %c0_251 = arith.constant 0 : index
    %c0_252 = arith.constant 0 : index
    %787 = vector.load %arg13[%c0_251, %c0_252] : memref<1x128xf32, #tpu.memory_space<vmem>>, vector<1x128xf32>
    %788 = vector.broadcast %787 : vector<1x128xf32> to vector<2x128xf32>
    %789 = arith.mulf %786, %788 : vector<2x128xf32>
    %cst_253 = arith.constant dense<0.000000e+00> : vector<2xf32>
    %790 = vector.multi_reduction <add>, %789, %cst_253 [1] : vector<2x128xf32> to vector<2xf32>
    %791 = vector.shape_cast %790 : vector<2xf32> to vector<2x1xf32>
    %c0_254 = arith.constant 0 : index
    %c0_255 = arith.constant 0 : index
    %792 = vector.load %arg14[%c0_254, %c0_255] : memref<1x1xf32, #tpu.memory_space<vmem>>, vector<1x1xf32>
    %793 = vector.broadcast %792 : vector<1x1xf32> to vector<2x1xf32>
    %794 = arith.addf %791, %793 : vector<2x1xf32>
    %795 = arith.negf %794 : vector<2x1xf32>
    %796 = math.exp %795 : vector<2x1xf32>
    %cst_256 = arith.constant 1.000000e+00 : f32
    %797 = vector.broadcast %cst_256 : f32 to vector<2x1xf32>
    %798 = arith.addf %797, %796 : vector<2x1xf32>
    %799 = arith.divf %797, %798 : vector<2x1xf32>
    %c0_257 = arith.constant 0 : index
    %c0_258 = arith.constant 0 : index
    %800 = vector.load %arg15[%c0_257, %c0_258] : memref<2x1xf32, #tpu.memory_space<vmem>>, vector<2x1xf32>
    tpu.vector_store %arg15[%c0_257, %c0_258], %799 {strides = array<i32>} : memref<2x1xf32, #tpu.memory_space<vmem>>, vector<2x1xf32>,
    return
  }
}

</mosaic_0001>

<llo_original>
// kernel: gru_model_forward.1
$region0: #{gru_model_forward.1}
  #allocation0 [shape = 'u32[]', space=smem, size = 0x4, offset = 0x4, fixed_abs, tag = 'smem constant byte address 0x4 - core index']
  #allocation1 [shape = 'u32[144,128]{1,0:T(1,128)}', space=vmem, size = 0x12000, scoped, tag = 'internal scratch']
  #allocation2 [shape = 'f32[16,384]{1,0:T(8,128)}', space=vmem, size = 0x6000, scoped, tag = 'scratch operand']
  #allocation3 [shape = 'f32[16,128]{1,0:T(8,128)}', space=vmem, size = 0x2000, scoped, tag = 'scratch operand']
  #allocation4 [shape = 'f32[1,1]{1,0:T(1,128)S(1)}', space=vmem, size = 0x200, scoped, tag = 'scoped memory for gru_model_forward.1']
  %s0 = inlined_call_operand.vmem [shape: f32[16,8], index: 0, kind: input, shape index: {}]
  %s1 = inlined_call_operand.vmem [shape: f32[8,384], index: 1, kind: input, shape index: {}]
  %s2 = inlined_call_operand.hbm [shape: f32[128,384], index: 2, kind: input, shape index: {}]
  %s3 = inlined_call_operand.vmem [shape: f32[1,384], index: 3, kind: input, shape index: {}]
  %s4 = inlined_call_operand.vmem [shape: f32[1,384], index: 4, kind: input, shape index: {}]
  %s5 = inlined_call_operand.hbm [shape: f32[128,384], index: 5, kind: input, shape index: {}]
  %s6 = inlined_call_operand.hbm [shape: f32[128,384], index: 6, kind: input, shape index: {}]
  %s7 = inlined_call_operand.vmem [shape: f32[1,384], index: 7, kind: input, shape index: {}]
  %s8 = inlined_call_operand.vmem [shape: f32[1,384], index: 8, kind: input, shape index: {}]
  %s9 = inlined_call_operand.hbm [shape: f32[128,384], index: 9, kind: input, shape index: {}]
  %s10 = inlined_call_operand.hbm [shape: f32[128,384], index: 10, kind: input, shape index: {}]
  %s11 = inlined_call_operand.vmem [shape: f32[1,384], index: 11, kind: input, shape index: {}]
  %s12 = inlined_call_operand.vmem [shape: f32[1,384], index: 12, kind: input, shape index: {}]
  %s13 = inlined_call_operand.vmem [shape: f32[1,128], index: 13, kind: input, shape index: {}]
  %s14 = inlined_call_operand.<no memory space> [shape: f32[1,1], index: 14, kind: input, shape index: {}]
  %s15 = inlined_call_operand.vmem [shape: f32[2,1], index: 15, kind: output, shape index: {}]
  %s16 = sld [smem:[#allocation0]]
  $region90: #{gru_model_forward.1} parent=0
    _
  %s18 = ssub.s32 1, %s16
  %s19 = scalar_select 0, %s18, %s16
  %v20 = vstv %s14
  %21 = vst [vmem:[#allocation4] sm:$0x1] %v20
  $region1: #{gru_model_forward.1} parent=0
    #allocation5 [shape = 'u8[196608]{0}', space=vmem, size = 0x30000, scoped, tag = 'input window, operand 2, single buffered']
    #allocation6 [shape = 's32[1]{0}', space=sflag, size = 0x4, scoped, tag = 'scoped memory for gru_model_forward.1']
    #allocation7 [shape = 'u8[196608]{0}', space=vmem, size = 0x30000, scoped, tag = 'input window, operand 5, single buffered']
    #allocation8 [shape = 's32[1]{0}', space=sflag, size = 0x4, scoped, tag = 'scoped memory for gru_model_forward.1']
    #allocation9 [shape = 'u8[196608]{0}', space=vmem, size = 0x30000, scoped, tag = 'input window, operand 6, single buffered']
    #allocation10 [shape = 'u8[196608]{0}', space=vmem, size = 0x30000, scoped, tag = 'input window, operand 9, single buffered']
    #allocation11 [shape = 's32[1]{0}', space=sflag, size = 0x4, scoped, tag = 'scoped memory for gru_model_forward.1']
    #allocation12 [shape = 'u8[196608]{0}', space=vmem, size = 0x30000, scoped, tag = 'input window, operand 10, single buffered']
    %22 = vsyncpa [#allocation6], 0
    %23 = vsyncpa [#allocation8], 0
    %24 = vsyncpa [#allocation11], 0
    // Predicated region
    $region2: #{gru_model_forward.1} parent=1 // pred_check
      _
    $region3: #{gru_model_forward.1} parent=1 // pred_check_branch
      %26 = sbr.rel (0) target = $region5
    $region4: #{gru_model_forward.1} parent=1 // pred_region
      _
    $region5: #{gru_model_forward.1} parent=1 // pred_fallthru
      _
    // Predicated region
    $region6: #{gru_model_forward.1} parent=1 // pred_check
      _
    $region7: #{gru_model_forward.1} parent=1 // pred_check_branch
      %28 = sbr.rel (0) target = $region9
    $region8: #{gru_model_forward.1} parent=1 // pred_region
      _
    $region9: #{gru_model_forward.1} parent=1 // pred_fallthru
      _
    // Predicated region
    $region10: #{gru_model_forward.1} parent=1 // pred_check
      _
    $region11: #{gru_model_forward.1} parent=1 // pred_check_branch
      %30 = sbr.rel (0) target = $region13
    $region12: #{gru_model_forward.1} parent=1 // pred_region
      %s32 = ssub.s32 6144, 6144
      %33 = vsyncadd [#allocation6], %s32
      %s34 = sshll.u32 [#allocation5], 4
      %s35 = int_to_ptr.vmem [resolvable:$true] %s34
      %40 = dma.hbm_to_vmem [thread:$0]  %s2, 6144, %s35, [#allocation6], 384, 384, 24
    $region13: #{gru_model_forward.1} parent=1 // pred_fallthru
      _
    // Predicated region
    $region14: #{gru_model_forward.1} parent=1 // pred_check
      _
    $region15: #{gru_model_forward.1} parent=1 // pred_check_branch
      %42 = sbr.rel (0) target = $region17
    $region16: #{gru_model_forward.1} parent=1 // pred_region
      _
    $region17: #{gru_model_forward.1} parent=1 // pred_fallthru
      _
    // Predicated region
    $region18: #{gru_model_forward.1} parent=1 // pred_check
      _
    $region19: #{gru_model_forward.1} parent=1 // pred_check_branch
      %44 = sbr.rel (0) target = $region21
    $region20: #{gru_model_forward.1} parent=1 // pred_region
      _
    $region21: #{gru_model_forward.1} parent=1 // pred_fallthru
      _
    // Predicated region
    $region22: #{gru_model_forward.1} parent=1 // pred_check
      _
    $region23: #{gru_model_forward.1} parent=1 // pred_check_branch
      %46 = sbr.rel (0) target = $region25
    $region24: #{gru_model_forward.1} parent=1 // pred_region
      %s48 = ssub.s32 6144, 6144
      %49 = vsyncadd [#allocation8], %s48
      %s50 = sshll.u32 [#allocation7], 4
      %s51 = int_to_ptr.vmem [resolvable:$true] %s50
      %56 = dma.hbm_to_vmem [thread:$0]  %s5, 6144, %s51, [#allocation8], 384, 384, 24
    $region25: #{gru_model_forward.1} parent=1 // pred_fallthru
      _
    // Predicated region
    $region26: #{gru_model_forward.1} parent=1 // pred_check
      _
    $region27: #{gru_model_forward.1} parent=1 // pred_check_branch
      %58 = sbr.rel (0) target = $region29
    $region28: #{gru_model_forward.1} parent=1 // pred_region
      %s60 = ssub.s32 6144, 6144
      %61 = vsyncadd [#allocation8], %s60
      %s62 = sshll.u32 [#allocation9], 4
      %s63 = int_to_ptr.vmem [resolvable:$true] %s62
      %68 = dma.hbm_to_vmem [thread:$0]  %s6, 6144, %s63, [#allocation8], 384, 384, 24
    $region29: #{gru_model_forward.1} parent=1 // pred_fallthru
      _
    // Predicated region
    $region30: #{gru_model_forward.1} parent=1 // pred_check
      _
    $region31: #{gru_model_forward.1} parent=1 // pred_check_branch
      %70 = sbr.rel (0) target = $region33
    $region32: #{gru_model_forward.1} parent=1 // pred_region
      _
    $region33: #{gru_model_forward.1} parent=1 // pred_fallthru
      _
    // Predicated region
    $region34: #{gru_model_forward.1} parent=1 // pred_check
      _
    $region35: #{gru_model_forward.1} parent=1 // pred_check_branch
      %72 = sbr.rel (0) target = $region37
    $region36: #{gru_model_forward.1} parent=1 // pred_region
      _
    $region37: #{gru_model_forward.1} parent=1 // pred_fallthru
      _
    // Predicated region
    $region38: #{gru_model_forward.1} parent=1 // pred_check
      _
    $region39: #{gru_model_forward.1} parent=1 // pred_check_branch
      %74 = sbr.rel (0) target = $region41
    $region40: #{gru_model_forward.1} parent=1 // pred_region
      %s76 = ssub.s32 6144, 6144
      %77 = vsyncadd [#allocation11], %s76
      %s78 = sshll.u32 [#allocation10], 4
      %s79 = int_to_ptr.vmem [resolvable:$true] %s78
      %84 = dma.hbm_to_vmem [thread:$0]  %s9, 6144, %s79, [#allocation11], 384, 384, 24
    $region41: #{gru_model_forward.1} parent=1 // pred_fallthru
      _
    // Predicated region
    $region42: #{gru_model_forward.1} parent=1 // pred_check
      _
    $region43: #{gru_model_forward.1} parent=1 // pred_check_branch
      %86 = sbr.rel (0) target = $region45
    $region44: #{gru_model_forward.1} parent=1 // pred_region
      %s88 = ssub.s32 6144, 6144
      %89 = vsyncadd [#allocation11], %s88
      %s90 = sshll.u32 [#allocation12], 4
      %s91 = int_to_ptr.vmem [resolvable:$true] %s90
      %96 = dma.hbm_to_vmem [thread:$0]  %s10, 6144, %s91, [#allocation11], 384, 384, 24
    $region45: #{gru_model_forward.1} parent=1 // pred_fallthru
      _
    // Predicated region
    $region46: #{gru_model_forward.1} parent=1 // pred_check
      _
    $region47: #{gru_model_forward.1} parent=1 // pred_check_branch
      %98 = sbr.rel (0) target = $region49
    $region48: #{gru_model_forward.1} parent=1 // pred_region
      _
    $region49: #{gru_model_forward.1} parent=1 // pred_fallthru
      _
    // Predicated region
    $region50: #{gru_model_forward.1} parent=1 // pred_check
      _
    $region51: #{gru_model_forward.1} parent=1 // pred_check_branch
      %100 = sbr.rel (0) target = $region53
    $region52: #{gru_model_forward.1} parent=1 // pred_region
      _
    $region53: #{gru_model_forward.1} parent=1 // pred_fallthru
      _
    // Predicated region
    $region54: #{gru_model_forward.1} parent=1 // pred_check
      _
    $region55: #{gru_model_forward.1} parent=1 // pred_check_branch
      %102 = sbr.rel (0) target = $region57
    $region56: #{gru_model_forward.1} parent=1 // pred_region
      _
    $region57: #{gru_model_forward.1} parent=1 // pred_fallthru
      _
    // Predicated region
    $region58: #{gru_model_forward.1} parent=1 // pred_check
      _
    $region59: #{gru_model_forward.1} parent=1 // pred_check_branch
      %104 = sbr.rel (0) target = $region61
    $region60: #{gru_model_forward.1} parent=1 // pred_region
      _
    $region61: #{gru_model_forward.1} parent=1 // pred_fallthru
      _
    // Predicated region
    $region62: #{gru_model_forward.1} parent=1 // pred_check
      _
    $region63: #{gru_model_forward.1} parent=1 // pred_check_branch
      %106 = sbr.rel (0) target = $region65
    $region64: #{gru_model_forward.1} parent=1 // pred_region
      %107 = dma.done [#allocation6], 6144
    $region65: #{gru_model_forward.1} parent=1 // pred_fallthru
      _
    // Predicated region
    $region66: #{gru_model_forward.1} parent=1 // pred_check
      _
    $region67: #{gru_model_forward.1} parent=1 // pred_check_branch
      %109 = sbr.rel (0) target = $region69
    $region68: #{gru_model_forward.1} parent=1 // pred_region
      %110 = dma.done [#allocation8], 6144
    $region69: #{gru_model_forward.1} parent=1 // pred_fallthru
      _
    // Predicated region
    $region70: #{gru_model_forward.1} parent=1 // pred_check
      _
    $region71: #{gru_model_forward.1} parent=1 // pred_check_branch
      %112 = sbr.rel (0) target = $region73
    $region72: #{gru_model_forward.1} parent=1 // pred_region
      %113 = dma.done [#allocation8], 6144
    $region73: #{gru_model_forward.1} parent=1 // pred_fallthru
      _
    // Predicated region
    $region74: #{gru_model_forward.1} parent=1 // pred_check
      _
    $region75: #{gru_model_forward.1} parent=1 // pred_check_branch
      %115 = sbr.rel (0) target = $region77
    $region76: #{gru_model_forward.1} parent=1 // pred_region
      %116 = dma.done [#allocation11], 6144
    $region77: #{gru_model_forward.1} parent=1 // pred_fallthru
      _
    // Predicated region
    $region78: #{gru_model_forward.1} parent=1 // pred_check
      _
    $region79: #{gru_model_forward.1} parent=1 // pred_check_branch
      %118 = sbr.rel (0) target = $region81
    $region80: #{gru_model_forward.1} parent=1 // pred_region
      %119 = dma.done [#allocation11], 6144
    $region81: #{gru_model_forward.1} parent=1 // pred_fallthru
      _
    %v120 = vld [vmem:[%s0] sm:$0xff]
    %v121 = vld [vmem:[%s0 + $0x8] sm:$0xff]
    %v122 = vld [vmem:[%s1] sm:$0xff]
    %v123 = vld [vmem:[%s1 + $0x8] sm:$0xff]
    %v124 = vld [vmem:[%s1 + $0x10] sm:$0xff]
    %v125 = vld [vmem:[%s3] sm:$0x7]
    %v127 = vlaneseq
    %v128 = vshrl.u32 %v127, 7
    %v129 = vsub.s32 0, %v128
    %v130 = vrot.slane %v125, %v129
    %v131 = vlaneseq
    %v132 = vshrl.u32 %v131, 7
    %v133 = vsub.s32 1, %v132
    %v134 = vrot.slane %v125, %v133
    %v135 = vlaneseq
    %v136 = vshrl.u32 %v135, 7
    %v137 = vsub.s32 2, %v136
    %v138 = vrot.slane %v125, %v137
    %vm142 = vcmask 64512
    %v144 = vsel %vm142, %v120, 0
    %v147 = vsel %vm142, %v121, 0
    %149 = vmatprep.subr.mxu0 %v123
    %150 = vmatpush1.msra.mxu0 %v122
    %151 = vmatprep.subr.mxu0 0.0
    %152 = vmatpush1.msra.mxu0 0.0
    %153 = vmatprep.subr.mxu0 0.0
    %154 = vmatpush1.msra.mxu0 0.0
    %155 = vmatprep.subr.mxu0 0.0
    %156 = vmatpush1.msra.mxu0 0.0
    %157 = vmatprep.subr.mxu0 0.0
    %158 = vmatpush1.msra.mxu0 0.0
    %159 = vmatprep.subr.mxu0 0.0
    %160 = vmatpush1.msra.mxu0 0.0
    %161 = vmatprep.subr.mxu0 0.0
    %162 = vmatpush1.msra.mxu0 0.0
    %163 = vmatprep.subr.mxu0 0.0
    %164 = vmatpush1.msra.mxu0 0.0
    %165 = vmatprep.subr.mxu0 0.0
    %166 = vmatpush1.msra.mxu0 0.0
    %167 = vmatprep.subr.mxu0 0.0
    %168 = vmatpush1.msra.mxu0 0.0
    %169 = vmatprep.subr.mxu0 0.0
    %170 = vmatpush1.msra.mxu0 0.0
    %171 = vmatprep.subr.mxu0 0.0
    %172 = vmatpush1.msra.mxu0 0.0
    %173 = vmatprep.subr.mxu0 0.0
    %174 = vmatpush1.msra.mxu0 0.0
    %175 = vmatprep.subr.mxu0 0.0
    %176 = vmatpush1.msra.mxu0 0.0
    %177 = vmatprep.subr.mxu0 0.0
    %178 = vmatpush1.msra.mxu0 0.0
    %179 = vmatprep.subr.mxu0 0.0
    %180 = vmatpush1.msra.mxu0 0.0
    %181 = vmatprep.subr.mxu0 0.0
    %182 = vmatpush1.msra.mxu0 0.0
    %183 = vmatprep.subr.mxu0 0.0
    %184 = vmatpush1.msra.mxu0 0.0
    %185 = vmatprep.subr.mxu0 0.0
    %186 = vmatpush1.msra.mxu0 0.0
    %187 = vmatprep.subr.mxu0 0.0
    %188 = vmatpush1.msra.mxu0 0.0
    %189 = vmatprep.subr.mxu0 0.0
    %190 = vmatpush1.msra.mxu0 0.0
    %191 = vmatprep.subr.mxu0 0.0
    %192 = vmatpush1.msra.mxu0 0.0
    %193 = vmatprep.subr.mxu0 0.0
    %194 = vmatpush1.msra.mxu0 0.0
    %195 = vmatprep.subr.mxu0 0.0
    %196 = vmatpush1.msra.mxu0 0.0
    %197 = vmatprep.subr.mxu0 0.0
    %198 = vmatpush1.msra.mxu0 0.0
    %199 = vmatprep.subr.mxu0 0.0
    %200 = vmatpush1.msra.mxu0 0.0
    %201 = vmatprep.subr.mxu0 0.0
    %202 = vmatpush1.msra.mxu0 0.0
    %203 = vmatprep.subr.mxu0 0.0
    %204 = vmatpush1.msra.mxu0 0.0
    %205 = vmatprep.subr.mxu0 0.0
    %206 = vmatpush1.msra.mxu0 0.0
    %207 = vmatprep.subr.mxu0 0.0
    %208 = vmatpush1.msra.mxu0 0.0
    %209 = vmatprep.subr.mxu0 0.0
    %210 = vmatpush1.msra.mxu0 0.0
    %211 = vmatprep.subr.mxu0 0.0
    %212 = vmatpush1.msra.mxu0 0.0
    %213 = vmatprep.mubr.f32.mxu0 0.0
    %214 = vmatmul.mubr.f32.gmra.mrb[0].mxu0 %v144
    %v215 = vpop.f32.mrb[0].mxu0
    %v216 = vadd.f32 %v130, %v215
    %v217 = vpop.f32.mrb[0].mxu0
    %v218 = vadd.f32 %v134, %v217
    %219 = vmatprep.mubr.f32.mxu0 0.0
    %220 = vmatmul.mubr.f32.gmra.mrb[0].mxu0 %v147
    %v221 = vpop.f32.mrb[0].mxu0
    %v222 = vadd.f32 %v130, %v221
    %v223 = vpop.f32.mrb[0].mxu0
    %v224 = vadd.f32 %v134, %v223
    %225 = vdwg.mxu0
    %226 = vmatprep.subr.mxu0 0.0
    %227 = vmatpush1.msra.mxu0 %v124
    %228 = vmatprep.subr.mxu0 0.0
    %229 = vmatpush1.msra.mxu0 0.0
    %230 = vmatprep.subr.mxu0 0.0
    %231 = vmatpush1.msra.mxu0 0.0
    %232 = vmatprep.subr.mxu0 0.0
    %233 = vmatpush1.msra.mxu0 0.0
    %234 = vmatprep.subr.mxu0 0.0
    %235 = vmatpush1.msra.mxu0 0.0
    %236 = vmatprep.subr.mxu0 0.0
    %237 = vmatpush1.msra.mxu0 0.0
    %238 = vmatprep.subr.mxu0 0.0
    %239 = vmatpush1.msra.mxu0 0.0
    %240 = vmatprep.subr.mxu0 0.0
    %241 = vmatpush1.msra.mxu0 0.0
    %242 = vmatprep.subr.mxu0 0.0
    %243 = vmatpush1.msra.mxu0 0.0
    %244 = vmatprep.subr.mxu0 0.0
    %245 = vmatpush1.msra.mxu0 0.0
    %246 = vmatprep.subr.mxu0 0.0
    %247 = vmatpush1.msra.mxu0 0.0
    %248 = vmatprep.subr.mxu0 0.0
    %249 = vmatpush1.msra.mxu0 0.0
    %250 = vmatprep.subr.mxu0 0.0
    %251 = vmatpush1.msra.mxu0 0.0
    %252 = vmatprep.subr.mxu0 0.0
    %253 = vmatpush1.msra.mxu0 0.0
    %254 = vmatprep.subr.mxu0 0.0
    %255 = vmatpush1.msra.mxu0 0.0
    %256 = vmatprep.subr.mxu0 0.0
    %257 = vmatpush1.msra.mxu0 0.0
    %258 = vmatprep.subr.mxu0 0.0
    %259 = vmatpush1.msra.mxu0 0.0
    %260 = vmatprep.subr.mxu0 0.0
    %261 = vmatpush1.msra.mxu0 0.0
    %262 = vmatprep.subr.mxu0 0.0
    %263 = vmatpush1.msra.mxu0 0.0
    %264 = vmatprep.subr.mxu0 0.0
    %265 = vmatpush1.msra.mxu0 0.0
    %266 = vmatprep.subr.mxu0 0.0
    %267 = vmatpush1.msra.mxu0 0.0
    %268 = vmatprep.subr.mxu0 0.0
    %269 = vmatpush1.msra.mxu0 0.0
    %270 = vmatprep.subr.mxu0 0.0
    %271 = vmatpush1.msra.mxu0 0.0
    %272 = vmatprep.subr.mxu0 0.0
    %273 = vmatpush1.msra.mxu0 0.0
    %274 = vmatprep.subr.mxu0 0.0
    %275 = vmatpush1.msra.mxu0 0.0
    %276 = vmatprep.subr.mxu0 0.0
    %277 = vmatpush1.msra.mxu0 0.0
    %278 = vmatprep.subr.mxu0 0.0
    %279 = vmatpush1.msra.mxu0 0.0
    %280 = vmatprep.subr.mxu0 0.0
    %281 = vmatpush1.msra.mxu0 0.0
    %282 = vmatprep.subr.mxu0 0.0
    %283 = vmatpush1.msra.mxu0 0.0
    %284 = vmatprep.subr.mxu0 0.0
    %285 = vmatpush1.msra.mxu0 0.0
    %286 = vmatprep.subr.mxu0 0.0
    %287 = vmatpush1.msra.mxu0 0.0
    %288 = vmatprep.subr.mxu0 0.0
    %289 = vmatpush1.msra.mxu0 0.0
    %290 = vmatprep.mubr.f32.mxu0 0.0
    %291 = vmatmul.mubr.f32.gmra.mrb[0].mxu0 %v144
    %v292 = vpop.f32.mrb[0].mxu0
    %v293 = vadd.f32 %v138, %v292
    %v294 = vpop.f32.mrb[0].mxu0
    %295 = vmatprep.mubr.f32.mxu0 0.0
    %296 = vmatmul.mubr.f32.gmra.mrb[0].mxu0 %v147
    %v297 = vpop.f32.mrb[0].mxu0
    %v298 = vadd.f32 %v138, %v297
    %v299 = vpop.f32.mrb[0].mxu0
    %300 = vdwg.mxu0
    %301 = vst [vmem:[#allocation2] sm:$0xff] %v216
    %302 = vst [vmem:[#allocation2 + $0x8] sm:$0xff] %v218
    %303 = vst [vmem:[#allocation2 + $0x10] sm:$0xff] %v293
    %304 = vst [vmem:[#allocation2 + $0x18] sm:$0xff] %v222
    %305 = vst [vmem:[#allocation2 + $0x20] sm:$0xff] %v224
    %306 = vst [vmem:[#allocation2 + $0x28] sm:$0xff] %v298
    %v307 = vld [vmem:[%s4] sm:$0x7]
    %v308 = vld [vmem:[#allocation2] sm:$0x3]
    %v309 = vld [vmem:[#allocation2 + $0x8] sm:$0x3]
    %v310 = vld [vmem:[#allocation2 + $0x10] sm:$0x3]
    %v311 = vld [vmem:[#allocation5] sm:$0xff]
    %v312 = vld [vmem:[#allocation5 + $0x8] sm:$0xff]
    %v313 = vld [vmem:[#allocation5 + $0x10] sm:$0xff]
    %v314 = vld [vmem:[#allocation5 + $0x18] sm:$0xff]
    %v315 = vld [vmem:[#allocation5 + $0x20] sm:$0xff]
    %v316 = vld [vmem:[#allocation5 + $0x28] sm:$0xff]
    %v317 = vld [vmem:[#allocation5 + $0x30] sm:$0xff]
    %v318 = vld [vmem:[#allocation5 + $0x38] sm:$0xff]
    %v319 = vld [vmem:[#allocation5 + $0x40] sm:$0xff]
    %v320 = vld [vmem:[#allocation5 + $0x48] sm:$0xff]
    %v321 = vld [vmem:[#allocation5 + $0x50] sm:$0xff]
    %v322 = vld [vmem:[#allocation5 + $0x58] sm:$0xff]
    %v323 = vld [vmem:[#allocation5 + $0x60] sm:$0xff]
    %v324 = vld [vmem:[#allocation5 + $0x68] sm:$0xff]
    %v325 = vld [vmem:[#allocation5 + $0x70] sm:$0xff]
    %v326 = vld [vmem:[#allocation5 + $0x78] sm:$0xff]
    %v327 = vld [vmem:[#allocation5 + $0x80] sm:$0xff]
    %v328 = vld [vmem:[#allocation5 + $0x88] sm:$0xff]
    %v329 = vld [vmem:[#allocation5 + $0x90] sm:$0xff]
    %v330 = vld [vmem:[#allocation5 + $0x98] sm:$0xff]
    %v331 = vld [vmem:[#allocation5 + $0xa0] sm:$0xff]
    %v332 = vld [vmem:[#allocation5 + $0xa8] sm:$0xff]
    %v333 = vld [vmem:[#allocation5 + $0xb0] sm:$0xff]
    %v334 = vld [vmem:[#allocation5 + $0xb8] sm:$0xff]
    %v335 = vld [vmem:[#allocation5 + $0xc0] sm:$0xff]
    %v336 = vld [vmem:[#allocation5 + $0xc8] sm:$0xff]
    %v337 = vld [vmem:[#allocation5 + $0xd0] sm:$0xff]
    %v338 = vld [vmem:[#allocation5 + $0xd8] sm:$0xff]
    %v339 = vld [vmem:[#allocation5 + $0xe0] sm:$0xff]
    %v340 = vld [vmem:[#allocation5 + $0xe8] sm:$0xff]
    %v341 = vld [vmem:[#allocation5 + $0xf0] sm:$0xff]
    %v342 = vld [vmem:[#allocation5 + $0xf8] sm:$0xff]
    %v343 = vld [vmem:[#allocation5 + $0x100] sm:$0xff]
    %v344 = vld [vmem:[#allocation5 + $0x108] sm:$0xff]
    %v345 = vld [vmem:[#allocation5 + $0x110] sm:$0xff]
    %v346 = vld [vmem:[#allocation5 + $0x118] sm:$0xff]
    %v347 = vld [vmem:[#allocation5 + $0x120] sm:$0xff]
    %v348 = vld [vmem:[#allocation5 + $0x128] sm:$0xff]
    %v349 = vld [vmem:[#allocation5 + $0x130] sm:$0xff]
    %v350 = vld [vmem:[#allocation5 + $0x138] sm:$0xff]
    %v351 = vld [vmem:[#allocation5 + $0x140] sm:$0xff]
    %v352 = vld [vmem:[#allocation5 + $0x148] sm:$0xff]
    %v353 = vld [vmem:[#allocation5 + $0x150] sm:$0xff]
    %v354 = vld [vmem:[#allocation5 + $0x158] sm:$0xff]
    %v355 = vld [vmem:[#allocation5 + $0x160] sm:$0xff]
    %v356 = vld [vmem:[#allocation5 + $0x168] sm:$0xff]
    %v357 = vld [vmem:[#allocation5 + $0x170] sm:$0xff]
    %v358 = vld [vmem:[#allocation5 + $0x178] sm:$0xff]
    %v360 = vlaneseq
    %v361 = vshrl.u32 %v360, 7
    %v362 = vsub.s32 0, %v361
    %v363 = vrot.slane %v307, %v362
    %v364 = vlaneseq
    %v365 = vshrl.u32 %v364, 7
    %v366 = vsub.s32 1, %v365
    %v367 = vrot.slane %v307, %v366
    %v368 = vlaneseq
    %v369 = vshrl.u32 %v368, 7
    %v370 = vsub.s32 2, %v369
    %v371 = vrot.slane %v307, %v370
    %375 = vmatprep.subr.mxu0 %v312
    %376 = vmatpush1.msra.mxu0 %v311
    %377 = vmatprep.subr.mxu0 %v315
    %378 = vmatpush1.msra.mxu0 %v314
    %379 = vmatprep.subr.mxu0 %v318
    %380 = vmatpush1.msra.mxu0 %v317
    %381 = vmatprep.subr.mxu0 %v321
    %382 = vmatpush1.msra.mxu0 %v320
    %383 = vmatprep.subr.mxu0 %v324
    %384 = vmatpush1.msra.mxu0 %v323
    %385 = vmatprep.subr.mxu0 %v327
    %386 = vmatpush1.msra.mxu0 %v326
    %387 = vmatprep.subr.mxu0 %v330
    %388 = vmatpush1.msra.mxu0 %v329
    %389 = vmatprep.subr.mxu0 %v333
    %390 = vmatpush1.msra.mxu0 %v332
    %391 = vmatprep.subr.mxu0 %v336
    %392 = vmatpush1.msra.mxu0 %v335
    %393 = vmatprep.subr.mxu0 %v339
    %394 = vmatpush1.msra.mxu0 %v338
    %395 = vmatprep.subr.mxu0 %v342
    %396 = vmatpush1.msra.mxu0 %v341
    %397 = vmatprep.subr.mxu0 %v345
    %398 = vmatpush1.msra.mxu0 %v344
    %399 = vmatprep.subr.mxu0 %v348
    %400 = vmatpush1.msra.mxu0 %v347
    %401 = vmatprep.subr.mxu0 %v351
    %402 = vmatpush1.msra.mxu0 %v350
    %403 = vmatprep.subr.mxu0 %v354
    %404 = vmatpush1.msra.mxu0 %v353
    %405 = vmatprep.subr.mxu0 %v357
    %406 = vmatpush1.msra.mxu0 %v356
    %407 = vmatprep.subr.mxu0 0.0
    %408 = vmatpush1.msra.mxu0 0.0
    %409 = vmatprep.subr.mxu0 0.0
    %410 = vmatpush1.msra.mxu0 0.0
    %411 = vmatprep.subr.mxu0 0.0
    %412 = vmatpush1.msra.mxu0 0.0
    %413 = vmatprep.subr.mxu0 0.0
    %414 = vmatpush1.msra.mxu0 0.0
    %415 = vmatprep.subr.mxu0 0.0
    %416 = vmatpush1.msra.mxu0 0.0
    %417 = vmatprep.subr.mxu0 0.0
    %418 = vmatpush1.msra.mxu0 0.0
    %419 = vmatprep.subr.mxu0 0.0
    %420 = vmatpush1.msra.mxu0 0.0
    %421 = vmatprep.subr.mxu0 0.0
    %422 = vmatpush1.msra.mxu0 0.0
    %423 = vmatprep.subr.mxu0 0.0
    %424 = vmatpush1.msra.mxu0 0.0
    %425 = vmatprep.subr.mxu0 0.0
    %426 = vmatpush1.msra.mxu0 0.0
    %427 = vmatprep.subr.mxu0 0.0
    %428 = vmatpush1.msra.mxu0 0.0
    %429 = vmatprep.subr.mxu0 0.0
    %430 = vmatpush1.msra.mxu0 0.0
    %431 = vmatprep.subr.mxu0 0.0
    %432 = vmatpush1.msra.mxu0 0.0
    %433 = vmatprep.subr.mxu0 0.0
    %434 = vmatpush1.msra.mxu0 0.0
    %435 = vmatprep.subr.mxu0 0.0
    %436 = vmatpush1.msra.mxu0 0.0
    %437 = vmatprep.subr.mxu0 0.0
    %438 = vmatpush1.msra.mxu0 0.0
    %439 = vmatprep.mubr.f32.mxu0 0.0
    %440 = vmatmul.mubr.f32.gmra.mrb[0].mxu0 0.0
    %v441 = vpop.f32.mrb[0].mxu0
    %v442 = vadd.f32 %v363, %v441
    %v443 = vpop.f32.mrb[0].mxu0
    %v444 = vadd.f32 %v367, %v443
    %445 = vdwg.mxu0
    %446 = vmatprep.subr.mxu0 0.0
    %447 = vmatpush1.msra.mxu0 %v313
    %448 = vmatprep.subr.mxu0 0.0
    %449 = vmatpush1.msra.mxu0 %v316
    %450 = vmatprep.subr.mxu0 0.0
    %451 = vmatpush1.msra.mxu0 %v319
    %452 = vmatprep.subr.mxu0 0.0
    %453 = vmatpush1.msra.mxu0 %v322
    %454 = vmatprep.subr.mxu0 0.0
    %455 = vmatpush1.msra.mxu0 %v325
    %456 = vmatprep.subr.mxu0 0.0
    %457 = vmatpush1.msra.mxu0 %v328
    %458 = vmatprep.subr.mxu0 0.0
    %459 = vmatpush1.msra.mxu0 %v331
    %460 = vmatprep.subr.mxu0 0.0
    %461 = vmatpush1.msra.mxu0 %v334
    %462 = vmatprep.subr.mxu0 0.0
    %463 = vmatpush1.msra.mxu0 %v337
    %464 = vmatprep.subr.mxu0 0.0
    %465 = vmatpush1.msra.mxu0 %v340
    %466 = vmatprep.subr.mxu0 0.0
    %467 = vmatpush1.msra.mxu0 %v343
    %468 = vmatprep.subr.mxu0 0.0
    %469 = vmatpush1.msra.mxu0 %v346
    %470 = vmatprep.subr.mxu0 0.0
    %471 = vmatpush1.msra.mxu0 %v349
    %472 = vmatprep.subr.mxu0 0.0
    %473 = vmatpush1.msra.mxu0 %v352
    %474 = vmatprep.subr.mxu0 0.0
    %475 = vmatpush1.msra.mxu0 %v355
    %476 = vmatprep.subr.mxu0 0.0
    %477 = vmatpush1.msra.mxu0 %v358
    %478 = vmatprep.subr.mxu0 0.0
    %479 = vmatpush1.msra.mxu0 0.0
    %480 = vmatprep.subr.mxu0 0.0
    %481 = vmatpush1.msra.mxu0 0.0
    %482 = vmatprep.subr.mxu0 0.0
    %483 = vmatpush1.msra.mxu0 0.0
    %484 = vmatprep.subr.mxu0 0.0
    %485 = vmatpush1.msra.mxu0 0.0
    %486 = vmatprep.subr.mxu0 0.0
    %487 = vmatpush1.msra.mxu0 0.0
    %488 = vmatprep.subr.mxu0 0.0
    %489 = vmatpush1.msra.mxu0 0.0
    %490 = vmatprep.subr.mxu0 0.0
    %491 = vmatpush1.msra.mxu0 0.0
    %492 = vmatprep.subr.mxu0 0.0
    %493 = vmatpush1.msra.mxu0 0.0
    %494 = vmatprep.subr.mxu0 0.0
    %495 = vmatpush1.msra.mxu0 0.0
    %496 = vmatprep.subr.mxu0 0.0
    %497 = vmatpush1.msra.mxu0 0.0
    %498 = vmatprep.subr.mxu0 0.0
    %499 = vmatpush1.msra.mxu0 0.0
    %500 = vmatprep.subr.mxu0 0.0
    %501 = vmatpush1.msra.mxu0 0.0
    %502 = vmatprep.subr.mxu0 0.0
    %503 = vmatpush1.msra.mxu0 0.0
    %504 = vmatprep.subr.mxu0 0.0
    %505 = vmatpush1.msra.mxu0 0.0
    %506 = vmatprep.subr.mxu0 0.0
    %507 = vmatpush1.msra.mxu0 0.0
    %508 = vmatprep.subr.mxu0 0.0
    %509 = vmatpush1.msra.mxu0 0.0
    %510 = vmatprep.mubr.f32.mxu0 0.0
    %511 = vmatmul.mubr.f32.gmra.mrb[0].mxu0 0.0
    %v512 = vpop.f32.mrb[0].mxu0
    %v513 = vadd.f32 %v371, %v512
    %v514 = vpop.f32.mrb[0].mxu0
    %515 = vdwg.mxu0
    %v516 = vadd.f32 %v308, %v442
    %v517 = vxor.u32 %v516, 2147483648
    %v518 = vmul.f32 %v517, 1.442695
    %v519 = vpow.pop %v518
    %v520 = vadd.f32 %v519, 1.0
    %v521 = vrcp.pop %v520
    %v522 = vmul.f32 1.0, %v521
    %v523 = vadd.f32 %v309, %v444
    %v524 = vxor.u32 %v523, 2147483648
    %v525 = vmul.f32 %v524, 1.442695
    %v526 = vpow.pop %v525
    %v527 = vadd.f32 %v526, 1.0
    %v528 = vrcp.pop %v527
    %v529 = vmul.f32 1.0, %v528
    %v530 = vmul.f32 %v522, %v513
    %v531 = vadd.f32 %v310, %v530
    %v532 = vtanh.pop %v531
    %v533 = vsub.f32 1.0, %v529
    %v534 = vmul.f32 %v533, %v532
    %v535 = vmul.f32 %v529, 0.0
    %v536 = vadd.f32 %v534, %v535
    %537 = vst [vmem:[#allocation3] sm:$0x3] %v536
    %v538 = vld [vmem:[#allocation2] sm:$0xc]
    %v539 = vld [vmem:[#allocation2 + $0x8] sm:$0xc]
    %v540 = vld [vmem:[#allocation2 + $0x10] sm:$0xc]
    %v541 = vld [vmem:[#allocation5] sm:$0xff]
    %v542 = vld [vmem:[#allocation5 + $0x8] sm:$0xff]
    %v543 = vld [vmem:[#allocation5 + $0x10] sm:$0xff]
    %v544 = vld [vmem:[#allocation5 + $0x18] sm:$0xff]
    %v545 = vld [vmem:[#allocation5 + $0x20] sm:$0xff]
    %v546 = vld [vmem:[#allocation5 + $0x28] sm:$0xff]
    %v547 = vld [vmem:[#allocation5 + $0x30] sm:$0xff]
    %v548 = vld [vmem:[#allocation5 + $0x38] sm:$0xff]
    %v549 = vld [vmem:[#allocation5 + $0x40] sm:$0xff]
    %v550 = vld [vmem:[#allocation5 + $0x48] sm:$0xff]
    %v551 = vld [vmem:[#allocation5 + $0x50] sm:$0xff]
    %v552 = vld [vmem:[#allocation5 + $0x58] sm:$0xff]
    %v553 = vld [vmem:[#allocation5 + $0x60] sm:$0xff]
    %v554 = vld [vmem:[#allocation5 + $0x68] sm:$0xff]
    %v555 = vld [vmem:[#allocation5 + $0x70] sm:$0xff]
    %v556 = vld [vmem:[#allocation5 + $0x78] sm:$0xff]
    %v557 = vld [vmem:[#allocation5 + $0x80] sm:$0xff]
    %v558 = vld [vmem:[#allocation5 + $0x88] sm:$0xff]
    %v559 = vld [vmem:[#allocation5 + $0x90] sm:$0xff]
    %v560 = vld [vmem:[#allocation5 + $0x98] sm:$0xff]
    %v561 = vld [vmem:[#allocation5 + $0xa0] sm:$0xff]
    %v562 = vld [vmem:[#allocation5 + $0xa8] sm:$0xff]
    %v563 = vld [vmem:[#allocation5 + $0xb0] sm:$0xff]
    %v564 = vld [vmem:[#allocation5 + $0xb8] sm:$0xff]
    %v565 = vld [vmem:[#allocation5 + $0xc0] sm:$0xff]
    %v566 = vld [vmem:[#allocation5 + $0xc8] sm:$0xff]
    %v567 = vld [vmem:[#allocation5 + $0xd0] sm:$0xff]
    %v568 = vld [vmem:[#allocation5 + $0xd8] sm:$0xff]
    %v569 = vld [vmem:[#allocation5 + $0xe0] sm:$0xff]
    %v570 = vld [vmem:[#allocation5 + $0xe8] sm:$0xff]
    %v571 = vld [vmem:[#allocation5 + $0xf0] sm:$0xff]
    %v572 = vld [vmem:[#allocation5 + $0xf8] sm:$0xff]
    %v573 = vld [vmem:[#allocation5 + $0x100] sm:$0xff]
    %v574 = vld [vmem:[#allocation5 + $0x108] sm:$0xff]
    %v575 = vld [vmem:[#allocation5 + $0x110] sm:$0xff]
    %v576 = vld [vmem:[#allocation5 + $0x118] sm:$0xff]
    %v577 = vld [vmem:[#allocation5 + $0x120] sm:$0xff]
    %v578 = vld [vmem:[#allocation5 + $0x128] sm:$0xff]
    %v579 = vld [vmem:[#allocation5 + $0x130] sm:$0xff]
    %v580 = vld [vmem:[#allocation5 + $0x138] sm:$0xff]
    %v581 = vld [vmem:[#allocation5 + $0x140] sm:$0xff]
    %v582 = vld [vmem:[#allocation5 + $0x148] sm:$0xff]
    %v583 = vld [vmem:[#allocation5 + $0x150] sm:$0xff]
    %v584 = vld [vmem:[#allocation5 + $0x158] sm:$0xff]
    %v585 = vld [vmem:[#allocation5 + $0x160] sm:$0xff]
    %v586 = vld [vmem:[#allocation5 + $0x168] sm:$0xff]
    %v587 = vld [vmem:[#allocation5 + $0x170] sm:$0xff]
    %v588 = vld [vmem:[#allocation5 + $0x178] sm:$0xff]
    %589 = vmatprep.subr.mxu0 %v542
    %590 = vmatpush1.msra.mxu0 %v541
    %591 = vmatprep.subr.mxu0 %v545
    %592 = vmatpush1.msra.mxu0 %v544
    %593 = vmatprep.subr.mxu0 %v548
    %594 = vmatpush1.msra.mxu0 %v547
    %595 = vmatprep.subr.mxu0 %v551
    %596 = vmatpush1.msra.mxu0 %v550
    %597 = vmatprep.subr.mxu0 %v554
    %598 = vmatpush1.msra.mxu0 %v553
    %599 = vmatprep.subr.mxu0 %v557
    %600 = vmatpush1.msra.mxu0 %v556
    %601 = vmatprep.subr.mxu0 %v560
    %602 = vmatpush1.msra.mxu0 %v559
    %603 = vmatprep.subr.mxu0 %v563
    %604 = vmatpush1.msra.mxu0 %v562
    %605 = vmatprep.subr.mxu0 %v566
    %606 = vmatpush1.msra.mxu0 %v565
    %607 = vmatprep.subr.mxu0 %v569
    %608 = vmatpush1.msra.mxu0 %v568
    %609 = vmatprep.subr.mxu0 %v572
    %610 = vmatpush1.msra.mxu0 %v571
    %611 = vmatprep.subr.mxu0 %v575
    %612 = vmatpush1.msra.mxu0 %v574
    %613 = vmatprep.subr.mxu0 %v578
    %614 = vmatpush1.msra.mxu0 %v577
    %615 = vmatprep.subr.mxu0 %v581
    %616 = vmatpush1.msra.mxu0 %v580
    %617 = vmatprep.subr.mxu0 %v584
    %618 = vmatpush1.msra.mxu0 %v583
    %619 = vmatprep.subr.mxu0 %v587
    %620 = vmatpush1.msra.mxu0 %v586
    %621 = vmatprep.subr.mxu0 0.0
    %622 = vmatpush1.msra.mxu0 0.0
    %623 = vmatprep.subr.mxu0 0.0
    %624 = vmatpush1.msra.mxu0 0.0
    %625 = vmatprep.subr.mxu0 0.0
    %626 = vmatpush1.msra.mxu0 0.0
    %627 = vmatprep.subr.mxu0 0.0
    %628 = vmatpush1.msra.mxu0 0.0
    %629 = vmatprep.subr.mxu0 0.0
    %630 = vmatpush1.msra.mxu0 0.0
    %631 = vmatprep.subr.mxu0 0.0
    %632 = vmatpush1.msra.mxu0 0.0
    %633 = vmatprep.subr.mxu0 0.0
    %634 = vmatpush1.msra.mxu0 0.0
    %635 = vmatprep.subr.mxu0 0.0
    %636 = vmatpush1.msra.mxu0 0.0
    %637 = vmatprep.subr.mxu0 0.0
    %638 = vmatpush1.msra.mxu0 0.0
    %639 = vmatprep.subr.mxu0 0.0
    %640 = vmatpush1.msra.mxu0 0.0
    %641 = vmatprep.subr.mxu0 0.0
    %642 = vmatpush1.msra.mxu0 0.0
    %643 = vmatprep.subr.mxu0 0.0
    %644 = vmatpush1.msra.mxu0 0.0
    %645 = vmatprep.subr.mxu0 0.0
    %646 = vmatpush1.msra.mxu0 0.0
    %647 = vmatprep.subr.mxu0 0.0
    %648 = vmatpush1.msra.mxu0 0.0
    %649 = vmatprep.subr.mxu0 0.0
    %650 = vmatpush1.msra.mxu0 0.0
    %651 = vmatprep.subr.mxu0 0.0
    %652 = vmatpush1.msra.mxu0 0.0
    %653 = vmatprep.mubr.f32.mxu0 0.0
    %654 = vmatmul.mubr.f32.gmra.mrb[0].mxu0 %v536
    %v655 = vpop.f32.mrb[0].mxu0
    %v656 = vadd.f32 %v363, %v655
    %v657 = vpop.f32.mrb[0].mxu0
    %v658 = vadd.f32 %v367, %v657
    %659 = vdwg.mxu0
    %660 = vmatprep.subr.mxu0 0.0
    %661 = vmatpush1.msra.mxu0 %v543
    %662 = vmatprep.subr.mxu0 0.0
    %663 = vmatpush1.msra.mxu0 %v546
    %664 = vmatprep.subr.mxu0 0.0
    %665 = vmatpush1.msra.mxu0 %v549
    %666 = vmatprep.subr.mxu0 0.0
    %667 = vmatpush1.msra.mxu0 %v552
    %668 = vmatprep.subr.mxu0 0.0
    %669 = vmatpush1.msra.mxu0 %v555
    %670 = vmatprep.subr.mxu0 0.0
    %671 = vmatpush1.msra.mxu0 %v558
    %672 = vmatprep.subr.mxu0 0.0
    %673 = vmatpush1.msra.mxu0 %v561
    %674 = vmatprep.subr.mxu0 0.0
    %675 = vmatpush1.msra.mxu0 %v564
    %676 = vmatprep.subr.mxu0 0.0
    %677 = vmatpush1.msra.mxu0 %v567
    %678 = vmatprep.subr.mxu0 0.0
    %679 = vmatpush1.msra.mxu0 %v570
    %680 = vmatprep.subr.mxu0 0.0
    %681 = vmatpush1.msra.mxu0 %v573
    %682 = vmatprep.subr.mxu0 0.0
    %683 = vmatpush1.msra.mxu0 %v576
    %684 = vmatprep.subr.mxu0 0.0
    %685 = vmatpush1.msra.mxu0 %v579
    %686 = vmatprep.subr.mxu0 0.0
    %687 = vmatpush1.msra.mxu0 %v582
    %688 = vmatprep.subr.mxu0 0.0
    %689 = vmatpush1.msra.mxu0 %v585
    %690 = vmatprep.subr.mxu0 0.0
    %691 = vmatpush1.msra.mxu0 %v588
    %692 = vmatprep.subr.mxu0 0.0
    %693 = vmatpush1.msra.mxu0 0.0
    %694 = vmatprep.subr.mxu0 0.0
    %695 = vmatpush1.msra.mxu0 0.0
    %696 = vmatprep.subr.mxu0 0.0
    %697 = vmatpush1.msra.mxu0 0.0
    %698 = vmatprep.subr.mxu0 0.0
    %699 = vmatpush1.msra.mxu0 0.0
    %700 = vmatprep.subr.mxu0 0.0
    %701 = vmatpush1.msra.mxu0 0.0
    %702 = vmatprep.subr.mxu0 0.0
    %703 = vmatpush1.msra.mxu0 0.0
    %704 = vmatprep.subr.mxu0 0.0
    %705 = vmatpush1.msra.mxu0 0.0
    %706 = vmatprep.subr.mxu0 0.0
    %707 = vmatpush1.msra.mxu0 0.0
    %708 = vmatprep.subr.mxu0 0.0
    %709 = vmatpush1.msra.mxu0 0.0
    %710 = vmatprep.subr.mxu0 0.0
    %711 = vmatpush1.msra.mxu0 0.0
    %712 = vmatprep.subr.mxu0 0.0
    %713 = vmatpush1.msra.mxu0 0.0
    %714 = vmatprep.subr.mxu0 0.0
    %715 = vmatpush1.msra.mxu0 0.0
    %716 = vmatprep.subr.mxu0 0.0
    %717 = vmatpush1.msra.mxu0 0.0
    %718 = vmatprep.subr.mxu0 0.0
    %719 = vmatpush1.msra.mxu0 0.0
    %720 = vmatprep.subr.mxu0 0.0
    %721 = vmatpush1.msra.mxu0 0.0
    %722 = vmatprep.subr.mxu0 0.0
    %723 = vmatpush1.msra.mxu0 0.0
    %724 = vmatprep.mubr.f32.mxu0 0.0
    %725 = vmatmul.mubr.f32.gmra.mrb[0].mxu0 %v536
    %v726 = vpop.f32.mrb[0].mxu0
    %v727 = vadd.f32 %v371, %v726
    %v728 = vpop.f32.mrb[0].mxu0
    %729 = vdwg.mxu0
    %v731 = vrot.slane %v656, 6
    %v733 = vadd.f32 %v538, %v731
    %v734 = vxor.u32 %v733, 2147483648
    %v735 = vmul.f32 %v734, 1.442695
    %v736 = vpow.pop %v735
    %v737 = vadd.f32 %v736, 1.0
    %v738 = vrcp.pop %v737
    %v739 = vmul.f32 1.0, %v738
    %v741 = vrot.slane %v658, 6
    %v743 = vadd.f32 %v539, %v741
    %v744 = vxor.u32 %v743, 2147483648
    %v745 = vmul.f32 %v744, 1.442695
    %v746 = vpow.pop %v745
    %v747 = vadd.f32 %v746, 1.0
    %v748 = vrcp.pop %v747
    %v749 = vmul.f32 1.0, %v748
    %v751 = vrot.slane %v727, 6
    %v753 = vmul.f32 %v739, %v751
    %v754 = vadd.f32 %v540, %v753
    %v755 = vtanh.pop %v754
    %v756 = vsub.f32 1.0, %v749
    %v757 = vmul.f32 %v756, %v755
    %v759 = vrot.slane %v536, 6
    %v761 = vmul.f32 %v749, %v759
    %v762 = vadd.f32 %v757, %v761
    %763 = vst [vmem:[#allocation3] sm:$0xc] %v762
    %v764 = vld [vmem:[#allocation2] sm:$0x30]
    %v765 = vld [vmem:[#allocation2 + $0x8] sm:$0x30]
    %v766 = vld [vmem:[#allocation2 + $0x10] sm:$0x30]
    %v767 = vld [vmem:[#allocation5] sm:$0xff]
    %v768 = vld [vmem:[#allocation5 + $0x8] sm:$0xff]
    %v769 = vld [vmem:[#allocation5 + $0x10] sm:$0xff]
    %v770 = vld [vmem:[#allocation5 + $0x18] sm:$0xff]
    %v771 = vld [vmem:[#allocation5 + $0x20] sm:$0xff]
    %v772 = vld [vmem:[#allocation5 + $0x28] sm:$0xff]
    %v773 = vld [vmem:[#allocation5 + $0x30] sm:$0xff]
    %v774 = vld [vmem:[#allocation5 + $0x38] sm:$0xff]
    %v775 = vld [vmem:[#allocation5 + $0x40] sm:$0xff]
    %v776 = vld [vmem:[#allocation5 + $0x48] sm:$0xff]
    %v777 = vld [vmem:[#allocation5 + $0x50] sm:$0xff]
    %v778 = vld [vmem:[#allocation5 + $0x58] sm:$0xff]
    %v779 = vld [vmem:[#allocation5 + $0x60] sm:$0xff]
    %v780 = vld [vmem:[#allocation5 + $0x68] sm:$0xff]
    %v781 = vld [vmem:[#allocation5 + $0x70] sm:$0xff]
    %v782 = vld [vmem:[#allocation5 + $0x78] sm:$0xff]
    %v783 = vld [vmem:[#allocation5 + $0x80] sm:$0xff]
    %v784 = vld [vmem:[#allocation5 + $0x88] sm:$0xff]
    %v785 = vld [vmem:[#allocation5 + $0x90] sm:$0xff]
    %v786 = vld [vmem:[#allocation5 + $0x98] sm:$0xff]
    %v787 = vld [vmem:[#allocation5 + $0xa0] sm:$0xff]
    %v788 = vld [vmem:[#allocation5 + $0xa8] sm:$0xff]
    %v789 = vld [vmem:[#allocation5 + $0xb0] sm:$0xff]
    %v790 = vld [vmem:[#allocation5 + $0xb8] sm:$0xff]
    %v791 = vld [vmem:[#allocation5 + $0xc0] sm:$0xff]
    %v792 = vld [vmem:[#allocation5 + $0xc8] sm:$0xff]
    %v793 = vld [vmem:[#allocation5 + $0xd0] sm:$0xff]
    %v794 = vld [vmem:[#allocation5 + $0xd8] sm:$0xff]
    %v795 = vld [vmem:[#allocation5 + $0xe0] sm:$0xff]
    %v796 = vld [vmem:[#allocation5 + $0xe8] sm:$0xff]
    %v797 = vld [vmem:[#allocation5 + $0xf0] sm:$0xff]
    %v798 = vld [vmem:[#allocation5 + $0xf8] sm:$0xff]
    %v799 = vld [vmem:[#allocation5 + $0x100] sm:$0xff]
    %v800 = vld [vmem:[#allocation5 + $0x108] sm:$0xff]
    %v801 = vld [vmem:[#allocation5 + $0x110] sm:$0xff]
    %v802 = vld [vmem:[#allocation5 + $0x118] sm:$0xff]
    %v803 = vld [vmem:[#allocation5 + $0x120] sm:$0xff]
    %v804 = vld [vmem:[#allocation5 + $0x128] sm:$0xff]
    %v805 = vld [vmem:[#allocation5 + $0x130] sm:$0xff]
    %v806 = vld [vmem:[#allocation5 + $0x138] sm:$0xff]
    %v807 = vld [vmem:[#allocation5 + $0x140] sm:$0xff]
    %v808 = vld [vmem:[#allocation5 + $0x148] sm:$0xff]
    %v809 = vld [vmem:[#allocation5 + $0x150] sm:$0xff]
    %v810 = vld [vmem:[#allocation5 + $0x158] sm:$0xff]
    %v811 = vld [vmem:[#allocation5 + $0x160] sm:$0xff]
    %v812 = vld [vmem:[#allocation5 + $0x168] sm:$0xff]
    %v813 = vld [vmem:[#allocation5 + $0x170] sm:$0xff]
    %v814 = vld [vmem:[#allocation5 + $0x178] sm:$0xff]
    %v816 = vrot.slane %v762, 2
    %818 = vmatprep.subr.mxu0 %v768
    %819 = vmatpush1.msra.mxu0 %v767
    %820 = vmatprep.subr.mxu0 %v771
    %821 = vmatpush1.msra.mxu0 %v770
    %822 = vmatprep.subr.mxu0 %v774
    %823 = vmatpush1.msra.mxu0 %v773
    %824 = vmatprep.subr.mxu0 %v777
    %825 = vmatpush1.msra.mxu0 %v776
    %826 = vmatprep.subr.mxu0 %v780
    %827 = vmatpush1.msra.mxu0 %v779
    %828 = vmatprep.subr.mxu0 %v783
    %829 = vmatpush1.msra.mxu0 %v782
    %830 = vmatprep.subr.mxu0 %v786
    %831 = vmatpush1.msra.mxu0 %v785
    %832 = vmatprep.subr.mxu0 %v789
    %833 = vmatpush1.msra.mxu0 %v788
    %834 = vmatprep.subr.mxu0 %v792
    %835 = vmatpush1.msra.mxu0 %v791
    %836 = vmatprep.subr.mxu0 %v795
    %837 = vmatpush1.msra.mxu0 %v794
    %838 = vmatprep.subr.mxu0 %v798
    %839 = vmatpush1.msra.mxu0 %v797
    %840 = vmatprep.subr.mxu0 %v801
    %841 = vmatpush1.msra.mxu0 %v800
    %842 = vmatprep.subr.mxu0 %v804
    %843 = vmatpush1.msra.mxu0 %v803
    %844 = vmatprep.subr.mxu0 %v807
    %845 = vmatpush1.msra.mxu0 %v806
    %846 = vmatprep.subr.mxu0 %v810
    %847 = vmatpush1.msra.mxu0 %v809
    %848 = vmatprep.subr.mxu0 %v813
    %849 = vmatpush1.msra.mxu0 %v812
    %850 = vmatprep.subr.mxu0 0.0
    %851 = vmatpush1.msra.mxu0 0.0
    %852 = vmatprep.subr.mxu0 0.0
    %853 = vmatpush1.msra.mxu0 0.0
    %854 = vmatprep.subr.mxu0 0.0
    %855 = vmatpush1.msra.mxu0 0.0
    %856 = vmatprep.subr.mxu0 0.0
    %857 = vmatpush1.msra.mxu0 0.0
    %858 = vmatprep.subr.mxu0 0.0
    %859 = vmatpush1.msra.mxu0 0.0
    %860 = vmatprep.subr.mxu0 0.0
    %861 = vmatpush1.msra.mxu0 0.0
    %862 = vmatprep.subr.mxu0 0.0
    %863 = vmatpush1.msra.mxu0 0.0
    %864 = vmatprep.subr.mxu0 0.0
    %865 = vmatpush1.msra.mxu0 0.0
    %866 = vmatprep.subr.mxu0 0.0
    %867 = vmatpush1.msra.mxu0 0.0
    %868 = vmatprep.subr.mxu0 0.0
    %869 = vmatpush1.msra.mxu0 0.0
    %870 = vmatprep.subr.mxu0 0.0
    %871 = vmatpush1.msra.mxu0 0.0
    %872 = vmatprep.subr.mxu0 0.0
    %873 = vmatpush1.msra.mxu0 0.0
    %874 = vmatprep.subr.mxu0 0.0
    %875 = vmatpush1.msra.mxu0 0.0
    %876 = vmatprep.subr.mxu0 0.0
    %877 = vmatpush1.msra.mxu0 0.0
    %878 = vmatprep.subr.mxu0 0.0
    %879 = vmatpush1.msra.mxu0 0.0
    %880 = vmatprep.subr.mxu0 0.0
    %881 = vmatpush1.msra.mxu0 0.0
    %882 = vmatprep.mubr.f32.mxu0 0.0
    %883 = vmatmul.mubr.f32.gmra.mrb[0].mxu0 %v816
    %v884 = vpop.f32.mrb[0].mxu0
    %v885 = vadd.f32 %v363, %v884
    %v886 = vpop.f32.mrb[0].mxu0
    %v887 = vadd.f32 %v367, %v886
    %888 = vdwg.mxu0
    %889 = vmatprep.subr.mxu0 0.0
    %890 = vmatpush1.msra.mxu0 %v769
    %891 = vmatprep.subr.mxu0 0.0
    %892 = vmatpush1.msra.mxu0 %v772
    %893 = vmatprep.subr.mxu0 0.0
    %894 = vmatpush1.msra.mxu0 %v775
    %895 = vmatprep.subr.mxu0 0.0
    %896 = vmatpush1.msra.mxu0 %v778
    %897 = vmatprep.subr.mxu0 0.0
    %898 = vmatpush1.msra.mxu0 %v781
    %899 = vmatprep.subr.mxu0 0.0
    %900 = vmatpush1.msra.mxu0 %v784
    %901 = vmatprep.subr.mxu0 0.0
    %902 = vmatpush1.msra.mxu0 %v787
    %903 = vmatprep.subr.mxu0 0.0
    %904 = vmatpush1.msra.mxu0 %v790
    %905 = vmatprep.subr.mxu0 0.0
    %906 = vmatpush1.msra.mxu0 %v793
    %907 = vmatprep.subr.mxu0 0.0
    %908 = vmatpush1.msra.mxu0 %v796
    %909 = vmatprep.subr.mxu0 0.0
    %910 = vmatpush1.msra.mxu0 %v799
    %911 = vmatprep.subr.mxu0 0.0
    %912 = vmatpush1.msra.mxu0 %v802
    %913 = vmatprep.subr.mxu0 0.0
    %914 = vmatpush1.msra.mxu0 %v805
    %915 = vmatprep.subr.mxu0 0.0
    %916 = vmatpush1.msra.mxu0 %v808
    %917 = vmatprep.subr.mxu0 0.0
    %918 = vmatpush1.msra.mxu0 %v811
    %919 = vmatprep.subr.mxu0 0.0
    %920 = vmatpush1.msra.mxu0 %v814
    %921 = vmatprep.subr.mxu0 0.0
    %922 = vmatpush1.msra.mxu0 0.0
    %923 = vmatprep.subr.mxu0 0.0
    %924 = vmatpush1.msra.mxu0 0.0
    %925 = vmatprep.subr.mxu0 0.0
    %926 = vmatpush1.msra.mxu0 0.0
    %927 = vmatprep.subr.mxu0 0.0
    %928 = vmatpush1.msra.mxu0 0.0
    %929 = vmatprep.subr.mxu0 0.0
    %930 = vmatpush1.msra.mxu0 0.0
    %931 = vmatprep.subr.mxu0 0.0
    %932 = vmatpush1.msra.mxu0 0.0
    %933 = vmatprep.subr.mxu0 0.0
    %934 = vmatpush1.msra.mxu0 0.0
    %935 = vmatprep.subr.mxu0 0.0
    %936 = vmatpush1.msra.mxu0 0.0
    %937 = vmatprep.subr.mxu0 0.0
    %938 = vmatpush1.msra.mxu0 0.0
    %939 = vmatprep.subr.mxu0 0.0
    %940 = vmatpush1.msra.mxu0 0.0
    %941 = vmatprep.subr.mxu0 0.0
    %942 = vmatpush1.msra.mxu0 0.0
    %943 = vmatprep.subr.mxu0 0.0
    %944 = vmatpush1.msra.mxu0 0.0
    %945 = vmatprep.subr.mxu0 0.0
    %946 = vmatpush1.msra.mxu0 0.0
    %947 = vmatprep.subr.mxu0 0.0
    %948 = vmatpush1.msra.mxu0 0.0
    %949 = vmatprep.subr.mxu0 0.0
    %950 = vmatpush1.msra.mxu0 0.0
    %951 = vmatprep.subr.mxu0 0.0
    %952 = vmatpush1.msra.mxu0 0.0
    %953 = vmatprep.mubr.f32.mxu0 0.0
    %954 = vmatmul.mubr.f32.gmra.mrb[0].mxu0 %v816
    %v955 = vpop.f32.mrb[0].mxu0
    %v956 = vadd.f32 %v371, %v955
    %v957 = vpop.f32.mrb[0].mxu0
    %958 = vdwg.mxu0
    %v960 = vrot.slane %v885, 4
    %v962 = vadd.f32 %v764, %v960
    %v963 = vxor.u32 %v962, 2147483648
    %v964 = vmul.f32 %v963, 1.442695
    %v965 = vpow.pop %v964
    %v966 = vadd.f32 %v965, 1.0
    %v967 = vrcp.pop %v966
    %v968 = vmul.f32 1.0, %v967
    %v970 = vrot.slane %v887, 4
    %v972 = vadd.f32 %v765, %v970
    %v973 = vxor.u32 %v972, 2147483648
    %v974 = vmul.f32 %v973, 1.442695
    %v975 = vpow.pop %v974
    %v976 = vadd.f32 %v975, 1.0
    %v977 = vrcp.pop %v976
    %v978 = vmul.f32 1.0, %v977
    %v980 = vrot.slane %v956, 4
    %v982 = vmul.f32 %v968, %v980
    %v983 = vadd.f32 %v766, %v982
    %v984 = vtanh.pop %v983
    %v985 = vsub.f32 1.0, %v978
    %v986 = vmul.f32 %v985, %v984
    %v987 = vrot.slane %v762, 6
    %v989 = vmul.f32 %v978, %v987
    %v990 = vadd.f32 %v986, %v989
    %991 = vst [vmem:[#allocation3] sm:$0x30] %v990
    %v992 = vld [vmem:[#allocation2] sm:$0xc0]
    %v993 = vld [vmem:[#allocation2 + $0x8] sm:$0xc0]
    %v994 = vld [vmem:[#allocation2 + $0x10] sm:$0xc0]
    %v995 = vld [vmem:[#allocation5] sm:$0xff]
    %v996 = vld [vmem:[#allocation5 + $0x8] sm:$0xff]
    %v997 = vld [vmem:[#allocation5 + $0x10] sm:$0xff]
    %v998 = vld [vmem:[#allocation5 + $0x18] sm:$0xff]
    %v999 = vld [vmem:[#allocation5 + $0x20] sm:$0xff]
    %v1000 = vld [vmem:[#allocation5 + $0x28] sm:$0xff]
    %v1001 = vld [vmem:[#allocation5 + $0x30] sm:$0xff]
    %v1002 = vld [vmem:[#allocation5 + $0x38] sm:$0xff]
    %v1003 = vld [vmem:[#allocation5 + $0x40] sm:$0xff]
    %v1004 = vld [vmem:[#allocation5 + $0x48] sm:$0xff]
    %v1005 = vld [vmem:[#allocation5 + $0x50] sm:$0xff]
    %v1006 = vld [vmem:[#allocation5 + $0x58] sm:$0xff]
    %v1007 = vld [vmem:[#allocation5 + $0x60] sm:$0xff]
    %v1008 = vld [vmem:[#allocation5 + $0x68] sm:$0xff]
    %v1009 = vld [vmem:[#allocation5 + $0x70] sm:$0xff]
    %v1010 = vld [vmem:[#allocation5 + $0x78] sm:$0xff]
    %v1011 = vld [vmem:[#allocation5 + $0x80] sm:$0xff]
    %v1012 = vld [vmem:[#allocation5 + $0x88] sm:$0xff]
    %v1013 = vld [vmem:[#allocation5 + $0x90] sm:$0xff]
    %v1014 = vld [vmem:[#allocation5 + $0x98] sm:$0xff]
    %v1015 = vld [vmem:[#allocation5 + $0xa0] sm:$0xff]
    %v1016 = vld [vmem:[#allocation5 + $0xa8] sm:$0xff]
    %v1017 = vld [vmem:[#allocation5 + $0xb0] sm:$0xff]
    %v1018 = vld [vmem:[#allocation5 + $0xb8] sm:$0xff]
    %v1019 = vld [vmem:[#allocation5 + $0xc0] sm:$0xff]
    %v1020 = vld [vmem:[#allocation5 + $0xc8] sm:$0xff]
    %v1021 = vld [vmem:[#allocation5 + $0xd0] sm:$0xff]
    %v1022 = vld [vmem:[#allocation5 + $0xd8] sm:$0xff]
    %v1023 = vld [vmem:[#allocation5 + $0xe0] sm:$0xff]
    %v1024 = vld [vmem:[#allocation5 + $0xe8] sm:$0xff]
    %v1025 = vld [vmem:[#allocation5 + $0xf0] sm:$0xff]
    %v1026 = vld [vmem:[#allocation5 + $0xf8] sm:$0xff]
    %v1027 = vld [vmem:[#allocation5 + $0x100] sm:$0xff]
    %v1028 = vld [vmem:[#allocation5 + $0x108] sm:$0xff]
    %v1029 = vld [vmem:[#allocation5 + $0x110] sm:$0xff]
    %v1030 = vld [vmem:[#allocation5 + $0x118] sm:$0xff]
    %v1031 = vld [vmem:[#allocation5 + $0x120] sm:$0xff]
    %v1032 = vld [vmem:[#allocation5 + $0x128] sm:$0xff]
    %v1033 = vld [vmem:[#allocation5 + $0x130] sm:$0xff]
    %v1034 = vld [vmem:[#allocation5 + $0x138] sm:$0xff]
    %v1035 = vld [vmem:[#allocation5 + $0x140] sm:$0xff]
    %v1036 = vld [vmem:[#allocation5 + $0x148] sm:$0xff]
    %v1037 = vld [vmem:[#allocation5 + $0x150] sm:$0xff]
    %v1038 = vld [vmem:[#allocation5 + $0x158] sm:$0xff]
    %v1039 = vld [vmem:[#allocation5 + $0x160] sm:$0xff]
    %v1040 = vld [vmem:[#allocation5 + $0x168] sm:$0xff]
    %v1041 = vld [vmem:[#allocation5 + $0x170] sm:$0xff]
    %v1042 = vld [vmem:[#allocation5 + $0x178] sm:$0xff]
    %v1044 = vrot.slane %v990, 4
    %1046 = vmatprep.subr.mxu0 %v996
    %1047 = vmatpush1.msra.mxu0 %v995
    %1048 = vmatprep.subr.mxu0 %v999
    %1049 = vmatpush1.msra.mxu0 %v998
    %1050 = vmatprep.subr.mxu0 %v1002
    %1051 = vmatpush1.msra.mxu0 %v1001
    %1052 = vmatprep.subr.mxu0 %v1005
    %1053 = vmatpush1.msra.mxu0 %v1004
    %1054 = vmatprep.subr.mxu0 %v1008
    %1055 = vmatpush1.msra.mxu0 %v1007
    %1056 = vmatprep.subr.mxu0 %v1011
    %1057 = vmatpush1.msra.mxu0 %v1010
    %1058 = vmatprep.subr.mxu0 %v1014
    %1059 = vmatpush1.msra.mxu0 %v1013
    %1060 = vmatprep.subr.mxu0 %v1017
    %1061 = vmatpush1.msra.mxu0 %v1016
    %1062 = vmatprep.subr.mxu0 %v1020
    %1063 = vmatpush1.msra.mxu0 %v1019
    %1064 = vmatprep.subr.mxu0 %v1023
    %1065 = vmatpush1.msra.mxu0 %v1022
    %1066 = vmatprep.subr.mxu0 %v1026
    %1067 = vmatpush1.msra.mxu0 %v1025
    %1068 = vmatprep.subr.mxu0 %v1029
    %1069 = vmatpush1.msra.mxu0 %v1028
    %1070 = vmatprep.subr.mxu0 %v1032
    %1071 = vmatpush1.msra.mxu0 %v1031
    %1072 = vmatprep.subr.mxu0 %v1035
    %1073 = vmatpush1.msra.mxu0 %v1034
    %1074 = vmatprep.subr.mxu0 %v1038
    %1075 = vmatpush1.msra.mxu0 %v1037
    %1076 = vmatprep.subr.mxu0 %v1041
    %1077 = vmatpush1.msra.mxu0 %v1040
    %1078 = vmatprep.subr.mxu0 0.0
    %1079 = vmatpush1.msra.mxu0 0.0
    %1080 = vmatprep.subr.mxu0 0.0
    %1081 = vmatpush1.msra.mxu0 0.0
    %1082 = vmatprep.subr.mxu0 0.0
    %1083 = vmatpush1.msra.mxu0 0.0
    %1084 = vmatprep.subr.mxu0 0.0
    %1085 = vmatpush1.msra.mxu0 0.0
    %1086 = vmatprep.subr.mxu0 0.0
    %1087 = vmatpush1.msra.mxu0 0.0
    %1088 = vmatprep.subr.mxu0 0.0
    %1089 = vmatpush1.msra.mxu0 0.0
    %1090 = vmatprep.subr.mxu0 0.0
    %1091 = vmatpush1.msra.mxu0 0.0
    %1092 = vmatprep.subr.mxu0 0.0
    %1093 = vmatpush1.msra.mxu0 0.0
    %1094 = vmatprep.subr.mxu0 0.0
    %1095 = vmatpush1.msra.mxu0 0.0
    %1096 = vmatprep.subr.mxu0 0.0
    %1097 = vmatpush1.msra.mxu0 0.0
    %1098 = vmatprep.subr.mxu0 0.0
    %1099 = vmatpush1.msra.mxu0 0.0
    %1100 = vmatprep.subr.mxu0 0.0
    %1101 = vmatpush1.msra.mxu0 0.0
    %1102 = vmatprep.subr.mxu0 0.0
    %1103 = vmatpush1.msra.mxu0 0.0
    %1104 = vmatprep.subr.mxu0 0.0
    %1105 = vmatpush1.msra.mxu0 0.0
    %1106 = vmatprep.subr.mxu0 0.0
    %1107 = vmatpush1.msra.mxu0 0.0
    %1108 = vmatprep.subr.mxu0 0.0
    %1109 = vmatpush1.msra.mxu0 0.0
    %1110 = vmatprep.mubr.f32.mxu0 0.0
    %1111 = vmatmul.mubr.f32.gmra.mrb[0].mxu0 %v1044
    %v1112 = vpop.f32.mrb[0].mxu0
    %v1113 = vadd.f32 %v363, %v1112
    %v1114 = vpop.f32.mrb[0].mxu0
    %v1115 = vadd.f32 %v367, %v1114
    %1116 = vdwg.mxu0
    %1117 = vmatprep.subr.mxu0 0.0
    %1118 = vmatpush1.msra.mxu0 %v997
    %1119 = vmatprep.subr.mxu0 0.0
    %1120 = vmatpush1.msra.mxu0 %v1000
    %1121 = vmatprep.subr.mxu0 0.0
    %1122 = vmatpush1.msra.mxu0 %v1003
    %1123 = vmatprep.subr.mxu0 0.0
    %1124 = vmatpush1.msra.mxu0 %v1006
    %1125 = vmatprep.subr.mxu0 0.0
    %1126 = vmatpush1.msra.mxu0 %v1009
    %1127 = vmatprep.subr.mxu0 0.0
    %1128 = vmatpush1.msra.mxu0 %v1012
    %1129 = vmatprep.subr.mxu0 0.0
    %1130 = vmatpush1.msra.mxu0 %v1015
    %1131 = vmatprep.subr.mxu0 0.0
    %1132 = vmatpush1.msra.mxu0 %v1018
    %1133 = vmatprep.subr.mxu0 0.0
    %1134 = vmatpush1.msra.mxu0 %v1021
    %1135 = vmatprep.subr.mxu0 0.0
    %1136 = vmatpush1.msra.mxu0 %v1024
    %1137 = vmatprep.subr.mxu0 0.0
    %1138 = vmatpush1.msra.mxu0 %v1027
    %1139 = vmatprep.subr.mxu0 0.0
    %1140 = vmatpush1.msra.mxu0 %v1030
    %1141 = vmatprep.subr.mxu0 0.0
    %1142 = vmatpush1.msra.mxu0 %v1033
    %1143 = vmatprep.subr.mxu0 0.0
    %1144 = vmatpush1.msra.mxu0 %v1036
    %1145 = vmatprep.subr.mxu0 0.0
    %1146 = vmatpush1.msra.mxu0 %v1039
    %1147 = vmatprep.subr.mxu0 0.0
    %1148 = vmatpush1.msra.mxu0 %v1042
    %1149 = vmatprep.subr.mxu0 0.0
    %1150 = vmatpush1.msra.mxu0 0.0
    %1151 = vmatprep.subr.mxu0 0.0
    %1152 = vmatpush1.msra.mxu0 0.0
    %1153 = vmatprep.subr.mxu0 0.0
    %1154 = vmatpush1.msra.mxu0 0.0
    %1155 = vmatprep.subr.mxu0 0.0
    %1156 = vmatpush1.msra.mxu0 0.0
    %1157 = vmatprep.subr.mxu0 0.0
    %1158 = vmatpush1.msra.mxu0 0.0
    %1159 = vmatprep.subr.mxu0 0.0
    %1160 = vmatpush1.msra.mxu0 0.0
    %1161 = vmatprep.subr.mxu0 0.0
    %1162 = vmatpush1.msra.mxu0 0.0
    %1163 = vmatprep.subr.mxu0 0.0
    %1164 = vmatpush1.msra.mxu0 0.0
    %1165 = vmatprep.subr.mxu0 0.0
    %1166 = vmatpush1.msra.mxu0 0.0
    %1167 = vmatprep.subr.mxu0 0.0
    %1168 = vmatpush1.msra.mxu0 0.0
    %1169 = vmatprep.subr.mxu0 0.0
    %1170 = vmatpush1.msra.mxu0 0.0
    %1171 = vmatprep.subr.mxu0 0.0
    %1172 = vmatpush1.msra.mxu0 0.0
    %1173 = vmatprep.subr.mxu0 0.0
    %1174 = vmatpush1.msra.mxu0 0.0
    %1175 = vmatprep.subr.mxu0 0.0
    %1176 = vmatpush1.msra.mxu0 0.0
    %1177 = vmatprep.subr.mxu0 0.0
    %1178 = vmatpush1.msra.mxu0 0.0
    %1179 = vmatprep.subr.mxu0 0.0
    %1180 = vmatpush1.msra.mxu0 0.0
    %1181 = vmatprep.mubr.f32.mxu0 0.0
    %1182 = vmatmul.mubr.f32.gmra.mrb[0].mxu0 %v1044
    %v1183 = vpop.f32.mrb[0].mxu0
    %v1184 = vadd.f32 %v371, %v1183
    %v1185 = vpop.f32.mrb[0].mxu0
    %1186 = vdwg.mxu0
    %v1188 = vrot.slane %v1113, 2
    %v1190 = vadd.f32 %v992, %v1188
    %v1191 = vxor.u32 %v1190, 2147483648
    %v1192 = vmul.f32 %v1191, 1.442695
    %v1193 = vpow.pop %v1192
    %v1194 = vadd.f32 %v1193, 1.0
    %v1195 = vrcp.pop %v1194
    %v1196 = vmul.f32 1.0, %v1195
    %v1198 = vrot.slane %v1115, 2
    %v1200 = vadd.f32 %v993, %v1198
    %v1201 = vxor.u32 %v1200, 2147483648
    %v1202 = vmul.f32 %v1201, 1.442695
    %v1203 = vpow.pop %v1202
    %v1204 = vadd.f32 %v1203, 1.0
    %v1205 = vrcp.pop %v1204
    %v1206 = vmul.f32 1.0, %v1205
    %v1208 = vrot.slane %v1184, 2
    %v1210 = vmul.f32 %v1196, %v1208
    %v1211 = vadd.f32 %v994, %v1210
    %v1212 = vtanh.pop %v1211
    %v1213 = vsub.f32 1.0, %v1206
    %v1214 = vmul.f32 %v1213, %v1212
    %v1215 = vrot.slane %v990, 6
    %v1217 = vmul.f32 %v1206, %v1215
    %v1218 = vadd.f32 %v1214, %v1217
    %1219 = vst [vmem:[#allocation3] sm:$0xc0] %v1218
    %v1220 = vld [vmem:[#allocation2 + $0x18] sm:$0x3]
    %v1221 = vld [vmem:[#allocation2 + $0x20] sm:$0x3]
    %v1222 = vld [vmem:[#allocation2 + $0x28] sm:$0x3]
    %v1223 = vld [vmem:[#allocation5] sm:$0xff]
    %v1224 = vld [vmem:[#allocation5 + $0x8] sm:$0xff]
    %v1225 = vld [vmem:[#allocation5 + $0x10] sm:$0xff]
    %v1226 = vld [vmem:[#allocation5 + $0x18] sm:$0xff]
    %v1227 = vld [vmem:[#allocation5 + $0x20] sm:$0xff]
    %v1228 = vld [vmem:[#allocation5 + $0x28] sm:$0xff]
    %v1229 = vld [vmem:[#allocation5 + $0x30] sm:$0xff]
    %v1230 = vld [vmem:[#allocation5 + $0x38] sm:$0xff]
    %v1231 = vld [vmem:[#allocation5 + $0x40] sm:$0xff]
    %v1232 = vld [vmem:[#allocation5 + $0x48] sm:$0xff]
    %v1233 = vld [vmem:[#allocation5 + $0x50] sm:$0xff]
    %v1234 = vld [vmem:[#allocation5 + $0x58] sm:$0xff]
    %v1235 = vld [vmem:[#allocation5 + $0x60] sm:$0xff]
    %v1236 = vld [vmem:[#allocation5 + $0x68] sm:$0xff]
    %v1237 = vld [vmem:[#allocation5 + $0x70] sm:$0xff]
    %v1238 = vld [vmem:[#allocation5 + $0x78] sm:$0xff]
    %v1239 = vld [vmem:[#allocation5 + $0x80] sm:$0xff]
    %v1240 = vld [vmem:[#allocation5 + $0x88] sm:$0xff]
    %v1241 = vld [vmem:[#allocation5 + $0x90] sm:$0xff]
    %v1242 = vld [vmem:[#allocation5 + $0x98] sm:$0xff]
    %v1243 = vld [vmem:[#allocation5 + $0xa0] sm:$0xff]
    %v1244 = vld [vmem:[#allocation5 + $0xa8] sm:$0xff]
    %v1245 = vld [vmem:[#allocation5 + $0xb0] sm:$0xff]
    %v1246 = vld [vmem:[#allocation5 + $0xb8] sm:$0xff]
    %v1247 = vld [vmem:[#allocation5 + $0xc0] sm:$0xff]
    %v1248 = vld [vmem:[#allocation5 + $0xc8] sm:$0xff]
    %v1249 = vld [vmem:[#allocation5 + $0xd0] sm:$0xff]
    %v1250 = vld [vmem:[#allocation5 + $0xd8] sm:$0xff]
    %v1251 = vld [vmem:[#allocation5 + $0xe0] sm:$0xff]
    %v1252 = vld [vmem:[#allocation5 + $0xe8] sm:$0xff]
    %v1253 = vld [vmem:[#allocation5 + $0xf0] sm:$0xff]
    %v1254 = vld [vmem:[#allocation5 + $0xf8] sm:$0xff]
    %v1255 = vld [vmem:[#allocation5 + $0x100] sm:$0xff]
    %v1256 = vld [vmem:[#allocation5 + $0x108] sm:$0xff]
    %v1257 = vld [vmem:[#allocation5 + $0x110] sm:$0xff]
    %v1258 = vld [vmem:[#allocation5 + $0x118] sm:$0xff]
    %v1259 = vld [vmem:[#allocation5 + $0x120] sm:$0xff]
    %v1260 = vld [vmem:[#allocation5 + $0x128] sm:$0xff]
    %v1261 = vld [vmem:[#allocation5 + $0x130] sm:$0xff]
    %v1262 = vld [vmem:[#allocation5 + $0x138] sm:$0xff]
    %v1263 = vld [vmem:[#allocation5 + $0x140] sm:$0xff]
    %v1264 = vld [vmem:[#allocation5 + $0x148] sm:$0xff]
    %v1265 = vld [vmem:[#allocation5 + $0x150] sm:$0xff]
    %v1266 = vld [vmem:[#allocation5 + $0x158] sm:$0xff]
    %v1267 = vld [vmem:[#allocation5 + $0x160] sm:$0xff]
    %v1268 = vld [vmem:[#allocation5 + $0x168] sm:$0xff]
    %v1269 = vld [vmem:[#allocation5 + $0x170] sm:$0xff]
    %v1270 = vld [vmem:[#allocation5 + $0x178] sm:$0xff]
    %v1272 = vrot.slane %v1218, 6
    %1274 = vmatprep.subr.mxu0 %v1224
    %1275 = vmatpush1.msra.mxu0 %v1223
    %1276 = vmatprep.subr.mxu0 %v1227
    %1277 = vmatpush1.msra.mxu0 %v1226
    %1278 = vmatprep.subr.mxu0 %v1230
    %1279 = vmatpush1.msra.mxu0 %v1229
    %1280 = vmatprep.subr.mxu0 %v1233
    %1281 = vmatpush1.msra.mxu0 %v1232
    %1282 = vmatprep.subr.mxu0 %v1236
    %1283 = vmatpush1.msra.mxu0 %v1235
    %1284 = vmatprep.subr.mxu0 %v1239
    %1285 = vmatpush1.msra.mxu0 %v1238
    %1286 = vmatprep.subr.mxu0 %v1242
    %1287 = vmatpush1.msra.mxu0 %v1241
    %1288 = vmatprep.subr.mxu0 %v1245
    %1289 = vmatpush1.msra.mxu0 %v1244
    %1290 = vmatprep.subr.mxu0 %v1248
    %1291 = vmatpush1.msra.mxu0 %v1247
    %1292 = vmatprep.subr.mxu0 %v1251
    %1293 = vmatpush1.msra.mxu0 %v1250
    %1294 = vmatprep.subr.mxu0 %v1254
    %1295 = vmatpush1.msra.mxu0 %v1253
    %1296 = vmatprep.subr.mxu0 %v1257
    %1297 = vmatpush1.msra.mxu0 %v1256
    %1298 = vmatprep.subr.mxu0 %v1260
    %1299 = vmatpush1.msra.mxu0 %v1259
    %1300 = vmatprep.subr.mxu0 %v1263
    %1301 = vmatpush1.msra.mxu0 %v1262
    %1302 = vmatprep.subr.mxu0 %v1266
    %1303 = vmatpush1.msra.mxu0 %v1265
    %1304 = vmatprep.subr.mxu0 %v1269
    %1305 = vmatpush1.msra.mxu0 %v1268
    %1306 = vmatprep.subr.mxu0 0.0
    %1307 = vmatpush1.msra.mxu0 0.0
    %1308 = vmatprep.subr.mxu0 0.0
    %1309 = vmatpush1.msra.mxu0 0.0
    %1310 = vmatprep.subr.mxu0 0.0
    %1311 = vmatpush1.msra.mxu0 0.0
    %1312 = vmatprep.subr.mxu0 0.0
    %1313 = vmatpush1.msra.mxu0 0.0
    %1314 = vmatprep.subr.mxu0 0.0
    %1315 = vmatpush1.msra.mxu0 0.0
    %1316 = vmatprep.subr.mxu0 0.0
    %1317 = vmatpush1.msra.mxu0 0.0
    %1318 = vmatprep.subr.mxu0 0.0
    %1319 = vmatpush1.msra.mxu0 0.0
    %1320 = vmatprep.subr.mxu0 0.0
    %1321 = vmatpush1.msra.mxu0 0.0
    %1322 = vmatprep.subr.mxu0 0.0
    %1323 = vmatpush1.msra.mxu0 0.0
    %1324 = vmatprep.subr.mxu0 0.0
    %1325 = vmatpush1.msra.mxu0 0.0
    %1326 = vmatprep.subr.mxu0 0.0
    %1327 = vmatpush1.msra.mxu0 0.0
    %1328 = vmatprep.subr.mxu0 0.0
    %1329 = vmatpush1.msra.mxu0 0.0
    %1330 = vmatprep.subr.mxu0 0.0
    %1331 = vmatpush1.msra.mxu0 0.0
    %1332 = vmatprep.subr.mxu0 0.0
    %1333 = vmatpush1.msra.mxu0 0.0
    %1334 = vmatprep.subr.mxu0 0.0
    %1335 = vmatpush1.msra.mxu0 0.0
    %1336 = vmatprep.subr.mxu0 0.0
    %1337 = vmatpush1.msra.mxu0 0.0
    %1338 = vmatprep.mubr.f32.mxu0 0.0
    %1339 = vmatmul.mubr.f32.gmra.mrb[0].mxu0 %v1272
    %v1340 = vpop.f32.mrb[0].mxu0
    %v1341 = vadd.f32 %v363, %v1340
    %v1342 = vpop.f32.mrb[0].mxu0
    %v1343 = vadd.f32 %v367, %v1342
    %1344 = vdwg.mxu0
    %1345 = vmatprep.subr.mxu0 0.0
    %1346 = vmatpush1.msra.mxu0 %v1225
    %1347 = vmatprep.subr.mxu0 0.0
    %1348 = vmatpush1.msra.mxu0 %v1228
    %1349 = vmatprep.subr.mxu0 0.0
    %1350 = vmatpush1.msra.mxu0 %v1231
    %1351 = vmatprep.subr.mxu0 0.0
    %1352 = vmatpush1.msra.mxu0 %v1234
    %1353 = vmatprep.subr.mxu0 0.0
    %1354 = vmatpush1.msra.mxu0 %v1237
    %1355 = vmatprep.subr.mxu0 0.0
    %1356 = vmatpush1.msra.mxu0 %v1240
    %1357 = vmatprep.subr.mxu0 0.0
    %1358 = vmatpush1.msra.mxu0 %v1243
    %1359 = vmatprep.subr.mxu0 0.0
    %1360 = vmatpush1.msra.mxu0 %v1246
    %1361 = vmatprep.subr.mxu0 0.0
    %1362 = vmatpush1.msra.mxu0 %v1249
    %1363 = vmatprep.subr.mxu0 0.0
    %1364 = vmatpush1.msra.mxu0 %v1252
    %1365 = vmatprep.subr.mxu0 0.0
    %1366 = vmatpush1.msra.mxu0 %v1255
    %1367 = vmatprep.subr.mxu0 0.0
    %1368 = vmatpush1.msra.mxu0 %v1258
    %1369 = vmatprep.subr.mxu0 0.0
    %1370 = vmatpush1.msra.mxu0 %v1261
    %1371 = vmatprep.subr.mxu0 0.0
    %1372 = vmatpush1.msra.mxu0 %v1264
    %1373 = vmatprep.subr.mxu0 0.0
    %1374 = vmatpush1.msra.mxu0 %v1267
    %1375 = vmatprep.subr.mxu0 0.0
    %1376 = vmatpush1.msra.mxu0 %v1270
    %1377 = vmatprep.subr.mxu0 0.0
    %1378 = vmatpush1.msra.mxu0 0.0
    %1379 = vmatprep.subr.mxu0 0.0
    %1380 = vmatpush1.msra.mxu0 0.0
    %1381 = vmatprep.subr.mxu0 0.0
    %1382 = vmatpush1.msra.mxu0 0.0
    %1383 = vmatprep.subr.mxu0 0.0
    %1384 = vmatpush1.msra.mxu0 0.0
    %1385 = vmatprep.subr.mxu0 0.0
    %1386 = vmatpush1.msra.mxu0 0.0
    %1387 = vmatprep.subr.mxu0 0.0
    %1388 = vmatpush1.msra.mxu0 0.0
    %1389 = vmatprep.subr.mxu0 0.0
    %1390 = vmatpush1.msra.mxu0 0.0
    %1391 = vmatprep.subr.mxu0 0.0
    %1392 = vmatpush1.msra.mxu0 0.0
    %1393 = vmatprep.subr.mxu0 0.0
    %1394 = vmatpush1.msra.mxu0 0.0
    %1395 = vmatprep.subr.mxu0 0.0
    %1396 = vmatpush1.msra.mxu0 0.0
    %1397 = vmatprep.subr.mxu0 0.0
    %1398 = vmatpush1.msra.mxu0 0.0
    %1399 = vmatprep.subr.mxu0 0.0
    %1400 = vmatpush1.msra.mxu0 0.0
    %1401 = vmatprep.subr.mxu0 0.0
    %1402 = vmatpush1.msra.mxu0 0.0
    %1403 = vmatprep.subr.mxu0 0.0
    %1404 = vmatpush1.msra.mxu0 0.0
    %1405 = vmatprep.subr.mxu0 0.0
    %1406 = vmatpush1.msra.mxu0 0.0
    %1407 = vmatprep.subr.mxu0 0.0
    %1408 = vmatpush1.msra.mxu0 0.0
    %1409 = vmatprep.mubr.f32.mxu0 0.0
    %1410 = vmatmul.mubr.f32.gmra.mrb[0].mxu0 %v1272
    %v1411 = vpop.f32.mrb[0].mxu0
    %v1412 = vadd.f32 %v371, %v1411
    %v1413 = vpop.f32.mrb[0].mxu0
    %1414 = vdwg.mxu0
    %v1415 = vadd.f32 %v1220, %v1341
    %v1416 = vxor.u32 %v1415, 2147483648
    %v1417 = vmul.f32 %v1416, 1.442695
    %v1418 = vpow.pop %v1417
    %v1419 = vadd.f32 %v1418, 1.0
    %v1420 = vrcp.pop %v1419
    %v1421 = vmul.f32 1.0, %v1420
    %v1422 = vadd.f32 %v1221, %v1343
    %v1423 = vxor.u32 %v1422, 2147483648
    %v1424 = vmul.f32 %v1423, 1.442695
    %v1425 = vpow.pop %v1424
    %v1426 = vadd.f32 %v1425, 1.0
    %v1427 = vrcp.pop %v1426
    %v1428 = vmul.f32 1.0, %v1427
    %v1429 = vmul.f32 %v1421, %v1412
    %v1430 = vadd.f32 %v1222, %v1429
    %v1431 = vtanh.pop %v1430
    %v1432 = vsub.f32 1.0, %v1428
    %v1433 = vmul.f32 %v1432, %v1431
    %v1434 = vmul.f32 %v1428, %v1272
    %v1435 = vadd.f32 %v1433, %v1434
    %1436 = vst [vmem:[#allocation3 + $0x8] sm:$0x3] %v1435
    %v1437 = vld [vmem:[#allocation2 + $0x18] sm:$0xc]
    %v1438 = vld [vmem:[#allocation2 + $0x20] sm:$0xc]
    %v1439 = vld [vmem:[#allocation2 + $0x28] sm:$0xc]
    %v1440 = vld [vmem:[#allocation5] sm:$0xff]
    %v1441 = vld [vmem:[#allocation5 + $0x8] sm:$0xff]
    %v1442 = vld [vmem:[#allocation5 + $0x10] sm:$0xff]
    %v1443 = vld [vmem:[#allocation5 + $0x18] sm:$0xff]
    %v1444 = vld [vmem:[#allocation5 + $0x20] sm:$0xff]
    %v1445 = vld [vmem:[#allocation5 + $0x28] sm:$0xff]
    %v1446 = vld [vmem:[#allocation5 + $0x30] sm:$0xff]
    %v1447 = vld [vmem:[#allocation5 + $0x38] sm:$0xff]
    %v1448 = vld [vmem:[#allocation5 + $0x40] sm:$0xff]
    %v1449 = vld [vmem:[#allocation5 + $0x48] sm:$0xff]
    %v1450 = vld [vmem:[#allocation5 + $0x50] sm:$0xff]
    %v1451 = vld [vmem:[#allocation5 + $0x58] sm:$0xff]
    %v1452 = vld [vmem:[#allocation5 + $0x60] sm:$0xff]
    %v1453 = vld [vmem:[#allocation5 + $0x68] sm:$0xff]
    %v1454 = vld [vmem:[#allocation5 + $0x70] sm:$0xff]
    %v1455 = vld [vmem:[#allocation5 + $0x78] sm:$0xff]
    %v1456 = vld [vmem:[#allocation5 + $0x80] sm:$0xff]
    %v1457 = vld [vmem:[#allocation5 + $0x88] sm:$0xff]
    %v1458 = vld [vmem:[#allocation5 + $0x90] sm:$0xff]
    %v1459 = vld [vmem:[#allocation5 + $0x98] sm:$0xff]
    %v1460 = vld [vmem:[#allocation5 + $0xa0] sm:$0xff]
    %v1461 = vld [vmem:[#allocation5 + $0xa8] sm:$0xff]
    %v1462 = vld [vmem:[#allocation5 + $0xb0] sm:$0xff]
    %v1463 = vld [vmem:[#allocation5 + $0xb8] sm:$0xff]
    %v1464 = vld [vmem:[#allocation5 + $0xc0] sm:$0xff]
    %v1465 = vld [vmem:[#allocation5 + $0xc8] sm:$0xff]
    %v1466 = vld [vmem:[#allocation5 + $0xd0] sm:$0xff]
    %v1467 = vld [vmem:[#allocation5 + $0xd8] sm:$0xff]
    %v1468 = vld [vmem:[#allocation5 + $0xe0] sm:$0xff]
    %v1469 = vld [vmem:[#allocation5 + $0xe8] sm:$0xff]
    %v1470 = vld [vmem:[#allocation5 + $0xf0] sm:$0xff]
    %v1471 = vld [vmem:[#allocation5 + $0xf8] sm:$0xff]
    %v1472 = vld [vmem:[#allocation5 + $0x100] sm:$0xff]
    %v1473 = vld [vmem:[#allocation5 + $0x108] sm:$0xff]
    %v1474 = vld [vmem:[#allocation5 + $0x110] sm:$0xff]
    %v1475 = vld [vmem:[#allocation5 + $0x118] sm:$0xff]
    %v1476 = vld [vmem:[#allocation5 + $0x120] sm:$0xff]
    %v1477 = vld [vmem:[#allocation5 + $0x128] sm:$0xff]
    %v1478 = vld [vmem:[#allocation5 + $0x130] sm:$0xff]
    %v1479 = vld [vmem:[#allocation5 + $0x138] sm:$0xff]
    %v1480 = vld [vmem:[#allocation5 + $0x140] sm:$0xff]
    %v1481 = vld [vmem:[#allocation5 + $0x148] sm:$0xff]
    %v1482 = vld [vmem:[#allocation5 + $0x150] sm:$0xff]
    %v1483 = vld [vmem:[#allocation5 + $0x158] sm:$0xff]
    %v1484 = vld [vmem:[#allocation5 + $0x160] sm:$0xff]
    %v1485 = vld [vmem:[#allocation5 + $0x168] sm:$0xff]
    %v1486 = vld [vmem:[#allocation5 + $0x170] sm:$0xff]
    %v1487 = vld [vmem:[#allocation5 + $0x178] sm:$0xff]
    %1488 = vmatprep.subr.mxu0 %v1441
    %1489 = vmatpush1.msra.mxu0 %v1440
    %1490 = vmatprep.subr.mxu0 %v1444
    %1491 = vmatpush1.msra.mxu0 %v1443
    %1492 = vmatprep.subr.mxu0 %v1447
    %1493 = vmatpush1.msra.mxu0 %v1446
    %1494 = vmatprep.subr.mxu0 %v1450
    %1495 = vmatpush1.msra.mxu0 %v1449
    %1496 = vmatprep.subr.mxu0 %v1453
    %1497 = vmatpush1.msra.mxu0 %v1452
    %1498 = vmatprep.subr.mxu0 %v1456
    %1499 = vmatpush1.msra.mxu0 %v1455
    %1500 = vmatprep.subr.mxu0 %v1459
    %1501 = vmatpush1.msra.mxu0 %v1458
    %1502 = vmatprep.subr.mxu0 %v1462
    %1503 = vmatpush1.msra.mxu0 %v1461
    %1504 = vmatprep.subr.mxu0 %v1465
    %1505 = vmatpush1.msra.mxu0 %v1464
    %1506 = vmatprep.subr.mxu0 %v1468
    %1507 = vmatpush1.msra.mxu0 %v1467
    %1508 = vmatprep.subr.mxu0 %v1471
    %1509 = vmatpush1.msra.mxu0 %v1470
    %1510 = vmatprep.subr.mxu0 %v1474
    %1511 = vmatpush1.msra.mxu0 %v1473
    %1512 = vmatprep.subr.mxu0 %v1477
    %1513 = vmatpush1.msra.mxu0 %v1476
    %1514 = vmatprep.subr.mxu0 %v1480
    %1515 = vmatpush1.msra.mxu0 %v1479
    %1516 = vmatprep.subr.mxu0 %v1483
    %1517 = vmatpush1.msra.mxu0 %v1482
    %1518 = vmatprep.subr.mxu0 %v1486
    %1519 = vmatpush1.msra.mxu0 %v1485
    %1520 = vmatprep.subr.mxu0 0.0
    %1521 = vmatpush1.msra.mxu0 0.0
    %1522 = vmatprep.subr.mxu0 0.0
    %1523 = vmatpush1.msra.mxu0 0.0
    %1524 = vmatprep.subr.mxu0 0.0
    %1525 = vmatpush1.msra.mxu0 0.0
    %1526 = vmatprep.subr.mxu0 0.0
    %1527 = vmatpush1.msra.mxu0 0.0
    %1528 = vmatprep.subr.mxu0 0.0
    %1529 = vmatpush1.msra.mxu0 0.0
    %1530 = vmatprep.subr.mxu0 0.0
    %1531 = vmatpush1.msra.mxu0 0.0
    %1532 = vmatprep.subr.mxu0 0.0
    %1533 = vmatpush1.msra.mxu0 0.0
    %1534 = vmatprep.subr.mxu0 0.0
    %1535 = vmatpush1.msra.mxu0 0.0
    %1536 = vmatprep.subr.mxu0 0.0
    %1537 = vmatpush1.msra.mxu0 0.0
    %1538 = vmatprep.subr.mxu0 0.0
    %1539 = vmatpush1.msra.mxu0 0.0
    %1540 = vmatprep.subr.mxu0 0.0
    %1541 = vmatpush1.msra.mxu0 0.0
    %1542 = vmatprep.subr.mxu0 0.0
    %1543 = vmatpush1.msra.mxu0 0.0
    %1544 = vmatprep.subr.mxu0 0.0
    %1545 = vmatpush1.msra.mxu0 0.0
    %1546 = vmatprep.subr.mxu0 0.0
    %1547 = vmatpush1.msra.mxu0 0.0
    %1548 = vmatprep.subr.mxu0 0.0
    %1549 = vmatpush1.msra.mxu0 0.0
    %1550 = vmatprep.subr.mxu0 0.0
    %1551 = vmatpush1.msra.mxu0 0.0
    %1552 = vmatprep.mubr.f32.mxu0 0.0
    %1553 = vmatmul.mubr.f32.gmra.mrb[0].mxu0 %v1435
    %v1554 = vpop.f32.mrb[0].mxu0
    %v1555 = vadd.f32 %v363, %v1554
    %v1556 = vpop.f32.mrb[0].mxu0
    %v1557 = vadd.f32 %v367, %v1556
    %1558 = vdwg.mxu0
    %1559 = vmatprep.subr.mxu0 0.0
    %1560 = vmatpush1.msra.mxu0 %v1442
    %1561 = vmatprep.subr.mxu0 0.0
    %1562 = vmatpush1.msra.mxu0 %v1445
    %1563 = vmatprep.subr.mxu0 0.0
    %1564 = vmatpush1.msra.mxu0 %v1448
    %1565 = vmatprep.subr.mxu0 0.0
    %1566 = vmatpush1.msra.mxu0 %v1451
    %1567 = vmatprep.subr.mxu0 0.0
    %1568 = vmatpush1.msra.mxu0 %v1454
    %1569 = vmatprep.subr.mxu0 0.0
    %1570 = vmatpush1.msra.mxu0 %v1457
    %1571 = vmatprep.subr.mxu0 0.0
    %1572 = vmatpush1.msra.mxu0 %v1460
    %1573 = vmatprep.subr.mxu0 0.0
    %1574 = vmatpush1.msra.mxu0 %v1463
    %1575 = vmatprep.subr.mxu0 0.0
    %1576 = vmatpush1.msra.mxu0 %v1466
    %1577 = vmatprep.subr.mxu0 0.0
    %1578 = vmatpush1.msra.mxu0 %v1469
    %1579 = vmatprep.subr.mxu0 0.0
    %1580 = vmatpush1.msra.mxu0 %v1472
    %1581 = vmatprep.subr.mxu0 0.0
    %1582 = vmatpush1.msra.mxu0 %v1475
    %1583 = vmatprep.subr.mxu0 0.0
    %1584 = vmatpush1.msra.mxu0 %v1478
    %1585 = vmatprep.subr.mxu0 0.0
    %1586 = vmatpush1.msra.mxu0 %v1481
    %1587 = vmatprep.subr.mxu0 0.0
    %1588 = vmatpush1.msra.mxu0 %v1484
    %1589 = vmatprep.subr.mxu0 0.0
    %1590 = vmatpush1.msra.mxu0 %v1487
    %1591 = vmatprep.subr.mxu0 0.0
    %1592 = vmatpush1.msra.mxu0 0.0
    %1593 = vmatprep.subr.mxu0 0.0
    %1594 = vmatpush1.msra.mxu0 0.0
    %1595 = vmatprep.subr.mxu0 0.0
    %1596 = vmatpush1.msra.mxu0 0.0
    %1597 = vmatprep.subr.mxu0 0.0
    %1598 = vmatpush1.msra.mxu0 0.0
    %1599 = vmatprep.subr.mxu0 0.0
    %1600 = vmatpush1.msra.mxu0 0.0
    %1601 = vmatprep.subr.mxu0 0.0
    %1602 = vmatpush1.msra.mxu0 0.0
    %1603 = vmatprep.subr.mxu0 0.0
    %1604 = vmatpush1.msra.mxu0 0.0
    %1605 = vmatprep.subr.mxu0 0.0
    %1606 = vmatpush1.msra.mxu0 0.0
    %1607 = vmatprep.subr.mxu0 0.0
    %1608 = vmatpush1.msra.mxu0 0.0
    %1609 = vmatprep.subr.mxu0 0.0
    %1610 = vmatpush1.msra.mxu0 0.0
    %1611 = vmatprep.subr.mxu0 0.0
    %1612 = vmatpush1.msra.mxu0 0.0
    %1613 = vmatprep.subr.mxu0 0.0
    %1614 = vmatpush1.msra.mxu0 0.0
    %1615 = vmatprep.subr.mxu0 0.0
    %1616 = vmatpush1.msra.mxu0 0.0
    %1617 = vmatprep.subr.mxu0 0.0
    %1618 = vmatpush1.msra.mxu0 0.0
    %1619 = vmatprep.subr.mxu0 0.0
    %1620 = vmatpush1.msra.mxu0 0.0
    %1621 = vmatprep.subr.mxu0 0.0
    %1622 = vmatpush1.msra.mxu0 0.0
    %1623 = vmatprep.mubr.f32.mxu0 0.0
    %1624 = vmatmul.mubr.f32.gmra.mrb[0].mxu0 %v1435
    %v1625 = vpop.f32.mrb[0].mxu0
    %v1626 = vadd.f32 %v371, %v1625
    %v1627 = vpop.f32.mrb[0].mxu0
    %1628 = vdwg.mxu0
    %v1630 = vrot.slane %v1555, 6
    %v1632 = vadd.f32 %v1437, %v1630
    %v1633 = vxor.u32 %v1632, 2147483648
    %v1634 = vmul.f32 %v1633, 1.442695
    %v1635 = vpow.pop %v1634
    %v1636 = vadd.f32 %v1635, 1.0
    %v1637 = vrcp.pop %v1636
    %v1638 = vmul.f32 1.0, %v1637
    %v1640 = vrot.slane %v1557, 6
    %v1642 = vadd.f32 %v1438, %v1640
    %v1643 = vxor.u32 %v1642, 2147483648
    %v1644 = vmul.f32 %v1643, 1.442695
    %v1645 = vpow.pop %v1644
    %v1646 = vadd.f32 %v1645, 1.0
    %v1647 = vrcp.pop %v1646
    %v1648 = vmul.f32 1.0, %v1647
    %v1650 = vrot.slane %v1626, 6
    %v1652 = vmul.f32 %v1638, %v1650
    %v1653 = vadd.f32 %v1439, %v1652
    %v1654 = vtanh.pop %v1653
    %v1655 = vsub.f32 1.0, %v1648
    %v1656 = vmul.f32 %v1655, %v1654
    %v1658 = vrot.slane %v1435, 6
    %v1660 = vmul.f32 %v1648, %v1658
    %v1661 = vadd.f32 %v1656, %v1660
    %1662 = vst [vmem:[#allocation3 + $0x8] sm:$0xc] %v1661
    %v1663 = vld [vmem:[#allocation2 + $0x18] sm:$0x30]
    %v1664 = vld [vmem:[#allocation2 + $0x20] sm:$0x30]
    %v1665 = vld [vmem:[#allocation2 + $0x28] sm:$0x30]
    %v1666 = vld [vmem:[#allocation5] sm:$0xff]
    %v1667 = vld [vmem:[#allocation5 + $0x8] sm:$0xff]
    %v1668 = vld [vmem:[#allocation5 + $0x10] sm:$0xff]
    %v1669 = vld [vmem:[#allocation5 + $0x18] sm:$0xff]
    %v1670 = vld [vmem:[#allocation5 + $0x20] sm:$0xff]
    %v1671 = vld [vmem:[#allocation5 + $0x28] sm:$0xff]
    %v1672 = vld [vmem:[#allocation5 + $0x30] sm:$0xff]
    %v1673 = vld [vmem:[#allocation5 + $0x38] sm:$0xff]
    %v1674 = vld [vmem:[#allocation5 + $0x40] sm:$0xff]
    %v1675 = vld [vmem:[#allocation5 + $0x48] sm:$0xff]
    %v1676 = vld [vmem:[#allocation5 + $0x50] sm:$0xff]
    %v1677 = vld [vmem:[#allocation5 + $0x58] sm:$0xff]
    %v1678 = vld [vmem:[#allocation5 + $0x60] sm:$0xff]
    %v1679 = vld [vmem:[#allocation5 + $0x68] sm:$0xff]
    %v1680 = vld [vmem:[#allocation5 + $0x70] sm:$0xff]
    %v1681 = vld [vmem:[#allocation5 + $0x78] sm:$0xff]
    %v1682 = vld [vmem:[#allocation5 + $0x80] sm:$0xff]
    %v1683 = vld [vmem:[#allocation5 + $0x88] sm:$0xff]
    %v1684 = vld [vmem:[#allocation5 + $0x90] sm:$0xff]
    %v1685 = vld [vmem:[#allocation5 + $0x98] sm:$0xff]
    %v1686 = vld [vmem:[#allocation5 + $0xa0] sm:$0xff]
    %v1687 = vld [vmem:[#allocation5 + $0xa8] sm:$0xff]
    %v1688 = vld [vmem:[#allocation5 + $0xb0] sm:$0xff]
    %v1689 = vld [vmem:[#allocation5 + $0xb8] sm:$0xff]
    %v1690 = vld [vmem:[#allocation5 + $0xc0] sm:$0xff]
    %v1691 = vld [vmem:[#allocation5 + $0xc8] sm:$0xff]
    %v1692 = vld [vmem:[#allocation5 + $0xd0] sm:$0xff]
    %v1693 = vld [vmem:[#allocation5 + $0xd8] sm:$0xff]
    %v1694 = vld [vmem:[#allocation5 + $0xe0] sm:$0xff]
    %v1695 = vld [vmem:[#allocation5 + $0xe8] sm:$0xff]
    %v1696 = vld [vmem:[#allocation5 + $0xf0] sm:$0xff]
    %v1697 = vld [vmem:[#allocation5 + $0xf8] sm:$0xff]
    %v1698 = vld [vmem:[#allocation5 + $0x100] sm:$0xff]
    %v1699 = vld [vmem:[#allocation5 + $0x108] sm:$0xff]
    %v1700 = vld [vmem:[#allocation5 + $0x110] sm:$0xff]
    %v1701 = vld [vmem:[#allocation5 + $0x118] sm:$0xff]
    %v1702 = vld [vmem:[#allocation5 + $0x120] sm:$0xff]
    %v1703 = vld [vmem:[#allocation5 + $0x128] sm:$0xff]
    %v1704 = vld [vmem:[#allocation5 + $0x130] sm:$0xff]
    %v1705 = vld [vmem:[#allocation5 + $0x138] sm:$0xff]
    %v1706 = vld [vmem:[#allocation5 + $0x140] sm:$0xff]
    %v1707 = vld [vmem:[#allocation5 + $0x148] sm:$0xff]
    %v1708 = vld [vmem:[#allocation5 + $0x150] sm:$0xff]
    %v1709 = vld [vmem:[#allocation5 + $0x158] sm:$0xff]
    %v1710 = vld [vmem:[#allocation5 + $0x160] sm:$0xff]
    %v1711 = vld [vmem:[#allocation5 + $0x168] sm:$0xff]
    %v1712 = vld [vmem:[#allocation5 + $0x170] sm:$0xff]
    %v1713 = vld [vmem:[#allocation5 + $0x178] sm:$0xff]
    %v1715 = vrot.slane %v1661, 2
    %1717 = vmatprep.subr.mxu0 %v1667
    %1718 = vmatpush1.msra.mxu0 %v1666
    %1719 = vmatprep.subr.mxu0 %v1670
    %1720 = vmatpush1.msra.mxu0 %v1669
    %1721 = vmatprep.subr.mxu0 %v1673
    %1722 = vmatpush1.msra.mxu0 %v1672
    %1723 = vmatprep.subr.mxu0 %v1676
    %1724 = vmatpush1.msra.mxu0 %v1675
    %1725 = vmatprep.subr.mxu0 %v1679
    %1726 = vmatpush1.msra.mxu0 %v1678
    %1727 = vmatprep.subr.mxu0 %v1682
    %1728 = vmatpush1.msra.mxu0 %v1681
    %1729 = vmatprep.subr.mxu0 %v1685
    %1730 = vmatpush1.msra.mxu0 %v1684
    %1731 = vmatprep.subr.mxu0 %v1688
    %1732 = vmatpush1.msra.mxu0 %v1687
    %1733 = vmatprep.subr.mxu0 %v1691
    %1734 = vmatpush1.msra.mxu0 %v1690
    %1735 = vmatprep.subr.mxu0 %v1694
    %1736 = vmatpush1.msra.mxu0 %v1693
    %1737 = vmatprep.subr.mxu0 %v1697
    %1738 = vmatpush1.msra.mxu0 %v1696
    %1739 = vmatprep.subr.mxu0 %v1700
    %1740 = vmatpush1.msra.mxu0 %v1699
    %1741 = vmatprep.subr.mxu0 %v1703
    %1742 = vmatpush1.msra.mxu0 %v1702
    %1743 = vmatprep.subr.mxu0 %v1706
    %1744 = vmatpush1.msra.mxu0 %v1705
    %1745 = vmatprep.subr.mxu0 %v1709
    %1746 = vmatpush1.msra.mxu0 %v1708
    %1747 = vmatprep.subr.mxu0 %v1712
    %1748 = vmatpush1.msra.mxu0 %v1711
    %1749 = vmatprep.subr.mxu0 0.0
    %1750 = vmatpush1.msra.mxu0 0.0
    %1751 = vmatprep.subr.mxu0 0.0
    %1752 = vmatpush1.msra.mxu0 0.0
    %1753 = vmatprep.subr.mxu0 0.0
    %1754 = vmatpush1.msra.mxu0 0.0
    %1755 = vmatprep.subr.mxu0 0.0
    %1756 = vmatpush1.msra.mxu0 0.0
    %1757 = vmatprep.subr.mxu0 0.0
    %1758 = vmatpush1.msra.mxu0 0.0
    %1759 = vmatprep.subr.mxu0 0.0
    %1760 = vmatpush1.msra.mxu0 0.0
    %1761 = vmatprep.subr.mxu0 0.0
    %1762 = vmatpush1.msra.mxu0 0.0
    %1763 = vmatprep.subr.mxu0 0.0
    %1764 = vmatpush1.msra.mxu0 0.0
    %1765 = vmatprep.subr.mxu0 0.0
    %1766 = vmatpush1.msra.mxu0 0.0
    %1767 = vmatprep.subr.mxu0 0.0
    %1768 = vmatpush1.msra.mxu0 0.0
    %1769 = vmatprep.subr.mxu0 0.0
    %1770 = vmatpush1.msra.mxu0 0.0
    %1771 = vmatprep.subr.mxu0 0.0
    %1772 = vmatpush1.msra.mxu0 0.0
    %1773 = vmatprep.subr.mxu0 0.0
    %1774 = vmatpush1.msra.mxu0 0.0
    %1775 = vmatprep.subr.mxu0 0.0
    %1776 = vmatpush1.msra.mxu0 0.0
    %1777 = vmatprep.subr.mxu0 0.0
    %1778 = vmatpush1.msra.mxu0 0.0
    %1779 = vmatprep.subr.mxu0 0.0
    %1780 = vmatpush1.msra.mxu0 0.0
    %1781 = vmatprep.mubr.f32.mxu0 0.0
    %1782 = vmatmul.mubr.f32.gmra.mrb[0].mxu0 %v1715
    %v1783 = vpop.f32.mrb[0].mxu0
    %v1784 = vadd.f32 %v363, %v1783
    %v1785 = vpop.f32.mrb[0].mxu0
    %v1786 = vadd.f32 %v367, %v1785
    %1787 = vdwg.mxu0
    %1788 = vmatprep.subr.mxu0 0.0
    %1789 = vmatpush1.msra.mxu0 %v1668
    %1790 = vmatprep.subr.mxu0 0.0
    %1791 = vmatpush1.msra.mxu0 %v1671
    %1792 = vmatprep.subr.mxu0 0.0
    %1793 = vmatpush1.msra.mxu0 %v1674
    %1794 = vmatprep.subr.mxu0 0.0
    %1795 = vmatpush1.msra.mxu0 %v1677
    %1796 = vmatprep.subr.mxu0 0.0
    %1797 = vmatpush1.msra.mxu0 %v1680
    %1798 = vmatprep.subr.mxu0 0.0
    %1799 = vmatpush1.msra.mxu0 %v1683
    %1800 = vmatprep.subr.mxu0 0.0
    %1801 = vmatpush1.msra.mxu0 %v1686
    %1802 = vmatprep.subr.mxu0 0.0
    %1803 = vmatpush1.msra.mxu0 %v1689
    %1804 = vmatprep.subr.mxu0 0.0
    %1805 = vmatpush1.msra.mxu0 %v1692
    %1806 = vmatprep.subr.mxu0 0.0
    %1807 = vmatpush1.msra.mxu0 %v1695
    %1808 = vmatprep.subr.mxu0 0.0
    %1809 = vmatpush1.msra.mxu0 %v1698
    %1810 = vmatprep.subr.mxu0 0.0
    %1811 = vmatpush1.msra.mxu0 %v1701
    %1812 = vmatprep.subr.mxu0 0.0
    %1813 = vmatpush1.msra.mxu0 %v1704
    %1814 = vmatprep.subr.mxu0 0.0
    %1815 = vmatpush1.msra.mxu0 %v1707
    %1816 = vmatprep.subr.mxu0 0.0
    %1817 = vmatpush1.msra.mxu0 %v1710
    %1818 = vmatprep.subr.mxu0 0.0
    %1819 = vmatpush1.msra.mxu0 %v1713
    %1820 = vmatprep.subr.mxu0 0.0
    %1821 = vmatpush1.msra.mxu0 0.0
    %1822 = vmatprep.subr.mxu0 0.0
    %1823 = vmatpush1.msra.mxu0 0.0
    %1824 = vmatprep.subr.mxu0 0.0
    %1825 = vmatpush1.msra.mxu0 0.0
    %1826 = vmatprep.subr.mxu0 0.0
    %1827 = vmatpush1.msra.mxu0 0.0
    %1828 = vmatprep.subr.mxu0 0.0
    %1829 = vmatpush1.msra.mxu0 0.0
    %1830 = vmatprep.subr.mxu0 0.0
    %1831 = vmatpush1.msra.mxu0 0.0
    %1832 = vmatprep.subr.mxu0 0.0
    %1833 = vmatpush1.msra.mxu0 0.0
    %1834 = vmatprep.subr.mxu0 0.0
    %1835 = vmatpush1.msra.mxu0 0.0
    %1836 = vmatprep.subr.mxu0 0.0
    %1837 = vmatpush1.msra.mxu0 0.0
    %1838 = vmatprep.subr.mxu0 0.0
    %1839 = vmatpush1.msra.mxu0 0.0
    %1840 = vmatprep.subr.mxu0 0.0
    %1841 = vmatpush1.msra.mxu0 0.0
    %1842 = vmatprep.subr.mxu0 0.0
    %1843 = vmatpush1.msra.mxu0 0.0
    %1844 = vmatprep.subr.mxu0 0.0
    %1845 = vmatpush1.msra.mxu0 0.0
    %1846 = vmatprep.subr.mxu0 0.0
    %1847 = vmatpush1.msra.mxu0 0.0
    %1848 = vmatprep.subr.mxu0 0.0
    %1849 = vmatpush1.msra.mxu0 0.0
    %1850 = vmatprep.subr.mxu0 0.0
    %1851 = vmatpush1.msra.mxu0 0.0
    %1852 = vmatprep.mubr.f32.mxu0 0.0
    %1853 = vmatmul.mubr.f32.gmra.mrb[0].mxu0 %v1715
    %v1854 = vpop.f32.mrb[0].mxu0
    %v1855 = vadd.f32 %v371, %v1854
    %v1856 = vpop.f32.mrb[0].mxu0
    %1857 = vdwg.mxu0
    %v1859 = vrot.slane %v1784, 4
    %v1861 = vadd.f32 %v1663, %v1859
    %v1862 = vxor.u32 %v1861, 2147483648
    %v1863 = vmul.f32 %v1862, 1.442695
    %v1864 = vpow.pop %v1863
    %v1865 = vadd.f32 %v1864, 1.0
    %v1866 = vrcp.pop %v1865
    %v1867 = vmul.f32 1.0, %v1866
    %v1869 = vrot.slane %v1786, 4
    %v1871 = vadd.f32 %v1664, %v1869
    %v1872 = vxor.u32 %v1871, 2147483648
    %v1873 = vmul.f32 %v1872, 1.442695
    %v1874 = vpow.pop %v1873
    %v1875 = vadd.f32 %v1874, 1.0
    %v1876 = vrcp.pop %v1875
    %v1877 = vmul.f32 1.0, %v1876
    %v1879 = vrot.slane %v1855, 4
    %v1881 = vmul.f32 %v1867, %v1879
    %v1882 = vadd.f32 %v1665, %v1881
    %v1883 = vtanh.pop %v1882
    %v1884 = vsub.f32 1.0, %v1877
    %v1885 = vmul.f32 %v1884, %v1883
    %v1886 = vrot.slane %v1661, 6
    %v1888 = vmul.f32 %v1877, %v1886
    %v1889 = vadd.f32 %v1885, %v1888
    %1890 = vst [vmem:[#allocation3 + $0x8] sm:$0x30] %v1889
    %v1891 = vld [vmem:[#allocation2 + $0x18] sm:$0xc0]
    %v1892 = vld [vmem:[#allocation2 + $0x20] sm:$0xc0]
    %v1893 = vld [vmem:[#allocation2 + $0x28] sm:$0xc0]
    %v1894 = vld [vmem:[#allocation5] sm:$0xff]
    %v1895 = vld [vmem:[#allocation5 + $0x8] sm:$0xff]
    %v1896 = vld [vmem:[#allocation5 + $0x10] sm:$0xff]
    %v1897 = vld [vmem:[#allocation5 + $0x18] sm:$0xff]
    %v1898 = vld [vmem:[#allocation5 + $0x20] sm:$0xff]
    %v1899 = vld [vmem:[#allocation5 + $0x28] sm:$0xff]
    %v1900 = vld [vmem:[#allocation5 + $0x30] sm:$0xff]
    %v1901 = vld [vmem:[#allocation5 + $0x38] sm:$0xff]
    %v1902 = vld [vmem:[#allocation5 + $0x40] sm:$0xff]
    %v1903 = vld [vmem:[#allocation5 + $0x48] sm:$0xff]
    %v1904 = vld [vmem:[#allocation5 + $0x50] sm:$0xff]
    %v1905 = vld [vmem:[#allocation5 + $0x58] sm:$0xff]
    %v1906 = vld [vmem:[#allocation5 + $0x60] sm:$0xff]
    %v1907 = vld [vmem:[#allocation5 + $0x68] sm:$0xff]
    %v1908 = vld [vmem:[#allocation5 + $0x70] sm:$0xff]
    %v1909 = vld [vmem:[#allocation5 + $0x78] sm:$0xff]
    %v1910 = vld [vmem:[#allocation5 + $0x80] sm:$0xff]
    %v1911 = vld [vmem:[#allocation5 + $0x88] sm:$0xff]
    %v1912 = vld [vmem:[#allocation5 + $0x90] sm:$0xff]
    %v1913 = vld [vmem:[#allocation5 + $0x98] sm:$0xff]
    %v1914 = vld [vmem:[#allocation5 + $0xa0] sm:$0xff]
    %v1915 = vld [vmem:[#allocation5 + $0xa8] sm:$0xff]
    %v1916 = vld [vmem:[#allocation5 + $0xb0] sm:$0xff]
    %v1917 = vld [vmem:[#allocation5 + $0xb8] sm:$0xff]
    %v1918 = vld [vmem:[#allocation5 + $0xc0] sm:$0xff]
    %v1919 = vld [vmem:[#allocation5 + $0xc8] sm:$0xff]
    %v1920 = vld [vmem:[#allocation5 + $0xd0] sm:$0xff]
    %v1921 = vld [vmem:[#allocation5 + $0xd8] sm:$0xff]
    %v1922 = vld [vmem:[#allocation5 + $0xe0] sm:$0xff]
    %v1923 = vld [vmem:[#allocation5 + $0xe8] sm:$0xff]
    %v1924 = vld [vmem:[#allocation5 + $0xf0] sm:$0xff]
    %v1925 = vld [vmem:[#allocation5 + $0xf8] sm:$0xff]
    %v1926 = vld [vmem:[#allocation5 + $0x100] sm:$0xff]
    %v1927 = vld [vmem:[#allocation5 + $0x108] sm:$0xff]
    %v1928 = vld [vmem:[#allocation5 + $0x110] sm:$0xff]
    %v1929 = vld [vmem:[#allocation5 + $0x118] sm:$0xff]
    %v1930 = vld [vmem:[#allocation5 + $0x120] sm:$0xff]
    %v1931 = vld [vmem:[#allocation5 + $0x128] sm:$0xff]
    %v1932 = vld [vmem:[#allocation5 + $0x130] sm:$0xff]
    %v1933 = vld [vmem:[#allocation5 + $0x138] sm:$0xff]
    %v1934 = vld [vmem:[#allocation5 + $0x140] sm:$0xff]
    %v1935 = vld [vmem:[#allocation5 + $0x148] sm:$0xff]
    %v1936 = vld [vmem:[#allocation5 + $0x150] sm:$0xff]
    %v1937 = vld [vmem:[#allocation5 + $0x158] sm:$0xff]
    %v1938 = vld [vmem:[#allocation5 + $0x160] sm:$0xff]
    %v1939 = vld [vmem:[#allocation5 + $0x168] sm:$0xff]
    %v1940 = vld [vmem:[#allocation5 + $0x170] sm:$0xff]
    %v1941 = vld [vmem:[#allocation5 + $0x178] sm:$0xff]
    %v1943 = vrot.slane %v1889, 4
    %1945 = vmatprep.subr.mxu0 %v1895
    %1946 = vmatpush1.msra.mxu0 %v1894
    %1947 = vmatprep.subr.mxu0 %v1898
    %1948 = vmatpush1.msra.mxu0 %v1897
    %1949 = vmatprep.subr.mxu0 %v1901
    %1950 = vmatpush1.msra.mxu0 %v1900
    %1951 = vmatprep.subr.mxu0 %v1904
    %1952 = vmatpush1.msra.mxu0 %v1903
    %1953 = vmatprep.subr.mxu0 %v1907
    %1954 = vmatpush1.msra.mxu0 %v1906
    %1955 = vmatprep.subr.mxu0 %v1910
    %1956 = vmatpush1.msra.mxu0 %v1909
    %1957 = vmatprep.subr.mxu0 %v1913
    %1958 = vmatpush1.msra.mxu0 %v1912
    %1959 = vmatprep.subr.mxu0 %v1916
    %1960 = vmatpush1.msra.mxu0 %v1915
    %1961 = vmatprep.subr.mxu0 %v1919
    %1962 = vmatpush1.msra.mxu0 %v1918
    %1963 = vmatprep.subr.mxu0 %v1922
    %1964 = vmatpush1.msra.mxu0 %v1921
    %1965 = vmatprep.subr.mxu0 %v1925
    %1966 = vmatpush1.msra.mxu0 %v1924
    %1967 = vmatprep.subr.mxu0 %v1928
    %1968 = vmatpush1.msra.mxu0 %v1927
    %1969 = vmatprep.subr.mxu0 %v1931
    %1970 = vmatpush1.msra.mxu0 %v1930
    %1971 = vmatprep.subr.mxu0 %v1934
    %1972 = vmatpush1.msra.mxu0 %v1933
    %1973 = vmatprep.subr.mxu0 %v1937
    %1974 = vmatpush1.msra.mxu0 %v1936
    %1975 = vmatprep.subr.mxu0 %v1940
    %1976 = vmatpush1.msra.mxu0 %v1939
    %1977 = vmatprep.subr.mxu0 0.0
    %1978 = vmatpush1.msra.mxu0 0.0
    %1979 = vmatprep.subr.mxu0 0.0
    %1980 = vmatpush1.msra.mxu0 0.0
    %1981 = vmatprep.subr.mxu0 0.0
    %1982 = vmatpush1.msra.mxu0 0.0
    %1983 = vmatprep.subr.mxu0 0.0
    %1984 = vmatpush1.msra.mxu0 0.0
    %1985 = vmatprep.subr.mxu0 0.0
    %1986 = vmatpush1.msra.mxu0 0.0
    %1987 = vmatprep.subr.mxu0 0.0
    %1988 = vmatpush1.msra.mxu0 0.0
    %1989 = vmatprep.subr.mxu0 0.0
    %1990 = vmatpush1.msra.mxu0 0.0
    %1991 = vmatprep.subr.mxu0 0.0
    %1992 = vmatpush1.msra.mxu0 0.0
    %1993 = vmatprep.subr.mxu0 0.0
    %1994 = vmatpush1.msra.mxu0 0.0
    %1995 = vmatprep.subr.mxu0 0.0
    %1996 = vmatpush1.msra.mxu0 0.0
    %1997 = vmatprep.subr.mxu0 0.0
    %1998 = vmatpush1.msra.mxu0 0.0
    %1999 = vmatprep.subr.mxu0 0.0
    %2000 = vmatpush1.msra.mxu0 0.0
    %2001 = vmatprep.subr.mxu0 0.0
    %2002 = vmatpush1.msra.mxu0 0.0
    %2003 = vmatprep.subr.mxu0 0.0
    %2004 = vmatpush1.msra.mxu0 0.0
    %2005 = vmatprep.subr.mxu0 0.0
    %2006 = vmatpush1.msra.mxu0 0.0
    %2007 = vmatprep.subr.mxu0 0.0
    %2008 = vmatpush1.msra.mxu0 0.0
    %2009 = vmatprep.mubr.f32.mxu0 0.0
    %2010 = vmatmul.mubr.f32.gmra.mrb[0].mxu0 %v1943
    %v2011 = vpop.f32.mrb[0].mxu0
    %v2012 = vadd.f32 %v363, %v2011
    %v2013 = vpop.f32.mrb[0].mxu0
    %v2014 = vadd.f32 %v367, %v2013
    %2015 = vdwg.mxu0
    %2016 = vmatprep.subr.mxu0 0.0
    %2017 = vmatpush1.msra.mxu0 %v1896
    %2018 = vmatprep.subr.mxu0 0.0
    %2019 = vmatpush1.msra.mxu0 %v1899
    %2020 = vmatprep.subr.mxu0 0.0
    %2021 = vmatpush1.msra.mxu0 %v1902
    %2022 = vmatprep.subr.mxu0 0.0
    %2023 = vmatpush1.msra.mxu0 %v1905
    %2024 = vmatprep.subr.mxu0 0.0
    %2025 = vmatpush1.msra.mxu0 %v1908
    %2026 = vmatprep.subr.mxu0 0.0
    %2027 = vmatpush1.msra.mxu0 %v1911
    %2028 = vmatprep.subr.mxu0 0.0
    %2029 = vmatpush1.msra.mxu0 %v1914
    %2030 = vmatprep.subr.mxu0 0.0
    %2031 = vmatpush1.msra.mxu0 %v1917
    %2032 = vmatprep.subr.mxu0 0.0
    %2033 = vmatpush1.msra.mxu0 %v1920
    %2034 = vmatprep.subr.mxu0 0.0
    %2035 = vmatpush1.msra.mxu0 %v1923
    %2036 = vmatprep.subr.mxu0 0.0
    %2037 = vmatpush1.msra.mxu0 %v1926
    %2038 = vmatprep.subr.mxu0 0.0
    %2039 = vmatpush1.msra.mxu0 %v1929
    %2040 = vmatprep.subr.mxu0 0.0
    %2041 = vmatpush1.msra.mxu0 %v1932
    %2042 = vmatprep.subr.mxu0 0.0
    %2043 = vmatpush1.msra.mxu0 %v1935
    %2044 = vmatprep.subr.mxu0 0.0
    %2045 = vmatpush1.msra.mxu0 %v1938
    %2046 = vmatprep.subr.mxu0 0.0
    %2047 = vmatpush1.msra.mxu0 %v1941
    %2048 = vmatprep.subr.mxu0 0.0
    %2049 = vmatpush1.msra.mxu0 0.0
    %2050 = vmatprep.subr.mxu0 0.0
    %2051 = vmatpush1.msra.mxu0 0.0
    %2052 = vmatprep.subr.mxu0 0.0
    %2053 = vmatpush1.msra.mxu0 0.0
    %2054 = vmatprep.subr.mxu0 0.0
    %2055 = vmatpush1.msra.mxu0 0.0
    %2056 = vmatprep.subr.mxu0 0.0
    %2057 = vmatpush1.msra.mxu0 0.0
    %2058 = vmatprep.subr.mxu0 0.0
    %2059 = vmatpush1.msra.mxu0 0.0
    %2060 = vmatprep.subr.mxu0 0.0
    %2061 = vmatpush1.msra.mxu0 0.0
    %2062 = vmatprep.subr.mxu0 0.0
    %2063 = vmatpush1.msra.mxu0 0.0
    %2064 = vmatprep.subr.mxu0 0.0
    %2065 = vmatpush1.msra.mxu0 0.0
    %2066 = vmatprep.subr.mxu0 0.0
    %2067 = vmatpush1.msra.mxu0 0.0
    %2068 = vmatprep.subr.mxu0 0.0
    %2069 = vmatpush1.msra.mxu0 0.0
    %2070 = vmatprep.subr.mxu0 0.0
    %2071 = vmatpush1.msra.mxu0 0.0
    %2072 = vmatprep.subr.mxu0 0.0
    %2073 = vmatpush1.msra.mxu0 0.0
    %2074 = vmatprep.subr.mxu0 0.0
    %2075 = vmatpush1.msra.mxu0 0.0
    %2076 = vmatprep.subr.mxu0 0.0
    %2077 = vmatpush1.msra.mxu0 0.0
    %2078 = vmatprep.subr.mxu0 0.0
    %2079 = vmatpush1.msra.mxu0 0.0
    %2080 = vmatprep.mubr.f32.mxu0 0.0
    %2081 = vmatmul.mubr.f32.gmra.mrb[0].mxu0 %v1943
    %v2082 = vpop.f32.mrb[0].mxu0
    %v2083 = vadd.f32 %v371, %v2082
    %v2084 = vpop.f32.mrb[0].mxu0
    %2085 = vdwg.mxu0
    %v2087 = vrot.slane %v2012, 2
    %v2089 = vadd.f32 %v1891, %v2087
    %v2090 = vxor.u32 %v2089, 2147483648
    %v2091 = vmul.f32 %v2090, 1.442695
    %v2092 = vpow.pop %v2091
    %v2093 = vadd.f32 %v2092, 1.0
    %v2094 = vrcp.pop %v2093
    %v2095 = vmul.f32 1.0, %v2094
    %v2097 = vrot.slane %v2014, 2
    %v2099 = vadd.f32 %v1892, %v2097
    %v2100 = vxor.u32 %v2099, 2147483648
    %v2101 = vmul.f32 %v2100, 1.442695
    %v2102 = vpow.pop %v2101
    %v2103 = vadd.f32 %v2102, 1.0
    %v2104 = vrcp.pop %v2103
    %v2105 = vmul.f32 1.0, %v2104
    %v2107 = vrot.slane %v2083, 2
    %v2109 = vmul.f32 %v2095, %v2107
    %v2110 = vadd.f32 %v1893, %v2109
    %v2111 = vtanh.pop %v2110
    %v2112 = vsub.f32 1.0, %v2105
    %v2113 = vmul.f32 %v2112, %v2111
    %v2114 = vrot.slane %v1889, 6
    %v2116 = vmul.f32 %v2105, %v2114
    %v2117 = vadd.f32 %v2113, %v2116
    %2118 = vst [vmem:[#allocation3 + $0x8] sm:$0xc0] %v2117
    %v2119 = vld [vmem:[#allocation3] sm:$0xff]
    %v2120 = vld [vmem:[#allocation3 + $0x8] sm:$0xff]
    %v2121 = vld [vmem:[#allocation7] sm:$0xff]
    %v2122 = vld [vmem:[#allocation7 + $0x8] sm:$0xff]
    %v2123 = vld [vmem:[#allocation7 + $0x10] sm:$0xff]
    %v2124 = vld [vmem:[#allocation7 + $0x18] sm:$0xff]
    %v2125 = vld [vmem:[#allocation7 + $0x20] sm:$0xff]
    %v2126 = vld [vmem:[#allocation7 + $0x28] sm:$0xff]
    %v2127 = vld [vmem:[#allocation7 + $0x30] sm:$0xff]
    %v2128 = vld [vmem:[#allocation7 + $0x38] sm:$0xff]
    %v2129 = vld [vmem:[#allocation7 + $0x40] sm:$0xff]
    %v2130 = vld [vmem:[#allocation7 + $0x48] sm:$0xff]
    %v2131 = vld [vmem:[#allocation7 + $0x50] sm:$0xff]
    %v2132 = vld [vmem:[#allocation7 + $0x58] sm:$0xff]
    %v2133 = vld [vmem:[#allocation7 + $0x60] sm:$0xff]
    %v2134 = vld [vmem:[#allocation7 + $0x68] sm:$0xff]
    %v2135 = vld [vmem:[#allocation7 + $0x70] sm:$0xff]
    %v2136 = vld [vmem:[#allocation7 + $0x78] sm:$0xff]
    %v2137 = vld [vmem:[#allocation7 + $0x80] sm:$0xff]
    %v2138 = vld [vmem:[#allocation7 + $0x88] sm:$0xff]
    %v2139 = vld [vmem:[#allocation7 + $0x90] sm:$0xff]
    %v2140 = vld [vmem:[#allocation7 + $0x98] sm:$0xff]
    %v2141 = vld [vmem:[#allocation7 + $0xa0] sm:$0xff]
    %v2142 = vld [vmem:[#allocation7 + $0xa8] sm:$0xff]
    %v2143 = vld [vmem:[#allocation7 + $0xb0] sm:$0xff]
    %v2144 = vld [vmem:[#allocation7 + $0xb8] sm:$0xff]
    %v2145 = vld [vmem:[#allocation7 + $0xc0] sm:$0xff]
    %v2146 = vld [vmem:[#allocation7 + $0xc8] sm:$0xff]
    %v2147 = vld [vmem:[#allocation7 + $0xd0] sm:$0xff]
    %v2148 = vld [vmem:[#allocation7 + $0xd8] sm:$0xff]
    %v2149 = vld [vmem:[#allocation7 + $0xe0] sm:$0xff]
    %v2150 = vld [vmem:[#allocation7 + $0xe8] sm:$0xff]
    %v2151 = vld [vmem:[#allocation7 + $0xf0] sm:$0xff]
    %v2152 = vld [vmem:[#allocation7 + $0xf8] sm:$0xff]
    %v2153 = vld [vmem:[#allocation7 + $0x100] sm:$0xff]
    %v2154 = vld [vmem:[#allocation7 + $0x108] sm:$0xff]
    %v2155 = vld [vmem:[#allocation7 + $0x110] sm:$0xff]
    %v2156 = vld [vmem:[#allocation7 + $0x118] sm:$0xff]
    %v2157 = vld [vmem:[#allocation7 + $0x120] sm:$0xff]
    %v2158 = vld [vmem:[#allocation7 + $0x128] sm:$0xff]
    %v2159 = vld [vmem:[#allocation7 + $0x130] sm:$0xff]
    %v2160 = vld [vmem:[#allocation7 + $0x138] sm:$0xff]
    %v2161 = vld [vmem:[#allocation7 + $0x140] sm:$0xff]
    %v2162 = vld [vmem:[#allocation7 + $0x148] sm:$0xff]
    %v2163 = vld [vmem:[#allocation7 + $0x150] sm:$0xff]
    %v2164 = vld [vmem:[#allocation7 + $0x158] sm:$0xff]
    %v2165 = vld [vmem:[#allocation7 + $0x160] sm:$0xff]
    %v2166 = vld [vmem:[#allocation7 + $0x168] sm:$0xff]
    %v2167 = vld [vmem:[#allocation7 + $0x170] sm:$0xff]
    %v2168 = vld [vmem:[#allocation7 + $0x178] sm:$0xff]
    %v2169 = vld [vmem:[%s7] sm:$0x7]
    %v2171 = vlaneseq
    %v2172 = vshrl.u32 %v2171, 7
    %v2173 = vsub.s32 0, %v2172
    %v2174 = vrot.slane %v2169, %v2173
    %v2175 = vlaneseq
    %v2176 = vshrl.u32 %v2175, 7
    %v2177 = vsub.s32 1, %v2176
    %v2178 = vrot.slane %v2169, %v2177
    %v2179 = vlaneseq
    %v2180 = vshrl.u32 %v2179, 7
    %v2181 = vsub.s32 2, %v2180
    %v2182 = vrot.slane %v2169, %v2181
    %2186 = vmatprep.subr.mxu0 %v2122
    %2187 = vmatpush1.msra.mxu0 %v2121
    %2188 = vmatprep.subr.mxu0 %v2125
    %2189 = vmatpush1.msra.mxu0 %v2124
    %2190 = vmatprep.subr.mxu0 %v2128
    %2191 = vmatpush1.msra.mxu0 %v2127
    %2192 = vmatprep.subr.mxu0 %v2131
    %2193 = vmatpush1.msra.mxu0 %v2130
    %2194 = vmatprep.subr.mxu0 %v2134
    %2195 = vmatpush1.msra.mxu0 %v2133
    %2196 = vmatprep.subr.mxu0 %v2137
    %2197 = vmatpush1.msra.mxu0 %v2136
    %2198 = vmatprep.subr.mxu0 %v2140
    %2199 = vmatpush1.msra.mxu0 %v2139
    %2200 = vmatprep.subr.mxu0 %v2143
    %2201 = vmatpush1.msra.mxu0 %v2142
    %2202 = vmatprep.subr.mxu0 %v2146
    %2203 = vmatpush1.msra.mxu0 %v2145
    %2204 = vmatprep.subr.mxu0 %v2149
    %2205 = vmatpush1.msra.mxu0 %v2148
    %2206 = vmatprep.subr.mxu0 %v2152
    %2207 = vmatpush1.msra.mxu0 %v2151
    %2208 = vmatprep.subr.mxu0 %v2155
    %2209 = vmatpush1.msra.mxu0 %v2154
    %2210 = vmatprep.subr.mxu0 %v2158
    %2211 = vmatpush1.msra.mxu0 %v2157
    %2212 = vmatprep.subr.mxu0 %v2161
    %2213 = vmatpush1.msra.mxu0 %v2160
    %2214 = vmatprep.subr.mxu0 %v2164
    %2215 = vmatpush1.msra.mxu0 %v2163
    %2216 = vmatprep.subr.mxu0 %v2167
    %2217 = vmatpush1.msra.mxu0 %v2166
    %2218 = vmatprep.subr.mxu0 0.0
    %2219 = vmatpush1.msra.mxu0 0.0
    %2220 = vmatprep.subr.mxu0 0.0
    %2221 = vmatpush1.msra.mxu0 0.0
    %2222 = vmatprep.subr.mxu0 0.0
    %2223 = vmatpush1.msra.mxu0 0.0
    %2224 = vmatprep.subr.mxu0 0.0
    %2225 = vmatpush1.msra.mxu0 0.0
    %2226 = vmatprep.subr.mxu0 0.0
    %2227 = vmatpush1.msra.mxu0 0.0
    %2228 = vmatprep.subr.mxu0 0.0
    %2229 = vmatpush1.msra.mxu0 0.0
    %2230 = vmatprep.subr.mxu0 0.0
    %2231 = vmatpush1.msra.mxu0 0.0
    %2232 = vmatprep.subr.mxu0 0.0
    %2233 = vmatpush1.msra.mxu0 0.0
    %2234 = vmatprep.subr.mxu0 0.0
    %2235 = vmatpush1.msra.mxu0 0.0
    %2236 = vmatprep.subr.mxu0 0.0
    %2237 = vmatpush1.msra.mxu0 0.0
    %2238 = vmatprep.subr.mxu0 0.0
    %2239 = vmatpush1.msra.mxu0 0.0
    %2240 = vmatprep.subr.mxu0 0.0
    %2241 = vmatpush1.msra.mxu0 0.0
    %2242 = vmatprep.subr.mxu0 0.0
    %2243 = vmatpush1.msra.mxu0 0.0
    %2244 = vmatprep.subr.mxu0 0.0
    %2245 = vmatpush1.msra.mxu0 0.0
    %2246 = vmatprep.subr.mxu0 0.0
    %2247 = vmatpush1.msra.mxu0 0.0
    %2248 = vmatprep.subr.mxu0 0.0
    %2249 = vmatpush1.msra.mxu0 0.0
    %2250 = vmatprep.mubr.f32.mxu0 0.0
    %2251 = vmatmul.mubr.f32.gmra.mrb[0].mxu0 %v2119
    %v2252 = vpop.f32.mrb[0].mxu0
    %v2253 = vadd.f32 %v2174, %v2252
    %v2254 = vpop.f32.mrb[0].mxu0
    %v2255 = vadd.f32 %v2178, %v2254
    %2256 = vmatprep.mubr.f32.mxu0 0.0
    %2257 = vmatmul.mubr.f32.gmra.mrb[0].mxu0 %v2120
    %v2258 = vpop.f32.mrb[0].mxu0
    %v2259 = vadd.f32 %v2174, %v2258
    %v2260 = vpop.f32.mrb[0].mxu0
    %v2261 = vadd.f32 %v2178, %v2260
    %2262 = vdwg.mxu0
    %2263 = vmatprep.subr.mxu0 0.0
    %2264 = vmatpush1.msra.mxu0 %v2123
    %2265 = vmatprep.subr.mxu0 0.0
    %2266 = vmatpush1.msra.mxu0 %v2126
    %2267 = vmatprep.subr.mxu0 0.0
    %2268 = vmatpush1.msra.mxu0 %v2129
    %2269 = vmatprep.subr.mxu0 0.0
    %2270 = vmatpush1.msra.mxu0 %v2132
    %2271 = vmatprep.subr.mxu0 0.0
    %2272 = vmatpush1.msra.mxu0 %v2135
    %2273 = vmatprep.subr.mxu0 0.0
    %2274 = vmatpush1.msra.mxu0 %v2138
    %2275 = vmatprep.subr.mxu0 0.0
    %2276 = vmatpush1.msra.mxu0 %v2141
    %2277 = vmatprep.subr.mxu0 0.0
    %2278 = vmatpush1.msra.mxu0 %v2144
    %2279 = vmatprep.subr.mxu0 0.0
    %2280 = vmatpush1.msra.mxu0 %v2147
    %2281 = vmatprep.subr.mxu0 0.0
    %2282 = vmatpush1.msra.mxu0 %v2150
    %2283 = vmatprep.subr.mxu0 0.0
    %2284 = vmatpush1.msra.mxu0 %v2153
    %2285 = vmatprep.subr.mxu0 0.0
    %2286 = vmatpush1.msra.mxu0 %v2156
    %2287 = vmatprep.subr.mxu0 0.0
    %2288 = vmatpush1.msra.mxu0 %v2159
    %2289 = vmatprep.subr.mxu0 0.0
    %2290 = vmatpush1.msra.mxu0 %v2162
    %2291 = vmatprep.subr.mxu0 0.0
    %2292 = vmatpush1.msra.mxu0 %v2165
    %2293 = vmatprep.subr.mxu0 0.0
    %2294 = vmatpush1.msra.mxu0 %v2168
    %2295 = vmatprep.subr.mxu0 0.0
    %2296 = vmatpush1.msra.mxu0 0.0
    %2297 = vmatprep.subr.mxu0 0.0
    %2298 = vmatpush1.msra.mxu0 0.0
    %2299 = vmatprep.subr.mxu0 0.0
    %2300 = vmatpush1.msra.mxu0 0.0
    %2301 = vmatprep.subr.mxu0 0.0
    %2302 = vmatpush1.msra.mxu0 0.0
    %2303 = vmatprep.subr.mxu0 0.0
    %2304 = vmatpush1.msra.mxu0 0.0
    %2305 = vmatprep.subr.mxu0 0.0
    %2306 = vmatpush1.msra.mxu0 0.0
    %2307 = vmatprep.subr.mxu0 0.0
    %2308 = vmatpush1.msra.mxu0 0.0
    %2309 = vmatprep.subr.mxu0 0.0
    %2310 = vmatpush1.msra.mxu0 0.0
    %2311 = vmatprep.subr.mxu0 0.0
    %2312 = vmatpush1.msra.mxu0 0.0
    %2313 = vmatprep.subr.mxu0 0.0
    %2314 = vmatpush1.msra.mxu0 0.0
    %2315 = vmatprep.subr.mxu0 0.0
    %2316 = vmatpush1.msra.mxu0 0.0
    %2317 = vmatprep.subr.mxu0 0.0
    %2318 = vmatpush1.msra.mxu0 0.0
    %2319 = vmatprep.subr.mxu0 0.0
    %2320 = vmatpush1.msra.mxu0 0.0
    %2321 = vmatprep.subr.mxu0 0.0
    %2322 = vmatpush1.msra.mxu0 0.0
    %2323 = vmatprep.subr.mxu0 0.0
    %2324 = vmatpush1.msra.mxu0 0.0
    %2325 = vmatprep.subr.mxu0 0.0
    %2326 = vmatpush1.msra.mxu0 0.0
    %2327 = vmatprep.mubr.f32.mxu0 0.0
    %2328 = vmatmul.mubr.f32.gmra.mrb[0].mxu0 %v2119
    %v2329 = vpop.f32.mrb[0].mxu0
    %v2330 = vadd.f32 %v2182, %v2329
    %v2331 = vpop.f32.mrb[0].mxu0
    %2332 = vmatprep.mubr.f32.mxu0 0.0
    %2333 = vmatmul.mubr.f32.gmra.mrb[0].mxu0 %v2120
    %v2334 = vpop.f32.mrb[0].mxu0
    %v2335 = vadd.f32 %v2182, %v2334
    %v2336 = vpop.f32.mrb[0].mxu0
    %2337 = vdwg.mxu0
    %2338 = vst [vmem:[#allocation2] sm:$0xff] %v2253
    %2339 = vst [vmem:[#allocation2 + $0x8] sm:$0xff] %v2255
    %2340 = vst [vmem:[#allocation2 + $0x10] sm:$0xff] %v2330
    %2341 = vst [vmem:[#allocation2 + $0x18] sm:$0xff] %v2259
    %2342 = vst [vmem:[#allocation2 + $0x20] sm:$0xff] %v2261
    %2343 = vst [vmem:[#allocation2 + $0x28] sm:$0xff] %v2335
    %v2344 = vld [vmem:[%s8] sm:$0x7]
    %v2345 = vld [vmem:[#allocation2] sm:$0x3]
    %v2346 = vld [vmem:[#allocation2 + $0x8] sm:$0x3]
    %v2347 = vld [vmem:[#allocation2 + $0x10] sm:$0x3]
    %v2348 = vld [vmem:[#allocation9] sm:$0xff]
    %v2349 = vld [vmem:[#allocation9 + $0x8] sm:$0xff]
    %v2350 = vld [vmem:[#allocation9 + $0x10] sm:$0xff]
    %v2351 = vld [vmem:[#allocation9 + $0x18] sm:$0xff]
    %v2352 = vld [vmem:[#allocation9 + $0x20] sm:$0xff]
    %v2353 = vld [vmem:[#allocation9 + $0x28] sm:$0xff]
    %v2354 = vld [vmem:[#allocation9 + $0x30] sm:$0xff]
    %v2355 = vld [vmem:[#allocation9 + $0x38] sm:$0xff]
    %v2356 = vld [vmem:[#allocation9 + $0x40] sm:$0xff]
    %v2357 = vld [vmem:[#allocation9 + $0x48] sm:$0xff]
    %v2358 = vld [vmem:[#allocation9 + $0x50] sm:$0xff]
    %v2359 = vld [vmem:[#allocation9 + $0x58] sm:$0xff]
    %v2360 = vld [vmem:[#allocation9 + $0x60] sm:$0xff]
    %v2361 = vld [vmem:[#allocation9 + $0x68] sm:$0xff]
    %v2362 = vld [vmem:[#allocation9 + $0x70] sm:$0xff]
    %v2363 = vld [vmem:[#allocation9 + $0x78] sm:$0xff]
    %v2364 = vld [vmem:[#allocation9 + $0x80] sm:$0xff]
    %v2365 = vld [vmem:[#allocation9 + $0x88] sm:$0xff]
    %v2366 = vld [vmem:[#allocation9 + $0x90] sm:$0xff]
    %v2367 = vld [vmem:[#allocation9 + $0x98] sm:$0xff]
    %v2368 = vld [vmem:[#allocation9 + $0xa0] sm:$0xff]
    %v2369 = vld [vmem:[#allocation9 + $0xa8] sm:$0xff]
    %v2370 = vld [vmem:[#allocation9 + $0xb0] sm:$0xff]
    %v2371 = vld [vmem:[#allocation9 + $0xb8] sm:$0xff]
    %v2372 = vld [vmem:[#allocation9 + $0xc0] sm:$0xff]
    %v2373 = vld [vmem:[#allocation9 + $0xc8] sm:$0xff]
    %v2374 = vld [vmem:[#allocation9 + $0xd0] sm:$0xff]
    %v2375 = vld [vmem:[#allocation9 + $0xd8] sm:$0xff]
    %v2376 = vld [vmem:[#allocation9 + $0xe0] sm:$0xff]
    %v2377 = vld [vmem:[#allocation9 + $0xe8] sm:$0xff]
    %v2378 = vld [vmem:[#allocation9 + $0xf0] sm:$0xff]
    %v2379 = vld [vmem:[#allocation9 + $0xf8] sm:$0xff]
    %v2380 = vld [vmem:[#allocation9 + $0x100] sm:$0xff]
    %v2381 = vld [vmem:[#allocation9 + $0x108] sm:$0xff]
    %v2382 = vld [vmem:[#allocation9 + $0x110] sm:$0xff]
    %v2383 = vld [vmem:[#allocation9 + $0x118] sm:$0xff]
    %v2384 = vld [vmem:[#allocation9 + $0x120] sm:$0xff]
    %v2385 = vld [vmem:[#allocation9 + $0x128] sm:$0xff]
    %v2386 = vld [vmem:[#allocation9 + $0x130] sm:$0xff]
    %v2387 = vld [vmem:[#allocation9 + $0x138] sm:$0xff]
    %v2388 = vld [vmem:[#allocation9 + $0x140] sm:$0xff]
    %v2389 = vld [vmem:[#allocation9 + $0x148] sm:$0xff]
    %v2390 = vld [vmem:[#allocation9 + $0x150] sm:$0xff]
    %v2391 = vld [vmem:[#allocation9 + $0x158] sm:$0xff]
    %v2392 = vld [vmem:[#allocation9 + $0x160] sm:$0xff]
    %v2393 = vld [vmem:[#allocation9 + $0x168] sm:$0xff]
    %v2394 = vld [vmem:[#allocation9 + $0x170] sm:$0xff]
    %v2395 = vld [vmem:[#allocation9 + $0x178] sm:$0xff]
    %v2397 = vlaneseq
    %v2398 = vshrl.u32 %v2397, 7
    %v2399 = vsub.s32 0, %v2398
    %v2400 = vrot.slane %v2344, %v2399
    %v2401 = vlaneseq
    %v2402 = vshrl.u32 %v2401, 7
    %v2403 = vsub.s32 1, %v2402
    %v2404 = vrot.slane %v2344, %v2403
    %v2405 = vlaneseq
    %v2406 = vshrl.u32 %v2405, 7
    %v2407 = vsub.s32 2, %v2406
    %v2408 = vrot.slane %v2344, %v2407
    %2412 = vmatprep.subr.mxu0 %v2349
    %2413 = vmatpush1.msra.mxu0 %v2348
    %2414 = vmatprep.subr.mxu0 %v2352
    %2415 = vmatpush1.msra.mxu0 %v2351
    %2416 = vmatprep.subr.mxu0 %v2355
    %2417 = vmatpush1.msra.mxu0 %v2354
    %2418 = vmatprep.subr.mxu0 %v2358
    %2419 = vmatpush1.msra.mxu0 %v2357
    %2420 = vmatprep.subr.mxu0 %v2361
    %2421 = vmatpush1.msra.mxu0 %v2360
    %2422 = vmatprep.subr.mxu0 %v2364
    %2423 = vmatpush1.msra.mxu0 %v2363
    %2424 = vmatprep.subr.mxu0 %v2367
    %2425 = vmatpush1.msra.mxu0 %v2366
    %2426 = vmatprep.subr.mxu0 %v2370
    %2427 = vmatpush1.msra.mxu0 %v2369
    %2428 = vmatprep.subr.mxu0 %v2373
    %2429 = vmatpush1.msra.mxu0 %v2372
    %2430 = vmatprep.subr.mxu0 %v2376
    %2431 = vmatpush1.msra.mxu0 %v2375
    %2432 = vmatprep.subr.mxu0 %v2379
    %2433 = vmatpush1.msra.mxu0 %v2378
    %2434 = vmatprep.subr.mxu0 %v2382
    %2435 = vmatpush1.msra.mxu0 %v2381
    %2436 = vmatprep.subr.mxu0 %v2385
    %2437 = vmatpush1.msra.mxu0 %v2384
    %2438 = vmatprep.subr.mxu0 %v2388
    %2439 = vmatpush1.msra.mxu0 %v2387
    %2440 = vmatprep.subr.mxu0 %v2391
    %2441 = vmatpush1.msra.mxu0 %v2390
    %2442 = vmatprep.subr.mxu0 %v2394
    %2443 = vmatpush1.msra.mxu0 %v2393
    %2444 = vmatprep.subr.mxu0 0.0
    %2445 = vmatpush1.msra.mxu0 0.0
    %2446 = vmatprep.subr.mxu0 0.0
    %2447 = vmatpush1.msra.mxu0 0.0
    %2448 = vmatprep.subr.mxu0 0.0
    %2449 = vmatpush1.msra.mxu0 0.0
    %2450 = vmatprep.subr.mxu0 0.0
    %2451 = vmatpush1.msra.mxu0 0.0
    %2452 = vmatprep.subr.mxu0 0.0
    %2453 = vmatpush1.msra.mxu0 0.0
    %2454 = vmatprep.subr.mxu0 0.0
    %2455 = vmatpush1.msra.mxu0 0.0
    %2456 = vmatprep.subr.mxu0 0.0
    %2457 = vmatpush1.msra.mxu0 0.0
    %2458 = vmatprep.subr.mxu0 0.0
    %2459 = vmatpush1.msra.mxu0 0.0
    %2460 = vmatprep.subr.mxu0 0.0
    %2461 = vmatpush1.msra.mxu0 0.0
    %2462 = vmatprep.subr.mxu0 0.0
    %2463 = vmatpush1.msra.mxu0 0.0
    %2464 = vmatprep.subr.mxu0 0.0
    %2465 = vmatpush1.msra.mxu0 0.0
    %2466 = vmatprep.subr.mxu0 0.0
    %2467 = vmatpush1.msra.mxu0 0.0
    %2468 = vmatprep.subr.mxu0 0.0
    %2469 = vmatpush1.msra.mxu0 0.0
    %2470 = vmatprep.subr.mxu0 0.0
    %2471 = vmatpush1.msra.mxu0 0.0
    %2472 = vmatprep.subr.mxu0 0.0
    %2473 = vmatpush1.msra.mxu0 0.0
    %2474 = vmatprep.subr.mxu0 0.0
    %2475 = vmatpush1.msra.mxu0 0.0
    %2476 = vmatprep.mubr.f32.mxu0 0.0
    %2477 = vmatmul.mubr.f32.gmra.mrb[0].mxu0 0.0
    %v2478 = vpop.f32.mrb[0].mxu0
    %v2479 = vadd.f32 %v2400, %v2478
    %v2480 = vpop.f32.mrb[0].mxu0
    %v2481 = vadd.f32 %v2404, %v2480
    %2482 = vdwg.mxu0
    %2483 = vmatprep.subr.mxu0 0.0
    %2484 = vmatpush1.msra.mxu0 %v2350
    %2485 = vmatprep.subr.mxu0 0.0
    %2486 = vmatpush1.msra.mxu0 %v2353
    %2487 = vmatprep.subr.mxu0 0.0
    %2488 = vmatpush1.msra.mxu0 %v2356
    %2489 = vmatprep.subr.mxu0 0.0
    %2490 = vmatpush1.msra.mxu0 %v2359
    %2491 = vmatprep.subr.mxu0 0.0
    %2492 = vmatpush1.msra.mxu0 %v2362
    %2493 = vmatprep.subr.mxu0 0.0
    %2494 = vmatpush1.msra.mxu0 %v2365
    %2495 = vmatprep.subr.mxu0 0.0
    %2496 = vmatpush1.msra.mxu0 %v2368
    %2497 = vmatprep.subr.mxu0 0.0
    %2498 = vmatpush1.msra.mxu0 %v2371
    %2499 = vmatprep.subr.mxu0 0.0
    %2500 = vmatpush1.msra.mxu0 %v2374
    %2501 = vmatprep.subr.mxu0 0.0
    %2502 = vmatpush1.msra.mxu0 %v2377
    %2503 = vmatprep.subr.mxu0 0.0
    %2504 = vmatpush1.msra.mxu0 %v2380
    %2505 = vmatprep.subr.mxu0 0.0
    %2506 = vmatpush1.msra.mxu0 %v2383
    %2507 = vmatprep.subr.mxu0 0.0
    %2508 = vmatpush1.msra.mxu0 %v2386
    %2509 = vmatprep.subr.mxu0 0.0
    %2510 = vmatpush1.msra.mxu0 %v2389
    %2511 = vmatprep.subr.mxu0 0.0
    %2512 = vmatpush1.msra.mxu0 %v2392
    %2513 = vmatprep.subr.mxu0 0.0
    %2514 = vmatpush1.msra.mxu0 %v2395
    %2515 = vmatprep.subr.mxu0 0.0
    %2516 = vmatpush1.msra.mxu0 0.0
    %2517 = vmatprep.subr.mxu0 0.0
    %2518 = vmatpush1.msra.mxu0 0.0
    %2519 = vmatprep.subr.mxu0 0.0
    %2520 = vmatpush1.msra.mxu0 0.0
    %2521 = vmatprep.subr.mxu0 0.0
    %2522 = vmatpush1.msra.mxu0 0.0
    %2523 = vmatprep.subr.mxu0 0.0
    %2524 = vmatpush1.msra.mxu0 0.0
    %2525 = vmatprep.subr.mxu0 0.0
    %2526 = vmatpush1.msra.mxu0 0.0
    %2527 = vmatprep.subr.mxu0 0.0
    %2528 = vmatpush1.msra.mxu0 0.0
    %2529 = vmatprep.subr.mxu0 0.0
    %2530 = vmatpush1.msra.mxu0 0.0
    %2531 = vmatprep.subr.mxu0 0.0
    %2532 = vmatpush1.msra.mxu0 0.0
    %2533 = vmatprep.subr.mxu0 0.0
    %2534 = vmatpush1.msra.mxu0 0.0
    %2535 = vmatprep.subr.mxu0 0.0
    %2536 = vmatpush1.msra.mxu0 0.0
    %2537 = vmatprep.subr.mxu0 0.0
    %2538 = vmatpush1.msra.mxu0 0.0
    %2539 = vmatprep.subr.mxu0 0.0
    %2540 = vmatpush1.msra.mxu0 0.0
    %2541 = vmatprep.subr.mxu0 0.0
    %2542 = vmatpush1.msra.mxu0 0.0
    %2543 = vmatprep.subr.mxu0 0.0
    %2544 = vmatpush1.msra.mxu0 0.0
    %2545 = vmatprep.subr.mxu0 0.0
    %2546 = vmatpush1.msra.mxu0 0.0
    %2547 = vmatprep.mubr.f32.mxu0 0.0
    %2548 = vmatmul.mubr.f32.gmra.mrb[0].mxu0 0.0
    %v2549 = vpop.f32.mrb[0].mxu0
    %v2550 = vadd.f32 %v2408, %v2549
    %v2551 = vpop.f32.mrb[0].mxu0
    %2552 = vdwg.mxu0
    %v2553 = vadd.f32 %v2345, %v2479
    %v2554 = vxor.u32 %v2553, 2147483648
    %v2555 = vmul.f32 %v2554, 1.442695
    %v2556 = vpow.pop %v2555
    %v2557 = vadd.f32 %v2556, 1.0
    %v2558 = vrcp.pop %v2557
    %v2559 = vmul.f32 1.0, %v2558
    %v2560 = vadd.f32 %v2346, %v2481
    %v2561 = vxor.u32 %v2560, 2147483648
    %v2562 = vmul.f32 %v2561, 1.442695
    %v2563 = vpow.pop %v2562
    %v2564 = vadd.f32 %v2563, 1.0
    %v2565 = vrcp.pop %v2564
    %v2566 = vmul.f32 1.0, %v2565
    %v2567 = vmul.f32 %v2559, %v2550
    %v2568 = vadd.f32 %v2347, %v2567
    %v2569 = vtanh.pop %v2568
    %v2570 = vsub.f32 1.0, %v2566
    %v2571 = vmul.f32 %v2570, %v2569
    %v2572 = vmul.f32 %v2566, 0.0
    %v2573 = vadd.f32 %v2571, %v2572
    %2574 = vst [vmem:[#allocation3] sm:$0x3] %v2573
    %v2575 = vld [vmem:[#allocation2] sm:$0xc]
    %v2576 = vld [vmem:[#allocation2 + $0x8] sm:$0xc]
    %v2577 = vld [vmem:[#allocation2 + $0x10] sm:$0xc]
    %v2578 = vld [vmem:[#allocation9] sm:$0xff]
    %v2579 = vld [vmem:[#allocation9 + $0x8] sm:$0xff]
    %v2580 = vld [vmem:[#allocation9 + $0x10] sm:$0xff]
    %v2581 = vld [vmem:[#allocation9 + $0x18] sm:$0xff]
    %v2582 = vld [vmem:[#allocation9 + $0x20] sm:$0xff]
    %v2583 = vld [vmem:[#allocation9 + $0x28] sm:$0xff]
    %v2584 = vld [vmem:[#allocation9 + $0x30] sm:$0xff]
    %v2585 = vld [vmem:[#allocation9 + $0x38] sm:$0xff]
    %v2586 = vld [vmem:[#allocation9 + $0x40] sm:$0xff]
    %v2587 = vld [vmem:[#allocation9 + $0x48] sm:$0xff]
    %v2588 = vld [vmem:[#allocation9 + $0x50] sm:$0xff]
    %v2589 = vld [vmem:[#allocation9 + $0x58] sm:$0xff]
    %v2590 = vld [vmem:[#allocation9 + $0x60] sm:$0xff]
    %v2591 = vld [vmem:[#allocation9 + $0x68] sm:$0xff]
    %v2592 = vld [vmem:[#allocation9 + $0x70] sm:$0xff]
    %v2593 = vld [vmem:[#allocation9 + $0x78] sm:$0xff]
    %v2594 = vld [vmem:[#allocation9 + $0x80] sm:$0xff]
    %v2595 = vld [vmem:[#allocation9 + $0x88] sm:$0xff]
    %v2596 = vld [vmem:[#allocation9 + $0x90] sm:$0xff]
    %v2597 = vld [vmem:[#allocation9 + $0x98] sm:$0xff]
    %v2598 = vld [vmem:[#allocation9 + $0xa0] sm:$0xff]
    %v2599 = vld [vmem:[#allocation9 + $0xa8] sm:$0xff]
    %v2600 = vld [vmem:[#allocation9 + $0xb0] sm:$0xff]
    %v2601 = vld [vmem:[#allocation9 + $0xb8] sm:$0xff]
    %v2602 = vld [vmem:[#allocation9 + $0xc0] sm:$0xff]
    %v2603 = vld [vmem:[#allocation9 + $0xc8] sm:$0xff]
    %v2604 = vld [vmem:[#allocation9 + $0xd0] sm:$0xff]
    %v2605 = vld [vmem:[#allocation9 + $0xd8] sm:$0xff]
    %v2606 = vld [vmem:[#allocation9 + $0xe0] sm:$0xff]
    %v2607 = vld [vmem:[#allocation9 + $0xe8] sm:$0xff]
    %v2608 = vld [vmem:[#allocation9 + $0xf0] sm:$0xff]
    %v2609 = vld [vmem:[#allocation9 + $0xf8] sm:$0xff]
    %v2610 = vld [vmem:[#allocation9 + $0x100] sm:$0xff]
    %v2611 = vld [vmem:[#allocation9 + $0x108] sm:$0xff]
    %v2612 = vld [vmem:[#allocation9 + $0x110] sm:$0xff]
    %v2613 = vld [vmem:[#allocation9 + $0x118] sm:$0xff]
    %v2614 = vld [vmem:[#allocation9 + $0x120] sm:$0xff]
    %v2615 = vld [vmem:[#allocation9 + $0x128] sm:$0xff]
    %v2616 = vld [vmem:[#allocation9 + $0x130] sm:$0xff]
    %v2617 = vld [vmem:[#allocation9 + $0x138] sm:$0xff]
    %v2618 = vld [vmem:[#allocation9 + $0x140] sm:$0xff]
    %v2619 = vld [vmem:[#allocation9 + $0x148] sm:$0xff]
    %v2620 = vld [vmem:[#allocation9 + $0x150] sm:$0xff]
    %v2621 = vld [vmem:[#allocation9 + $0x158] sm:$0xff]
    %v2622 = vld [vmem:[#allocation9 + $0x160] sm:$0xff]
    %v2623 = vld [vmem:[#allocation9 + $0x168] sm:$0xff]
    %v2624 = vld [vmem:[#allocation9 + $0x170] sm:$0xff]
    %v2625 = vld [vmem:[#allocation9 + $0x178] sm:$0xff]
    %2626 = vmatprep.subr.mxu0 %v2579
    %2627 = vmatpush1.msra.mxu0 %v2578
    %2628 = vmatprep.subr.mxu0 %v2582
    %2629 = vmatpush1.msra.mxu0 %v2581
    %2630 = vmatprep.subr.mxu0 %v2585
    %2631 = vmatpush1.msra.mxu0 %v2584
    %2632 = vmatprep.subr.mxu0 %v2588
    %2633 = vmatpush1.msra.mxu0 %v2587
    %2634 = vmatprep.subr.mxu0 %v2591
    %2635 = vmatpush1.msra.mxu0 %v2590
    %2636 = vmatprep.subr.mxu0 %v2594
    %2637 = vmatpush1.msra.mxu0 %v2593
    %2638 = vmatprep.subr.mxu0 %v2597
    %2639 = vmatpush1.msra.mxu0 %v2596
    %2640 = vmatprep.subr.mxu0 %v2600
    %2641 = vmatpush1.msra.mxu0 %v2599
    %2642 = vmatprep.subr.mxu0 %v2603
    %2643 = vmatpush1.msra.mxu0 %v2602
    %2644 = vmatprep.subr.mxu0 %v2606
    %2645 = vmatpush1.msra.mxu0 %v2605
    %2646 = vmatprep.subr.mxu0 %v2609
    %2647 = vmatpush1.msra.mxu0 %v2608
    %2648 = vmatprep.subr.mxu0 %v2612
    %2649 = vmatpush1.msra.mxu0 %v2611
    %2650 = vmatprep.subr.mxu0 %v2615
    %2651 = vmatpush1.msra.mxu0 %v2614
    %2652 = vmatprep.subr.mxu0 %v2618
    %2653 = vmatpush1.msra.mxu0 %v2617
    %2654 = vmatprep.subr.mxu0 %v2621
    %2655 = vmatpush1.msra.mxu0 %v2620
    %2656 = vmatprep.subr.mxu0 %v2624
    %2657 = vmatpush1.msra.mxu0 %v2623
    %2658 = vmatprep.subr.mxu0 0.0
    %2659 = vmatpush1.msra.mxu0 0.0
    %2660 = vmatprep.subr.mxu0 0.0
    %2661 = vmatpush1.msra.mxu0 0.0
    %2662 = vmatprep.subr.mxu0 0.0
    %2663 = vmatpush1.msra.mxu0 0.0
    %2664 = vmatprep.subr.mxu0 0.0
    %2665 = vmatpush1.msra.mxu0 0.0
    %2666 = vmatprep.subr.mxu0 0.0
    %2667 = vmatpush1.msra.mxu0 0.0
    %2668 = vmatprep.subr.mxu0 0.0
    %2669 = vmatpush1.msra.mxu0 0.0
    %2670 = vmatprep.subr.mxu0 0.0
    %2671 = vmatpush1.msra.mxu0 0.0
    %2672 = vmatprep.subr.mxu0 0.0
    %2673 = vmatpush1.msra.mxu0 0.0
    %2674 = vmatprep.subr.mxu0 0.0
    %2675 = vmatpush1.msra.mxu0 0.0
    %2676 = vmatprep.subr.mxu0 0.0
    %2677 = vmatpush1.msra.mxu0 0.0
    %2678 = vmatprep.subr.mxu0 0.0
    %2679 = vmatpush1.msra.mxu0 0.0
    %2680 = vmatprep.subr.mxu0 0.0
    %2681 = vmatpush1.msra.mxu0 0.0
    %2682 = vmatprep.subr.mxu0 0.0
    %2683 = vmatpush1.msra.mxu0 0.0
    %2684 = vmatprep.subr.mxu0 0.0
    %2685 = vmatpush1.msra.mxu0 0.0
    %2686 = vmatprep.subr.mxu0 0.0
    %2687 = vmatpush1.msra.mxu0 0.0
    %2688 = vmatprep.subr.mxu0 0.0
    %2689 = vmatpush1.msra.mxu0 0.0
    %2690 = vmatprep.mubr.f32.mxu0 0.0
    %2691 = vmatmul.mubr.f32.gmra.mrb[0].mxu0 %v2573
    %v2692 = vpop.f32.mrb[0].mxu0
    %v2693 = vadd.f32 %v2400, %v2692
    %v2694 = vpop.f32.mrb[0].mxu0
    %v2695 = vadd.f32 %v2404, %v2694
    %2696 = vdwg.mxu0
    %2697 = vmatprep.subr.mxu0 0.0
    %2698 = vmatpush1.msra.mxu0 %v2580
    %2699 = vmatprep.subr.mxu0 0.0
    %2700 = vmatpush1.msra.mxu0 %v2583
    %2701 = vmatprep.subr.mxu0 0.0
    %2702 = vmatpush1.msra.mxu0 %v2586
    %2703 = vmatprep.subr.mxu0 0.0
    %2704 = vmatpush1.msra.mxu0 %v2589
    %2705 = vmatprep.subr.mxu0 0.0
    %2706 = vmatpush1.msra.mxu0 %v2592
    %2707 = vmatprep.subr.mxu0 0.0
    %2708 = vmatpush1.msra.mxu0 %v2595
    %2709 = vmatprep.subr.mxu0 0.0
    %2710 = vmatpush1.msra.mxu0 %v2598
    %2711 = vmatprep.subr.mxu0 0.0
    %2712 = vmatpush1.msra.mxu0 %v2601
    %2713 = vmatprep.subr.mxu0 0.0
    %2714 = vmatpush1.msra.mxu0 %v2604
    %2715 = vmatprep.subr.mxu0 0.0
    %2716 = vmatpush1.msra.mxu0 %v2607
    %2717 = vmatprep.subr.mxu0 0.0
    %2718 = vmatpush1.msra.mxu0 %v2610
    %2719 = vmatprep.subr.mxu0 0.0
    %2720 = vmatpush1.msra.mxu0 %v2613
    %2721 = vmatprep.subr.mxu0 0.0
    %2722 = vmatpush1.msra.mxu0 %v2616
    %2723 = vmatprep.subr.mxu0 0.0
    %2724 = vmatpush1.msra.mxu0 %v2619
    %2725 = vmatprep.subr.mxu0 0.0
    %2726 = vmatpush1.msra.mxu0 %v2622
    %2727 = vmatprep.subr.mxu0 0.0
    %2728 = vmatpush1.msra.mxu0 %v2625
    %2729 = vmatprep.subr.mxu0 0.0
    %2730 = vmatpush1.msra.mxu0 0.0
    %2731 = vmatprep.subr.mxu0 0.0
    %2732 = vmatpush1.msra.mxu0 0.0
    %2733 = vmatprep.subr.mxu0 0.0
    %2734 = vmatpush1.msra.mxu0 0.0
    %2735 = vmatprep.subr.mxu0 0.0
    %2736 = vmatpush1.msra.mxu0 0.0
    %2737 = vmatprep.subr.mxu0 0.0
    %2738 = vmatpush1.msra.mxu0 0.0
    %2739 = vmatprep.subr.mxu0 0.0
    %2740 = vmatpush1.msra.mxu0 0.0
    %2741 = vmatprep.subr.mxu0 0.0
    %2742 = vmatpush1.msra.mxu0 0.0
    %2743 = vmatprep.subr.mxu0 0.0
    %2744 = vmatpush1.msra.mxu0 0.0
    %2745 = vmatprep.subr.mxu0 0.0
    %2746 = vmatpush1.msra.mxu0 0.0
    %2747 = vmatprep.subr.mxu0 0.0
    %2748 = vmatpush1.msra.mxu0 0.0
    %2749 = vmatprep.subr.mxu0 0.0
    %2750 = vmatpush1.msra.mxu0 0.0
    %2751 = vmatprep.subr.mxu0 0.0
    %2752 = vmatpush1.msra.mxu0 0.0
    %2753 = vmatprep.subr.mxu0 0.0
    %2754 = vmatpush1.msra.mxu0 0.0
    %2755 = vmatprep.subr.mxu0 0.0
    %2756 = vmatpush1.msra.mxu0 0.0
    %2757 = vmatprep.subr.mxu0 0.0
    %2758 = vmatpush1.msra.mxu0 0.0
    %2759 = vmatprep.subr.mxu0 0.0
    %2760 = vmatpush1.msra.mxu0 0.0
    %2761 = vmatprep.mubr.f32.mxu0 0.0
    %2762 = vmatmul.mubr.f32.gmra.mrb[0].mxu0 %v2573
    %v2763 = vpop.f32.mrb[0].mxu0
    %v2764 = vadd.f32 %v2408, %v2763
    %v2765 = vpop.f32.mrb[0].mxu0
    %2766 = vdwg.mxu0
    %v2768 = vrot.slane %v2693, 6
    %v2770 = vadd.f32 %v2575, %v2768
    %v2771 = vxor.u32 %v2770, 2147483648
    %v2772 = vmul.f32 %v2771, 1.442695
    %v2773 = vpow.pop %v2772
    %v2774 = vadd.f32 %v2773, 1.0
    %v2775 = vrcp.pop %v2774
    %v2776 = vmul.f32 1.0, %v2775
    %v2778 = vrot.slane %v2695, 6
    %v2780 = vadd.f32 %v2576, %v2778
    %v2781 = vxor.u32 %v2780, 2147483648
    %v2782 = vmul.f32 %v2781, 1.442695
    %v2783 = vpow.pop %v2782
    %v2784 = vadd.f32 %v2783, 1.0
    %v2785 = vrcp.pop %v2784
    %v2786 = vmul.f32 1.0, %v2785
    %v2788 = vrot.slane %v2764, 6
    %v2790 = vmul.f32 %v2776, %v2788
    %v2791 = vadd.f32 %v2577, %v2790
    %v2792 = vtanh.pop %v2791
    %v2793 = vsub.f32 1.0, %v2786
    %v2794 = vmul.f32 %v2793, %v2792
    %v2796 = vrot.slane %v2573, 6
    %v2798 = vmul.f32 %v2786, %v2796
    %v2799 = vadd.f32 %v2794, %v2798
    %2800 = vst [vmem:[#allocation3] sm:$0xc] %v2799
    %v2801 = vld [vmem:[#allocation2] sm:$0x30]
    %v2802 = vld [vmem:[#allocation2 + $0x8] sm:$0x30]
    %v2803 = vld [vmem:[#allocation2 + $0x10] sm:$0x30]
    %v2804 = vld [vmem:[#allocation9] sm:$0xff]
    %v2805 = vld [vmem:[#allocation9 + $0x8] sm:$0xff]
    %v2806 = vld [vmem:[#allocation9 + $0x10] sm:$0xff]
    %v2807 = vld [vmem:[#allocation9 + $0x18] sm:$0xff]
    %v2808 = vld [vmem:[#allocation9 + $0x20] sm:$0xff]
    %v2809 = vld [vmem:[#allocation9 + $0x28] sm:$0xff]
    %v2810 = vld [vmem:[#allocation9 + $0x30] sm:$0xff]
    %v2811 = vld [vmem:[#allocation9 + $0x38] sm:$0xff]
    %v2812 = vld [vmem:[#allocation9 + $0x40] sm:$0xff]
    %v2813 = vld [vmem:[#allocation9 + $0x48] sm:$0xff]
    %v2814 = vld [vmem:[#allocation9 + $0x50] sm:$0xff]
    %v2815 = vld [vmem:[#allocation9 + $0x58] sm:$0xff]
    %v2816 = vld [vmem:[#allocation9 + $0x60] sm:$0xff]
    %v2817 = vld [vmem:[#allocation9 + $0x68] sm:$0xff]
    %v2818 = vld [vmem:[#allocation9 + $0x70] sm:$0xff]
    %v2819 = vld [vmem:[#allocation9 + $0x78] sm:$0xff]
    %v2820 = vld [vmem:[#allocation9 + $0x80] sm:$0xff]
    %v2821 = vld [vmem:[#allocation9 + $0x88] sm:$0xff]
    %v2822 = vld [vmem:[#allocation9 + $0x90] sm:$0xff]
    %v2823 = vld [vmem:[#allocation9 + $0x98] sm:$0xff]
    %v2824 = vld [vmem:[#allocation9 + $0xa0] sm:$0xff]
    %v2825 = vld [vmem:[#allocation9 + $0xa8] sm:$0xff]
    %v2826 = vld [vmem:[#allocation9 + $0xb0] sm:$0xff]
    %v2827 = vld [vmem:[#allocation9 + $0xb8] sm:$0xff]
    %v2828 = vld [vmem:[#allocation9 + $0xc0] sm:$0xff]
    %v2829 = vld [vmem:[#allocation9 + $0xc8] sm:$0xff]
    %v2830 = vld [vmem:[#allocation9 + $0xd0] sm:$0xff]
    %v2831 = vld [vmem:[#allocation9 + $0xd8] sm:$0xff]
    %v2832 = vld [vmem:[#allocation9 + $0xe0] sm:$0xff]
    %v2833 = vld [vmem:[#allocation9 + $0xe8] sm:$0xff]
    %v2834 = vld [vmem:[#allocation9 + $0xf0] sm:$0xff]
    %v2835 = vld [vmem:[#allocation9 + $0xf8] sm:$0xff]
    %v2836 = vld [vmem:[#allocation9 + $0x100] sm:$0xff]
    %v2837 = vld [vmem:[#allocation9 + $0x108] sm:$0xff]
    %v2838 = vld [vmem:[#allocation9 + $0x110] sm:$0xff]
    %v2839 = vld [vmem:[#allocation9 + $0x118] sm:$0xff]
    %v2840 = vld [vmem:[#allocation9 + $0x120] sm:$0xff]
    %v2841 = vld [vmem:[#allocation9 + $0x128] sm:$0xff]
    %v2842 = vld [vmem:[#allocation9 + $0x130] sm:$0xff]
    %v2843 = vld [vmem:[#allocation9 + $0x138] sm:$0xff]
    %v2844 = vld [vmem:[#allocation9 + $0x140] sm:$0xff]
    %v2845 = vld [vmem:[#allocation9 + $0x148] sm:$0xff]
    %v2846 = vld [vmem:[#allocation9 + $0x150] sm:$0xff]
    %v2847 = vld [vmem:[#allocation9 + $0x158] sm:$0xff]
    %v2848 = vld [vmem:[#allocation9 + $0x160] sm:$0xff]
    %v2849 = vld [vmem:[#allocation9 + $0x168] sm:$0xff]
    %v2850 = vld [vmem:[#allocation9 + $0x170] sm:$0xff]
    %v2851 = vld [vmem:[#allocation9 + $0x178] sm:$0xff]
    %v2853 = vrot.slane %v2799, 2
    %2855 = vmatprep.subr.mxu0 %v2805
    %2856 = vmatpush1.msra.mxu0 %v2804
    %2857 = vmatprep.subr.mxu0 %v2808
    %2858 = vmatpush1.msra.mxu0 %v2807
    %2859 = vmatprep.subr.mxu0 %v2811
    %2860 = vmatpush1.msra.mxu0 %v2810
    %2861 = vmatprep.subr.mxu0 %v2814
    %2862 = vmatpush1.msra.mxu0 %v2813
    %2863 = vmatprep.subr.mxu0 %v2817
    %2864 = vmatpush1.msra.mxu0 %v2816
    %2865 = vmatprep.subr.mxu0 %v2820
    %2866 = vmatpush1.msra.mxu0 %v2819
    %2867 = vmatprep.subr.mxu0 %v2823
    %2868 = vmatpush1.msra.mxu0 %v2822
    %2869 = vmatprep.subr.mxu0 %v2826
    %2870 = vmatpush1.msra.mxu0 %v2825
    %2871 = vmatprep.subr.mxu0 %v2829
    %2872 = vmatpush1.msra.mxu0 %v2828
    %2873 = vmatprep.subr.mxu0 %v2832
    %2874 = vmatpush1.msra.mxu0 %v2831
    %2875 = vmatprep.subr.mxu0 %v2835
    %2876 = vmatpush1.msra.mxu0 %v2834
    %2877 = vmatprep.subr.mxu0 %v2838
    %2878 = vmatpush1.msra.mxu0 %v2837
    %2879 = vmatprep.subr.mxu0 %v2841
    %2880 = vmatpush1.msra.mxu0 %v2840
    %2881 = vmatprep.subr.mxu0 %v2844
    %2882 = vmatpush1.msra.mxu0 %v2843
    %2883 = vmatprep.subr.mxu0 %v2847
    %2884 = vmatpush1.msra.mxu0 %v2846
    %2885 = vmatprep.subr.mxu0 %v2850
    %2886 = vmatpush1.msra.mxu0 %v2849
    %2887 = vmatprep.subr.mxu0 0.0
    %2888 = vmatpush1.msra.mxu0 0.0
    %2889 = vmatprep.subr.mxu0 0.0
    %2890 = vmatpush1.msra.mxu0 0.0
    %2891 = vmatprep.subr.mxu0 0.0
    %2892 = vmatpush1.msra.mxu0 0.0
    %2893 = vmatprep.subr.mxu0 0.0
    %2894 = vmatpush1.msra.mxu0 0.0
    %2895 = vmatprep.subr.mxu0 0.0
    %2896 = vmatpush1.msra.mxu0 0.0
    %2897 = vmatprep.subr.mxu0 0.0
    %2898 = vmatpush1.msra.mxu0 0.0
    %2899 = vmatprep.subr.mxu0 0.0
    %2900 = vmatpush1.msra.mxu0 0.0
    %2901 = vmatprep.subr.mxu0 0.0
    %2902 = vmatpush1.msra.mxu0 0.0
    %2903 = vmatprep.subr.mxu0 0.0
    %2904 = vmatpush1.msra.mxu0 0.0
    %2905 = vmatprep.subr.mxu0 0.0
    %2906 = vmatpush1.msra.mxu0 0.0
    %2907 = vmatprep.subr.mxu0 0.0
    %2908 = vmatpush1.msra.mxu0 0.0
    %2909 = vmatprep.subr.mxu0 0.0
    %2910 = vmatpush1.msra.mxu0 0.0
    %2911 = vmatprep.subr.mxu0 0.0
    %2912 = vmatpush1.msra.mxu0 0.0
    %2913 = vmatprep.subr.mxu0 0.0
    %2914 = vmatpush1.msra.mxu0 0.0
    %2915 = vmatprep.subr.mxu0 0.0
    %2916 = vmatpush1.msra.mxu0 0.0
    %2917 = vmatprep.subr.mxu0 0.0
    %2918 = vmatpush1.msra.mxu0 0.0
    %2919 = vmatprep.mubr.f32.mxu0 0.0
    %2920 = vmatmul.mubr.f32.gmra.mrb[0].mxu0 %v2853
    %v2921 = vpop.f32.mrb[0].mxu0
    %v2922 = vadd.f32 %v2400, %v2921
    %v2923 = vpop.f32.mrb[0].mxu0
    %v2924 = vadd.f32 %v2404, %v2923
    %2925 = vdwg.mxu0
    %2926 = vmatprep.subr.mxu0 0.0
    %2927 = vmatpush1.msra.mxu0 %v2806
    %2928 = vmatprep.subr.mxu0 0.0
    %2929 = vmatpush1.msra.mxu0 %v2809
    %2930 = vmatprep.subr.mxu0 0.0
    %2931 = vmatpush1.msra.mxu0 %v2812
    %2932 = vmatprep.subr.mxu0 0.0
    %2933 = vmatpush1.msra.mxu0 %v2815
    %2934 = vmatprep.subr.mxu0 0.0
    %2935 = vmatpush1.msra.mxu0 %v2818
    %2936 = vmatprep.subr.mxu0 0.0
    %2937 = vmatpush1.msra.mxu0 %v2821
    %2938 = vmatprep.subr.mxu0 0.0
    %2939 = vmatpush1.msra.mxu0 %v2824
    %2940 = vmatprep.subr.mxu0 0.0
    %2941 = vmatpush1.msra.mxu0 %v2827
    %2942 = vmatprep.subr.mxu0 0.0
    %2943 = vmatpush1.msra.mxu0 %v2830
    %2944 = vmatprep.subr.mxu0 0.0
    %2945 = vmatpush1.msra.mxu0 %v2833
    %2946 = vmatprep.subr.mxu0 0.0
    %2947 = vmatpush1.msra.mxu0 %v2836
    %2948 = vmatprep.subr.mxu0 0.0
    %2949 = vmatpush1.msra.mxu0 %v2839
    %2950 = vmatprep.subr.mxu0 0.0
    %2951 = vmatpush1.msra.mxu0 %v2842
    %2952 = vmatprep.subr.mxu0 0.0
    %2953 = vmatpush1.msra.mxu0 %v2845
    %2954 = vmatprep.subr.mxu0 0.0
    %2955 = vmatpush1.msra.mxu0 %v2848
    %2956 = vmatprep.subr.mxu0 0.0
    %2957 = vmatpush1.msra.mxu0 %v2851
    %2958 = vmatprep.subr.mxu0 0.0
    %2959 = vmatpush1.msra.mxu0 0.0
    %2960 = vmatprep.subr.mxu0 0.0
    %2961 = vmatpush1.msra.mxu0 0.0
    %2962 = vmatprep.subr.mxu0 0.0
    %2963 = vmatpush1.msra.mxu0 0.0
    %2964 = vmatprep.subr.mxu0 0.0
    %2965 = vmatpush1.msra.mxu0 0.0
    %2966 = vmatprep.subr.mxu0 0.0
    %2967 = vmatpush1.msra.mxu0 0.0
    %2968 = vmatprep.subr.mxu0 0.0
    %2969 = vmatpush1.msra.mxu0 0.0
    %2970 = vmatprep.subr.mxu0 0.0
    %2971 = vmatpush1.msra.mxu0 0.0
    %2972 = vmatprep.subr.mxu0 0.0
    %2973 = vmatpush1.msra.mxu0 0.0
    %2974 = vmatprep.subr.mxu0 0.0
    %2975 = vmatpush1.msra.mxu0 0.0
    %2976 = vmatprep.subr.mxu0 0.0
    %2977 = vmatpush1.msra.mxu0 0.0
    %2978 = vmatprep.subr.mxu0 0.0
    %2979 = vmatpush1.msra.mxu0 0.0
    %2980 = vmatprep.subr.mxu0 0.0
    %2981 = vmatpush1.msra.mxu0 0.0
    %2982 = vmatprep.subr.mxu0 0.0
    %2983 = vmatpush1.msra.mxu0 0.0
    %2984 = vmatprep.subr.mxu0 0.0
    %2985 = vmatpush1.msra.mxu0 0.0
    %2986 = vmatprep.subr.mxu0 0.0
    %2987 = vmatpush1.msra.mxu0 0.0
    %2988 = vmatprep.subr.mxu0 0.0
    %2989 = vmatpush1.msra.mxu0 0.0
    %2990 = vmatprep.mubr.f32.mxu0 0.0
    %2991 = vmatmul.mubr.f32.gmra.mrb[0].mxu0 %v2853
    %v2992 = vpop.f32.mrb[0].mxu0
    %v2993 = vadd.f32 %v2408, %v2992
    %v2994 = vpop.f32.mrb[0].mxu0
    %2995 = vdwg.mxu0
    %v2997 = vrot.slane %v2922, 4
    %v2999 = vadd.f32 %v2801, %v2997
    %v3000 = vxor.u32 %v2999, 2147483648
    %v3001 = vmul.f32 %v3000, 1.442695
    %v3002 = vpow.pop %v3001
    %v3003 = vadd.f32 %v3002, 1.0
    %v3004 = vrcp.pop %v3003
    %v3005 = vmul.f32 1.0, %v3004
    %v3007 = vrot.slane %v2924, 4
    %v3009 = vadd.f32 %v2802, %v3007
    %v3010 = vxor.u32 %v3009, 2147483648
    %v3011 = vmul.f32 %v3010, 1.442695
    %v3012 = vpow.pop %v3011
    %v3013 = vadd.f32 %v3012, 1.0
    %v3014 = vrcp.pop %v3013
    %v3015 = vmul.f32 1.0, %v3014
    %v3017 = vrot.slane %v2993, 4
    %v3019 = vmul.f32 %v3005, %v3017
    %v3020 = vadd.f32 %v2803, %v3019
    %v3021 = vtanh.pop %v3020
    %v3022 = vsub.f32 1.0, %v3015
    %v3023 = vmul.f32 %v3022, %v3021
    %v3024 = vrot.slane %v2799, 6
    %v3026 = vmul.f32 %v3015, %v3024
    %v3027 = vadd.f32 %v3023, %v3026
    %3028 = vst [vmem:[#allocation3] sm:$0x30] %v3027
    %v3029 = vld [vmem:[#allocation2] sm:$0xc0]
    %v3030 = vld [vmem:[#allocation2 + $0x8] sm:$0xc0]
    %v3031 = vld [vmem:[#allocation2 + $0x10] sm:$0xc0]
    %v3032 = vld [vmem:[#allocation9] sm:$0xff]
    %v3033 = vld [vmem:[#allocation9 + $0x8] sm:$0xff]
    %v3034 = vld [vmem:[#allocation9 + $0x10] sm:$0xff]
    %v3035 = vld [vmem:[#allocation9 + $0x18] sm:$0xff]
    %v3036 = vld [vmem:[#allocation9 + $0x20] sm:$0xff]
    %v3037 = vld [vmem:[#allocation9 + $0x28] sm:$0xff]
    %v3038 = vld [vmem:[#allocation9 + $0x30] sm:$0xff]
    %v3039 = vld [vmem:[#allocation9 + $0x38] sm:$0xff]
    %v3040 = vld [vmem:[#allocation9 + $0x40] sm:$0xff]
    %v3041 = vld [vmem:[#allocation9 + $0x48] sm:$0xff]
    %v3042 = vld [vmem:[#allocation9 + $0x50] sm:$0xff]
    %v3043 = vld [vmem:[#allocation9 + $0x58] sm:$0xff]
    %v3044 = vld [vmem:[#allocation9 + $0x60] sm:$0xff]
    %v3045 = vld [vmem:[#allocation9 + $0x68] sm:$0xff]
    %v3046 = vld [vmem:[#allocation9 + $0x70] sm:$0xff]
    %v3047 = vld [vmem:[#allocation9 + $0x78] sm:$0xff]
    %v3048 = vld [vmem:[#allocation9 + $0x80] sm:$0xff]
    %v3049 = vld [vmem:[#allocation9 + $0x88] sm:$0xff]
    %v3050 = vld [vmem:[#allocation9 + $0x90] sm:$0xff]
    %v3051 = vld [vmem:[#allocation9 + $0x98] sm:$0xff]
    %v3052 = vld [vmem:[#allocation9 + $0xa0] sm:$0xff]
    %v3053 = vld [vmem:[#allocation9 + $0xa8] sm:$0xff]
    %v3054 = vld [vmem:[#allocation9 + $0xb0] sm:$0xff]
    %v3055 = vld [vmem:[#allocation9 + $0xb8] sm:$0xff]
    %v3056 = vld [vmem:[#allocation9 + $0xc0] sm:$0xff]
    %v3057 = vld [vmem:[#allocation9 + $0xc8] sm:$0xff]
    %v3058 = vld [vmem:[#allocation9 + $0xd0] sm:$0xff]
    %v3059 = vld [vmem:[#allocation9 + $0xd8] sm:$0xff]
    %v3060 = vld [vmem:[#allocation9 + $0xe0] sm:$0xff]
    %v3061 = vld [vmem:[#allocation9 + $0xe8] sm:$0xff]
    %v3062 = vld [vmem:[#allocation9 + $0xf0] sm:$0xff]
    %v3063 = vld [vmem:[#allocation9 + $0xf8] sm:$0xff]
    %v3064 = vld [vmem:[#allocation9 + $0x100] sm:$0xff]
    %v3065 = vld [vmem:[#allocation9 + $0x108] sm:$0xff]
    %v3066 = vld [vmem:[#allocation9 + $0x110] sm:$0xff]
    %v3067 = vld [vmem:[#allocation9 + $0x118] sm:$0xff]
    %v3068 = vld [vmem:[#allocation9 + $0x120] sm:$0xff]
    %v3069 = vld [vmem:[#allocation9 + $0x128] sm:$0xff]
    %v3070 = vld [vmem:[#allocation9 + $0x130] sm:$0xff]
    %v3071 = vld [vmem:[#allocation9 + $0x138] sm:$0xff]
    %v3072 = vld [vmem:[#allocation9 + $0x140] sm:$0xff]
    %v3073 = vld [vmem:[#allocation9 + $0x148] sm:$0xff]
    %v3074 = vld [vmem:[#allocation9 + $0x150] sm:$0xff]
    %v3075 = vld [vmem:[#allocation9 + $0x158] sm:$0xff]
    %v3076 = vld [vmem:[#allocation9 + $0x160] sm:$0xff]
    %v3077 = vld [vmem:[#allocation9 + $0x168] sm:$0xff]
    %v3078 = vld [vmem:[#allocation9 + $0x170] sm:$0xff]
    %v3079 = vld [vmem:[#allocation9 + $0x178] sm:$0xff]
    %v3081 = vrot.slane %v3027, 4
    %3083 = vmatprep.subr.mxu0 %v3033
    %3084 = vmatpush1.msra.mxu0 %v3032
    %3085 = vmatprep.subr.mxu0 %v3036
    %3086 = vmatpush1.msra.mxu0 %v3035
    %3087 = vmatprep.subr.mxu0 %v3039
    %3088 = vmatpush1.msra.mxu0 %v3038
    %3089 = vmatprep.subr.mxu0 %v3042
    %3090 = vmatpush1.msra.mxu0 %v3041
    %3091 = vmatprep.subr.mxu0 %v3045
    %3092 = vmatpush1.msra.mxu0 %v3044
    %3093 = vmatprep.subr.mxu0 %v3048
    %3094 = vmatpush1.msra.mxu0 %v3047
    %3095 = vmatprep.subr.mxu0 %v3051
    %3096 = vmatpush1.msra.mxu0 %v3050
    %3097 = vmatprep.subr.mxu0 %v3054
    %3098 = vmatpush1.msra.mxu0 %v3053
    %3099 = vmatprep.subr.mxu0 %v3057
    %3100 = vmatpush1.msra.mxu0 %v3056
    %3101 = vmatprep.subr.mxu0 %v3060
    %3102 = vmatpush1.msra.mxu0 %v3059
    %3103 = vmatprep.subr.mxu0 %v3063
    %3104 = vmatpush1.msra.mxu0 %v3062
    %3105 = vmatprep.subr.mxu0 %v3066
    %3106 = vmatpush1.msra.mxu0 %v3065
    %3107 = vmatprep.subr.mxu0 %v3069
    %3108 = vmatpush1.msra.mxu0 %v3068
    %3109 = vmatprep.subr.mxu0 %v3072
    %3110 = vmatpush1.msra.mxu0 %v3071
    %3111 = vmatprep.subr.mxu0 %v3075
    %3112 = vmatpush1.msra.mxu0 %v3074
    %3113 = vmatprep.subr.mxu0 %v3078
    %3114 = vmatpush1.msra.mxu0 %v3077
    %3115 = vmatprep.subr.mxu0 0.0
    %3116 = vmatpush1.msra.mxu0 0.0
    %3117 = vmatprep.subr.mxu0 0.0
    %3118 = vmatpush1.msra.mxu0 0.0
    %3119 = vmatprep.subr.mxu0 0.0
    %3120 = vmatpush1.msra.mxu0 0.0
    %3121 = vmatprep.subr.mxu0 0.0
    %3122 = vmatpush1.msra.mxu0 0.0
    %3123 = vmatprep.subr.mxu0 0.0
    %3124 = vmatpush1.msra.mxu0 0.0
    %3125 = vmatprep.subr.mxu0 0.0
    %3126 = vmatpush1.msra.mxu0 0.0
    %3127 = vmatprep.subr.mxu0 0.0
    %3128 = vmatpush1.msra.mxu0 0.0
    %3129 = vmatprep.subr.mxu0 0.0
    %3130 = vmatpush1.msra.mxu0 0.0
    %3131 = vmatprep.subr.mxu0 0.0
    %3132 = vmatpush1.msra.mxu0 0.0
    %3133 = vmatprep.subr.mxu0 0.0
    %3134 = vmatpush1.msra.mxu0 0.0
    %3135 = vmatprep.subr.mxu0 0.0
    %3136 = vmatpush1.msra.mxu0 0.0
    %3137 = vmatprep.subr.mxu0 0.0
    %3138 = vmatpush1.msra.mxu0 0.0
    %3139 = vmatprep.subr.mxu0 0.0
    %3140 = vmatpush1.msra.mxu0 0.0
    %3141 = vmatprep.subr.mxu0 0.0
    %3142 = vmatpush1.msra.mxu0 0.0
    %3143 = vmatprep.subr.mxu0 0.0
    %3144 = vmatpush1.msra.mxu0 0.0
    %3145 = vmatprep.subr.mxu0 0.0
    %3146 = vmatpush1.msra.mxu0 0.0
    %3147 = vmatprep.mubr.f32.mxu0 0.0
    %3148 = vmatmul.mubr.f32.gmra.mrb[0].mxu0 %v3081
    %v3149 = vpop.f32.mrb[0].mxu0
    %v3150 = vadd.f32 %v2400, %v3149
    %v3151 = vpop.f32.mrb[0].mxu0
    %v3152 = vadd.f32 %v2404, %v3151
    %3153 = vdwg.mxu0
    %3154 = vmatprep.subr.mxu0 0.0
    %3155 = vmatpush1.msra.mxu0 %v3034
    %3156 = vmatprep.subr.mxu0 0.0
    %3157 = vmatpush1.msra.mxu0 %v3037
    %3158 = vmatprep.subr.mxu0 0.0
    %3159 = vmatpush1.msra.mxu0 %v3040
    %3160 = vmatprep.subr.mxu0 0.0
    %3161 = vmatpush1.msra.mxu0 %v3043
    %3162 = vmatprep.subr.mxu0 0.0
    %3163 = vmatpush1.msra.mxu0 %v3046
    %3164 = vmatprep.subr.mxu0 0.0
    %3165 = vmatpush1.msra.mxu0 %v3049
    %3166 = vmatprep.subr.mxu0 0.0
    %3167 = vmatpush1.msra.mxu0 %v3052
    %3168 = vmatprep.subr.mxu0 0.0
    %3169 = vmatpush1.msra.mxu0 %v3055
    %3170 = vmatprep.subr.mxu0 0.0
    %3171 = vmatpush1.msra.mxu0 %v3058
    %3172 = vmatprep.subr.mxu0 0.0
    %3173 = vmatpush1.msra.mxu0 %v3061
    %3174 = vmatprep.subr.mxu0 0.0
    %3175 = vmatpush1.msra.mxu0 %v3064
    %3176 = vmatprep.subr.mxu0 0.0
    %3177 = vmatpush1.msra.mxu0 %v3067
    %3178 = vmatprep.subr.mxu0 0.0
    %3179 = vmatpush1.msra.mxu0 %v3070
    %3180 = vmatprep.subr.mxu0 0.0
    %3181 = vmatpush1.msra.mxu0 %v3073
    %3182 = vmatprep.subr.mxu0 0.0
    %3183 = vmatpush1.msra.mxu0 %v3076
    %3184 = vmatprep.subr.mxu0 0.0
    %3185 = vmatpush1.msra.mxu0 %v3079
    %3186 = vmatprep.subr.mxu0 0.0
    %3187 = vmatpush1.msra.mxu0 0.0
    %3188 = vmatprep.subr.mxu0 0.0
    %3189 = vmatpush1.msra.mxu0 0.0
    %3190 = vmatprep.subr.mxu0 0.0
    %3191 = vmatpush1.msra.mxu0 0.0
    %3192 = vmatprep.subr.mxu0 0.0
    %3193 = vmatpush1.msra.mxu0 0.0
    %3194 = vmatprep.subr.mxu0 0.0
    %3195 = vmatpush1.msra.mxu0 0.0
    %3196 = vmatprep.subr.mxu0 0.0
    %3197 = vmatpush1.msra.mxu0 0.0
    %3198 = vmatprep.subr.mxu0 0.0
    %3199 = vmatpush1.msra.mxu0 0.0
    %3200 = vmatprep.subr.mxu0 0.0
    %3201 = vmatpush1.msra.mxu0 0.0
    %3202 = vmatprep.subr.mxu0 0.0
    %3203 = vmatpush1.msra.mxu0 0.0
    %3204 = vmatprep.subr.mxu0 0.0
    %3205 = vmatpush1.msra.mxu0 0.0
    %3206 = vmatprep.subr.mxu0 0.0
    %3207 = vmatpush1.msra.mxu0 0.0
    %3208 = vmatprep.subr.mxu0 0.0
    %3209 = vmatpush1.msra.mxu0 0.0
    %3210 = vmatprep.subr.mxu0 0.0
    %3211 = vmatpush1.msra.mxu0 0.0
    %3212 = vmatprep.subr.mxu0 0.0
    %3213 = vmatpush1.msra.mxu0 0.0
    %3214 = vmatprep.subr.mxu0 0.0
    %3215 = vmatpush1.msra.mxu0 0.0
    %3216 = vmatprep.subr.mxu0 0.0
    %3217 = vmatpush1.msra.mxu0 0.0
    %3218 = vmatprep.mubr.f32.mxu0 0.0
    %3219 = vmatmul.mubr.f32.gmra.mrb[0].mxu0 %v3081
    %v3220 = vpop.f32.mrb[0].mxu0
    %v3221 = vadd.f32 %v2408, %v3220
    %v3222 = vpop.f32.mrb[0].mxu0
    %3223 = vdwg.mxu0
    %v3225 = vrot.slane %v3150, 2
    %v3227 = vadd.f32 %v3029, %v3225
    %v3228 = vxor.u32 %v3227, 2147483648
    %v3229 = vmul.f32 %v3228, 1.442695
    %v3230 = vpow.pop %v3229
    %v3231 = vadd.f32 %v3230, 1.0
    %v3232 = vrcp.pop %v3231
    %v3233 = vmul.f32 1.0, %v3232
    %v3235 = vrot.slane %v3152, 2
    %v3237 = vadd.f32 %v3030, %v3235
    %v3238 = vxor.u32 %v3237, 2147483648
    %v3239 = vmul.f32 %v3238, 1.442695
    %v3240 = vpow.pop %v3239
    %v3241 = vadd.f32 %v3240, 1.0
    %v3242 = vrcp.pop %v3241
    %v3243 = vmul.f32 1.0, %v3242
    %v3245 = vrot.slane %v3221, 2
    %v3247 = vmul.f32 %v3233, %v3245
    %v3248 = vadd.f32 %v3031, %v3247
    %v3249 = vtanh.pop %v3248
    %v3250 = vsub.f32 1.0, %v3243
    %v3251 = vmul.f32 %v3250, %v3249
    %v3252 = vrot.slane %v3027, 6
    %v3254 = vmul.f32 %v3243, %v3252
    %v3255 = vadd.f32 %v3251, %v3254
    %3256 = vst [vmem:[#allocation3] sm:$0xc0] %v3255
    %v3257 = vld [vmem:[#allocation2 + $0x18] sm:$0x3]
    %v3258 = vld [vmem:[#allocation2 + $0x20] sm:$0x3]
    %v3259 = vld [vmem:[#allocation2 + $0x28] sm:$0x3]
    %v3260 = vld [vmem:[#allocation9] sm:$0xff]
    %v3261 = vld [vmem:[#allocation9 + $0x8] sm:$0xff]
    %v3262 = vld [vmem:[#allocation9 + $0x10] sm:$0xff]
    %v3263 = vld [vmem:[#allocation9 + $0x18] sm:$0xff]
    %v3264 = vld [vmem:[#allocation9 + $0x20] sm:$0xff]
    %v3265 = vld [vmem:[#allocation9 + $0x28] sm:$0xff]
    %v3266 = vld [vmem:[#allocation9 + $0x30] sm:$0xff]
    %v3267 = vld [vmem:[#allocation9 + $0x38] sm:$0xff]
    %v3268 = vld [vmem:[#allocation9 + $0x40] sm:$0xff]
    %v3269 = vld [vmem:[#allocation9 + $0x48] sm:$0xff]
    %v3270 = vld [vmem:[#allocation9 + $0x50] sm:$0xff]
    %v3271 = vld [vmem:[#allocation9 + $0x58] sm:$0xff]
    %v3272 = vld [vmem:[#allocation9 + $0x60] sm:$0xff]
    %v3273 = vld [vmem:[#allocation9 + $0x68] sm:$0xff]
    %v3274 = vld [vmem:[#allocation9 + $0x70] sm:$0xff]
    %v3275 = vld [vmem:[#allocation9 + $0x78] sm:$0xff]
    %v3276 = vld [vmem:[#allocation9 + $0x80] sm:$0xff]
    %v3277 = vld [vmem:[#allocation9 + $0x88] sm:$0xff]
    %v3278 = vld [vmem:[#allocation9 + $0x90] sm:$0xff]
    %v3279 = vld [vmem:[#allocation9 + $0x98] sm:$0xff]
    %v3280 = vld [vmem:[#allocation9 + $0xa0] sm:$0xff]
    %v3281 = vld [vmem:[#allocation9 + $0xa8] sm:$0xff]
    %v3282 = vld [vmem:[#allocation9 + $0xb0] sm:$0xff]
    %v3283 = vld [vmem:[#allocation9 + $0xb8] sm:$0xff]
    %v3284 = vld [vmem:[#allocation9 + $0xc0] sm:$0xff]
    %v3285 = vld [vmem:[#allocation9 + $0xc8] sm:$0xff]
    %v3286 = vld [vmem:[#allocation9 + $0xd0] sm:$0xff]
    %v3287 = vld [vmem:[#allocation9 + $0xd8] sm:$0xff]
    %v3288 = vld [vmem:[#allocation9 + $0xe0] sm:$0xff]
    %v3289 = vld [vmem:[#allocation9 + $0xe8] sm:$0xff]
    %v3290 = vld [vmem:[#allocation9 + $0xf0] sm:$0xff]
    %v3291 = vld [vmem:[#allocation9 + $0xf8] sm:$0xff]
    %v3292 = vld [vmem:[#allocation9 + $0x100] sm:$0xff]
    %v3293 = vld [vmem:[#allocation9 + $0x108] sm:$0xff]
    %v3294 = vld [vmem:[#allocation9 + $0x110] sm:$0xff]
    %v3295 = vld [vmem:[#allocation9 + $0x118] sm:$0xff]
    %v3296 = vld [vmem:[#allocation9 + $0x120] sm:$0xff]
    %v3297 = vld [vmem:[#allocation9 + $0x128] sm:$0xff]
    %v3298 = vld [vmem:[#allocation9 + $0x130] sm:$0xff]
    %v3299 = vld [vmem:[#allocation9 + $0x138] sm:$0xff]
    %v3300 = vld [vmem:[#allocation9 + $0x140] sm:$0xff]
    %v3301 = vld [vmem:[#allocation9 + $0x148] sm:$0xff]
    %v3302 = vld [vmem:[#allocation9 + $0x150] sm:$0xff]
    %v3303 = vld [vmem:[#allocation9 + $0x158] sm:$0xff]
    %v3304 = vld [vmem:[#allocation9 + $0x160] sm:$0xff]
    %v3305 = vld [vmem:[#allocation9 + $0x168] sm:$0xff]
    %v3306 = vld [vmem:[#allocation9 + $0x170] sm:$0xff]
    %v3307 = vld [vmem:[#allocation9 + $0x178] sm:$0xff]
    %v3309 = vrot.slane %v3255, 6
    %3311 = vmatprep.subr.mxu0 %v3261
    %3312 = vmatpush1.msra.mxu0 %v3260
    %3313 = vmatprep.subr.mxu0 %v3264
    %3314 = vmatpush1.msra.mxu0 %v3263
    %3315 = vmatprep.subr.mxu0 %v3267
    %3316 = vmatpush1.msra.mxu0 %v3266
    %3317 = vmatprep.subr.mxu0 %v3270
    %3318 = vmatpush1.msra.mxu0 %v3269
    %3319 = vmatprep.subr.mxu0 %v3273
    %3320 = vmatpush1.msra.mxu0 %v3272
    %3321 = vmatprep.subr.mxu0 %v3276
    %3322 = vmatpush1.msra.mxu0 %v3275
    %3323 = vmatprep.subr.mxu0 %v3279
    %3324 = vmatpush1.msra.mxu0 %v3278
    %3325 = vmatprep.subr.mxu0 %v3282
    %3326 = vmatpush1.msra.mxu0 %v3281
    %3327 = vmatprep.subr.mxu0 %v3285
    %3328 = vmatpush1.msra.mxu0 %v3284
    %3329 = vmatprep.subr.mxu0 %v3288
    %3330 = vmatpush1.msra.mxu0 %v3287
    %3331 = vmatprep.subr.mxu0 %v3291
    %3332 = vmatpush1.msra.mxu0 %v3290
    %3333 = vmatprep.subr.mxu0 %v3294
    %3334 = vmatpush1.msra.mxu0 %v3293
    %3335 = vmatprep.subr.mxu0 %v3297
    %3336 = vmatpush1.msra.mxu0 %v3296
    %3337 = vmatprep.subr.mxu0 %v3300
    %3338 = vmatpush1.msra.mxu0 %v3299
    %3339 = vmatprep.subr.mxu0 %v3303
    %3340 = vmatpush1.msra.mxu0 %v3302
    %3341 = vmatprep.subr.mxu0 %v3306
    %3342 = vmatpush1.msra.mxu0 %v3305
    %3343 = vmatprep.subr.mxu0 0.0
    %3344 = vmatpush1.msra.mxu0 0.0
    %3345 = vmatprep.subr.mxu0 0.0
    %3346 = vmatpush1.msra.mxu0 0.0
    %3347 = vmatprep.subr.mxu0 0.0
    %3348 = vmatpush1.msra.mxu0 0.0
    %3349 = vmatprep.subr.mxu0 0.0
    %3350 = vmatpush1.msra.mxu0 0.0
    %3351 = vmatprep.subr.mxu0 0.0
    %3352 = vmatpush1.msra.mxu0 0.0
    %3353 = vmatprep.subr.mxu0 0.0
    %3354 = vmatpush1.msra.mxu0 0.0
    %3355 = vmatprep.subr.mxu0 0.0
    %3356 = vmatpush1.msra.mxu0 0.0
    %3357 = vmatprep.subr.mxu0 0.0
    %3358 = vmatpush1.msra.mxu0 0.0
    %3359 = vmatprep.subr.mxu0 0.0
    %3360 = vmatpush1.msra.mxu0 0.0
    %3361 = vmatprep.subr.mxu0 0.0
    %3362 = vmatpush1.msra.mxu0 0.0
    %3363 = vmatprep.subr.mxu0 0.0
    %3364 = vmatpush1.msra.mxu0 0.0
    %3365 = vmatprep.subr.mxu0 0.0
    %3366 = vmatpush1.msra.mxu0 0.0
    %3367 = vmatprep.subr.mxu0 0.0
    %3368 = vmatpush1.msra.mxu0 0.0
    %3369 = vmatprep.subr.mxu0 0.0
    %3370 = vmatpush1.msra.mxu0 0.0
    %3371 = vmatprep.subr.mxu0 0.0
    %3372 = vmatpush1.msra.mxu0 0.0
    %3373 = vmatprep.subr.mxu0 0.0
    %3374 = vmatpush1.msra.mxu0 0.0
    %3375 = vmatprep.mubr.f32.mxu0 0.0
    %3376 = vmatmul.mubr.f32.gmra.mrb[0].mxu0 %v3309
    %v3377 = vpop.f32.mrb[0].mxu0
    %v3378 = vadd.f32 %v2400, %v3377
    %v3379 = vpop.f32.mrb[0].mxu0
    %v3380 = vadd.f32 %v2404, %v3379
    %3381 = vdwg.mxu0
    %3382 = vmatprep.subr.mxu0 0.0
    %3383 = vmatpush1.msra.mxu0 %v3262
    %3384 = vmatprep.subr.mxu0 0.0
    %3385 = vmatpush1.msra.mxu0 %v3265
    %3386 = vmatprep.subr.mxu0 0.0
    %3387 = vmatpush1.msra.mxu0 %v3268
    %3388 = vmatprep.subr.mxu0 0.0
    %3389 = vmatpush1.msra.mxu0 %v3271
    %3390 = vmatprep.subr.mxu0 0.0
    %3391 = vmatpush1.msra.mxu0 %v3274
    %3392 = vmatprep.subr.mxu0 0.0
    %3393 = vmatpush1.msra.mxu0 %v3277
    %3394 = vmatprep.subr.mxu0 0.0
    %3395 = vmatpush1.msra.mxu0 %v3280
    %3396 = vmatprep.subr.mxu0 0.0
    %3397 = vmatpush1.msra.mxu0 %v3283
    %3398 = vmatprep.subr.mxu0 0.0
    %3399 = vmatpush1.msra.mxu0 %v3286
    %3400 = vmatprep.subr.mxu0 0.0
    %3401 = vmatpush1.msra.mxu0 %v3289
    %3402 = vmatprep.subr.mxu0 0.0
    %3403 = vmatpush1.msra.mxu0 %v3292
    %3404 = vmatprep.subr.mxu0 0.0
    %3405 = vmatpush1.msra.mxu0 %v3295
    %3406 = vmatprep.subr.mxu0 0.0
    %3407 = vmatpush1.msra.mxu0 %v3298
    %3408 = vmatprep.subr.mxu0 0.0
    %3409 = vmatpush1.msra.mxu0 %v3301
    %3410 = vmatprep.subr.mxu0 0.0
    %3411 = vmatpush1.msra.mxu0 %v3304
    %3412 = vmatprep.subr.mxu0 0.0
    %3413 = vmatpush1.msra.mxu0 %v3307
    %3414 = vmatprep.subr.mxu0 0.0
    %3415 = vmatpush1.msra.mxu0 0.0
    %3416 = vmatprep.subr.mxu0 0.0
    %3417 = vmatpush1.msra.mxu0 0.0
    %3418 = vmatprep.subr.mxu0 0.0
    %3419 = vmatpush1.msra.mxu0 0.0
    %3420 = vmatprep.subr.mxu0 0.0
    %3421 = vmatpush1.msra.mxu0 0.0
    %3422 = vmatprep.subr.mxu0 0.0
    %3423 = vmatpush1.msra.mxu0 0.0
    %3424 = vmatprep.subr.mxu0 0.0
    %3425 = vmatpush1.msra.mxu0 0.0
    %3426 = vmatprep.subr.mxu0 0.0
    %3427 = vmatpush1.msra.mxu0 0.0
    %3428 = vmatprep.subr.mxu0 0.0
    %3429 = vmatpush1.msra.mxu0 0.0
    %3430 = vmatprep.subr.mxu0 0.0
    %3431 = vmatpush1.msra.mxu0 0.0
    %3432 = vmatprep.subr.mxu0 0.0
    %3433 = vmatpush1.msra.mxu0 0.0
    %3434 = vmatprep.subr.mxu0 0.0
    %3435 = vmatpush1.msra.mxu0 0.0
    %3436 = vmatprep.subr.mxu0 0.0
    %3437 = vmatpush1.msra.mxu0 0.0
    %3438 = vmatprep.subr.mxu0 0.0
    %3439 = vmatpush1.msra.mxu0 0.0
    %3440 = vmatprep.subr.mxu0 0.0
    %3441 = vmatpush1.msra.mxu0 0.0
    %3442 = vmatprep.subr.mxu0 0.0
    %3443 = vmatpush1.msra.mxu0 0.0
    %3444 = vmatprep.subr.mxu0 0.0
    %3445 = vmatpush1.msra.mxu0 0.0
    %3446 = vmatprep.mubr.f32.mxu0 0.0
    %3447 = vmatmul.mubr.f32.gmra.mrb[0].mxu0 %v3309
    %v3448 = vpop.f32.mrb[0].mxu0
    %v3449 = vadd.f32 %v2408, %v3448
    %v3450 = vpop.f32.mrb[0].mxu0
    %3451 = vdwg.mxu0
    %v3452 = vadd.f32 %v3257, %v3378
    %v3453 = vxor.u32 %v3452, 2147483648
    %v3454 = vmul.f32 %v3453, 1.442695
    %v3455 = vpow.pop %v3454
    %v3456 = vadd.f32 %v3455, 1.0
    %v3457 = vrcp.pop %v3456
    %v3458 = vmul.f32 1.0, %v3457
    %v3459 = vadd.f32 %v3258, %v3380
    %v3460 = vxor.u32 %v3459, 2147483648
    %v3461 = vmul.f32 %v3460, 1.442695
    %v3462 = vpow.pop %v3461
    %v3463 = vadd.f32 %v3462, 1.0
    %v3464 = vrcp.pop %v3463
    %v3465 = vmul.f32 1.0, %v3464
    %v3466 = vmul.f32 %v3458, %v3449
    %v3467 = vadd.f32 %v3259, %v3466
    %v3468 = vtanh.pop %v3467
    %v3469 = vsub.f32 1.0, %v3465
    %v3470 = vmul.f32 %v3469, %v3468
    %v3471 = vmul.f32 %v3465, %v3309
    %v3472 = vadd.f32 %v3470, %v3471
    %3473 = vst [vmem:[#allocation3 + $0x8] sm:$0x3] %v3472
    %v3474 = vld [vmem:[#allocation2 + $0x18] sm:$0xc]
    %v3475 = vld [vmem:[#allocation2 + $0x20] sm:$0xc]
    %v3476 = vld [vmem:[#allocation2 + $0x28] sm:$0xc]
    %v3477 = vld [vmem:[#allocation9] sm:$0xff]
    %v3478 = vld [vmem:[#allocation9 + $0x8] sm:$0xff]
    %v3479 = vld [vmem:[#allocation9 + $0x10] sm:$0xff]
    %v3480 = vld [vmem:[#allocation9 + $0x18] sm:$0xff]
    %v3481 = vld [vmem:[#allocation9 + $0x20] sm:$0xff]
    %v3482 = vld [vmem:[#allocation9 + $0x28] sm:$0xff]
    %v3483 = vld [vmem:[#allocation9 + $0x30] sm:$0xff]
    %v3484 = vld [vmem:[#allocation9 + $0x38] sm:$0xff]
    %v3485 = vld [vmem:[#allocation9 + $0x40] sm:$0xff]
    %v3486 = vld [vmem:[#allocation9 + $0x48] sm:$0xff]
    %v3487 = vld [vmem:[#allocation9 + $0x50] sm:$0xff]
    %v3488 = vld [vmem:[#allocation9 + $0x58] sm:$0xff]
    %v3489 = vld [vmem:[#allocation9 + $0x60] sm:$0xff]
    %v3490 = vld [vmem:[#allocation9 + $0x68] sm:$0xff]
    %v3491 = vld [vmem:[#allocation9 + $0x70] sm:$0xff]
    %v3492 = vld [vmem:[#allocation9 + $0x78] sm:$0xff]
    %v3493 = vld [vmem:[#allocation9 + $0x80] sm:$0xff]
    %v3494 = vld [vmem:[#allocation9 + $0x88] sm:$0xff]
    %v3495 = vld [vmem:[#allocation9 + $0x90] sm:$0xff]
    %v3496 = vld [vmem:[#allocation9 + $0x98] sm:$0xff]
    %v3497 = vld [vmem:[#allocation9 + $0xa0] sm:$0xff]
    %v3498 = vld [vmem:[#allocation9 + $0xa8] sm:$0xff]
    %v3499 = vld [vmem:[#allocation9 + $0xb0] sm:$0xff]
    %v3500 = vld [vmem:[#allocation9 + $0xb8] sm:$0xff]
    %v3501 = vld [vmem:[#allocation9 + $0xc0] sm:$0xff]
    %v3502 = vld [vmem:[#allocation9 + $0xc8] sm:$0xff]
    %v3503 = vld [vmem:[#allocation9 + $0xd0] sm:$0xff]
    %v3504 = vld [vmem:[#allocation9 + $0xd8] sm:$0xff]
    %v3505 = vld [vmem:[#allocation9 + $0xe0] sm:$0xff]
    %v3506 = vld [vmem:[#allocation9 + $0xe8] sm:$0xff]
    %v3507 = vld [vmem:[#allocation9 + $0xf0] sm:$0xff]
    %v3508 = vld [vmem:[#allocation9 + $0xf8] sm:$0xff]
    %v3509 = vld [vmem:[#allocation9 + $0x100] sm:$0xff]
    %v3510 = vld [vmem:[#allocation9 + $0x108] sm:$0xff]
    %v3511 = vld [vmem:[#allocation9 + $0x110] sm:$0xff]
    %v3512 = vld [vmem:[#allocation9 + $0x118] sm:$0xff]
    %v3513 = vld [vmem:[#allocation9 + $0x120] sm:$0xff]
    %v3514 = vld [vmem:[#allocation9 + $0x128] sm:$0xff]
    %v3515 = vld [vmem:[#allocation9 + $0x130] sm:$0xff]
    %v3516 = vld [vmem:[#allocation9 + $0x138] sm:$0xff]
    %v3517 = vld [vmem:[#allocation9 + $0x140] sm:$0xff]
    %v3518 = vld [vmem:[#allocation9 + $0x148] sm:$0xff]
    %v3519 = vld [vmem:[#allocation9 + $0x150] sm:$0xff]
    %v3520 = vld [vmem:[#allocation9 + $0x158] sm:$0xff]
    %v3521 = vld [vmem:[#allocation9 + $0x160] sm:$0xff]
    %v3522 = vld [vmem:[#allocation9 + $0x168] sm:$0xff]
    %v3523 = vld [vmem:[#allocation9 + $0x170] sm:$0xff]
    %v3524 = vld [vmem:[#allocation9 + $0x178] sm:$0xff]
    %3525 = vmatprep.subr.mxu0 %v3478
    %3526 = vmatpush1.msra.mxu0 %v3477
    %3527 = vmatprep.subr.mxu0 %v3481
    %3528 = vmatpush1.msra.mxu0 %v3480
    %3529 = vmatprep.subr.mxu0 %v3484
    %3530 = vmatpush1.msra.mxu0 %v3483
    %3531 = vmatprep.subr.mxu0 %v3487
    %3532 = vmatpush1.msra.mxu0 %v3486
    %3533 = vmatprep.subr.mxu0 %v3490
    %3534 = vmatpush1.msra.mxu0 %v3489
    %3535 = vmatprep.subr.mxu0 %v3493
    %3536 = vmatpush1.msra.mxu0 %v3492
    %3537 = vmatprep.subr.mxu0 %v3496
    %3538 = vmatpush1.msra.mxu0 %v3495
    %3539 = vmatprep.subr.mxu0 %v3499
    %3540 = vmatpush1.msra.mxu0 %v3498
    %3541 = vmatprep.subr.mxu0 %v3502
    %3542 = vmatpush1.msra.mxu0 %v3501
    %3543 = vmatprep.subr.mxu0 %v3505
    %3544 = vmatpush1.msra.mxu0 %v3504
    %3545 = vmatprep.subr.mxu0 %v3508
    %3546 = vmatpush1.msra.mxu0 %v3507
    %3547 = vmatprep.subr.mxu0 %v3511
    %3548 = vmatpush1.msra.mxu0 %v3510
    %3549 = vmatprep.subr.mxu0 %v3514
    %3550 = vmatpush1.msra.mxu0 %v3513
    %3551 = vmatprep.subr.mxu0 %v3517
    %3552 = vmatpush1.msra.mxu0 %v3516
    %3553 = vmatprep.subr.mxu0 %v3520
    %3554 = vmatpush1.msra.mxu0 %v3519
    %3555 = vmatprep.subr.mxu0 %v3523
    %3556 = vmatpush1.msra.mxu0 %v3522
    %3557 = vmatprep.subr.mxu0 0.0
    %3558 = vmatpush1.msra.mxu0 0.0
    %3559 = vmatprep.subr.mxu0 0.0
    %3560 = vmatpush1.msra.mxu0 0.0
    %3561 = vmatprep.subr.mxu0 0.0
    %3562 = vmatpush1.msra.mxu0 0.0
    %3563 = vmatprep.subr.mxu0 0.0
    %3564 = vmatpush1.msra.mxu0 0.0
    %3565 = vmatprep.subr.mxu0 0.0
    %3566 = vmatpush1.msra.mxu0 0.0
    %3567 = vmatprep.subr.mxu0 0.0
    %3568 = vmatpush1.msra.mxu0 0.0
    %3569 = vmatprep.subr.mxu0 0.0
    %3570 = vmatpush1.msra.mxu0 0.0
    %3571 = vmatprep.subr.mxu0 0.0
    %3572 = vmatpush1.msra.mxu0 0.0
    %3573 = vmatprep.subr.mxu0 0.0
    %3574 = vmatpush1.msra.mxu0 0.0
    %3575 = vmatprep.subr.mxu0 0.0
    %3576 = vmatpush1.msra.mxu0 0.0
    %3577 = vmatprep.subr.mxu0 0.0
    %3578 = vmatpush1.msra.mxu0 0.0
    %3579 = vmatprep.subr.mxu0 0.0
    %3580 = vmatpush1.msra.mxu0 0.0
    %3581 = vmatprep.subr.mxu0 0.0
    %3582 = vmatpush1.msra.mxu0 0.0
    %3583 = vmatprep.subr.mxu0 0.0
    %3584 = vmatpush1.msra.mxu0 0.0
    %3585 = vmatprep.subr.mxu0 0.0
    %3586 = vmatpush1.msra.mxu0 0.0
    %3587 = vmatprep.subr.mxu0 0.0
    %3588 = vmatpush1.msra.mxu0 0.0
    %3589 = vmatprep.mubr.f32.mxu0 0.0
    %3590 = vmatmul.mubr.f32.gmra.mrb[0].mxu0 %v3472
    %v3591 = vpop.f32.mrb[0].mxu0
    %v3592 = vadd.f32 %v2400, %v3591
    %v3593 = vpop.f32.mrb[0].mxu0
    %v3594 = vadd.f32 %v2404, %v3593
    %3595 = vdwg.mxu0
    %3596 = vmatprep.subr.mxu0 0.0
    %3597 = vmatpush1.msra.mxu0 %v3479
    %3598 = vmatprep.subr.mxu0 0.0
    %3599 = vmatpush1.msra.mxu0 %v3482
    %3600 = vmatprep.subr.mxu0 0.0
    %3601 = vmatpush1.msra.mxu0 %v3485
    %3602 = vmatprep.subr.mxu0 0.0
    %3603 = vmatpush1.msra.mxu0 %v3488
    %3604 = vmatprep.subr.mxu0 0.0
    %3605 = vmatpush1.msra.mxu0 %v3491
    %3606 = vmatprep.subr.mxu0 0.0
    %3607 = vmatpush1.msra.mxu0 %v3494
    %3608 = vmatprep.subr.mxu0 0.0
    %3609 = vmatpush1.msra.mxu0 %v3497
    %3610 = vmatprep.subr.mxu0 0.0
    %3611 = vmatpush1.msra.mxu0 %v3500
    %3612 = vmatprep.subr.mxu0 0.0
    %3613 = vmatpush1.msra.mxu0 %v3503
    %3614 = vmatprep.subr.mxu0 0.0
    %3615 = vmatpush1.msra.mxu0 %v3506
    %3616 = vmatprep.subr.mxu0 0.0
    %3617 = vmatpush1.msra.mxu0 %v3509
    %3618 = vmatprep.subr.mxu0 0.0
    %3619 = vmatpush1.msra.mxu0 %v3512
    %3620 = vmatprep.subr.mxu0 0.0
    %3621 = vmatpush1.msra.mxu0 %v3515
    %3622 = vmatprep.subr.mxu0 0.0
    %3623 = vmatpush1.msra.mxu0 %v3518
    %3624 = vmatprep.subr.mxu0 0.0
    %3625 = vmatpush1.msra.mxu0 %v3521
    %3626 = vmatprep.subr.mxu0 0.0
    %3627 = vmatpush1.msra.mxu0 %v3524
    %3628 = vmatprep.subr.mxu0 0.0
    %3629 = vmatpush1.msra.mxu0 0.0
    %3630 = vmatprep.subr.mxu0 0.0
    %3631 = vmatpush1.msra.mxu0 0.0
    %3632 = vmatprep.subr.mxu0 0.0
    %3633 = vmatpush1.msra.mxu0 0.0
    %3634 = vmatprep.subr.mxu0 0.0
    %3635 = vmatpush1.msra.mxu0 0.0
    %3636 = vmatprep.subr.mxu0 0.0
    %3637 = vmatpush1.msra.mxu0 0.0
    %3638 = vmatprep.subr.mxu0 0.0
    %3639 = vmatpush1.msra.mxu0 0.0
    %3640 = vmatprep.subr.mxu0 0.0
    %3641 = vmatpush1.msra.mxu0 0.0
    %3642 = vmatprep.subr.mxu0 0.0
    %3643 = vmatpush1.msra.mxu0 0.0
    %3644 = vmatprep.subr.mxu0 0.0
    %3645 = vmatpush1.msra.mxu0 0.0
    %3646 = vmatprep.subr.mxu0 0.0
    %3647 = vmatpush1.msra.mxu0 0.0
    %3648 = vmatprep.subr.mxu0 0.0
    %3649 = vmatpush1.msra.mxu0 0.0
    %3650 = vmatprep.subr.mxu0 0.0
    %3651 = vmatpush1.msra.mxu0 0.0
    %3652 = vmatprep.subr.mxu0 0.0
    %3653 = vmatpush1.msra.mxu0 0.0
    %3654 = vmatprep.subr.mxu0 0.0
    %3655 = vmatpush1.msra.mxu0 0.0
    %3656 = vmatprep.subr.mxu0 0.0
    %3657 = vmatpush1.msra.mxu0 0.0
    %3658 = vmatprep.subr.mxu0 0.0
    %3659 = vmatpush1.msra.mxu0 0.0
    %3660 = vmatprep.mubr.f32.mxu0 0.0
    %3661 = vmatmul.mubr.f32.gmra.mrb[0].mxu0 %v3472
    %v3662 = vpop.f32.mrb[0].mxu0
    %v3663 = vadd.f32 %v2408, %v3662
    %v3664 = vpop.f32.mrb[0].mxu0
    %3665 = vdwg.mxu0
    %v3667 = vrot.slane %v3592, 6
    %v3669 = vadd.f32 %v3474, %v3667
    %v3670 = vxor.u32 %v3669, 2147483648
    %v3671 = vmul.f32 %v3670, 1.442695
    %v3672 = vpow.pop %v3671
    %v3673 = vadd.f32 %v3672, 1.0
    %v3674 = vrcp.pop %v3673
    %v3675 = vmul.f32 1.0, %v3674
    %v3677 = vrot.slane %v3594, 6
    %v3679 = vadd.f32 %v3475, %v3677
    %v3680 = vxor.u32 %v3679, 2147483648
    %v3681 = vmul.f32 %v3680, 1.442695
    %v3682 = vpow.pop %v3681
    %v3683 = vadd.f32 %v3682, 1.0
    %v3684 = vrcp.pop %v3683
    %v3685 = vmul.f32 1.0, %v3684
    %v3687 = vrot.slane %v3663, 6
    %v3689 = vmul.f32 %v3675, %v3687
    %v3690 = vadd.f32 %v3476, %v3689
    %v3691 = vtanh.pop %v3690
    %v3692 = vsub.f32 1.0, %v3685
    %v3693 = vmul.f32 %v3692, %v3691
    %v3695 = vrot.slane %v3472, 6
    %v3697 = vmul.f32 %v3685, %v3695
    %v3698 = vadd.f32 %v3693, %v3697
    %3699 = vst [vmem:[#allocation3 + $0x8] sm:$0xc] %v3698
    %v3700 = vld [vmem:[#allocation2 + $0x18] sm:$0x30]
    %v3701 = vld [vmem:[#allocation2 + $0x20] sm:$0x30]
    %v3702 = vld [vmem:[#allocation2 + $0x28] sm:$0x30]
    %v3703 = vld [vmem:[#allocation9] sm:$0xff]
    %v3704 = vld [vmem:[#allocation9 + $0x8] sm:$0xff]
    %v3705 = vld [vmem:[#allocation9 + $0x10] sm:$0xff]
    %v3706 = vld [vmem:[#allocation9 + $0x18] sm:$0xff]
    %v3707 = vld [vmem:[#allocation9 + $0x20] sm:$0xff]
    %v3708 = vld [vmem:[#allocation9 + $0x28] sm:$0xff]
    %v3709 = vld [vmem:[#allocation9 + $0x30] sm:$0xff]
    %v3710 = vld [vmem:[#allocation9 + $0x38] sm:$0xff]
    %v3711 = vld [vmem:[#allocation9 + $0x40] sm:$0xff]
    %v3712 = vld [vmem:[#allocation9 + $0x48] sm:$0xff]
    %v3713 = vld [vmem:[#allocation9 + $0x50] sm:$0xff]
    %v3714 = vld [vmem:[#allocation9 + $0x58] sm:$0xff]
    %v3715 = vld [vmem:[#allocation9 + $0x60] sm:$0xff]
    %v3716 = vld [vmem:[#allocation9 + $0x68] sm:$0xff]
    %v3717 = vld [vmem:[#allocation9 + $0x70] sm:$0xff]
    %v3718 = vld [vmem:[#allocation9 + $0x78] sm:$0xff]
    %v3719 = vld [vmem:[#allocation9 + $0x80] sm:$0xff]
    %v3720 = vld [vmem:[#allocation9 + $0x88] sm:$0xff]
    %v3721 = vld [vmem:[#allocation9 + $0x90] sm:$0xff]
    %v3722 = vld [vmem:[#allocation9 + $0x98] sm:$0xff]
    %v3723 = vld [vmem:[#allocation9 + $0xa0] sm:$0xff]
    %v3724 = vld [vmem:[#allocation9 + $0xa8] sm:$0xff]
    %v3725 = vld [vmem:[#allocation9 + $0xb0] sm:$0xff]
    %v3726 = vld [vmem:[#allocation9 + $0xb8] sm:$0xff]
    %v3727 = vld [vmem:[#allocation9 + $0xc0] sm:$0xff]
    %v3728 = vld [vmem:[#allocation9 + $0xc8] sm:$0xff]
    %v3729 = vld [vmem:[#allocation9 + $0xd0] sm:$0xff]
    %v3730 = vld [vmem:[#allocation9 + $0xd8] sm:$0xff]
    %v3731 = vld [vmem:[#allocation9 + $0xe0] sm:$0xff]
    %v3732 = vld [vmem:[#allocation9 + $0xe8] sm:$0xff]
    %v3733 = vld [vmem:[#allocation9 + $0xf0] sm:$0xff]
    %v3734 = vld [vmem:[#allocation9 + $0xf8] sm:$0xff]
    %v3735 = vld [vmem:[#allocation9 + $0x100] sm:$0xff]
    %v3736 = vld [vmem:[#allocation9 + $0x108] sm:$0xff]
    %v3737 = vld [vmem:[#allocation9 + $0x110] sm:$0xff]
    %v3738 = vld [vmem:[#allocation9 + $0x118] sm:$0xff]
    %v3739 = vld [vmem:[#allocation9 + $0x120] sm:$0xff]
    %v3740 = vld [vmem:[#allocation9 + $0x128] sm:$0xff]
    %v3741 = vld [vmem:[#allocation9 + $0x130] sm:$0xff]
    %v3742 = vld [vmem:[#allocation9 + $0x138] sm:$0xff]
    %v3743 = vld [vmem:[#allocation9 + $0x140] sm:$0xff]
    %v3744 = vld [vmem:[#allocation9 + $0x148] sm:$0xff]
    %v3745 = vld [vmem:[#allocation9 + $0x150] sm:$0xff]
    %v3746 = vld [vmem:[#allocation9 + $0x158] sm:$0xff]
    %v3747 = vld [vmem:[#allocation9 + $0x160] sm:$0xff]
    %v3748 = vld [vmem:[#allocation9 + $0x168] sm:$0xff]
    %v3749 = vld [vmem:[#allocation9 + $0x170] sm:$0xff]
    %v3750 = vld [vmem:[#allocation9 + $0x178] sm:$0xff]
    %v3752 = vrot.slane %v3698, 2
    %3754 = vmatprep.subr.mxu0 %v3704
    %3755 = vmatpush1.msra.mxu0 %v3703
    %3756 = vmatprep.subr.mxu0 %v3707
    %3757 = vmatpush1.msra.mxu0 %v3706
    %3758 = vmatprep.subr.mxu0 %v3710
    %3759 = vmatpush1.msra.mxu0 %v3709
    %3760 = vmatprep.subr.mxu0 %v3713
    %3761 = vmatpush1.msra.mxu0 %v3712
    %3762 = vmatprep.subr.mxu0 %v3716
    %3763 = vmatpush1.msra.mxu0 %v3715
    %3764 = vmatprep.subr.mxu0 %v3719
    %3765 = vmatpush1.msra.mxu0 %v3718
    %3766 = vmatprep.subr.mxu0 %v3722
    %3767 = vmatpush1.msra.mxu0 %v3721
    %3768 = vmatprep.subr.mxu0 %v3725
    %3769 = vmatpush1.msra.mxu0 %v3724
    %3770 = vmatprep.subr.mxu0 %v3728
    %3771 = vmatpush1.msra.mxu0 %v3727
    %3772 = vmatprep.subr.mxu0 %v3731
    %3773 = vmatpush1.msra.mxu0 %v3730
    %3774 = vmatprep.subr.mxu0 %v3734
    %3775 = vmatpush1.msra.mxu0 %v3733
    %3776 = vmatprep.subr.mxu0 %v3737
    %3777 = vmatpush1.msra.mxu0 %v3736
    %3778 = vmatprep.subr.mxu0 %v3740
    %3779 = vmatpush1.msra.mxu0 %v3739
    %3780 = vmatprep.subr.mxu0 %v3743
    %3781 = vmatpush1.msra.mxu0 %v3742
    %3782 = vmatprep.subr.mxu0 %v3746
    %3783 = vmatpush1.msra.mxu0 %v3745
    %3784 = vmatprep.subr.mxu0 %v3749
    %3785 = vmatpush1.msra.mxu0 %v3748
    %3786 = vmatprep.subr.mxu0 0.0
    %3787 = vmatpush1.msra.mxu0 0.0
    %3788 = vmatprep.subr.mxu0 0.0
    %3789 = vmatpush1.msra.mxu0 0.0
    %3790 = vmatprep.subr.mxu0 0.0
    %3791 = vmatpush1.msra.mxu0 0.0
    %3792 = vmatprep.subr.mxu0 0.0
    %3793 = vmatpush1.msra.mxu0 0.0
    %3794 = vmatprep.subr.mxu0 0.0
    %3795 = vmatpush1.msra.mxu0 0.0
    %3796 = vmatprep.subr.mxu0 0.0
    %3797 = vmatpush1.msra.mxu0 0.0
    %3798 = vmatprep.subr.mxu0 0.0
    %3799 = vmatpush1.msra.mxu0 0.0
    %3800 = vmatprep.subr.mxu0 0.0
    %3801 = vmatpush1.msra.mxu0 0.0
    %3802 = vmatprep.subr.mxu0 0.0
    %3803 = vmatpush1.msra.mxu0 0.0
    %3804 = vmatprep.subr.mxu0 0.0
    %3805 = vmatpush1.msra.mxu0 0.0
    %3806 = vmatprep.subr.mxu0 0.0
    %3807 = vmatpush1.msra.mxu0 0.0
    %3808 = vmatprep.subr.mxu0 0.0
    %3809 = vmatpush1.msra.mxu0 0.0
    %3810 = vmatprep.subr.mxu0 0.0
    %3811 = vmatpush1.msra.mxu0 0.0
    %3812 = vmatprep.subr.mxu0 0.0
    %3813 = vmatpush1.msra.mxu0 0.0
    %3814 = vmatprep.subr.mxu0 0.0
    %3815 = vmatpush1.msra.mxu0 0.0
    %3816 = vmatprep.subr.mxu0 0.0
    %3817 = vmatpush1.msra.mxu0 0.0
    %3818 = vmatprep.mubr.f32.mxu0 0.0
    %3819 = vmatmul.mubr.f32.gmra.mrb[0].mxu0 %v3752
    %v3820 = vpop.f32.mrb[0].mxu0
    %v3821 = vadd.f32 %v2400, %v3820
    %v3822 = vpop.f32.mrb[0].mxu0
    %v3823 = vadd.f32 %v2404, %v3822
    %3824 = vdwg.mxu0
    %3825 = vmatprep.subr.mxu0 0.0
    %3826 = vmatpush1.msra.mxu0 %v3705
    %3827 = vmatprep.subr.mxu0 0.0
    %3828 = vmatpush1.msra.mxu0 %v3708
    %3829 = vmatprep.subr.mxu0 0.0
    %3830 = vmatpush1.msra.mxu0 %v3711
    %3831 = vmatprep.subr.mxu0 0.0
    %3832 = vmatpush1.msra.mxu0 %v3714
    %3833 = vmatprep.subr.mxu0 0.0
    %3834 = vmatpush1.msra.mxu0 %v3717
    %3835 = vmatprep.subr.mxu0 0.0
    %3836 = vmatpush1.msra.mxu0 %v3720
    %3837 = vmatprep.subr.mxu0 0.0
    %3838 = vmatpush1.msra.mxu0 %v3723
    %3839 = vmatprep.subr.mxu0 0.0
    %3840 = vmatpush1.msra.mxu0 %v3726
    %3841 = vmatprep.subr.mxu0 0.0
    %3842 = vmatpush1.msra.mxu0 %v3729
    %3843 = vmatprep.subr.mxu0 0.0
    %3844 = vmatpush1.msra.mxu0 %v3732
    %3845 = vmatprep.subr.mxu0 0.0
    %3846 = vmatpush1.msra.mxu0 %v3735
    %3847 = vmatprep.subr.mxu0 0.0
    %3848 = vmatpush1.msra.mxu0 %v3738
    %3849 = vmatprep.subr.mxu0 0.0
    %3850 = vmatpush1.msra.mxu0 %v3741
    %3851 = vmatprep.subr.mxu0 0.0
    %3852 = vmatpush1.msra.mxu0 %v3744
    %3853 = vmatprep.subr.mxu0 0.0
    %3854 = vmatpush1.msra.mxu0 %v3747
    %3855 = vmatprep.subr.mxu0 0.0
    %3856 = vmatpush1.msra.mxu0 %v3750
    %3857 = vmatprep.subr.mxu0 0.0
    %3858 = vmatpush1.msra.mxu0 0.0
    %3859 = vmatprep.subr.mxu0 0.0
    %3860 = vmatpush1.msra.mxu0 0.0
    %3861 = vmatprep.subr.mxu0 0.0
    %3862 = vmatpush1.msra.mxu0 0.0
    %3863 = vmatprep.subr.mxu0 0.0
    %3864 = vmatpush1.msra.mxu0 0.0
    %3865 = vmatprep.subr.mxu0 0.0
    %3866 = vmatpush1.msra.mxu0 0.0
    %3867 = vmatprep.subr.mxu0 0.0
    %3868 = vmatpush1.msra.mxu0 0.0
    %3869 = vmatprep.subr.mxu0 0.0
    %3870 = vmatpush1.msra.mxu0 0.0
    %3871 = vmatprep.subr.mxu0 0.0
    %3872 = vmatpush1.msra.mxu0 0.0
    %3873 = vmatprep.subr.mxu0 0.0
    %3874 = vmatpush1.msra.mxu0 0.0
    %3875 = vmatprep.subr.mxu0 0.0
    %3876 = vmatpush1.msra.mxu0 0.0
    %3877 = vmatprep.subr.mxu0 0.0
    %3878 = vmatpush1.msra.mxu0 0.0
    %3879 = vmatprep.subr.mxu0 0.0
    %3880 = vmatpush1.msra.mxu0 0.0
    %3881 = vmatprep.subr.mxu0 0.0
    %3882 = vmatpush1.msra.mxu0 0.0
    %3883 = vmatprep.subr.mxu0 0.0
    %3884 = vmatpush1.msra.mxu0 0.0
    %3885 = vmatprep.subr.mxu0 0.0
    %3886 = vmatpush1.msra.mxu0 0.0
    %3887 = vmatprep.subr.mxu0 0.0
    %3888 = vmatpush1.msra.mxu0 0.0
    %3889 = vmatprep.mubr.f32.mxu0 0.0
    %3890 = vmatmul.mubr.f32.gmra.mrb[0].mxu0 %v3752
    %v3891 = vpop.f32.mrb[0].mxu0
    %v3892 = vadd.f32 %v2408, %v3891
    %v3893 = vpop.f32.mrb[0].mxu0
    %3894 = vdwg.mxu0
    %v3896 = vrot.slane %v3821, 4
    %v3898 = vadd.f32 %v3700, %v3896
    %v3899 = vxor.u32 %v3898, 2147483648
    %v3900 = vmul.f32 %v3899, 1.442695
    %v3901 = vpow.pop %v3900
    %v3902 = vadd.f32 %v3901, 1.0
    %v3903 = vrcp.pop %v3902
    %v3904 = vmul.f32 1.0, %v3903
    %v3906 = vrot.slane %v3823, 4
    %v3908 = vadd.f32 %v3701, %v3906
    %v3909 = vxor.u32 %v3908, 2147483648
    %v3910 = vmul.f32 %v3909, 1.442695
    %v3911 = vpow.pop %v3910
    %v3912 = vadd.f32 %v3911, 1.0
    %v3913 = vrcp.pop %v3912
    %v3914 = vmul.f32 1.0, %v3913
    %v3916 = vrot.slane %v3892, 4
    %v3918 = vmul.f32 %v3904, %v3916
    %v3919 = vadd.f32 %v3702, %v3918
    %v3920 = vtanh.pop %v3919
    %v3921 = vsub.f32 1.0, %v3914
    %v3922 = vmul.f32 %v3921, %v3920
    %v3923 = vrot.slane %v3698, 6
    %v3925 = vmul.f32 %v3914, %v3923
    %v3926 = vadd.f32 %v3922, %v3925
    %3927 = vst [vmem:[#allocation3 + $0x8] sm:$0x30] %v3926
    %v3928 = vld [vmem:[#allocation2 + $0x18] sm:$0xc0]
    %v3929 = vld [vmem:[#allocation2 + $0x20] sm:$0xc0]
    %v3930 = vld [vmem:[#allocation2 + $0x28] sm:$0xc0]
    %v3931 = vld [vmem:[#allocation9] sm:$0xff]
    %v3932 = vld [vmem:[#allocation9 + $0x8] sm:$0xff]
    %v3933 = vld [vmem:[#allocation9 + $0x10] sm:$0xff]
    %v3934 = vld [vmem:[#allocation9 + $0x18] sm:$0xff]
    %v3935 = vld [vmem:[#allocation9 + $0x20] sm:$0xff]
    %v3936 = vld [vmem:[#allocation9 + $0x28] sm:$0xff]
    %v3937 = vld [vmem:[#allocation9 + $0x30] sm:$0xff]
    %v3938 = vld [vmem:[#allocation9 + $0x38] sm:$0xff]
    %v3939 = vld [vmem:[#allocation9 + $0x40] sm:$0xff]
    %v3940 = vld [vmem:[#allocation9 + $0x48] sm:$0xff]
    %v3941 = vld [vmem:[#allocation9 + $0x50] sm:$0xff]
    %v3942 = vld [vmem:[#allocation9 + $0x58] sm:$0xff]
    %v3943 = vld [vmem:[#allocation9 + $0x60] sm:$0xff]
    %v3944 = vld [vmem:[#allocation9 + $0x68] sm:$0xff]
    %v3945 = vld [vmem:[#allocation9 + $0x70] sm:$0xff]
    %v3946 = vld [vmem:[#allocation9 + $0x78] sm:$0xff]
    %v3947 = vld [vmem:[#allocation9 + $0x80] sm:$0xff]
    %v3948 = vld [vmem:[#allocation9 + $0x88] sm:$0xff]
    %v3949 = vld [vmem:[#allocation9 + $0x90] sm:$0xff]
    %v3950 = vld [vmem:[#allocation9 + $0x98] sm:$0xff]
    %v3951 = vld [vmem:[#allocation9 + $0xa0] sm:$0xff]
    %v3952 = vld [vmem:[#allocation9 + $0xa8] sm:$0xff]
    %v3953 = vld [vmem:[#allocation9 + $0xb0] sm:$0xff]
    %v3954 = vld [vmem:[#allocation9 + $0xb8] sm:$0xff]
    %v3955 = vld [vmem:[#allocation9 + $0xc0] sm:$0xff]
    %v3956 = vld [vmem:[#allocation9 + $0xc8] sm:$0xff]
    %v3957 = vld [vmem:[#allocation9 + $0xd0] sm:$0xff]
    %v3958 = vld [vmem:[#allocation9 + $0xd8] sm:$0xff]
    %v3959 = vld [vmem:[#allocation9 + $0xe0] sm:$0xff]
    %v3960 = vld [vmem:[#allocation9 + $0xe8] sm:$0xff]
    %v3961 = vld [vmem:[#allocation9 + $0xf0] sm:$0xff]
    %v3962 = vld [vmem:[#allocation9 + $0xf8] sm:$0xff]
    %v3963 = vld [vmem:[#allocation9 + $0x100] sm:$0xff]
    %v3964 = vld [vmem:[#allocation9 + $0x108] sm:$0xff]
    %v3965 = vld [vmem:[#allocation9 + $0x110] sm:$0xff]
    %v3966 = vld [vmem:[#allocation9 + $0x118] sm:$0xff]
    %v3967 = vld [vmem:[#allocation9 + $0x120] sm:$0xff]
    %v3968 = vld [vmem:[#allocation9 + $0x128] sm:$0xff]
    %v3969 = vld [vmem:[#allocation9 + $0x130] sm:$0xff]
    %v3970 = vld [vmem:[#allocation9 + $0x138] sm:$0xff]
    %v3971 = vld [vmem:[#allocation9 + $0x140] sm:$0xff]
    %v3972 = vld [vmem:[#allocation9 + $0x148] sm:$0xff]
    %v3973 = vld [vmem:[#allocation9 + $0x150] sm:$0xff]
    %v3974 = vld [vmem:[#allocation9 + $0x158] sm:$0xff]
    %v3975 = vld [vmem:[#allocation9 + $0x160] sm:$0xff]
    %v3976 = vld [vmem:[#allocation9 + $0x168] sm:$0xff]
    %v3977 = vld [vmem:[#allocation9 + $0x170] sm:$0xff]
    %v3978 = vld [vmem:[#allocation9 + $0x178] sm:$0xff]
    %v3980 = vrot.slane %v3926, 4
    %3982 = vmatprep.subr.mxu0 %v3932
    %3983 = vmatpush1.msra.mxu0 %v3931
    %3984 = vmatprep.subr.mxu0 %v3935
    %3985 = vmatpush1.msra.mxu0 %v3934
    %3986 = vmatprep.subr.mxu0 %v3938
    %3987 = vmatpush1.msra.mxu0 %v3937
    %3988 = vmatprep.subr.mxu0 %v3941
    %3989 = vmatpush1.msra.mxu0 %v3940
    %3990 = vmatprep.subr.mxu0 %v3944
    %3991 = vmatpush1.msra.mxu0 %v3943
    %3992 = vmatprep.subr.mxu0 %v3947
    %3993 = vmatpush1.msra.mxu0 %v3946
    %3994 = vmatprep.subr.mxu0 %v3950
    %3995 = vmatpush1.msra.mxu0 %v3949
    %3996 = vmatprep.subr.mxu0 %v3953
    %3997 = vmatpush1.msra.mxu0 %v3952
    %3998 = vmatprep.subr.mxu0 %v3956
    %3999 = vmatpush1.msra.mxu0 %v3955
    %4000 = vmatprep.subr.mxu0 %v3959
    %4001 = vmatpush1.msra.mxu0 %v3958
    %4002 = vmatprep.subr.mxu0 %v3962
    %4003 = vmatpush1.msra.mxu0 %v3961
    %4004 = vmatprep.subr.mxu0 %v3965
    %4005 = vmatpush1.msra.mxu0 %v3964
    %4006 = vmatprep.subr.mxu0 %v3968
    %4007 = vmatpush1.msra.mxu0 %v3967
    %4008 = vmatprep.subr.mxu0 %v3971
    %4009 = vmatpush1.msra.mxu0 %v3970
    %4010 = vmatprep.subr.mxu0 %v3974
    %4011 = vmatpush1.msra.mxu0 %v3973
    %4012 = vmatprep.subr.mxu0 %v3977
    %4013 = vmatpush1.msra.mxu0 %v3976
    %4014 = vmatprep.subr.mxu0 0.0
    %4015 = vmatpush1.msra.mxu0 0.0
    %4016 = vmatprep.subr.mxu0 0.0
    %4017 = vmatpush1.msra.mxu0 0.0
    %4018 = vmatprep.subr.mxu0 0.0
    %4019 = vmatpush1.msra.mxu0 0.0
    %4020 = vmatprep.subr.mxu0 0.0
    %4021 = vmatpush1.msra.mxu0 0.0
    %4022 = vmatprep.subr.mxu0 0.0
    %4023 = vmatpush1.msra.mxu0 0.0
    %4024 = vmatprep.subr.mxu0 0.0
    %4025 = vmatpush1.msra.mxu0 0.0
    %4026 = vmatprep.subr.mxu0 0.0
    %4027 = vmatpush1.msra.mxu0 0.0
    %4028 = vmatprep.subr.mxu0 0.0
    %4029 = vmatpush1.msra.mxu0 0.0
    %4030 = vmatprep.subr.mxu0 0.0
    %4031 = vmatpush1.msra.mxu0 0.0
    %4032 = vmatprep.subr.mxu0 0.0
    %4033 = vmatpush1.msra.mxu0 0.0
    %4034 = vmatprep.subr.mxu0 0.0
    %4035 = vmatpush1.msra.mxu0 0.0
    %4036 = vmatprep.subr.mxu0 0.0
    %4037 = vmatpush1.msra.mxu0 0.0
    %4038 = vmatprep.subr.mxu0 0.0
    %4039 = vmatpush1.msra.mxu0 0.0
    %4040 = vmatprep.subr.mxu0 0.0
    %4041 = vmatpush1.msra.mxu0 0.0
    %4042 = vmatprep.subr.mxu0 0.0
    %4043 = vmatpush1.msra.mxu0 0.0
    %4044 = vmatprep.subr.mxu0 0.0
    %4045 = vmatpush1.msra.mxu0 0.0
    %4046 = vmatprep.mubr.f32.mxu0 0.0
    %4047 = vmatmul.mubr.f32.gmra.mrb[0].mxu0 %v3980
    %v4048 = vpop.f32.mrb[0].mxu0
    %v4049 = vadd.f32 %v2400, %v4048
    %v4050 = vpop.f32.mrb[0].mxu0
    %v4051 = vadd.f32 %v2404, %v4050
    %4052 = vdwg.mxu0
    %4053 = vmatprep.subr.mxu0 0.0
    %4054 = vmatpush1.msra.mxu0 %v3933
    %4055 = vmatprep.subr.mxu0 0.0
    %4056 = vmatpush1.msra.mxu0 %v3936
    %4057 = vmatprep.subr.mxu0 0.0
    %4058 = vmatpush1.msra.mxu0 %v3939
    %4059 = vmatprep.subr.mxu0 0.0
    %4060 = vmatpush1.msra.mxu0 %v3942
    %4061 = vmatprep.subr.mxu0 0.0
    %4062 = vmatpush1.msra.mxu0 %v3945
    %4063 = vmatprep.subr.mxu0 0.0
    %4064 = vmatpush1.msra.mxu0 %v3948
    %4065 = vmatprep.subr.mxu0 0.0
    %4066 = vmatpush1.msra.mxu0 %v3951
    %4067 = vmatprep.subr.mxu0 0.0
    %4068 = vmatpush1.msra.mxu0 %v3954
    %4069 = vmatprep.subr.mxu0 0.0
    %4070 = vmatpush1.msra.mxu0 %v3957
    %4071 = vmatprep.subr.mxu0 0.0
    %4072 = vmatpush1.msra.mxu0 %v3960
    %4073 = vmatprep.subr.mxu0 0.0
    %4074 = vmatpush1.msra.mxu0 %v3963
    %4075 = vmatprep.subr.mxu0 0.0
    %4076 = vmatpush1.msra.mxu0 %v3966
    %4077 = vmatprep.subr.mxu0 0.0
    %4078 = vmatpush1.msra.mxu0 %v3969
    %4079 = vmatprep.subr.mxu0 0.0
    %4080 = vmatpush1.msra.mxu0 %v3972
    %4081 = vmatprep.subr.mxu0 0.0
    %4082 = vmatpush1.msra.mxu0 %v3975
    %4083 = vmatprep.subr.mxu0 0.0
    %4084 = vmatpush1.msra.mxu0 %v3978
    %4085 = vmatprep.subr.mxu0 0.0
    %4086 = vmatpush1.msra.mxu0 0.0
    %4087 = vmatprep.subr.mxu0 0.0
    %4088 = vmatpush1.msra.mxu0 0.0
    %4089 = vmatprep.subr.mxu0 0.0
    %4090 = vmatpush1.msra.mxu0 0.0
    %4091 = vmatprep.subr.mxu0 0.0
    %4092 = vmatpush1.msra.mxu0 0.0
    %4093 = vmatprep.subr.mxu0 0.0
    %4094 = vmatpush1.msra.mxu0 0.0
    %4095 = vmatprep.subr.mxu0 0.0
    %4096 = vmatpush1.msra.mxu0 0.0
    %4097 = vmatprep.subr.mxu0 0.0
    %4098 = vmatpush1.msra.mxu0 0.0
    %4099 = vmatprep.subr.mxu0 0.0
    %4100 = vmatpush1.msra.mxu0 0.0
    %4101 = vmatprep.subr.mxu0 0.0
    %4102 = vmatpush1.msra.mxu0 0.0
    %4103 = vmatprep.subr.mxu0 0.0
    %4104 = vmatpush1.msra.mxu0 0.0
    %4105 = vmatprep.subr.mxu0 0.0
    %4106 = vmatpush1.msra.mxu0 0.0
    %4107 = vmatprep.subr.mxu0 0.0
    %4108 = vmatpush1.msra.mxu0 0.0
    %4109 = vmatprep.subr.mxu0 0.0
    %4110 = vmatpush1.msra.mxu0 0.0
    %4111 = vmatprep.subr.mxu0 0.0
    %4112 = vmatpush1.msra.mxu0 0.0
    %4113 = vmatprep.subr.mxu0 0.0
    %4114 = vmatpush1.msra.mxu0 0.0
    %4115 = vmatprep.subr.mxu0 0.0
    %4116 = vmatpush1.msra.mxu0 0.0
    %4117 = vmatprep.mubr.f32.mxu0 0.0
    %4118 = vmatmul.mubr.f32.gmra.mrb[0].mxu0 %v3980
    %v4119 = vpop.f32.mrb[0].mxu0
    %v4120 = vadd.f32 %v2408, %v4119
    %v4121 = vpop.f32.mrb[0].mxu0
    %4122 = vdwg.mxu0
    %v4124 = vrot.slane %v4049, 2
    %v4126 = vadd.f32 %v3928, %v4124
    %v4127 = vxor.u32 %v4126, 2147483648
    %v4128 = vmul.f32 %v4127, 1.442695
    %v4129 = vpow.pop %v4128
    %v4130 = vadd.f32 %v4129, 1.0
    %v4131 = vrcp.pop %v4130
    %v4132 = vmul.f32 1.0, %v4131
    %v4134 = vrot.slane %v4051, 2
    %v4136 = vadd.f32 %v3929, %v4134
    %v4137 = vxor.u32 %v4136, 2147483648
    %v4138 = vmul.f32 %v4137, 1.442695
    %v4139 = vpow.pop %v4138
    %v4140 = vadd.f32 %v4139, 1.0
    %v4141 = vrcp.pop %v4140
    %v4142 = vmul.f32 1.0, %v4141
    %v4144 = vrot.slane %v4120, 2
    %v4146 = vmul.f32 %v4132, %v4144
    %v4147 = vadd.f32 %v3930, %v4146
    %v4148 = vtanh.pop %v4147
    %v4149 = vsub.f32 1.0, %v4142
    %v4150 = vmul.f32 %v4149, %v4148
    %v4151 = vrot.slane %v3926, 6
    %v4153 = vmul.f32 %v4142, %v4151
    %v4154 = vadd.f32 %v4150, %v4153
    %4155 = vst [vmem:[#allocation3 + $0x8] sm:$0xc0] %v4154
    %v4156 = vld [vmem:[#allocation3] sm:$0xff]
    %v4157 = vld [vmem:[#allocation3 + $0x8] sm:$0xff]
    %v4158 = vld [vmem:[#allocation10] sm:$0xff]
    %v4159 = vld [vmem:[#allocation10 + $0x8] sm:$0xff]
    %v4160 = vld [vmem:[#allocation10 + $0x10] sm:$0xff]
    %v4161 = vld [vmem:[#allocation10 + $0x18] sm:$0xff]
    %v4162 = vld [vmem:[#allocation10 + $0x20] sm:$0xff]
    %v4163 = vld [vmem:[#allocation10 + $0x28] sm:$0xff]
    %v4164 = vld [vmem:[#allocation10 + $0x30] sm:$0xff]
    %v4165 = vld [vmem:[#allocation10 + $0x38] sm:$0xff]
    %v4166 = vld [vmem:[#allocation10 + $0x40] sm:$0xff]
    %v4167 = vld [vmem:[#allocation10 + $0x48] sm:$0xff]
    %v4168 = vld [vmem:[#allocation10 + $0x50] sm:$0xff]
    %v4169 = vld [vmem:[#allocation10 + $0x58] sm:$0xff]
    %v4170 = vld [vmem:[#allocation10 + $0x60] sm:$0xff]
    %v4171 = vld [vmem:[#allocation10 + $0x68] sm:$0xff]
    %v4172 = vld [vmem:[#allocation10 + $0x70] sm:$0xff]
    %v4173 = vld [vmem:[#allocation10 + $0x78] sm:$0xff]
    %v4174 = vld [vmem:[#allocation10 + $0x80] sm:$0xff]
    %v4175 = vld [vmem:[#allocation10 + $0x88] sm:$0xff]
    %v4176 = vld [vmem:[#allocation10 + $0x90] sm:$0xff]
    %v4177 = vld [vmem:[#allocation10 + $0x98] sm:$0xff]
    %v4178 = vld [vmem:[#allocation10 + $0xa0] sm:$0xff]
    %v4179 = vld [vmem:[#allocation10 + $0xa8] sm:$0xff]
    %v4180 = vld [vmem:[#allocation10 + $0xb0] sm:$0xff]
    %v4181 = vld [vmem:[#allocation10 + $0xb8] sm:$0xff]
    %v4182 = vld [vmem:[#allocation10 + $0xc0] sm:$0xff]
    %v4183 = vld [vmem:[#allocation10 + $0xc8] sm:$0xff]
    %v4184 = vld [vmem:[#allocation10 + $0xd0] sm:$0xff]
    %v4185 = vld [vmem:[#allocation10 + $0xd8] sm:$0xff]
    %v4186 = vld [vmem:[#allocation10 + $0xe0] sm:$0xff]
    %v4187 = vld [vmem:[#allocation10 + $0xe8] sm:$0xff]
    %v4188 = vld [vmem:[#allocation10 + $0xf0] sm:$0xff]
    %v4189 = vld [vmem:[#allocation10 + $0xf8] sm:$0xff]
    %v4190 = vld [vmem:[#allocation10 + $0x100] sm:$0xff]
    %v4191 = vld [vmem:[#allocation10 + $0x108] sm:$0xff]
    %v4192 = vld [vmem:[#allocation10 + $0x110] sm:$0xff]
    %v4193 = vld [vmem:[#allocation10 + $0x118] sm:$0xff]
    %v4194 = vld [vmem:[#allocation10 + $0x120] sm:$0xff]
    %v4195 = vld [vmem:[#allocation10 + $0x128] sm:$0xff]
    %v4196 = vld [vmem:[#allocation10 + $0x130] sm:$0xff]
    %v4197 = vld [vmem:[#allocation10 + $0x138] sm:$0xff]
    %v4198 = vld [vmem:[#allocation10 + $0x140] sm:$0xff]
    %v4199 = vld [vmem:[#allocation10 + $0x148] sm:$0xff]
    %v4200 = vld [vmem:[#allocation10 + $0x150] sm:$0xff]
    %v4201 = vld [vmem:[#allocation10 + $0x158] sm:$0xff]
    %v4202 = vld [vmem:[#allocation10 + $0x160] sm:$0xff]
    %v4203 = vld [vmem:[#allocation10 + $0x168] sm:$0xff]
    %v4204 = vld [vmem:[#allocation10 + $0x170] sm:$0xff]
    %v4205 = vld [vmem:[#allocation10 + $0x178] sm:$0xff]
    %v4206 = vld [vmem:[%s11] sm:$0x7]
    %v4208 = vlaneseq
    %v4209 = vshrl.u32 %v4208, 7
    %v4210 = vsub.s32 0, %v4209
    %v4211 = vrot.slane %v4206, %v4210
    %v4212 = vlaneseq
    %v4213 = vshrl.u32 %v4212, 7
    %v4214 = vsub.s32 1, %v4213
    %v4215 = vrot.slane %v4206, %v4214
    %v4216 = vlaneseq
    %v4217 = vshrl.u32 %v4216, 7
    %v4218 = vsub.s32 2, %v4217
    %v4219 = vrot.slane %v4206, %v4218
    %4223 = vmatprep.subr.mxu0 %v4159
    %4224 = vmatpush1.msra.mxu0 %v4158
    %4225 = vmatprep.subr.mxu0 %v4162
    %4226 = vmatpush1.msra.mxu0 %v4161
    %4227 = vmatprep.subr.mxu0 %v4165
    %4228 = vmatpush1.msra.mxu0 %v4164
    %4229 = vmatprep.subr.mxu0 %v4168
    %4230 = vmatpush1.msra.mxu0 %v4167
    %4231 = vmatprep.subr.mxu0 %v4171
    %4232 = vmatpush1.msra.mxu0 %v4170
    %4233 = vmatprep.subr.mxu0 %v4174
    %4234 = vmatpush1.msra.mxu0 %v4173
    %4235 = vmatprep.subr.mxu0 %v4177
    %4236 = vmatpush1.msra.mxu0 %v4176
    %4237 = vmatprep.subr.mxu0 %v4180
    %4238 = vmatpush1.msra.mxu0 %v4179
    %4239 = vmatprep.subr.mxu0 %v4183
    %4240 = vmatpush1.msra.mxu0 %v4182
    %4241 = vmatprep.subr.mxu0 %v4186
    %4242 = vmatpush1.msra.mxu0 %v4185
    %4243 = vmatprep.subr.mxu0 %v4189
    %4244 = vmatpush1.msra.mxu0 %v4188
    %4245 = vmatprep.subr.mxu0 %v4192
    %4246 = vmatpush1.msra.mxu0 %v4191
    %4247 = vmatprep.subr.mxu0 %v4195
    %4248 = vmatpush1.msra.mxu0 %v4194
    %4249 = vmatprep.subr.mxu0 %v4198
    %4250 = vmatpush1.msra.mxu0 %v4197
    %4251 = vmatprep.subr.mxu0 %v4201
    %4252 = vmatpush1.msra.mxu0 %v4200
    %4253 = vmatprep.subr.mxu0 %v4204
    %4254 = vmatpush1.msra.mxu0 %v4203
    %4255 = vmatprep.subr.mxu0 0.0
    %4256 = vmatpush1.msra.mxu0 0.0
    %4257 = vmatprep.subr.mxu0 0.0
    %4258 = vmatpush1.msra.mxu0 0.0
    %4259 = vmatprep.subr.mxu0 0.0
    %4260 = vmatpush1.msra.mxu0 0.0
    %4261 = vmatprep.subr.mxu0 0.0
    %4262 = vmatpush1.msra.mxu0 0.0
    %4263 = vmatprep.subr.mxu0 0.0
    %4264 = vmatpush1.msra.mxu0 0.0
    %4265 = vmatprep.subr.mxu0 0.0
    %4266 = vmatpush1.msra.mxu0 0.0
    %4267 = vmatprep.subr.mxu0 0.0
    %4268 = vmatpush1.msra.mxu0 0.0
    %4269 = vmatprep.subr.mxu0 0.0
    %4270 = vmatpush1.msra.mxu0 0.0
    %4271 = vmatprep.subr.mxu0 0.0
    %4272 = vmatpush1.msra.mxu0 0.0
    %4273 = vmatprep.subr.mxu0 0.0
    %4274 = vmatpush1.msra.mxu0 0.0
    %4275 = vmatprep.subr.mxu0 0.0
    %4276 = vmatpush1.msra.mxu0 0.0
    %4277 = vmatprep.subr.mxu0 0.0
    %4278 = vmatpush1.msra.mxu0 0.0
    %4279 = vmatprep.subr.mxu0 0.0
    %4280 = vmatpush1.msra.mxu0 0.0
    %4281 = vmatprep.subr.mxu0 0.0
    %4282 = vmatpush1.msra.mxu0 0.0
    %4283 = vmatprep.subr.mxu0 0.0
    %4284 = vmatpush1.msra.mxu0 0.0
    %4285 = vmatprep.subr.mxu0 0.0
    %4286 = vmatpush1.msra.mxu0 0.0
    %4287 = vmatprep.mubr.f32.mxu0 0.0
    %4288 = vmatmul.mubr.f32.gmra.mrb[0].mxu0 %v4156
    %v4289 = vpop.f32.mrb[0].mxu0
    %v4290 = vadd.f32 %v4211, %v4289
    %v4291 = vpop.f32.mrb[0].mxu0
    %v4292 = vadd.f32 %v4215, %v4291
    %4293 = vmatprep.mubr.f32.mxu0 0.0
    %4294 = vmatmul.mubr.f32.gmra.mrb[0].mxu0 %v4157
    %v4295 = vpop.f32.mrb[0].mxu0
    %v4296 = vadd.f32 %v4211, %v4295
    %v4297 = vpop.f32.mrb[0].mxu0
    %v4298 = vadd.f32 %v4215, %v4297
    %4299 = vdwg.mxu0
    %4300 = vmatprep.subr.mxu0 0.0
    %4301 = vmatpush1.msra.mxu0 %v4160
    %4302 = vmatprep.subr.mxu0 0.0
    %4303 = vmatpush1.msra.mxu0 %v4163
    %4304 = vmatprep.subr.mxu0 0.0
    %4305 = vmatpush1.msra.mxu0 %v4166
    %4306 = vmatprep.subr.mxu0 0.0
    %4307 = vmatpush1.msra.mxu0 %v4169
    %4308 = vmatprep.subr.mxu0 0.0
    %4309 = vmatpush1.msra.mxu0 %v4172
    %4310 = vmatprep.subr.mxu0 0.0
    %4311 = vmatpush1.msra.mxu0 %v4175
    %4312 = vmatprep.subr.mxu0 0.0
    %4313 = vmatpush1.msra.mxu0 %v4178
    %4314 = vmatprep.subr.mxu0 0.0
    %4315 = vmatpush1.msra.mxu0 %v4181
    %4316 = vmatprep.subr.mxu0 0.0
    %4317 = vmatpush1.msra.mxu0 %v4184
    %4318 = vmatprep.subr.mxu0 0.0
    %4319 = vmatpush1.msra.mxu0 %v4187
    %4320 = vmatprep.subr.mxu0 0.0
    %4321 = vmatpush1.msra.mxu0 %v4190
    %4322 = vmatprep.subr.mxu0 0.0
    %4323 = vmatpush1.msra.mxu0 %v4193
    %4324 = vmatprep.subr.mxu0 0.0
    %4325 = vmatpush1.msra.mxu0 %v4196
    %4326 = vmatprep.subr.mxu0 0.0
    %4327 = vmatpush1.msra.mxu0 %v4199
    %4328 = vmatprep.subr.mxu0 0.0
    %4329 = vmatpush1.msra.mxu0 %v4202
    %4330 = vmatprep.subr.mxu0 0.0
    %4331 = vmatpush1.msra.mxu0 %v4205
    %4332 = vmatprep.subr.mxu0 0.0
    %4333 = vmatpush1.msra.mxu0 0.0
    %4334 = vmatprep.subr.mxu0 0.0
    %4335 = vmatpush1.msra.mxu0 0.0
    %4336 = vmatprep.subr.mxu0 0.0
    %4337 = vmatpush1.msra.mxu0 0.0
    %4338 = vmatprep.subr.mxu0 0.0
    %4339 = vmatpush1.msra.mxu0 0.0
    %4340 = vmatprep.subr.mxu0 0.0
    %4341 = vmatpush1.msra.mxu0 0.0
    %4342 = vmatprep.subr.mxu0 0.0
    %4343 = vmatpush1.msra.mxu0 0.0
    %4344 = vmatprep.subr.mxu0 0.0
    %4345 = vmatpush1.msra.mxu0 0.0
    %4346 = vmatprep.subr.mxu0 0.0
    %4347 = vmatpush1.msra.mxu0 0.0
    %4348 = vmatprep.subr.mxu0 0.0
    %4349 = vmatpush1.msra.mxu0 0.0
    %4350 = vmatprep.subr.mxu0 0.0
    %4351 = vmatpush1.msra.mxu0 0.0
    %4352 = vmatprep.subr.mxu0 0.0
    %4353 = vmatpush1.msra.mxu0 0.0
    %4354 = vmatprep.subr.mxu0 0.0
    %4355 = vmatpush1.msra.mxu0 0.0
    %4356 = vmatprep.subr.mxu0 0.0
    %4357 = vmatpush1.msra.mxu0 0.0
    %4358 = vmatprep.subr.mxu0 0.0
    %4359 = vmatpush1.msra.mxu0 0.0
    %4360 = vmatprep.subr.mxu0 0.0
    %4361 = vmatpush1.msra.mxu0 0.0
    %4362 = vmatprep.subr.mxu0 0.0
    %4363 = vmatpush1.msra.mxu0 0.0
    %4364 = vmatprep.mubr.f32.mxu0 0.0
    %4365 = vmatmul.mubr.f32.gmra.mrb[0].mxu0 %v4156
    %v4366 = vpop.f32.mrb[0].mxu0
    %v4367 = vadd.f32 %v4219, %v4366
    %v4368 = vpop.f32.mrb[0].mxu0
    %4369 = vmatprep.mubr.f32.mxu0 0.0
    %4370 = vmatmul.mubr.f32.gmra.mrb[0].mxu0 %v4157
    %v4371 = vpop.f32.mrb[0].mxu0
    %v4372 = vadd.f32 %v4219, %v4371
    %v4373 = vpop.f32.mrb[0].mxu0
    %4374 = vdwg.mxu0
    %4375 = vst [vmem:[#allocation2] sm:$0xff] %v4290
    %4376 = vst [vmem:[#allocation2 + $0x8] sm:$0xff] %v4292
    %4377 = vst [vmem:[#allocation2 + $0x10] sm:$0xff] %v4367
    %4378 = vst [vmem:[#allocation2 + $0x18] sm:$0xff] %v4296
    %4379 = vst [vmem:[#allocation2 + $0x20] sm:$0xff] %v4298
    %4380 = vst [vmem:[#allocation2 + $0x28] sm:$0xff] %v4372
    %v4381 = vld [vmem:[%s12] sm:$0x7]
    %v4382 = vld [vmem:[#allocation2] sm:$0x3]
    %v4383 = vld [vmem:[#allocation2 + $0x8] sm:$0x3]
    %v4384 = vld [vmem:[#allocation2 + $0x10] sm:$0x3]
    %v4385 = vld [vmem:[#allocation12] sm:$0xff]
    %v4386 = vld [vmem:[#allocation12 + $0x8] sm:$0xff]
    %v4387 = vld [vmem:[#allocation12 + $0x10] sm:$0xff]
    %v4388 = vld [vmem:[#allocation12 + $0x18] sm:$0xff]
    %v4389 = vld [vmem:[#allocation12 + $0x20] sm:$0xff]
    %v4390 = vld [vmem:[#allocation12 + $0x28] sm:$0xff]
    %v4391 = vld [vmem:[#allocation12 + $0x30] sm:$0xff]
    %v4392 = vld [vmem:[#allocation12 + $0x38] sm:$0xff]
    %v4393 = vld [vmem:[#allocation12 + $0x40] sm:$0xff]
    %v4394 = vld [vmem:[#allocation12 + $0x48] sm:$0xff]
    %v4395 = vld [vmem:[#allocation12 + $0x50] sm:$0xff]
    %v4396 = vld [vmem:[#allocation12 + $0x58] sm:$0xff]
    %v4397 = vld [vmem:[#allocation12 + $0x60] sm:$0xff]
    %v4398 = vld [vmem:[#allocation12 + $0x68] sm:$0xff]
    %v4399 = vld [vmem:[#allocation12 + $0x70] sm:$0xff]
    %v4400 = vld [vmem:[#allocation12 + $0x78] sm:$0xff]
    %v4401 = vld [vmem:[#allocation12 + $0x80] sm:$0xff]
    %v4402 = vld [vmem:[#allocation12 + $0x88] sm:$0xff]
    %v4403 = vld [vmem:[#allocation12 + $0x90] sm:$0xff]
    %v4404 = vld [vmem:[#allocation12 + $0x98] sm:$0xff]
    %v4405 = vld [vmem:[#allocation12 + $0xa0] sm:$0xff]
    %v4406 = vld [vmem:[#allocation12 + $0xa8] sm:$0xff]
    %v4407 = vld [vmem:[#allocation12 + $0xb0] sm:$0xff]
    %v4408 = vld [vmem:[#allocation12 + $0xb8] sm:$0xff]
    %v4409 = vld [vmem:[#allocation12 + $0xc0] sm:$0xff]
    %v4410 = vld [vmem:[#allocation12 + $0xc8] sm:$0xff]
    %v4411 = vld [vmem:[#allocation12 + $0xd0] sm:$0xff]
    %v4412 = vld [vmem:[#allocation12 + $0xd8] sm:$0xff]
    %v4413 = vld [vmem:[#allocation12 + $0xe0] sm:$0xff]
    %v4414 = vld [vmem:[#allocation12 + $0xe8] sm:$0xff]
    %v4415 = vld [vmem:[#allocation12 + $0xf0] sm:$0xff]
    %v4416 = vld [vmem:[#allocation12 + $0xf8] sm:$0xff]
    %v4417 = vld [vmem:[#allocation12 + $0x100] sm:$0xff]
    %v4418 = vld [vmem:[#allocation12 + $0x108] sm:$0xff]
    %v4419 = vld [vmem:[#allocation12 + $0x110] sm:$0xff]
    %v4420 = vld [vmem:[#allocation12 + $0x118] sm:$0xff]
    %v4421 = vld [vmem:[#allocation12 + $0x120] sm:$0xff]
    %v4422 = vld [vmem:[#allocation12 + $0x128] sm:$0xff]
    %v4423 = vld [vmem:[#allocation12 + $0x130] sm:$0xff]
    %v4424 = vld [vmem:[#allocation12 + $0x138] sm:$0xff]
    %v4425 = vld [vmem:[#allocation12 + $0x140] sm:$0xff]
    %v4426 = vld [vmem:[#allocation12 + $0x148] sm:$0xff]
    %v4427 = vld [vmem:[#allocation12 + $0x150] sm:$0xff]
    %v4428 = vld [vmem:[#allocation12 + $0x158] sm:$0xff]
    %v4429 = vld [vmem:[#allocation12 + $0x160] sm:$0xff]
    %v4430 = vld [vmem:[#allocation12 + $0x168] sm:$0xff]
    %v4431 = vld [vmem:[#allocation12 + $0x170] sm:$0xff]
    %v4432 = vld [vmem:[#allocation12 + $0x178] sm:$0xff]
    %v4434 = vlaneseq
    %v4435 = vshrl.u32 %v4434, 7
    %v4436 = vsub.s32 0, %v4435
    %v4437 = vrot.slane %v4381, %v4436
    %v4438 = vlaneseq
    %v4439 = vshrl.u32 %v4438, 7
    %v4440 = vsub.s32 1, %v4439
    %v4441 = vrot.slane %v4381, %v4440
    %v4442 = vlaneseq
    %v4443 = vshrl.u32 %v4442, 7
    %v4444 = vsub.s32 2, %v4443
    %v4445 = vrot.slane %v4381, %v4444
    %4449 = vmatprep.subr.mxu0 %v4386
    %4450 = vmatpush1.msra.mxu0 %v4385
    %4451 = vmatprep.subr.mxu0 %v4389
    %4452 = vmatpush1.msra.mxu0 %v4388
    %4453 = vmatprep.subr.mxu0 %v4392
    %4454 = vmatpush1.msra.mxu0 %v4391
    %4455 = vmatprep.subr.mxu0 %v4395
    %4456 = vmatpush1.msra.mxu0 %v4394
    %4457 = vmatprep.subr.mxu0 %v4398
    %4458 = vmatpush1.msra.mxu0 %v4397
    %4459 = vmatprep.subr.mxu0 %v4401
    %4460 = vmatpush1.msra.mxu0 %v4400
    %4461 = vmatprep.subr.mxu0 %v4404
    %4462 = vmatpush1.msra.mxu0 %v4403
    %4463 = vmatprep.subr.mxu0 %v4407
    %4464 = vmatpush1.msra.mxu0 %v4406
    %4465 = vmatprep.subr.mxu0 %v4410
    %4466 = vmatpush1.msra.mxu0 %v4409
    %4467 = vmatprep.subr.mxu0 %v4413
    %4468 = vmatpush1.msra.mxu0 %v4412
    %4469 = vmatprep.subr.mxu0 %v4416
    %4470 = vmatpush1.msra.mxu0 %v4415
    %4471 = vmatprep.subr.mxu0 %v4419
    %4472 = vmatpush1.msra.mxu0 %v4418
    %4473 = vmatprep.subr.mxu0 %v4422
    %4474 = vmatpush1.msra.mxu0 %v4421
    %4475 = vmatprep.subr.mxu0 %v4425
    %4476 = vmatpush1.msra.mxu0 %v4424
    %4477 = vmatprep.subr.mxu0 %v4428
    %4478 = vmatpush1.msra.mxu0 %v4427
    %4479 = vmatprep.subr.mxu0 %v4431
    %4480 = vmatpush1.msra.mxu0 %v4430
    %4481 = vmatprep.subr.mxu0 0.0
    %4482 = vmatpush1.msra.mxu0 0.0
    %4483 = vmatprep.subr.mxu0 0.0
    %4484 = vmatpush1.msra.mxu0 0.0
    %4485 = vmatprep.subr.mxu0 0.0
    %4486 = vmatpush1.msra.mxu0 0.0
    %4487 = vmatprep.subr.mxu0 0.0
    %4488 = vmatpush1.msra.mxu0 0.0
    %4489 = vmatprep.subr.mxu0 0.0
    %4490 = vmatpush1.msra.mxu0 0.0
    %4491 = vmatprep.subr.mxu0 0.0
    %4492 = vmatpush1.msra.mxu0 0.0
    %4493 = vmatprep.subr.mxu0 0.0
    %4494 = vmatpush1.msra.mxu0 0.0
    %4495 = vmatprep.subr.mxu0 0.0
    %4496 = vmatpush1.msra.mxu0 0.0
    %4497 = vmatprep.subr.mxu0 0.0
    %4498 = vmatpush1.msra.mxu0 0.0
    %4499 = vmatprep.subr.mxu0 0.0
    %4500 = vmatpush1.msra.mxu0 0.0
    %4501 = vmatprep.subr.mxu0 0.0
    %4502 = vmatpush1.msra.mxu0 0.0
    %4503 = vmatprep.subr.mxu0 0.0
    %4504 = vmatpush1.msra.mxu0 0.0
    %4505 = vmatprep.subr.mxu0 0.0
    %4506 = vmatpush1.msra.mxu0 0.0
    %4507 = vmatprep.subr.mxu0 0.0
    %4508 = vmatpush1.msra.mxu0 0.0
    %4509 = vmatprep.subr.mxu0 0.0
    %4510 = vmatpush1.msra.mxu0 0.0
    %4511 = vmatprep.subr.mxu0 0.0
    %4512 = vmatpush1.msra.mxu0 0.0
    %4513 = vmatprep.mubr.f32.mxu0 0.0
    %4514 = vmatmul.mubr.f32.gmra.mrb[0].mxu0 0.0
    %v4515 = vpop.f32.mrb[0].mxu0
    %v4516 = vadd.f32 %v4437, %v4515
    %v4517 = vpop.f32.mrb[0].mxu0
    %v4518 = vadd.f32 %v4441, %v4517
    %4519 = vdwg.mxu0
    %4520 = vmatprep.subr.mxu0 0.0
    %4521 = vmatpush1.msra.mxu0 %v4387
    %4522 = vmatprep.subr.mxu0 0.0
    %4523 = vmatpush1.msra.mxu0 %v4390
    %4524 = vmatprep.subr.mxu0 0.0
    %4525 = vmatpush1.msra.mxu0 %v4393
    %4526 = vmatprep.subr.mxu0 0.0
    %4527 = vmatpush1.msra.mxu0 %v4396
    %4528 = vmatprep.subr.mxu0 0.0
    %4529 = vmatpush1.msra.mxu0 %v4399
    %4530 = vmatprep.subr.mxu0 0.0
    %4531 = vmatpush1.msra.mxu0 %v4402
    %4532 = vmatprep.subr.mxu0 0.0
    %4533 = vmatpush1.msra.mxu0 %v4405
    %4534 = vmatprep.subr.mxu0 0.0
    %4535 = vmatpush1.msra.mxu0 %v4408
    %4536 = vmatprep.subr.mxu0 0.0
    %4537 = vmatpush1.msra.mxu0 %v4411
    %4538 = vmatprep.subr.mxu0 0.0
    %4539 = vmatpush1.msra.mxu0 %v4414
    %4540 = vmatprep.subr.mxu0 0.0
    %4541 = vmatpush1.msra.mxu0 %v4417
    %4542 = vmatprep.subr.mxu0 0.0
    %4543 = vmatpush1.msra.mxu0 %v4420
    %4544 = vmatprep.subr.mxu0 0.0
    %4545 = vmatpush1.msra.mxu0 %v4423
    %4546 = vmatprep.subr.mxu0 0.0
    %4547 = vmatpush1.msra.mxu0 %v4426
    %4548 = vmatprep.subr.mxu0 0.0
    %4549 = vmatpush1.msra.mxu0 %v4429
    %4550 = vmatprep.subr.mxu0 0.0
    %4551 = vmatpush1.msra.mxu0 %v4432
    %4552 = vmatprep.subr.mxu0 0.0
    %4553 = vmatpush1.msra.mxu0 0.0
    %4554 = vmatprep.subr.mxu0 0.0
    %4555 = vmatpush1.msra.mxu0 0.0
    %4556 = vmatprep.subr.mxu0 0.0
    %4557 = vmatpush1.msra.mxu0 0.0
    %4558 = vmatprep.subr.mxu0 0.0
    %4559 = vmatpush1.msra.mxu0 0.0
    %4560 = vmatprep.subr.mxu0 0.0
    %4561 = vmatpush1.msra.mxu0 0.0
    %4562 = vmatprep.subr.mxu0 0.0
    %4563 = vmatpush1.msra.mxu0 0.0
    %4564 = vmatprep.subr.mxu0 0.0
    %4565 = vmatpush1.msra.mxu0 0.0
    %4566 = vmatprep.subr.mxu0 0.0
    %4567 = vmatpush1.msra.mxu0 0.0
    %4568 = vmatprep.subr.mxu0 0.0
    %4569 = vmatpush1.msra.mxu0 0.0
    %4570 = vmatprep.subr.mxu0 0.0
    %4571 = vmatpush1.msra.mxu0 0.0
    %4572 = vmatprep.subr.mxu0 0.0
    %4573 = vmatpush1.msra.mxu0 0.0
    %4574 = vmatprep.subr.mxu0 0.0
    %4575 = vmatpush1.msra.mxu0 0.0
    %4576 = vmatprep.subr.mxu0 0.0
    %4577 = vmatpush1.msra.mxu0 0.0
    %4578 = vmatprep.subr.mxu0 0.0
    %4579 = vmatpush1.msra.mxu0 0.0
    %4580 = vmatprep.subr.mxu0 0.0
    %4581 = vmatpush1.msra.mxu0 0.0
    %4582 = vmatprep.subr.mxu0 0.0
    %4583 = vmatpush1.msra.mxu0 0.0
    %4584 = vmatprep.mubr.f32.mxu0 0.0
    %4585 = vmatmul.mubr.f32.gmra.mrb[0].mxu0 0.0
    %v4586 = vpop.f32.mrb[0].mxu0
    %v4587 = vadd.f32 %v4445, %v4586
    %v4588 = vpop.f32.mrb[0].mxu0
    %4589 = vdwg.mxu0
    %v4590 = vadd.f32 %v4382, %v4516
    %v4591 = vxor.u32 %v4590, 2147483648
    %v4592 = vmul.f32 %v4591, 1.442695
    %v4593 = vpow.pop %v4592
    %v4594 = vadd.f32 %v4593, 1.0
    %v4595 = vrcp.pop %v4594
    %v4596 = vmul.f32 1.0, %v4595
    %v4597 = vadd.f32 %v4383, %v4518
    %v4598 = vxor.u32 %v4597, 2147483648
    %v4599 = vmul.f32 %v4598, 1.442695
    %v4600 = vpow.pop %v4599
    %v4601 = vadd.f32 %v4600, 1.0
    %v4602 = vrcp.pop %v4601
    %v4603 = vmul.f32 1.0, %v4602
    %v4604 = vmul.f32 %v4596, %v4587
    %v4605 = vadd.f32 %v4384, %v4604
    %v4606 = vtanh.pop %v4605
    %v4607 = vsub.f32 1.0, %v4603
    %v4608 = vmul.f32 %v4607, %v4606
    %v4609 = vmul.f32 %v4603, 0.0
    %v4610 = vadd.f32 %v4608, %v4609
    %v4611 = vld [vmem:[#allocation2] sm:$0xc]
    %v4612 = vld [vmem:[#allocation2 + $0x8] sm:$0xc]
    %v4613 = vld [vmem:[#allocation2 + $0x10] sm:$0xc]
    %4614 = vmatprep.subr.mxu0 %v4386
    %4615 = vmatpush1.msra.mxu0 %v4385
    %4616 = vmatprep.subr.mxu0 %v4389
    %4617 = vmatpush1.msra.mxu0 %v4388
    %4618 = vmatprep.subr.mxu0 %v4392
    %4619 = vmatpush1.msra.mxu0 %v4391
    %4620 = vmatprep.subr.mxu0 %v4395
    %4621 = vmatpush1.msra.mxu0 %v4394
    %4622 = vmatprep.subr.mxu0 %v4398
    %4623 = vmatpush1.msra.mxu0 %v4397
    %4624 = vmatprep.subr.mxu0 %v4401
    %4625 = vmatpush1.msra.mxu0 %v4400
    %4626 = vmatprep.subr.mxu0 %v4404
    %4627 = vmatpush1.msra.mxu0 %v4403
    %4628 = vmatprep.subr.mxu0 %v4407
    %4629 = vmatpush1.msra.mxu0 %v4406
    %4630 = vmatprep.subr.mxu0 %v4410
    %4631 = vmatpush1.msra.mxu0 %v4409
    %4632 = vmatprep.subr.mxu0 %v4413
    %4633 = vmatpush1.msra.mxu0 %v4412
    %4634 = vmatprep.subr.mxu0 %v4416
    %4635 = vmatpush1.msra.mxu0 %v4415
    %4636 = vmatprep.subr.mxu0 %v4419
    %4637 = vmatpush1.msra.mxu0 %v4418
    %4638 = vmatprep.subr.mxu0 %v4422
    %4639 = vmatpush1.msra.mxu0 %v4421
    %4640 = vmatprep.subr.mxu0 %v4425
    %4641 = vmatpush1.msra.mxu0 %v4424
    %4642 = vmatprep.subr.mxu0 %v4428
    %4643 = vmatpush1.msra.mxu0 %v4427
    %4644 = vmatprep.subr.mxu0 %v4431
    %4645 = vmatpush1.msra.mxu0 %v4430
    %4646 = vmatprep.subr.mxu0 0.0
    %4647 = vmatpush1.msra.mxu0 0.0
    %4648 = vmatprep.subr.mxu0 0.0
    %4649 = vmatpush1.msra.mxu0 0.0
    %4650 = vmatprep.subr.mxu0 0.0
    %4651 = vmatpush1.msra.mxu0 0.0
    %4652 = vmatprep.subr.mxu0 0.0
    %4653 = vmatpush1.msra.mxu0 0.0
    %4654 = vmatprep.subr.mxu0 0.0
    %4655 = vmatpush1.msra.mxu0 0.0
    %4656 = vmatprep.subr.mxu0 0.0
    %4657 = vmatpush1.msra.mxu0 0.0
    %4658 = vmatprep.subr.mxu0 0.0
    %4659 = vmatpush1.msra.mxu0 0.0
    %4660 = vmatprep.subr.mxu0 0.0
    %4661 = vmatpush1.msra.mxu0 0.0
    %4662 = vmatprep.subr.mxu0 0.0
    %4663 = vmatpush1.msra.mxu0 0.0
    %4664 = vmatprep.subr.mxu0 0.0
    %4665 = vmatpush1.msra.mxu0 0.0
    %4666 = vmatprep.subr.mxu0 0.0
    %4667 = vmatpush1.msra.mxu0 0.0
    %4668 = vmatprep.subr.mxu0 0.0
    %4669 = vmatpush1.msra.mxu0 0.0
    %4670 = vmatprep.subr.mxu0 0.0
    %4671 = vmatpush1.msra.mxu0 0.0
    %4672 = vmatprep.subr.mxu0 0.0
    %4673 = vmatpush1.msra.mxu0 0.0
    %4674 = vmatprep.subr.mxu0 0.0
    %4675 = vmatpush1.msra.mxu0 0.0
    %4676 = vmatprep.subr.mxu0 0.0
    %4677 = vmatpush1.msra.mxu0 0.0
    %4678 = vmatprep.mubr.f32.mxu0 0.0
    %4679 = vmatmul.mubr.f32.gmra.mrb[0].mxu0 %v4610
    %v4680 = vpop.f32.mrb[0].mxu0
    %v4681 = vadd.f32 %v4437, %v4680
    %v4682 = vpop.f32.mrb[0].mxu0
    %v4683 = vadd.f32 %v4441, %v4682
    %4684 = vdwg.mxu0
    %4685 = vmatprep.subr.mxu0 0.0
    %4686 = vmatpush1.msra.mxu0 %v4387
    %4687 = vmatprep.subr.mxu0 0.0
    %4688 = vmatpush1.msra.mxu0 %v4390
    %4689 = vmatprep.subr.mxu0 0.0
    %4690 = vmatpush1.msra.mxu0 %v4393
    %4691 = vmatprep.subr.mxu0 0.0
    %4692 = vmatpush1.msra.mxu0 %v4396
    %4693 = vmatprep.subr.mxu0 0.0
    %4694 = vmatpush1.msra.mxu0 %v4399
    %4695 = vmatprep.subr.mxu0 0.0
    %4696 = vmatpush1.msra.mxu0 %v4402
    %4697 = vmatprep.subr.mxu0 0.0
    %4698 = vmatpush1.msra.mxu0 %v4405
    %4699 = vmatprep.subr.mxu0 0.0
    %4700 = vmatpush1.msra.mxu0 %v4408
    %4701 = vmatprep.subr.mxu0 0.0
    %4702 = vmatpush1.msra.mxu0 %v4411
    %4703 = vmatprep.subr.mxu0 0.0
    %4704 = vmatpush1.msra.mxu0 %v4414
    %4705 = vmatprep.subr.mxu0 0.0
    %4706 = vmatpush1.msra.mxu0 %v4417
    %4707 = vmatprep.subr.mxu0 0.0
    %4708 = vmatpush1.msra.mxu0 %v4420
    %4709 = vmatprep.subr.mxu0 0.0
    %4710 = vmatpush1.msra.mxu0 %v4423
    %4711 = vmatprep.subr.mxu0 0.0
    %4712 = vmatpush1.msra.mxu0 %v4426
    %4713 = vmatprep.subr.mxu0 0.0
    %4714 = vmatpush1.msra.mxu0 %v4429
    %4715 = vmatprep.subr.mxu0 0.0
    %4716 = vmatpush1.msra.mxu0 %v4432
    %4717 = vmatprep.subr.mxu0 0.0
    %4718 = vmatpush1.msra.mxu0 0.0
    %4719 = vmatprep.subr.mxu0 0.0
    %4720 = vmatpush1.msra.mxu0 0.0
    %4721 = vmatprep.subr.mxu0 0.0
    %4722 = vmatpush1.msra.mxu0 0.0
    %4723 = vmatprep.subr.mxu0 0.0
    %4724 = vmatpush1.msra.mxu0 0.0
    %4725 = vmatprep.subr.mxu0 0.0
    %4726 = vmatpush1.msra.mxu0 0.0
    %4727 = vmatprep.subr.mxu0 0.0
    %4728 = vmatpush1.msra.mxu0 0.0
    %4729 = vmatprep.subr.mxu0 0.0
    %4730 = vmatpush1.msra.mxu0 0.0
    %4731 = vmatprep.subr.mxu0 0.0
    %4732 = vmatpush1.msra.mxu0 0.0
    %4733 = vmatprep.subr.mxu0 0.0
    %4734 = vmatpush1.msra.mxu0 0.0
    %4735 = vmatprep.subr.mxu0 0.0
    %4736 = vmatpush1.msra.mxu0 0.0
    %4737 = vmatprep.subr.mxu0 0.0
    %4738 = vmatpush1.msra.mxu0 0.0
    %4739 = vmatprep.subr.mxu0 0.0
    %4740 = vmatpush1.msra.mxu0 0.0
    %4741 = vmatprep.subr.mxu0 0.0
    %4742 = vmatpush1.msra.mxu0 0.0
    %4743 = vmatprep.subr.mxu0 0.0
    %4744 = vmatpush1.msra.mxu0 0.0
    %4745 = vmatprep.subr.mxu0 0.0
    %4746 = vmatpush1.msra.mxu0 0.0
    %4747 = vmatprep.subr.mxu0 0.0
    %4748 = vmatpush1.msra.mxu0 0.0
    %4749 = vmatprep.mubr.f32.mxu0 0.0
    %4750 = vmatmul.mubr.f32.gmra.mrb[0].mxu0 %v4610
    %v4751 = vpop.f32.mrb[0].mxu0
    %v4752 = vadd.f32 %v4445, %v4751
    %v4753 = vpop.f32.mrb[0].mxu0
    %4754 = vdwg.mxu0
    %v4756 = vrot.slane %v4681, 6
    %v4758 = vadd.f32 %v4611, %v4756
    %v4759 = vxor.u32 %v4758, 2147483648
    %v4760 = vmul.f32 %v4759, 1.442695
    %v4761 = vpow.pop %v4760
    %v4762 = vadd.f32 %v4761, 1.0
    %v4763 = vrcp.pop %v4762
    %v4764 = vmul.f32 1.0, %v4763
    %v4766 = vrot.slane %v4683, 6
    %v4768 = vadd.f32 %v4612, %v4766
    %v4769 = vxor.u32 %v4768, 2147483648
    %v4770 = vmul.f32 %v4769, 1.442695
    %v4771 = vpow.pop %v4770
    %v4772 = vadd.f32 %v4771, 1.0
    %v4773 = vrcp.pop %v4772
    %v4774 = vmul.f32 1.0, %v4773
    %v4776 = vrot.slane %v4752, 6
    %v4778 = vmul.f32 %v4764, %v4776
    %v4779 = vadd.f32 %v4613, %v4778
    %v4780 = vtanh.pop %v4779
    %v4781 = vsub.f32 1.0, %v4774
    %v4782 = vmul.f32 %v4781, %v4780
    %v4784 = vrot.slane %v4610, 6
    %v4786 = vmul.f32 %v4774, %v4784
    %v4787 = vadd.f32 %v4782, %v4786
    %v4788 = vld [vmem:[#allocation2] sm:$0x30]
    %v4789 = vld [vmem:[#allocation2 + $0x8] sm:$0x30]
    %v4790 = vld [vmem:[#allocation2 + $0x10] sm:$0x30]
    %v4792 = vrot.slane %v4787, 2
    %4794 = vmatprep.subr.mxu0 %v4386
    %4795 = vmatpush1.msra.mxu0 %v4385
    %4796 = vmatprep.subr.mxu0 %v4389
    %4797 = vmatpush1.msra.mxu0 %v4388
    %4798 = vmatprep.subr.mxu0 %v4392
    %4799 = vmatpush1.msra.mxu0 %v4391
    %4800 = vmatprep.subr.mxu0 %v4395
    %4801 = vmatpush1.msra.mxu0 %v4394
    %4802 = vmatprep.subr.mxu0 %v4398
    %4803 = vmatpush1.msra.mxu0 %v4397
    %4804 = vmatprep.subr.mxu0 %v4401
    %4805 = vmatpush1.msra.mxu0 %v4400
    %4806 = vmatprep.subr.mxu0 %v4404
    %4807 = vmatpush1.msra.mxu0 %v4403
    %4808 = vmatprep.subr.mxu0 %v4407
    %4809 = vmatpush1.msra.mxu0 %v4406
    %4810 = vmatprep.subr.mxu0 %v4410
    %4811 = vmatpush1.msra.mxu0 %v4409
    %4812 = vmatprep.subr.mxu0 %v4413
    %4813 = vmatpush1.msra.mxu0 %v4412
    %4814 = vmatprep.subr.mxu0 %v4416
    %4815 = vmatpush1.msra.mxu0 %v4415
    %4816 = vmatprep.subr.mxu0 %v4419
    %4817 = vmatpush1.msra.mxu0 %v4418
    %4818 = vmatprep.subr.mxu0 %v4422
    %4819 = vmatpush1.msra.mxu0 %v4421
    %4820 = vmatprep.subr.mxu0 %v4425
    %4821 = vmatpush1.msra.mxu0 %v4424
    %4822 = vmatprep.subr.mxu0 %v4428
    %4823 = vmatpush1.msra.mxu0 %v4427
    %4824 = vmatprep.subr.mxu0 %v4431
    %4825 = vmatpush1.msra.mxu0 %v4430
    %4826 = vmatprep.subr.mxu0 0.0
    %4827 = vmatpush1.msra.mxu0 0.0
    %4828 = vmatprep.subr.mxu0 0.0
    %4829 = vmatpush1.msra.mxu0 0.0
    %4830 = vmatprep.subr.mxu0 0.0
    %4831 = vmatpush1.msra.mxu0 0.0
    %4832 = vmatprep.subr.mxu0 0.0
    %4833 = vmatpush1.msra.mxu0 0.0
    %4834 = vmatprep.subr.mxu0 0.0
    %4835 = vmatpush1.msra.mxu0 0.0
    %4836 = vmatprep.subr.mxu0 0.0
    %4837 = vmatpush1.msra.mxu0 0.0
    %4838 = vmatprep.subr.mxu0 0.0
    %4839 = vmatpush1.msra.mxu0 0.0
    %4840 = vmatprep.subr.mxu0 0.0
    %4841 = vmatpush1.msra.mxu0 0.0
    %4842 = vmatprep.subr.mxu0 0.0
    %4843 = vmatpush1.msra.mxu0 0.0
    %4844 = vmatprep.subr.mxu0 0.0
    %4845 = vmatpush1.msra.mxu0 0.0
    %4846 = vmatprep.subr.mxu0 0.0
    %4847 = vmatpush1.msra.mxu0 0.0
    %4848 = vmatprep.subr.mxu0 0.0
    %4849 = vmatpush1.msra.mxu0 0.0
    %4850 = vmatprep.subr.mxu0 0.0
    %4851 = vmatpush1.msra.mxu0 0.0
    %4852 = vmatprep.subr.mxu0 0.0
    %4853 = vmatpush1.msra.mxu0 0.0
    %4854 = vmatprep.subr.mxu0 0.0
    %4855 = vmatpush1.msra.mxu0 0.0
    %4856 = vmatprep.subr.mxu0 0.0
    %4857 = vmatpush1.msra.mxu0 0.0
    %4858 = vmatprep.mubr.f32.mxu0 0.0
    %4859 = vmatmul.mubr.f32.gmra.mrb[0].mxu0 %v4792
    %v4860 = vpop.f32.mrb[0].mxu0
    %v4861 = vadd.f32 %v4437, %v4860
    %v4862 = vpop.f32.mrb[0].mxu0
    %v4863 = vadd.f32 %v4441, %v4862
    %4864 = vdwg.mxu0
    %4865 = vmatprep.subr.mxu0 0.0
    %4866 = vmatpush1.msra.mxu0 %v4387
    %4867 = vmatprep.subr.mxu0 0.0
    %4868 = vmatpush1.msra.mxu0 %v4390
    %4869 = vmatprep.subr.mxu0 0.0
    %4870 = vmatpush1.msra.mxu0 %v4393
    %4871 = vmatprep.subr.mxu0 0.0
    %4872 = vmatpush1.msra.mxu0 %v4396
    %4873 = vmatprep.subr.mxu0 0.0
    %4874 = vmatpush1.msra.mxu0 %v4399
    %4875 = vmatprep.subr.mxu0 0.0
    %4876 = vmatpush1.msra.mxu0 %v4402
    %4877 = vmatprep.subr.mxu0 0.0
    %4878 = vmatpush1.msra.mxu0 %v4405
    %4879 = vmatprep.subr.mxu0 0.0
    %4880 = vmatpush1.msra.mxu0 %v4408
    %4881 = vmatprep.subr.mxu0 0.0
    %4882 = vmatpush1.msra.mxu0 %v4411
    %4883 = vmatprep.subr.mxu0 0.0
    %4884 = vmatpush1.msra.mxu0 %v4414
    %4885 = vmatprep.subr.mxu0 0.0
    %4886 = vmatpush1.msra.mxu0 %v4417
    %4887 = vmatprep.subr.mxu0 0.0
    %4888 = vmatpush1.msra.mxu0 %v4420
    %4889 = vmatprep.subr.mxu0 0.0
    %4890 = vmatpush1.msra.mxu0 %v4423
    %4891 = vmatprep.subr.mxu0 0.0
    %4892 = vmatpush1.msra.mxu0 %v4426
    %4893 = vmatprep.subr.mxu0 0.0
    %4894 = vmatpush1.msra.mxu0 %v4429
    %4895 = vmatprep.subr.mxu0 0.0
    %4896 = vmatpush1.msra.mxu0 %v4432
    %4897 = vmatprep.subr.mxu0 0.0
    %4898 = vmatpush1.msra.mxu0 0.0
    %4899 = vmatprep.subr.mxu0 0.0
    %4900 = vmatpush1.msra.mxu0 0.0
    %4901 = vmatprep.subr.mxu0 0.0
    %4902 = vmatpush1.msra.mxu0 0.0
    %4903 = vmatprep.subr.mxu0 0.0
    %4904 = vmatpush1.msra.mxu0 0.0
    %4905 = vmatprep.subr.mxu0 0.0
    %4906 = vmatpush1.msra.mxu0 0.0
    %4907 = vmatprep.subr.mxu0 0.0
    %4908 = vmatpush1.msra.mxu0 0.0
    %4909 = vmatprep.subr.mxu0 0.0
    %4910 = vmatpush1.msra.mxu0 0.0
    %4911 = vmatprep.subr.mxu0 0.0
    %4912 = vmatpush1.msra.mxu0 0.0
    %4913 = vmatprep.subr.mxu0 0.0
    %4914 = vmatpush1.msra.mxu0 0.0
    %4915 = vmatprep.subr.mxu0 0.0
    %4916 = vmatpush1.msra.mxu0 0.0
    %4917 = vmatprep.subr.mxu0 0.0
    %4918 = vmatpush1.msra.mxu0 0.0
    %4919 = vmatprep.subr.mxu0 0.0
    %4920 = vmatpush1.msra.mxu0 0.0
    %4921 = vmatprep.subr.mxu0 0.0
    %4922 = vmatpush1.msra.mxu0 0.0
    %4923 = vmatprep.subr.mxu0 0.0
    %4924 = vmatpush1.msra.mxu0 0.0
    %4925 = vmatprep.subr.mxu0 0.0
    %4926 = vmatpush1.msra.mxu0 0.0
    %4927 = vmatprep.subr.mxu0 0.0
    %4928 = vmatpush1.msra.mxu0 0.0
    %4929 = vmatprep.mubr.f32.mxu0 0.0
    %4930 = vmatmul.mubr.f32.gmra.mrb[0].mxu0 %v4792
    %v4931 = vpop.f32.mrb[0].mxu0
    %v4932 = vadd.f32 %v4445, %v4931
    %v4933 = vpop.f32.mrb[0].mxu0
    %4934 = vdwg.mxu0
    %v4936 = vrot.slane %v4861, 4
    %v4938 = vadd.f32 %v4788, %v4936
    %v4939 = vxor.u32 %v4938, 2147483648
    %v4940 = vmul.f32 %v4939, 1.442695
    %v4941 = vpow.pop %v4940
    %v4942 = vadd.f32 %v4941, 1.0
    %v4943 = vrcp.pop %v4942
    %v4944 = vmul.f32 1.0, %v4943
    %v4946 = vrot.slane %v4863, 4
    %v4948 = vadd.f32 %v4789, %v4946
    %v4949 = vxor.u32 %v4948, 2147483648
    %v4950 = vmul.f32 %v4949, 1.442695
    %v4951 = vpow.pop %v4950
    %v4952 = vadd.f32 %v4951, 1.0
    %v4953 = vrcp.pop %v4952
    %v4954 = vmul.f32 1.0, %v4953
    %v4956 = vrot.slane %v4932, 4
    %v4958 = vmul.f32 %v4944, %v4956
    %v4959 = vadd.f32 %v4790, %v4958
    %v4960 = vtanh.pop %v4959
    %v4961 = vsub.f32 1.0, %v4954
    %v4962 = vmul.f32 %v4961, %v4960
    %v4963 = vrot.slane %v4787, 6
    %v4965 = vmul.f32 %v4954, %v4963
    %v4966 = vadd.f32 %v4962, %v4965
    %v4967 = vld [vmem:[#allocation2] sm:$0xc0]
    %v4968 = vld [vmem:[#allocation2 + $0x8] sm:$0xc0]
    %v4969 = vld [vmem:[#allocation2 + $0x10] sm:$0xc0]
    %v4971 = vrot.slane %v4966, 4
    %4973 = vmatprep.subr.mxu0 %v4386
    %4974 = vmatpush1.msra.mxu0 %v4385
    %4975 = vmatprep.subr.mxu0 %v4389
    %4976 = vmatpush1.msra.mxu0 %v4388
    %4977 = vmatprep.subr.mxu0 %v4392
    %4978 = vmatpush1.msra.mxu0 %v4391
    %4979 = vmatprep.subr.mxu0 %v4395
    %4980 = vmatpush1.msra.mxu0 %v4394
    %4981 = vmatprep.subr.mxu0 %v4398
    %4982 = vmatpush1.msra.mxu0 %v4397
    %4983 = vmatprep.subr.mxu0 %v4401
    %4984 = vmatpush1.msra.mxu0 %v4400
    %4985 = vmatprep.subr.mxu0 %v4404
    %4986 = vmatpush1.msra.mxu0 %v4403
    %4987 = vmatprep.subr.mxu0 %v4407
    %4988 = vmatpush1.msra.mxu0 %v4406
    %4989 = vmatprep.subr.mxu0 %v4410
    %4990 = vmatpush1.msra.mxu0 %v4409
    %4991 = vmatprep.subr.mxu0 %v4413
    %4992 = vmatpush1.msra.mxu0 %v4412
    %4993 = vmatprep.subr.mxu0 %v4416
    %4994 = vmatpush1.msra.mxu0 %v4415
    %4995 = vmatprep.subr.mxu0 %v4419
    %4996 = vmatpush1.msra.mxu0 %v4418
    %4997 = vmatprep.subr.mxu0 %v4422
    %4998 = vmatpush1.msra.mxu0 %v4421
    %4999 = vmatprep.subr.mxu0 %v4425
    %5000 = vmatpush1.msra.mxu0 %v4424
    %5001 = vmatprep.subr.mxu0 %v4428
    %5002 = vmatpush1.msra.mxu0 %v4427
    %5003 = vmatprep.subr.mxu0 %v4431
    %5004 = vmatpush1.msra.mxu0 %v4430
    %5005 = vmatprep.subr.mxu0 0.0
    %5006 = vmatpush1.msra.mxu0 0.0
    %5007 = vmatprep.subr.mxu0 0.0
    %5008 = vmatpush1.msra.mxu0 0.0
    %5009 = vmatprep.subr.mxu0 0.0
    %5010 = vmatpush1.msra.mxu0 0.0
    %5011 = vmatprep.subr.mxu0 0.0
    %5012 = vmatpush1.msra.mxu0 0.0
    %5013 = vmatprep.subr.mxu0 0.0
    %5014 = vmatpush1.msra.mxu0 0.0
    %5015 = vmatprep.subr.mxu0 0.0
    %5016 = vmatpush1.msra.mxu0 0.0
    %5017 = vmatprep.subr.mxu0 0.0
    %5018 = vmatpush1.msra.mxu0 0.0
    %5019 = vmatprep.subr.mxu0 0.0
    %5020 = vmatpush1.msra.mxu0 0.0
    %5021 = vmatprep.subr.mxu0 0.0
    %5022 = vmatpush1.msra.mxu0 0.0
    %5023 = vmatprep.subr.mxu0 0.0
    %5024 = vmatpush1.msra.mxu0 0.0
    %5025 = vmatprep.subr.mxu0 0.0
    %5026 = vmatpush1.msra.mxu0 0.0
    %5027 = vmatprep.subr.mxu0 0.0
    %5028 = vmatpush1.msra.mxu0 0.0
    %5029 = vmatprep.subr.mxu0 0.0
    %5030 = vmatpush1.msra.mxu0 0.0
    %5031 = vmatprep.subr.mxu0 0.0
    %5032 = vmatpush1.msra.mxu0 0.0
    %5033 = vmatprep.subr.mxu0 0.0
    %5034 = vmatpush1.msra.mxu0 0.0
    %5035 = vmatprep.subr.mxu0 0.0
    %5036 = vmatpush1.msra.mxu0 0.0
    %5037 = vmatprep.mubr.f32.mxu0 0.0
    %5038 = vmatmul.mubr.f32.gmra.mrb[0].mxu0 %v4971
    %v5039 = vpop.f32.mrb[0].mxu0
    %v5040 = vadd.f32 %v4437, %v5039
    %v5041 = vpop.f32.mrb[0].mxu0
    %v5042 = vadd.f32 %v4441, %v5041
    %5043 = vdwg.mxu0
    %5044 = vmatprep.subr.mxu0 0.0
    %5045 = vmatpush1.msra.mxu0 %v4387
    %5046 = vmatprep.subr.mxu0 0.0
    %5047 = vmatpush1.msra.mxu0 %v4390
    %5048 = vmatprep.subr.mxu0 0.0
    %5049 = vmatpush1.msra.mxu0 %v4393
    %5050 = vmatprep.subr.mxu0 0.0
    %5051 = vmatpush1.msra.mxu0 %v4396
    %5052 = vmatprep.subr.mxu0 0.0
    %5053 = vmatpush1.msra.mxu0 %v4399
    %5054 = vmatprep.subr.mxu0 0.0
    %5055 = vmatpush1.msra.mxu0 %v4402
    %5056 = vmatprep.subr.mxu0 0.0
    %5057 = vmatpush1.msra.mxu0 %v4405
    %5058 = vmatprep.subr.mxu0 0.0
    %5059 = vmatpush1.msra.mxu0 %v4408
    %5060 = vmatprep.subr.mxu0 0.0
    %5061 = vmatpush1.msra.mxu0 %v4411
    %5062 = vmatprep.subr.mxu0 0.0
    %5063 = vmatpush1.msra.mxu0 %v4414
    %5064 = vmatprep.subr.mxu0 0.0
    %5065 = vmatpush1.msra.mxu0 %v4417
    %5066 = vmatprep.subr.mxu0 0.0
    %5067 = vmatpush1.msra.mxu0 %v4420
    %5068 = vmatprep.subr.mxu0 0.0
    %5069 = vmatpush1.msra.mxu0 %v4423
    %5070 = vmatprep.subr.mxu0 0.0
    %5071 = vmatpush1.msra.mxu0 %v4426
    %5072 = vmatprep.subr.mxu0 0.0
    %5073 = vmatpush1.msra.mxu0 %v4429
    %5074 = vmatprep.subr.mxu0 0.0
    %5075 = vmatpush1.msra.mxu0 %v4432
    %5076 = vmatprep.subr.mxu0 0.0
    %5077 = vmatpush1.msra.mxu0 0.0
    %5078 = vmatprep.subr.mxu0 0.0
    %5079 = vmatpush1.msra.mxu0 0.0
    %5080 = vmatprep.subr.mxu0 0.0
    %5081 = vmatpush1.msra.mxu0 0.0
    %5082 = vmatprep.subr.mxu0 0.0
    %5083 = vmatpush1.msra.mxu0 0.0
    %5084 = vmatprep.subr.mxu0 0.0
    %5085 = vmatpush1.msra.mxu0 0.0
    %5086 = vmatprep.subr.mxu0 0.0
    %5087 = vmatpush1.msra.mxu0 0.0
    %5088 = vmatprep.subr.mxu0 0.0
    %5089 = vmatpush1.msra.mxu0 0.0
    %5090 = vmatprep.subr.mxu0 0.0
    %5091 = vmatpush1.msra.mxu0 0.0
    %5092 = vmatprep.subr.mxu0 0.0
    %5093 = vmatpush1.msra.mxu0 0.0
    %5094 = vmatprep.subr.mxu0 0.0
    %5095 = vmatpush1.msra.mxu0 0.0
    %5096 = vmatprep.subr.mxu0 0.0
    %5097 = vmatpush1.msra.mxu0 0.0
    %5098 = vmatprep.subr.mxu0 0.0
    %5099 = vmatpush1.msra.mxu0 0.0
    %5100 = vmatprep.subr.mxu0 0.0
    %5101 = vmatpush1.msra.mxu0 0.0
    %5102 = vmatprep.subr.mxu0 0.0
    %5103 = vmatpush1.msra.mxu0 0.0
    %5104 = vmatprep.subr.mxu0 0.0
    %5105 = vmatpush1.msra.mxu0 0.0
    %5106 = vmatprep.subr.mxu0 0.0
    %5107 = vmatpush1.msra.mxu0 0.0
    %5108 = vmatprep.mubr.f32.mxu0 0.0
    %5109 = vmatmul.mubr.f32.gmra.mrb[0].mxu0 %v4971
    %v5110 = vpop.f32.mrb[0].mxu0
    %v5111 = vadd.f32 %v4445, %v5110
    %v5112 = vpop.f32.mrb[0].mxu0
    %5113 = vdwg.mxu0
    %v5115 = vrot.slane %v5040, 2
    %v5117 = vadd.f32 %v4967, %v5115
    %v5118 = vxor.u32 %v5117, 2147483648
    %v5119 = vmul.f32 %v5118, 1.442695
    %v5120 = vpow.pop %v5119
    %v5121 = vadd.f32 %v5120, 1.0
    %v5122 = vrcp.pop %v5121
    %v5123 = vmul.f32 1.0, %v5122
    %v5125 = vrot.slane %v5042, 2
    %v5127 = vadd.f32 %v4968, %v5125
    %v5128 = vxor.u32 %v5127, 2147483648
    %v5129 = vmul.f32 %v5128, 1.442695
    %v5130 = vpow.pop %v5129
    %v5131 = vadd.f32 %v5130, 1.0
    %v5132 = vrcp.pop %v5131
    %v5133 = vmul.f32 1.0, %v5132
    %v5135 = vrot.slane %v5111, 2
    %v5137 = vmul.f32 %v5123, %v5135
    %v5138 = vadd.f32 %v4969, %v5137
    %v5139 = vtanh.pop %v5138
    %v5140 = vsub.f32 1.0, %v5133
    %v5141 = vmul.f32 %v5140, %v5139
    %v5142 = vrot.slane %v4966, 6
    %v5144 = vmul.f32 %v5133, %v5142
    %v5145 = vadd.f32 %v5141, %v5144
    %v5146 = vld [vmem:[#allocation2 + $0x18] sm:$0x3]
    %v5147 = vld [vmem:[#allocation2 + $0x20] sm:$0x3]
    %v5148 = vld [vmem:[#allocation2 + $0x28] sm:$0x3]
    %v5150 = vrot.slane %v5145, 6
    %5152 = vmatprep.subr.mxu0 %v4386
    %5153 = vmatpush1.msra.mxu0 %v4385
    %5154 = vmatprep.subr.mxu0 %v4389
    %5155 = vmatpush1.msra.mxu0 %v4388
    %5156 = vmatprep.subr.mxu0 %v4392
    %5157 = vmatpush1.msra.mxu0 %v4391
    %5158 = vmatprep.subr.mxu0 %v4395
    %5159 = vmatpush1.msra.mxu0 %v4394
    %5160 = vmatprep.subr.mxu0 %v4398
    %5161 = vmatpush1.msra.mxu0 %v4397
    %5162 = vmatprep.subr.mxu0 %v4401
    %5163 = vmatpush1.msra.mxu0 %v4400
    %5164 = vmatprep.subr.mxu0 %v4404
    %5165 = vmatpush1.msra.mxu0 %v4403
    %5166 = vmatprep.subr.mxu0 %v4407
    %5167 = vmatpush1.msra.mxu0 %v4406
    %5168 = vmatprep.subr.mxu0 %v4410
    %5169 = vmatpush1.msra.mxu0 %v4409
    %5170 = vmatprep.subr.mxu0 %v4413
    %5171 = vmatpush1.msra.mxu0 %v4412
    %5172 = vmatprep.subr.mxu0 %v4416
    %5173 = vmatpush1.msra.mxu0 %v4415
    %5174 = vmatprep.subr.mxu0 %v4419
    %5175 = vmatpush1.msra.mxu0 %v4418
    %5176 = vmatprep.subr.mxu0 %v4422
    %5177 = vmatpush1.msra.mxu0 %v4421
    %5178 = vmatprep.subr.mxu0 %v4425
    %5179 = vmatpush1.msra.mxu0 %v4424
    %5180 = vmatprep.subr.mxu0 %v4428
    %5181 = vmatpush1.msra.mxu0 %v4427
    %5182 = vmatprep.subr.mxu0 %v4431
    %5183 = vmatpush1.msra.mxu0 %v4430
    %5184 = vmatprep.subr.mxu0 0.0
    %5185 = vmatpush1.msra.mxu0 0.0
    %5186 = vmatprep.subr.mxu0 0.0
    %5187 = vmatpush1.msra.mxu0 0.0
    %5188 = vmatprep.subr.mxu0 0.0
    %5189 = vmatpush1.msra.mxu0 0.0
    %5190 = vmatprep.subr.mxu0 0.0
    %5191 = vmatpush1.msra.mxu0 0.0
    %5192 = vmatprep.subr.mxu0 0.0
    %5193 = vmatpush1.msra.mxu0 0.0
    %5194 = vmatprep.subr.mxu0 0.0
    %5195 = vmatpush1.msra.mxu0 0.0
    %5196 = vmatprep.subr.mxu0 0.0
    %5197 = vmatpush1.msra.mxu0 0.0
    %5198 = vmatprep.subr.mxu0 0.0
    %5199 = vmatpush1.msra.mxu0 0.0
    %5200 = vmatprep.subr.mxu0 0.0
    %5201 = vmatpush1.msra.mxu0 0.0
    %5202 = vmatprep.subr.mxu0 0.0
    %5203 = vmatpush1.msra.mxu0 0.0
    %5204 = vmatprep.subr.mxu0 0.0
    %5205 = vmatpush1.msra.mxu0 0.0
    %5206 = vmatprep.subr.mxu0 0.0
    %5207 = vmatpush1.msra.mxu0 0.0
    %5208 = vmatprep.subr.mxu0 0.0
    %5209 = vmatpush1.msra.mxu0 0.0
    %5210 = vmatprep.subr.mxu0 0.0
    %5211 = vmatpush1.msra.mxu0 0.0
    %5212 = vmatprep.subr.mxu0 0.0
    %5213 = vmatpush1.msra.mxu0 0.0
    %5214 = vmatprep.subr.mxu0 0.0
    %5215 = vmatpush1.msra.mxu0 0.0
    %5216 = vmatprep.mubr.f32.mxu0 0.0
    %5217 = vmatmul.mubr.f32.gmra.mrb[0].mxu0 %v5150
    %v5218 = vpop.f32.mrb[0].mxu0
    %v5219 = vadd.f32 %v4437, %v5218
    %v5220 = vpop.f32.mrb[0].mxu0
    %v5221 = vadd.f32 %v4441, %v5220
    %5222 = vdwg.mxu0
    %5223 = vmatprep.subr.mxu0 0.0
    %5224 = vmatpush1.msra.mxu0 %v4387
    %5225 = vmatprep.subr.mxu0 0.0
    %5226 = vmatpush1.msra.mxu0 %v4390
    %5227 = vmatprep.subr.mxu0 0.0
    %5228 = vmatpush1.msra.mxu0 %v4393
    %5229 = vmatprep.subr.mxu0 0.0
    %5230 = vmatpush1.msra.mxu0 %v4396
    %5231 = vmatprep.subr.mxu0 0.0
    %5232 = vmatpush1.msra.mxu0 %v4399
    %5233 = vmatprep.subr.mxu0 0.0
    %5234 = vmatpush1.msra.mxu0 %v4402
    %5235 = vmatprep.subr.mxu0 0.0
    %5236 = vmatpush1.msra.mxu0 %v4405
    %5237 = vmatprep.subr.mxu0 0.0
    %5238 = vmatpush1.msra.mxu0 %v4408
    %5239 = vmatprep.subr.mxu0 0.0
    %5240 = vmatpush1.msra.mxu0 %v4411
    %5241 = vmatprep.subr.mxu0 0.0
    %5242 = vmatpush1.msra.mxu0 %v4414
    %5243 = vmatprep.subr.mxu0 0.0
    %5244 = vmatpush1.msra.mxu0 %v4417
    %5245 = vmatprep.subr.mxu0 0.0
    %5246 = vmatpush1.msra.mxu0 %v4420
    %5247 = vmatprep.subr.mxu0 0.0
    %5248 = vmatpush1.msra.mxu0 %v4423
    %5249 = vmatprep.subr.mxu0 0.0
    %5250 = vmatpush1.msra.mxu0 %v4426
    %5251 = vmatprep.subr.mxu0 0.0
    %5252 = vmatpush1.msra.mxu0 %v4429
    %5253 = vmatprep.subr.mxu0 0.0
    %5254 = vmatpush1.msra.mxu0 %v4432
    %5255 = vmatprep.subr.mxu0 0.0
    %5256 = vmatpush1.msra.mxu0 0.0
    %5257 = vmatprep.subr.mxu0 0.0
    %5258 = vmatpush1.msra.mxu0 0.0
    %5259 = vmatprep.subr.mxu0 0.0
    %5260 = vmatpush1.msra.mxu0 0.0
    %5261 = vmatprep.subr.mxu0 0.0
    %5262 = vmatpush1.msra.mxu0 0.0
    %5263 = vmatprep.subr.mxu0 0.0
    %5264 = vmatpush1.msra.mxu0 0.0
    %5265 = vmatprep.subr.mxu0 0.0
    %5266 = vmatpush1.msra.mxu0 0.0
    %5267 = vmatprep.subr.mxu0 0.0
    %5268 = vmatpush1.msra.mxu0 0.0
    %5269 = vmatprep.subr.mxu0 0.0
    %5270 = vmatpush1.msra.mxu0 0.0
    %5271 = vmatprep.subr.mxu0 0.0
    %5272 = vmatpush1.msra.mxu0 0.0
    %5273 = vmatprep.subr.mxu0 0.0
    %5274 = vmatpush1.msra.mxu0 0.0
    %5275 = vmatprep.subr.mxu0 0.0
    %5276 = vmatpush1.msra.mxu0 0.0
    %5277 = vmatprep.subr.mxu0 0.0
    %5278 = vmatpush1.msra.mxu0 0.0
    %5279 = vmatprep.subr.mxu0 0.0
    %5280 = vmatpush1.msra.mxu0 0.0
    %5281 = vmatprep.subr.mxu0 0.0
    %5282 = vmatpush1.msra.mxu0 0.0
    %5283 = vmatprep.subr.mxu0 0.0
    %5284 = vmatpush1.msra.mxu0 0.0
    %5285 = vmatprep.subr.mxu0 0.0
    %5286 = vmatpush1.msra.mxu0 0.0
    %5287 = vmatprep.mubr.f32.mxu0 0.0
    %5288 = vmatmul.mubr.f32.gmra.mrb[0].mxu0 %v5150
    %v5289 = vpop.f32.mrb[0].mxu0
    %v5290 = vadd.f32 %v4445, %v5289
    %v5291 = vpop.f32.mrb[0].mxu0
    %5292 = vdwg.mxu0
    %v5293 = vadd.f32 %v5146, %v5219
    %v5294 = vxor.u32 %v5293, 2147483648
    %v5295 = vmul.f32 %v5294, 1.442695
    %v5296 = vpow.pop %v5295
    %v5297 = vadd.f32 %v5296, 1.0
    %v5298 = vrcp.pop %v5297
    %v5299 = vmul.f32 1.0, %v5298
    %v5300 = vadd.f32 %v5147, %v5221
    %v5301 = vxor.u32 %v5300, 2147483648
    %v5302 = vmul.f32 %v5301, 1.442695
    %v5303 = vpow.pop %v5302
    %v5304 = vadd.f32 %v5303, 1.0
    %v5305 = vrcp.pop %v5304
    %v5306 = vmul.f32 1.0, %v5305
    %v5307 = vmul.f32 %v5299, %v5290
    %v5308 = vadd.f32 %v5148, %v5307
    %v5309 = vtanh.pop %v5308
    %v5310 = vsub.f32 1.0, %v5306
    %v5311 = vmul.f32 %v5310, %v5309
    %v5312 = vmul.f32 %v5306, %v5150
    %v5313 = vadd.f32 %v5311, %v5312
    %v5314 = vld [vmem:[#allocation2 + $0x18] sm:$0xc]
    %v5315 = vld [vmem:[#allocation2 + $0x20] sm:$0xc]
    %v5316 = vld [vmem:[#allocation2 + $0x28] sm:$0xc]
    %5317 = vmatprep.subr.mxu0 %v4386
    %5318 = vmatpush1.msra.mxu0 %v4385
    %5319 = vmatprep.subr.mxu0 %v4389
    %5320 = vmatpush1.msra.mxu0 %v4388
    %5321 = vmatprep.subr.mxu0 %v4392
    %5322 = vmatpush1.msra.mxu0 %v4391
    %5323 = vmatprep.subr.mxu0 %v4395
    %5324 = vmatpush1.msra.mxu0 %v4394
    %5325 = vmatprep.subr.mxu0 %v4398
    %5326 = vmatpush1.msra.mxu0 %v4397
    %5327 = vmatprep.subr.mxu0 %v4401
    %5328 = vmatpush1.msra.mxu0 %v4400
    %5329 = vmatprep.subr.mxu0 %v4404
    %5330 = vmatpush1.msra.mxu0 %v4403
    %5331 = vmatprep.subr.mxu0 %v4407
    %5332 = vmatpush1.msra.mxu0 %v4406
    %5333 = vmatprep.subr.mxu0 %v4410
    %5334 = vmatpush1.msra.mxu0 %v4409
    %5335 = vmatprep.subr.mxu0 %v4413
    %5336 = vmatpush1.msra.mxu0 %v4412
    %5337 = vmatprep.subr.mxu0 %v4416
    %5338 = vmatpush1.msra.mxu0 %v4415
    %5339 = vmatprep.subr.mxu0 %v4419
    %5340 = vmatpush1.msra.mxu0 %v4418
    %5341 = vmatprep.subr.mxu0 %v4422
    %5342 = vmatpush1.msra.mxu0 %v4421
    %5343 = vmatprep.subr.mxu0 %v4425
    %5344 = vmatpush1.msra.mxu0 %v4424
    %5345 = vmatprep.subr.mxu0 %v4428
    %5346 = vmatpush1.msra.mxu0 %v4427
    %5347 = vmatprep.subr.mxu0 %v4431
    %5348 = vmatpush1.msra.mxu0 %v4430
    %5349 = vmatprep.subr.mxu0 0.0
    %5350 = vmatpush1.msra.mxu0 0.0
    %5351 = vmatprep.subr.mxu0 0.0
    %5352 = vmatpush1.msra.mxu0 0.0
    %5353 = vmatprep.subr.mxu0 0.0
    %5354 = vmatpush1.msra.mxu0 0.0
    %5355 = vmatprep.subr.mxu0 0.0
    %5356 = vmatpush1.msra.mxu0 0.0
    %5357 = vmatprep.subr.mxu0 0.0
    %5358 = vmatpush1.msra.mxu0 0.0
    %5359 = vmatprep.subr.mxu0 0.0
    %5360 = vmatpush1.msra.mxu0 0.0
    %5361 = vmatprep.subr.mxu0 0.0
    %5362 = vmatpush1.msra.mxu0 0.0
    %5363 = vmatprep.subr.mxu0 0.0
    %5364 = vmatpush1.msra.mxu0 0.0
    %5365 = vmatprep.subr.mxu0 0.0
    %5366 = vmatpush1.msra.mxu0 0.0
    %5367 = vmatprep.subr.mxu0 0.0
    %5368 = vmatpush1.msra.mxu0 0.0
    %5369 = vmatprep.subr.mxu0 0.0
    %5370 = vmatpush1.msra.mxu0 0.0
    %5371 = vmatprep.subr.mxu0 0.0
    %5372 = vmatpush1.msra.mxu0 0.0
    %5373 = vmatprep.subr.mxu0 0.0
    %5374 = vmatpush1.msra.mxu0 0.0
    %5375 = vmatprep.subr.mxu0 0.0
    %5376 = vmatpush1.msra.mxu0 0.0
    %5377 = vmatprep.subr.mxu0 0.0
    %5378 = vmatpush1.msra.mxu0 0.0
    %5379 = vmatprep.subr.mxu0 0.0
    %5380 = vmatpush1.msra.mxu0 0.0
    %5381 = vmatprep.mubr.f32.mxu0 0.0
    %5382 = vmatmul.mubr.f32.gmra.mrb[0].mxu0 %v5313
    %v5383 = vpop.f32.mrb[0].mxu0
    %v5384 = vadd.f32 %v4437, %v5383
    %v5385 = vpop.f32.mrb[0].mxu0
    %v5386 = vadd.f32 %v4441, %v5385
    %5387 = vdwg.mxu0
    %5388 = vmatprep.subr.mxu0 0.0
    %5389 = vmatpush1.msra.mxu0 %v4387
    %5390 = vmatprep.subr.mxu0 0.0
    %5391 = vmatpush1.msra.mxu0 %v4390
    %5392 = vmatprep.subr.mxu0 0.0
    %5393 = vmatpush1.msra.mxu0 %v4393
    %5394 = vmatprep.subr.mxu0 0.0
    %5395 = vmatpush1.msra.mxu0 %v4396
    %5396 = vmatprep.subr.mxu0 0.0
    %5397 = vmatpush1.msra.mxu0 %v4399
    %5398 = vmatprep.subr.mxu0 0.0
    %5399 = vmatpush1.msra.mxu0 %v4402
    %5400 = vmatprep.subr.mxu0 0.0
    %5401 = vmatpush1.msra.mxu0 %v4405
    %5402 = vmatprep.subr.mxu0 0.0
    %5403 = vmatpush1.msra.mxu0 %v4408
    %5404 = vmatprep.subr.mxu0 0.0
    %5405 = vmatpush1.msra.mxu0 %v4411
    %5406 = vmatprep.subr.mxu0 0.0
    %5407 = vmatpush1.msra.mxu0 %v4414
    %5408 = vmatprep.subr.mxu0 0.0
    %5409 = vmatpush1.msra.mxu0 %v4417
    %5410 = vmatprep.subr.mxu0 0.0
    %5411 = vmatpush1.msra.mxu0 %v4420
    %5412 = vmatprep.subr.mxu0 0.0
    %5413 = vmatpush1.msra.mxu0 %v4423
    %5414 = vmatprep.subr.mxu0 0.0
    %5415 = vmatpush1.msra.mxu0 %v4426
    %5416 = vmatprep.subr.mxu0 0.0
    %5417 = vmatpush1.msra.mxu0 %v4429
    %5418 = vmatprep.subr.mxu0 0.0
    %5419 = vmatpush1.msra.mxu0 %v4432
    %5420 = vmatprep.subr.mxu0 0.0
    %5421 = vmatpush1.msra.mxu0 0.0
    %5422 = vmatprep.subr.mxu0 0.0
    %5423 = vmatpush1.msra.mxu0 0.0
    %5424 = vmatprep.subr.mxu0 0.0
    %5425 = vmatpush1.msra.mxu0 0.0
    %5426 = vmatprep.subr.mxu0 0.0
    %5427 = vmatpush1.msra.mxu0 0.0
    %5428 = vmatprep.subr.mxu0 0.0
    %5429 = vmatpush1.msra.mxu0 0.0
    %5430 = vmatprep.subr.mxu0 0.0
    %5431 = vmatpush1.msra.mxu0 0.0
    %5432 = vmatprep.subr.mxu0 0.0
    %5433 = vmatpush1.msra.mxu0 0.0
    %5434 = vmatprep.subr.mxu0 0.0
    %5435 = vmatpush1.msra.mxu0 0.0
    %5436 = vmatprep.subr.mxu0 0.0
    %5437 = vmatpush1.msra.mxu0 0.0
    %5438 = vmatprep.subr.mxu0 0.0
    %5439 = vmatpush1.msra.mxu0 0.0
    %5440 = vmatprep.subr.mxu0 0.0
    %5441 = vmatpush1.msra.mxu0 0.0
    %5442 = vmatprep.subr.mxu0 0.0
    %5443 = vmatpush1.msra.mxu0 0.0
    %5444 = vmatprep.subr.mxu0 0.0
    %5445 = vmatpush1.msra.mxu0 0.0
    %5446 = vmatprep.subr.mxu0 0.0
    %5447 = vmatpush1.msra.mxu0 0.0
    %5448 = vmatprep.subr.mxu0 0.0
    %5449 = vmatpush1.msra.mxu0 0.0
    %5450 = vmatprep.subr.mxu0 0.0
    %5451 = vmatpush1.msra.mxu0 0.0
    %5452 = vmatprep.mubr.f32.mxu0 0.0
    %5453 = vmatmul.mubr.f32.gmra.mrb[0].mxu0 %v5313
    %v5454 = vpop.f32.mrb[0].mxu0
    %v5455 = vadd.f32 %v4445, %v5454
    %v5456 = vpop.f32.mrb[0].mxu0
    %5457 = vdwg.mxu0
    %v5459 = vrot.slane %v5384, 6
    %v5461 = vadd.f32 %v5314, %v5459
    %v5462 = vxor.u32 %v5461, 2147483648
    %v5463 = vmul.f32 %v5462, 1.442695
    %v5464 = vpow.pop %v5463
    %v5465 = vadd.f32 %v5464, 1.0
    %v5466 = vrcp.pop %v5465
    %v5467 = vmul.f32 1.0, %v5466
    %v5469 = vrot.slane %v5386, 6
    %v5471 = vadd.f32 %v5315, %v5469
    %v5472 = vxor.u32 %v5471, 2147483648
    %v5473 = vmul.f32 %v5472, 1.442695
    %v5474 = vpow.pop %v5473
    %v5475 = vadd.f32 %v5474, 1.0
    %v5476 = vrcp.pop %v5475
    %v5477 = vmul.f32 1.0, %v5476
    %v5479 = vrot.slane %v5455, 6
    %v5481 = vmul.f32 %v5467, %v5479
    %v5482 = vadd.f32 %v5316, %v5481
    %v5483 = vtanh.pop %v5482
    %v5484 = vsub.f32 1.0, %v5477
    %v5485 = vmul.f32 %v5484, %v5483
    %v5487 = vrot.slane %v5313, 6
    %v5489 = vmul.f32 %v5477, %v5487
    %v5490 = vadd.f32 %v5485, %v5489
    %v5491 = vld [vmem:[#allocation2 + $0x18] sm:$0x30]
    %v5492 = vld [vmem:[#allocation2 + $0x20] sm:$0x30]
    %v5493 = vld [vmem:[#allocation2 + $0x28] sm:$0x30]
    %v5495 = vrot.slane %v5490, 2
    %5497 = vmatprep.subr.mxu0 %v4386
    %5498 = vmatpush1.msra.mxu0 %v4385
    %5499 = vmatprep.subr.mxu0 %v4389
    %5500 = vmatpush1.msra.mxu0 %v4388
    %5501 = vmatprep.subr.mxu0 %v4392
    %5502 = vmatpush1.msra.mxu0 %v4391
    %5503 = vmatprep.subr.mxu0 %v4395
    %5504 = vmatpush1.msra.mxu0 %v4394
    %5505 = vmatprep.subr.mxu0 %v4398
    %5506 = vmatpush1.msra.mxu0 %v4397
    %5507 = vmatprep.subr.mxu0 %v4401
    %5508 = vmatpush1.msra.mxu0 %v4400
    %5509 = vmatprep.subr.mxu0 %v4404
    %5510 = vmatpush1.msra.mxu0 %v4403
    %5511 = vmatprep.subr.mxu0 %v4407
    %5512 = vmatpush1.msra.mxu0 %v4406
    %5513 = vmatprep.subr.mxu0 %v4410
    %5514 = vmatpush1.msra.mxu0 %v4409
    %5515 = vmatprep.subr.mxu0 %v4413
    %5516 = vmatpush1.msra.mxu0 %v4412
    %5517 = vmatprep.subr.mxu0 %v4416
    %5518 = vmatpush1.msra.mxu0 %v4415
    %5519 = vmatprep.subr.mxu0 %v4419
    %5520 = vmatpush1.msra.mxu0 %v4418
    %5521 = vmatprep.subr.mxu0 %v4422
    %5522 = vmatpush1.msra.mxu0 %v4421
    %5523 = vmatprep.subr.mxu0 %v4425
    %5524 = vmatpush1.msra.mxu0 %v4424
    %5525 = vmatprep.subr.mxu0 %v4428
    %5526 = vmatpush1.msra.mxu0 %v4427
    %5527 = vmatprep.subr.mxu0 %v4431
    %5528 = vmatpush1.msra.mxu0 %v4430
    %5529 = vmatprep.subr.mxu0 0.0
    %5530 = vmatpush1.msra.mxu0 0.0
    %5531 = vmatprep.subr.mxu0 0.0
    %5532 = vmatpush1.msra.mxu0 0.0
    %5533 = vmatprep.subr.mxu0 0.0
    %5534 = vmatpush1.msra.mxu0 0.0
    %5535 = vmatprep.subr.mxu0 0.0
    %5536 = vmatpush1.msra.mxu0 0.0
    %5537 = vmatprep.subr.mxu0 0.0
    %5538 = vmatpush1.msra.mxu0 0.0
    %5539 = vmatprep.subr.mxu0 0.0
    %5540 = vmatpush1.msra.mxu0 0.0
    %5541 = vmatprep.subr.mxu0 0.0
    %5542 = vmatpush1.msra.mxu0 0.0
    %5543 = vmatprep.subr.mxu0 0.0
    %5544 = vmatpush1.msra.mxu0 0.0
    %5545 = vmatprep.subr.mxu0 0.0
    %5546 = vmatpush1.msra.mxu0 0.0
    %5547 = vmatprep.subr.mxu0 0.0
    %5548 = vmatpush1.msra.mxu0 0.0
    %5549 = vmatprep.subr.mxu0 0.0
    %5550 = vmatpush1.msra.mxu0 0.0
    %5551 = vmatprep.subr.mxu0 0.0
    %5552 = vmatpush1.msra.mxu0 0.0
    %5553 = vmatprep.subr.mxu0 0.0
    %5554 = vmatpush1.msra.mxu0 0.0
    %5555 = vmatprep.subr.mxu0 0.0
    %5556 = vmatpush1.msra.mxu0 0.0
    %5557 = vmatprep.subr.mxu0 0.0
    %5558 = vmatpush1.msra.mxu0 0.0
    %5559 = vmatprep.subr.mxu0 0.0
    %5560 = vmatpush1.msra.mxu0 0.0
    %5561 = vmatprep.mubr.f32.mxu0 0.0
    %5562 = vmatmul.mubr.f32.gmra.mrb[0].mxu0 %v5495
    %v5563 = vpop.f32.mrb[0].mxu0
    %v5564 = vadd.f32 %v4437, %v5563
    %v5565 = vpop.f32.mrb[0].mxu0
    %v5566 = vadd.f32 %v4441, %v5565
    %5567 = vdwg.mxu0
    %5568 = vmatprep.subr.mxu0 0.0
    %5569 = vmatpush1.msra.mxu0 %v4387
    %5570 = vmatprep.subr.mxu0 0.0
    %5571 = vmatpush1.msra.mxu0 %v4390
    %5572 = vmatprep.subr.mxu0 0.0
    %5573 = vmatpush1.msra.mxu0 %v4393
    %5574 = vmatprep.subr.mxu0 0.0
    %5575 = vmatpush1.msra.mxu0 %v4396
    %5576 = vmatprep.subr.mxu0 0.0
    %5577 = vmatpush1.msra.mxu0 %v4399
    %5578 = vmatprep.subr.mxu0 0.0
    %5579 = vmatpush1.msra.mxu0 %v4402
    %5580 = vmatprep.subr.mxu0 0.0
    %5581 = vmatpush1.msra.mxu0 %v4405
    %5582 = vmatprep.subr.mxu0 0.0
    %5583 = vmatpush1.msra.mxu0 %v4408
    %5584 = vmatprep.subr.mxu0 0.0
    %5585 = vmatpush1.msra.mxu0 %v4411
    %5586 = vmatprep.subr.mxu0 0.0
    %5587 = vmatpush1.msra.mxu0 %v4414
    %5588 = vmatprep.subr.mxu0 0.0
    %5589 = vmatpush1.msra.mxu0 %v4417
    %5590 = vmatprep.subr.mxu0 0.0
    %5591 = vmatpush1.msra.mxu0 %v4420
    %5592 = vmatprep.subr.mxu0 0.0
    %5593 = vmatpush1.msra.mxu0 %v4423
    %5594 = vmatprep.subr.mxu0 0.0
    %5595 = vmatpush1.msra.mxu0 %v4426
    %5596 = vmatprep.subr.mxu0 0.0
    %5597 = vmatpush1.msra.mxu0 %v4429
    %5598 = vmatprep.subr.mxu0 0.0
    %5599 = vmatpush1.msra.mxu0 %v4432
    %5600 = vmatprep.subr.mxu0 0.0
    %5601 = vmatpush1.msra.mxu0 0.0
    %5602 = vmatprep.subr.mxu0 0.0
    %5603 = vmatpush1.msra.mxu0 0.0
    %5604 = vmatprep.subr.mxu0 0.0
    %5605 = vmatpush1.msra.mxu0 0.0
    %5606 = vmatprep.subr.mxu0 0.0
    %5607 = vmatpush1.msra.mxu0 0.0
    %5608 = vmatprep.subr.mxu0 0.0
    %5609 = vmatpush1.msra.mxu0 0.0
    %5610 = vmatprep.subr.mxu0 0.0
    %5611 = vmatpush1.msra.mxu0 0.0
    %5612 = vmatprep.subr.mxu0 0.0
    %5613 = vmatpush1.msra.mxu0 0.0
    %5614 = vmatprep.subr.mxu0 0.0
    %5615 = vmatpush1.msra.mxu0 0.0
    %5616 = vmatprep.subr.mxu0 0.0
    %5617 = vmatpush1.msra.mxu0 0.0
    %5618 = vmatprep.subr.mxu0 0.0
    %5619 = vmatpush1.msra.mxu0 0.0
    %5620 = vmatprep.subr.mxu0 0.0
    %5621 = vmatpush1.msra.mxu0 0.0
    %5622 = vmatprep.subr.mxu0 0.0
    %5623 = vmatpush1.msra.mxu0 0.0
    %5624 = vmatprep.subr.mxu0 0.0
    %5625 = vmatpush1.msra.mxu0 0.0
    %5626 = vmatprep.subr.mxu0 0.0
    %5627 = vmatpush1.msra.mxu0 0.0
    %5628 = vmatprep.subr.mxu0 0.0
    %5629 = vmatpush1.msra.mxu0 0.0
    %5630 = vmatprep.subr.mxu0 0.0
    %5631 = vmatpush1.msra.mxu0 0.0
    %5632 = vmatprep.mubr.f32.mxu0 0.0
    %5633 = vmatmul.mubr.f32.gmra.mrb[0].mxu0 %v5495
    %v5634 = vpop.f32.mrb[0].mxu0
    %v5635 = vadd.f32 %v4445, %v5634
    %v5636 = vpop.f32.mrb[0].mxu0
    %5637 = vdwg.mxu0
    %v5639 = vrot.slane %v5564, 4
    %v5641 = vadd.f32 %v5491, %v5639
    %v5642 = vxor.u32 %v5641, 2147483648
    %v5643 = vmul.f32 %v5642, 1.442695
    %v5644 = vpow.pop %v5643
    %v5645 = vadd.f32 %v5644, 1.0
    %v5646 = vrcp.pop %v5645
    %v5647 = vmul.f32 1.0, %v5646
    %v5649 = vrot.slane %v5566, 4
    %v5651 = vadd.f32 %v5492, %v5649
    %v5652 = vxor.u32 %v5651, 2147483648
    %v5653 = vmul.f32 %v5652, 1.442695
    %v5654 = vpow.pop %v5653
    %v5655 = vadd.f32 %v5654, 1.0
    %v5656 = vrcp.pop %v5655
    %v5657 = vmul.f32 1.0, %v5656
    %v5659 = vrot.slane %v5635, 4
    %v5661 = vmul.f32 %v5647, %v5659
    %v5662 = vadd.f32 %v5493, %v5661
    %v5663 = vtanh.pop %v5662
    %v5664 = vsub.f32 1.0, %v5657
    %v5665 = vmul.f32 %v5664, %v5663
    %v5666 = vrot.slane %v5490, 6
    %v5668 = vmul.f32 %v5657, %v5666
    %v5669 = vadd.f32 %v5665, %v5668
    %v5670 = vld [vmem:[#allocation2 + $0x18] sm:$0xc0]
    %v5671 = vld [vmem:[#allocation2 + $0x20] sm:$0xc0]
    %v5672 = vld [vmem:[#allocation2 + $0x28] sm:$0xc0]
    %v5674 = vrot.slane %v5669, 4
    %5676 = vmatprep.subr.mxu0 %v4386
    %5677 = vmatpush1.msra.mxu0 %v4385
    %5678 = vmatprep.subr.mxu0 %v4389
    %5679 = vmatpush1.msra.mxu0 %v4388
    %5680 = vmatprep.subr.mxu0 %v4392
    %5681 = vmatpush1.msra.mxu0 %v4391
    %5682 = vmatprep.subr.mxu0 %v4395
    %5683 = vmatpush1.msra.mxu0 %v4394
    %5684 = vmatprep.subr.mxu0 %v4398
    %5685 = vmatpush1.msra.mxu0 %v4397
    %5686 = vmatprep.subr.mxu0 %v4401
    %5687 = vmatpush1.msra.mxu0 %v4400
    %5688 = vmatprep.subr.mxu0 %v4404
    %5689 = vmatpush1.msra.mxu0 %v4403
    %5690 = vmatprep.subr.mxu0 %v4407
    %5691 = vmatpush1.msra.mxu0 %v4406
    %5692 = vmatprep.subr.mxu0 %v4410
    %5693 = vmatpush1.msra.mxu0 %v4409
    %5694 = vmatprep.subr.mxu0 %v4413
    %5695 = vmatpush1.msra.mxu0 %v4412
    %5696 = vmatprep.subr.mxu0 %v4416
    %5697 = vmatpush1.msra.mxu0 %v4415
    %5698 = vmatprep.subr.mxu0 %v4419
    %5699 = vmatpush1.msra.mxu0 %v4418
    %5700 = vmatprep.subr.mxu0 %v4422
    %5701 = vmatpush1.msra.mxu0 %v4421
    %5702 = vmatprep.subr.mxu0 %v4425
    %5703 = vmatpush1.msra.mxu0 %v4424
    %5704 = vmatprep.subr.mxu0 %v4428
    %5705 = vmatpush1.msra.mxu0 %v4427
    %5706 = vmatprep.subr.mxu0 %v4431
    %5707 = vmatpush1.msra.mxu0 %v4430
    %5708 = vmatprep.subr.mxu0 0.0
    %5709 = vmatpush1.msra.mxu0 0.0
    %5710 = vmatprep.subr.mxu0 0.0
    %5711 = vmatpush1.msra.mxu0 0.0
    %5712 = vmatprep.subr.mxu0 0.0
    %5713 = vmatpush1.msra.mxu0 0.0
    %5714 = vmatprep.subr.mxu0 0.0
    %5715 = vmatpush1.msra.mxu0 0.0
    %5716 = vmatprep.subr.mxu0 0.0
    %5717 = vmatpush1.msra.mxu0 0.0
    %5718 = vmatprep.subr.mxu0 0.0
    %5719 = vmatpush1.msra.mxu0 0.0
    %5720 = vmatprep.subr.mxu0 0.0
    %5721 = vmatpush1.msra.mxu0 0.0
    %5722 = vmatprep.subr.mxu0 0.0
    %5723 = vmatpush1.msra.mxu0 0.0
    %5724 = vmatprep.subr.mxu0 0.0
    %5725 = vmatpush1.msra.mxu0 0.0
    %5726 = vmatprep.subr.mxu0 0.0
    %5727 = vmatpush1.msra.mxu0 0.0
    %5728 = vmatprep.subr.mxu0 0.0
    %5729 = vmatpush1.msra.mxu0 0.0
    %5730 = vmatprep.subr.mxu0 0.0
    %5731 = vmatpush1.msra.mxu0 0.0
    %5732 = vmatprep.subr.mxu0 0.0
    %5733 = vmatpush1.msra.mxu0 0.0
    %5734 = vmatprep.subr.mxu0 0.0
    %5735 = vmatpush1.msra.mxu0 0.0
    %5736 = vmatprep.subr.mxu0 0.0
    %5737 = vmatpush1.msra.mxu0 0.0
    %5738 = vmatprep.subr.mxu0 0.0
    %5739 = vmatpush1.msra.mxu0 0.0
    %5740 = vmatprep.mubr.f32.mxu0 0.0
    %5741 = vmatmul.mubr.f32.gmra.mrb[0].mxu0 %v5674
    %v5742 = vpop.f32.mrb[0].mxu0
    %v5743 = vadd.f32 %v4437, %v5742
    %v5744 = vpop.f32.mrb[0].mxu0
    %v5745 = vadd.f32 %v4441, %v5744
    %5746 = vdwg.mxu0
    %5747 = vmatprep.subr.mxu0 0.0
    %5748 = vmatpush1.msra.mxu0 %v4387
    %5749 = vmatprep.subr.mxu0 0.0
    %5750 = vmatpush1.msra.mxu0 %v4390
    %5751 = vmatprep.subr.mxu0 0.0
    %5752 = vmatpush1.msra.mxu0 %v4393
    %5753 = vmatprep.subr.mxu0 0.0
    %5754 = vmatpush1.msra.mxu0 %v4396
    %5755 = vmatprep.subr.mxu0 0.0
    %5756 = vmatpush1.msra.mxu0 %v4399
    %5757 = vmatprep.subr.mxu0 0.0
    %5758 = vmatpush1.msra.mxu0 %v4402
    %5759 = vmatprep.subr.mxu0 0.0
    %5760 = vmatpush1.msra.mxu0 %v4405
    %5761 = vmatprep.subr.mxu0 0.0
    %5762 = vmatpush1.msra.mxu0 %v4408
    %5763 = vmatprep.subr.mxu0 0.0
    %5764 = vmatpush1.msra.mxu0 %v4411
    %5765 = vmatprep.subr.mxu0 0.0
    %5766 = vmatpush1.msra.mxu0 %v4414
    %5767 = vmatprep.subr.mxu0 0.0
    %5768 = vmatpush1.msra.mxu0 %v4417
    %5769 = vmatprep.subr.mxu0 0.0
    %5770 = vmatpush1.msra.mxu0 %v4420
    %5771 = vmatprep.subr.mxu0 0.0
    %5772 = vmatpush1.msra.mxu0 %v4423
    %5773 = vmatprep.subr.mxu0 0.0
    %5774 = vmatpush1.msra.mxu0 %v4426
    %5775 = vmatprep.subr.mxu0 0.0
    %5776 = vmatpush1.msra.mxu0 %v4429
    %5777 = vmatprep.subr.mxu0 0.0
    %5778 = vmatpush1.msra.mxu0 %v4432
    %5779 = vmatprep.subr.mxu0 0.0
    %5780 = vmatpush1.msra.mxu0 0.0
    %5781 = vmatprep.subr.mxu0 0.0
    %5782 = vmatpush1.msra.mxu0 0.0
    %5783 = vmatprep.subr.mxu0 0.0
    %5784 = vmatpush1.msra.mxu0 0.0
    %5785 = vmatprep.subr.mxu0 0.0
    %5786 = vmatpush1.msra.mxu0 0.0
    %5787 = vmatprep.subr.mxu0 0.0
    %5788 = vmatpush1.msra.mxu0 0.0
    %5789 = vmatprep.subr.mxu0 0.0
    %5790 = vmatpush1.msra.mxu0 0.0
    %5791 = vmatprep.subr.mxu0 0.0
    %5792 = vmatpush1.msra.mxu0 0.0
    %5793 = vmatprep.subr.mxu0 0.0
    %5794 = vmatpush1.msra.mxu0 0.0
    %5795 = vmatprep.subr.mxu0 0.0
    %5796 = vmatpush1.msra.mxu0 0.0
    %5797 = vmatprep.subr.mxu0 0.0
    %5798 = vmatpush1.msra.mxu0 0.0
    %5799 = vmatprep.subr.mxu0 0.0
    %5800 = vmatpush1.msra.mxu0 0.0
    %5801 = vmatprep.subr.mxu0 0.0
    %5802 = vmatpush1.msra.mxu0 0.0
    %5803 = vmatprep.subr.mxu0 0.0
    %5804 = vmatpush1.msra.mxu0 0.0
    %5805 = vmatprep.subr.mxu0 0.0
    %5806 = vmatpush1.msra.mxu0 0.0
    %5807 = vmatprep.subr.mxu0 0.0
    %5808 = vmatpush1.msra.mxu0 0.0
    %5809 = vmatprep.subr.mxu0 0.0
    %5810 = vmatpush1.msra.mxu0 0.0
    %5811 = vmatprep.mubr.f32.mxu0 0.0
    %5812 = vmatmul.mubr.f32.gmra.mrb[0].mxu0 %v5674
    %v5813 = vpop.f32.mrb[0].mxu0
    %v5814 = vadd.f32 %v4445, %v5813
    %v5815 = vpop.f32.mrb[0].mxu0
    %5816 = vdwg.mxu0
    %v5818 = vrot.slane %v5743, 2
    %v5820 = vadd.f32 %v5670, %v5818
    %v5821 = vxor.u32 %v5820, 2147483648
    %v5822 = vmul.f32 %v5821, 1.442695
    %v5823 = vpow.pop %v5822
    %v5824 = vadd.f32 %v5823, 1.0
    %v5825 = vrcp.pop %v5824
    %v5826 = vmul.f32 1.0, %v5825
    %v5828 = vrot.slane %v5745, 2
    %v5830 = vadd.f32 %v5671, %v5828
    %v5831 = vxor.u32 %v5830, 2147483648
    %v5832 = vmul.f32 %v5831, 1.442695
    %v5833 = vpow.pop %v5832
    %v5834 = vadd.f32 %v5833, 1.0
    %v5835 = vrcp.pop %v5834
    %v5836 = vmul.f32 1.0, %v5835
    %v5838 = vrot.slane %v5814, 2
    %v5840 = vmul.f32 %v5826, %v5838
    %v5841 = vadd.f32 %v5672, %v5840
    %v5842 = vtanh.pop %v5841
    %v5843 = vsub.f32 1.0, %v5836
    %v5844 = vmul.f32 %v5843, %v5842
    %v5845 = vrot.slane %v5669, 6
    %v5847 = vmul.f32 %v5836, %v5845
    %v5848 = vadd.f32 %v5844, %v5847
    %v5849 = vld [vmem:[%s13] sm:$0x1]
    %v5851 = vlaneseq
    %v5852 = vshrl.u32 %v5851, 7
    %v5853 = vsub.s32 0, %v5852
    %v5854 = vrot.slane %v5849, %v5853
    %v5856 = vmul.f32 %v5848, %v5854
    %vm5857 = vcmask 1047558
    %v5858 = vsel %vm5857, %v5856, 0.0
    %5859 = vadd.xlane.f32.xlu0 %v5858
    %v5860 = vpop.xlane.xlu0 %5859
    %v5861 = vld [vmem:[#allocation4] sm:$0x1]
    %v5863 = vlaneseq
    %v5864 = vshrl.u32 %v5863, 7
    %v5865 = vsub.s32 0, %v5864
    %v5866 = vrot.slane %v5861, %v5865
    %v5868 = vadd.f32 %v5860, %v5866
    %v5869 = vxor.u32 %v5868, 2147483648
    %v5870 = vmul.f32 %v5869, 1.442695
    %v5871 = vpow.pop %v5870
    %v5872 = vadd.f32 %v5871, 1.0
    %v5873 = vrcp.pop %v5872
    %v5874 = vmul.f32 1.0, %v5873
    %vm5875 = vcmask 7174
    %5876 = vst.msk [vmem:[%s15 - $0x6] sm:$0xc0] %vm5875, %v5874
    // Predicated region
    $region82: #{gru_model_forward.1} parent=1 // pred_check
      _
    $region83: #{gru_model_forward.1} parent=1 // pred_check_branch
      %5878 = sbr.rel (0) target = $region85
    $region84: #{gru_model_forward.1} parent=1 // pred_region
      _
    $region85: #{gru_model_forward.1} parent=1 // pred_fallthru
      _
    // Predicated region
    $region86: #{gru_model_forward.1} parent=1 // pred_check
      _
    $region87: #{gru_model_forward.1} parent=1 // pred_check_branch
      %5880 = sbr.rel (0) target = $region89
    $region88: #{gru_model_forward.1} parent=1 // pred_region
      _
    $region89: #{gru_model_forward.1} parent=1 // pred_fallthru
      _
    %5881 = vsyncpa [#allocation6], 1
    %5882 = vsyncpa [#allocation8], 1
    %5883 = vsyncpa [#allocation11], 1

</llo_original>
